<compile_context>
chip_gen: v6e
topology: v6e:2x2x1
jax: 0.10.0
libtpu: 0.0.40
codegen_flags: <defaults>
</compile_context>

<pallas_src>
import functools
import math

import numpy as np
import jax
import jax.numpy as jnp
from jax.experimental import pallas as pl
from jax.experimental.pallas import tpu as pltpu


# ----------------------------- helpers -------------------------------------

def _apply_act(y, act):
    if act == "relu":
        return jnp.maximum(y, 0.0)
    if act == "leaky_relu":
        return jnp.where(y >= 0.0, y, 0.01 * y)
    return y


# ----------------------------- Pallas kernels ------------------------------

def _linear_kernel(x_ref, w_ref, b_ref, o_ref, *, act):
    y = jnp.dot(x_ref[...], w_ref[...], preferred_element_type=jnp.float32)
    y = y + b_ref[...]
    o_ref[...] = _apply_act(y, act)


def pallas_linear(x2d, w, b=None, act=None, block_m=512):
    """out = act(x2d @ w + b).  Single full block when M <= block_m (no pad/slice)."""
    x2d = x2d.astype(jnp.float32)
    w = w.astype(jnp.float32)
    M, K = x2d.shape
    N = w.shape[1]
    b2 = jnp.zeros((1, N), jnp.float32) if b is None else jnp.asarray(b, jnp.float32).reshape(1, N)
    bm = M if M <= block_m else block_m
    Mp = ((M + bm - 1) // bm) * bm
    xp = x2d if Mp == M else jnp.pad(x2d, ((0, Mp - M), (0, 0)))
    out = pl.pallas_call(
        functools.partial(_linear_kernel, act=act),
        out_shape=jax.ShapeDtypeStruct((Mp, N), jnp.float32),
        grid=(Mp // bm,),
        in_specs=[
            pl.BlockSpec((bm, K), lambda i: (i, 0)),
            pl.BlockSpec((K, N), lambda i: (0, 0)),
            pl.BlockSpec((1, N), lambda i: (0, 0)),
        ],
        out_specs=pl.BlockSpec((bm, N), lambda i: (i, 0)),
        compiler_params=pltpu.CompilerParams(dimension_semantics=("parallel",)),
    )(xp, w, b2)
    return out if Mp == M else out[:M]


def _mlp_kernel(*refs, n_layers, acts, pre_act):
    x_ref = refs[0]
    o_ref = refs[-1]
    y = _apply_act(x_ref[...], pre_act)
    for i in range(n_layers):
        w = refs[1 + 2 * i][...]
        b = refs[2 + 2 * i][...]
        y = jnp.dot(y, w, preferred_element_type=jnp.float32) + b
        y = _apply_act(y, acts[i])
    o_ref[...] = y


def pallas_mlp(x2d, layers, acts, pre_act=None):
    """Whole MLP chain in ONE pallas_call; inter-layer activations never touch HBM."""
    x2d = x2d.astype(jnp.float32)
    M, K = x2d.shape
    ops = [x2d]
    in_specs = [pl.BlockSpec((M, K), lambda i: (0, 0))]
    for lp in layers:
        w = lp["w"].astype(jnp.float32)
        kin, nout = w.shape
        b = lp["b"]
        b2 = jnp.zeros((1, nout), jnp.float32) if b is None else jnp.asarray(b, jnp.float32).reshape(1, nout)
        ops += [w, b2]
        in_specs += [pl.BlockSpec((kin, nout), lambda i: (0, 0)),
                     pl.BlockSpec((1, nout), lambda i: (0, 0))]
    N = layers[-1]["w"].shape[1]
    return pl.pallas_call(
        functools.partial(_mlp_kernel, n_layers=len(layers), acts=tuple(acts), pre_act=pre_act),
        out_shape=jax.ShapeDtypeStruct((M, N), jnp.float32),
        grid=(1,),
        in_specs=in_specs,
        out_specs=pl.BlockSpec((M, N), lambda i: (0, 0)),
    )(*ops)


def _ln_kernel(*refs, n_res):
    x = refs[0][...]
    for r in refs[1:1 + n_res]:
        x = x + r[...]
    g = refs[1 + n_res][...]
    be = refs[2 + n_res][...]
    o_ref = refs[-1]
    mu = jnp.mean(x, axis=-1, keepdims=True)
    var = jnp.mean((x - mu) ** 2, axis=-1, keepdims=True)
    o_ref[...] = (x - mu) * jax.lax.rsqrt(var + 1e-5) * g + be


def pallas_layernorm(x, gamma, beta, residuals=()):
    """LayerNorm over the last axis, residual adds fused in-kernel."""
    shp = x.shape
    D = shp[-1]
    x2 = x.reshape(-1, D).astype(jnp.float32)
    M = x2.shape[0]
    res2 = [jnp.broadcast_to(r, shp).reshape(-1, D).astype(jnp.float32) for r in residuals]
    ops = [x2] + res2 + [gamma.reshape(1, D).astype(jnp.float32),
                         beta.reshape(1, D).astype(jnp.float32)]
    in_specs = ([pl.BlockSpec((M, D), lambda i: (0, 0)) for _ in range(1 + len(res2))]
                + [pl.BlockSpec((1, D), lambda i: (0, 0))] * 2)
    out = pl.pallas_call(
        functools.partial(_ln_kernel, n_res=len(res2)),
        out_shape=jax.ShapeDtypeStruct((M, D), jnp.float32),
        grid=(1,),
        in_specs=in_specs,
        out_specs=pl.BlockSpec((M, D), lambda i: (0, 0)),
    )(*ops)
    return out.reshape(shp)


def _ln_res_proj_kernel(x_ref, res_ref, g_ref, be_ref, w_ref, zo_ref, po_ref):
    y = x_ref[...] + res_ref[...]
    mu = jnp.mean(y, axis=-1, keepdims=True)
    var = jnp.mean((y - mu) ** 2, axis=-1, keepdims=True)
    zn = (y - mu) * jax.lax.rsqrt(var + 1e-5) * g_ref[...] + be_ref[...]
    zo_ref[...] = zn
    po_ref[...] = jnp.dot(zn, w_ref[...], preferred_element_type=jnp.float32)


def pallas_ln_res_proj(x2d, res2d, gamma, beta, w):
    """LN(x + res) plus an immediate projection of the normalized output (one kernel)."""
    M, D = x2d.shape
    N = w.shape[1]
    return pl.pallas_call(
        _ln_res_proj_kernel,
        out_shape=(jax.ShapeDtypeStruct((M, D), jnp.float32),
                   jax.ShapeDtypeStruct((M, N), jnp.float32)),
        grid=(1,),
        in_specs=[
            pl.BlockSpec((M, D), lambda i: (0, 0)),
            pl.BlockSpec((M, D), lambda i: (0, 0)),
            pl.BlockSpec((1, D), lambda i: (0, 0)),
            pl.BlockSpec((1, D), lambda i: (0, 0)),
            pl.BlockSpec((D, N), lambda i: (0, 0)),
        ],
        out_specs=(pl.BlockSpec((M, D), lambda i: (0, 0)),
                   pl.BlockSpec((M, N), lambda i: (0, 0))),
    )(x2d.astype(jnp.float32), res2d.astype(jnp.float32),
      gamma.reshape(1, D).astype(jnp.float32), beta.reshape(1, D).astype(jnp.float32),
      w.astype(jnp.float32))


def pallas_node_mix(x, assign):
    """einsum('...nc,nm->...mc', x, assign) as ONE matmul: assign^T [m,n] @ x_flat [n, B*c]."""
    lead = x.shape[:-2]
    n, c = x.shape[-2:]
    m = assign.shape[1]
    B = int(np.prod(lead)) if lead else 1
    x_flat = jnp.moveaxis(x.reshape(B, n, c), 1, 0).reshape(n, B * c).astype(jnp.float32)
    out = pallas_linear(assign.T.astype(jnp.float32), x_flat)          # [m, B*c]
    out = jnp.moveaxis(out.reshape(m, B, c), 0, 1).reshape(*lead, m, c)
    return out


def _attn_z_kernel(q_ref, k_ref, v_ref, bias_ref, zres_ref, wo_ref, wm_ref, g_ref, be_ref,
                   zo_ref, zm_ref, *, scale):
    # z<-h temporal attention for one batch item, fused with wo_z, residual, LN(ln_z1), wm_z.
    q = q_ref[0]                                      # (n, heads, H)
    k = k_ref[0]                                      # (n, s, H)
    v = v_ref[0]                                      # (n, s, H)
    n = q.shape[0]
    s = jnp.einsum('nqd,nkd->nqk', q, k, preferred_element_type=jnp.float32)
    s = s * scale + bias_ref[0]
    s = s - jnp.max(s, axis=-1, keepdims=True)
    p = jnp.exp(s)
    p = p * pl.reciprocal(jnp.sum(p, axis=-1, keepdims=True), approx=True)
    att = jnp.einsum('nqk,nkd->nqd', p, v, preferred_element_type=jnp.float32)   # (n, heads, H)
    wo = jnp.broadcast_to(wo_ref[...], (n,) + wo_ref.shape)                      # (n, H, Z)
    z_upd = jnp.einsum('nqd,nde->nqe', att, wo, preferred_element_type=jnp.float32)
    y = zres_ref[0] + z_upd
    mu = jnp.mean(y, axis=-1, keepdims=True)
    var = jnp.mean((y - mu) ** 2, axis=-1, keepdims=True)
    zn = (y - mu) * jax.lax.rsqrt(var + 1e-5) * g_ref[...] + be_ref[...]
    zo_ref[0] = zn
    wm = jnp.broadcast_to(wm_ref[...], (n,) + wm_ref.shape)                      # (n, Z, Z)
    zm_ref[0] = jnp.einsum('nqe,nef->nqf', zn, wm, preferred_element_type=jnp.float32)


def pallas_attn_z(qz, kh, vh, bias, z_res, wo, wm, gamma, beta, scale):
    b, n, heads, H = qz.shape
    s = kh.shape[2]
    Z = z_res.shape[-1]
    return pl.pallas_call(
        functools.partial(_attn_z_kernel, scale=float(scale)),
        out_shape=(jax.ShapeDtypeStruct((b, n, heads, Z), jnp.float32),
                   jax.ShapeDtypeStruct((b, n, heads, Z), jnp.float32)),
        grid=(b,),
        in_specs=[
            pl.BlockSpec((1, n, heads, H), lambda i: (i, 0, 0, 0)),
            pl.BlockSpec((1, n, s, H), lambda i: (i, 0, 0, 0)),
            pl.BlockSpec((1, n, s, H), lambda i: (i, 0, 0, 0)),
            pl.BlockSpec((1, n, heads, s), lambda i: (i, 0, 0, 0)),
            pl.BlockSpec((1, n, heads, Z), lambda i: (i, 0, 0, 0)),
            pl.BlockSpec((H, Z), lambda i: (0, 0)),
            pl.BlockSpec((Z, Z), lambda i: (0, 0)),
            pl.BlockSpec((1, Z), lambda i: (0, 0)),
            pl.BlockSpec((1, Z), lambda i: (0, 0)),
        ],
        out_specs=(pl.BlockSpec((1, n, heads, Z), lambda i: (i, 0, 0, 0)),
                   pl.BlockSpec((1, n, heads, Z), lambda i: (i, 0, 0, 0))),
        compiler_params=pltpu.CompilerParams(dimension_semantics=("parallel",)),
    )(qz.astype(jnp.float32), kh.astype(jnp.float32), vh.astype(jnp.float32),
      bias.astype(jnp.float32), z_res.astype(jnp.float32),
      wo.astype(jnp.float32), wm.astype(jnp.float32),
      gamma.reshape(1, Z).astype(jnp.float32), beta.reshape(1, Z).astype(jnp.float32))


def _attn_h_kernel(q_ref, k_ref, v_ref, hres_ref, rres_ref, g_ref, be_ref, o_ref, *, scale):
    # h<-z attention for one batch item, fused with residual(h) + root skip + LN(ln_h).
    q = q_ref[0]                                      # (n, s, H)
    k = k_ref[0]                                      # (n, heads, H)
    v = v_ref[0]                                      # (n, heads, H)
    s = jnp.einsum('nqd,nkd->nqk', q, k, preferred_element_type=jnp.float32) * scale
    s = s - jnp.max(s, axis=-1, keepdims=True)
    p = jnp.exp(s)
    p = p * pl.reciprocal(jnp.sum(p, axis=-1, keepdims=True), approx=True)
    att = jnp.einsum('nqk,nkd->nqd', p, v, preferred_element_type=jnp.float32)   # (n, s, H)
    y = hres_ref[0] + rres_ref[0] + att
    mu = jnp.mean(y, axis=-1, keepdims=True)
    var = jnp.mean((y - mu) ** 2, axis=-1, keepdims=True)
    o_ref[0] = (y - mu) * jax.lax.rsqrt(var + 1e-5) * g_ref[...] + be_ref[...]


def pallas_attn_h(qh, kz, vz, h_res, root_res, gamma, beta, scale):
    b, n, s, H = qh.shape
    heads = kz.shape[2]
    return pl.pallas_call(
        functools.partial(_attn_h_kernel, scale=float(scale)),
        out_shape=jax.ShapeDtypeStruct((b, n, s, H), jnp.float32),
        grid=(b,),
        in_specs=[
            pl.BlockSpec((1, n, s, H), lambda i: (i, 0, 0, 0)),
            pl.BlockSpec((1, n, heads, H), lambda i: (i, 0, 0, 0)),
            pl.BlockSpec((1, n, heads, H), lambda i: (i, 0, 0, 0)),
            pl.BlockSpec((1, n, s, H), lambda i: (i, 0, 0, 0)),
            pl.BlockSpec((1, n, s, H), lambda i: (i, 0, 0, 0)),
            pl.BlockSpec((1, H), lambda i: (0, 0)),
            pl.BlockSpec((1, H), lambda i: (0, 0)),
        ],
        out_specs=pl.BlockSpec((1, n, s, H), lambda i: (i, 0, 0, 0)),
        compiler_params=pltpu.CompilerParams(dimension_semantics=("parallel",)),
    )(qh.astype(jnp.float32), kz.astype(jnp.float32), vz.astype(jnp.float32),
      h_res.astype(jnp.float32), root_res.astype(jnp.float32),
      gamma.reshape(1, H).astype(jnp.float32), beta.reshape(1, H).astype(jnp.float32))


# ------------------------------ parameters ---------------------------------

def build_params(key, cfg):
    keys = list(jax.random.split(key, 256))
    it = iter(keys)

    def nxt():
        return next(it)

    def lin(fan_in, fan_out, bias=True):
        bd = 1.0 / math.sqrt(fan_in)
        w = jax.random.uniform(nxt(), (fan_in, fan_out), jnp.float32, -bd, bd)
        b = jax.random.uniform(nxt(), (fan_out,), jnp.float32, -bd, bd) if bias else None
        return {"w": w, "b": b}

    def emb(n, d):
        # StaticGraphEmbedding 'uniform' init: U(-1/sqrt(emb_size), 1/sqrt(emb_size))
        bd = 1.0 / math.sqrt(d)
        return jax.random.uniform(nxt(), (n, d), jnp.float32, -bd, bd)

    H, Z = cfg["h_size"], cfg["z_size"]
    C, O = cfg["input_size"], cfg["output_size"]
    n, og, heads = cfg["n_nodes"], cfg["og_nodes"], cfg["z_heads"]

    p = {}
    p["shrink_pool"] = lin(C, n)
    p["expand_pool"] = lin(O, og)
    p["v"] = emb(n, H)
    p["lin_v"] = lin(H, Z, bias=False)
    bd = 1.0 / math.sqrt(Z)
    p["z"] = jax.random.uniform(nxt(), (1, heads, n, Z), jnp.float32, -bd, bd)
    p["z_norm"] = {"g": jnp.ones((Z,), jnp.float32), "b": jnp.zeros((Z,), jnp.float32)}
    p["h_norm"] = {"g": jnp.ones((H,), jnp.float32), "b": jnp.zeros((H,), jnp.float32)}
    p["u_enc"] = {"lin": lin(cfg["u_size"], H),
                  "mlp": [lin(H, H), lin(H, H), lin(H, H)]}
    p["h_enc"] = [lin(C, H), lin(H, H)]
    for name in ("v1", "m1", "v2", "m2"):
        p[name] = emb(n, H)

    layers = []
    for _ in range(cfg["n_layers"]):
        enc = {
            "wq_z": lin(Z, H, bias=False), "wk_h": lin(H, H, bias=False),
            "wv_h": lin(H, H, bias=False), "wo_z": lin(H, Z, bias=False),
            "wm_z": lin(Z, Z, bias=False),
            "wq_h": lin(H, H, bias=False), "wk_z": lin(Z, H, bias=False),
            "wv_z": lin(Z, H, bias=False), "root": lin(H, H),
            "ln_z1": {"g": jnp.ones((Z,), jnp.float32), "b": jnp.zeros((Z,), jnp.float32)},
            "ln_z2": {"g": jnp.ones((Z,), jnp.float32), "b": jnp.zeros((Z,), jnp.float32)},
            "ln_h": {"g": jnp.ones((H,), jnp.float32), "b": jnp.zeros((H,), jnp.float32)},
        }
        layers.append({
            "x_skip": lin(C, H),
            "enc": enc,
            "readout": [lin(H, Z), lin(Z, Z), lin(Z, O)],
        })
    p["layers"] = layers
    return p


# ------------------------------- sub-modules --------------------------------

def sinusoidal_pe(s, d):
    pos = jnp.arange(s, dtype=jnp.float32)[:, None]
    i = jnp.arange(d, dtype=jnp.float32)[None, :]
    angle = pos / jnp.power(10000.0, (2.0 * jnp.floor(i / 2.0)) / d)
    return jnp.where(jnp.mod(jnp.arange(d), 2) == 0, jnp.sin(angle), jnp.cos(angle))


def h_enc_forward(p, x):
    shp = x.shape
    y = pallas_mlp(x.reshape(-1, shp[-1]), p, acts=("relu", "relu"))
    return y.reshape(*shp[:-1], y.shape[-1])


def readout_forward(p, h):
    shp = h.shape
    y = pallas_mlp(h.reshape(-1, shp[-1]), p, acts=("relu", "relu", None))
    return y.reshape(*shp[:-1], y.shape[-1])


def u_enc_forward(p, u, node_emb):
    # TODO(synk): PositionalEncoder internals not in the reference snippet; follows the
    # SPIN paper implementation (linear + node-emb add + LeakyReLU + MLP + sinusoidal PE).
    b, s, uc = u.shape
    n, H = node_emb.shape
    x = pallas_linear(u.reshape(-1, uc), p["lin"]["w"], p["lin"]["b"]).reshape(b, s, 1, H)
    x = x + node_emb[None, None]                              # [b, s, n, H]
    y = pallas_mlp(x.reshape(-1, H), p["mlp"], acts=("relu", "relu", None),
                   pre_act="leaky_relu")
    y = y.reshape(b, s, n, H)
    return y + sinusoidal_pe(s, H)[None, :, None, :]


def pool_data(pool_p, x, adj, mask, compute_graph=True):
    """SPIN pool_data stand-in (assignment -> softmax -> node contraction + adj/mask pooling).
    edge_index is carried as a dense adjacency (JAX has no dynamic nonzero)."""
    # TODO(synk): DiffPool internals are not given in the reference; deterministic
    # stand-in = time-mean features, one-hop adjacency aggregation, linear projection.
    b, s, n, c = x.shape
    feat = x.mean(axis=1)                                     # [b, n, c]
    agg = pallas_node_mix(feat, adj) + feat                   # [b, n, c]
    m_out = pool_p["w"].shape[1]
    assign = pallas_linear(agg.reshape(-1, c), pool_p["w"], pool_p["b"]).reshape(b, n, m_out)
    assign = jax.nn.softmax(assign.mean(axis=0), axis=1)      # [n, m]
    x_new = pallas_node_mix(x, assign)                        # einsum('bsnc,nm->bsmc')
    if not compute_graph:
        return x_new, None, None
    t = pallas_node_mix(adj[None], assign)[0]                 # assign^T @ adj  -> [m, n]
    adj_new = (pallas_linear(t, assign) > 0.5).astype(jnp.float32)     # [m, m]
    mask_new = (pallas_node_mix(mask.astype(jnp.float32), assign) > 0.5).astype(jnp.float32)
    return x_new, adj_new, mask_new


def encoder_layer(p, h, z, adj, mask):
    # TODO(synk): HierarchicalTemporalGraphAttention source not provided; faithful-in-spirit
    # stand-in: masked temporal cross-attention (z<-h), spatial propagation of z over the
    # pooled adjacency, cross-attention (h<-z) with root skip, LayerNorms throughout.
    b, s, n, H = h.shape
    if z.shape[0] == 1 and b > 1:
        z = jnp.broadcast_to(z, (b,) + z.shape[1:])
    heads, Z = z.shape[1], z.shape[-1]
    scale = 1.0 / math.sqrt(H)

    mask_any = (jnp.max(mask, axis=-1) > 0).astype(jnp.float32)          # [b, s, n]
    bias = jnp.where(mask_any.transpose(0, 2, 1)[:, :, None, :] > 0, 0.0, -1e9)
    bias = jnp.broadcast_to(bias, (b, n, heads, s))                      # [b, n, heads, s]

    # ---- fused, lane-dense h projections: [wk_h | wv_h | wq_h | root] -> [H, 4H] ----
    w_h4 = jnp.concatenate([p["wk_h"]["w"], p["wv_h"]["w"], p["wq_h"]["w"], p["root"]["w"]], axis=1)
    b_h4 = jnp.concatenate([jnp.zeros((3 * H,), jnp.float32), p["root"]["b"]], axis=0)
    hp = pallas_linear(h.reshape(-1, H), w_h4, b_h4).reshape(b, s, n, 4 * H)
    hp = hp.transpose(0, 2, 1, 3)                                        # [b, n, s, 4H]
    kh, vh = hp[..., :H], hp[..., H:2 * H]
    qh, h_root = hp[..., 2 * H:3 * H], hp[..., 3 * H:]

    # ---- z -> query projection ----
    qz = pallas_linear(z.reshape(-1, Z), p["wq_z"]["w"]).reshape(b, heads, n, H)
    qz = qz.transpose(0, 2, 1, 3)                                        # [b, n, heads, H]

    # ---- z<-h attention fused with wo_z + residual + ln_z1 + wm_z ----
    z_res = z.transpose(0, 2, 1, 3)                                      # [b, n, heads, Z]
    z_new_t, zm_t = pallas_attn_z(qz, kh, vh, bias, z_res,
                                  p["wo_z"]["w"], p["wm_z"]["w"],
                                  p["ln_z1"]["g"], p["ln_z1"]["b"], scale)
    z = z_new_t.transpose(0, 2, 1, 3)                                    # [b, heads, n, Z]
    zm = zm_t.transpose(0, 2, 1, 3)                                      # [b, heads, n, Z]

    # ---- spatial propagation of z over the graph (aggr='add') ----
    z_sp = pallas_node_mix(zm, adj)                                      # [b, heads, n, Z]

    # ---- ln_z2 (+ residual) fused with the k/v projection of z ----
    w_kv = jnp.concatenate([p["wk_z"]["w"], p["wv_z"]["w"]], axis=1)     # [Z, 2H]
    z2d, kvz = pallas_ln_res_proj(z.reshape(-1, Z), z_sp.reshape(-1, Z),
                                  p["ln_z2"]["g"], p["ln_z2"]["b"], w_kv)
    z = z2d.reshape(b, heads, n, Z)
    kvz = kvz.reshape(b, heads, n, 2 * H).transpose(0, 2, 1, 3)          # [b, n, heads, 2H]
    kz, vz = kvz[..., :H], kvz[..., H:]

    # ---- h<-z attention fused with root skip + residual + ln_h ----
    h_res = h.transpose(0, 2, 1, 3)                                      # [b, n, s, H]
    h_new_t = pallas_attn_h(qh, kz, vz, h_res, h_root,
                            p["ln_h"]["g"], p["ln_h"]["b"], scale)
    h = h_new_t.transpose(0, 2, 1, 3)                                    # [b, s, n, H]
    return h, z


# ------------------------------ full forward --------------------------------

def spin_forward(params, cfg, x, u, mask, adj_og):
    # shrink pooling: og_nodes -> n_nodes (= 2*og_nodes//3)
    x, adj, mask = pool_data(params["shrink_pool"], x, adj_og, mask)
    b, s, n, _ = x.shape
    H = cfg["h_size"]

    v_nodes = params["v"]                                                        # [n, H]
    z = params["z"] + pallas_linear(v_nodes, params["lin_v"]["w"])[None, None]   # [1, heads, n, Z]
    q = u_enc_forward(params["u_enc"], u, v_nodes)                               # [b, s, n, H]
    h = h_enc_forward(params["h_enc"], x) + q
    h = jnp.where(mask > 0, h + params["v1"][None, None], q + params["m1"][None, None])
    h = pallas_layernorm(h, params["h_norm"]["g"], params["h_norm"]["b"])
    z = pallas_layernorm(z, params["z_norm"]["g"], params["z_norm"]["b"])

    imputations = []
    for l in range(cfg["n_layers"]):
        lp = params["layers"][l]
        if l == cfg["eta"]:
            h = jnp.where(mask > 0, h + params["v2"][None, None], h + params["m2"][None, None])
        xs = pallas_linear(x.reshape(-1, x.shape[-1]),
                           lp["x_skip"]["w"], lp["x_skip"]["b"]).reshape(b, s, n, H)
        h = h + xs * mask
        h, z = encoder_layer(lp["enc"], h, z, adj, mask)
        tr = readout_forward(lp["readout"], h)                                   # [b, s, n, out]
        # expand pooling back to the original node set (pooled adj/mask unused -> skipped)
        tr, _, _ = pool_data(params["expand_pool"], tr, adj, mask, compute_graph=False)
        imputations.append(tr)
    x_hat = imputations.pop(-1)
    # (reference calls breakpoint() here; omitted)
    return x_hat, imputations


# ---------------------------------- main -------------------------------------

if __name__ == "__main__":
    og_nodes = 6
    cfg = dict(
        input_size=1, u_size=1, output_size=1,
        h_size=32, z_size=32, z_heads=1,
        og_nodes=og_nodes, n_nodes=2 * og_nodes // 3,
        n_layers=5, eta=3,
    )
    B, S = 2, 12

    key = jax.random.PRNGKey(0)
    kp, kx, ku, km = jax.random.split(key, 4)
    params = build_params(kp, cfg)

    x = jax.random.normal(kx, (B, S, og_nodes, cfg["input_size"]), jnp.float32)
    u = jax.random.normal(ku, (B, S, cfg["u_size"]), jnp.float32)
    mask = (jax.random.uniform(km, (B, S, og_nodes, cfg["input_size"])) > 0.3).astype(jnp.float32)

    # ring graph + self loops over the original nodes (edge_index -> dense adjacency)
    src = np.concatenate([np.arange(og_nodes), np.arange(og_nodes), np.arange(og_nodes)])
    dst = np.concatenate([np.arange(og_nodes),
                          (np.arange(og_nodes) + 1) % og_nodes,
                          (np.arange(og_nodes) - 1) % og_nodes])
    edge_index = jnp.asarray(np.stack([src, dst]), jnp.int32)
    adj_og = jnp.zeros((og_nodes, og_nodes), jnp.float32).at[edge_index[0], edge_index[1]].set(1.0)

    fwd = jax.jit(lambda p, xx, uu, mm, aa: spin_forward(p, cfg, xx, uu, mm, aa))
    x_hat, imputations = fwd(params, x, u, mask, adj_og)
    jax.block_until_ready(x_hat)
    for im in imputations:
        jax.block_until_ready(im)

    assert x_hat.shape == (B, S, og_nodes, cfg["output_size"])
    assert len(imputations) == cfg["n_layers"] - 1
    assert all(bool(jnp.all(jnp.isfinite(im))) for im in imputations + [x_hat])
    print("KERNEL_OK")
</pallas_src>

<mosaic_0001>
module attributes {stable_mosaic.version = 11 : i64} {
  func.func @_linear_kernel(%arg0: i32, %arg1: memref<12x1xf32, #tpu.memory_space<vmem>>, %arg2: memref<1x4xf32, #tpu.memory_space<vmem>>, %arg3: memref<1x4xf32, #tpu.memory_space<vmem>>, %arg4: memref<12x4xf32, #tpu.memory_space<vmem>>) attributes {dimension_semantics = [#tpu.dimension_semantics<parallel>], iteration_bounds = array<i64: 1>, scalar_prefetch = 0 : i64, scratch_operands = 0 : i64, tpu.core_type = #tpu.core_type<tc>, window_params = [{transform_indices = @transform_0, window_bounds = array<i64: 12, 1>}, {pipeline_mode = #tpu.pipeline_mode<synchronous>, transform_indices = @transform_1, window_bounds = array<i64: 1, 4>}, {pipeline_mode = #tpu.pipeline_mode<synchronous>, transform_indices = @transform_2, window_bounds = array<i64: 1, 4>}, {transform_indices = @transform_3, window_bounds = array<i64: 12, 4>}]} {
    %c0 = arith.constant 0 : index
    %c0_0 = arith.constant 0 : index
    %0 = vector.load %arg1[%c0, %c0_0] : memref<12x1xf32, #tpu.memory_space<vmem>>, vector<12x1xf32>
    %c0_1 = arith.constant 0 : index
    %c0_2 = arith.constant 0 : index
    %1 = vector.load %arg2[%c0_1, %c0_2] : memref<1x4xf32, #tpu.memory_space<vmem>>, vector<1x4xf32>
    %cst = arith.constant dense<0.000000e+00> : vector<12x4xf32>
    %2 = tpu.matmul %0, %1, %cst {dimension_numbers = #tpu.dot_dimension_numbers<[1], [0], [0], [1], [0, 0, 1, 1], [], []>} : vector<12x1xf32>, vector<1x4xf32>, vector<12x4xf32> -> vector<12x4xf32>
    %c0_3 = arith.constant 0 : index
    %c0_4 = arith.constant 0 : index
    %3 = vector.load %arg3[%c0_3, %c0_4] : memref<1x4xf32, #tpu.memory_space<vmem>>, vector<1x4xf32>
    %4 = vector.broadcast %3 : vector<1x4xf32> to vector<12x4xf32>
    %5 = arith.addf %2, %4 : vector<12x4xf32>
    %c0_5 = arith.constant 0 : index
    %c0_6 = arith.constant 0 : index
    %6 = vector.load %arg4[%c0_5, %c0_6] : memref<12x4xf32, #tpu.memory_space<vmem>>, vector<12x4xf32>
    tpu.vector_store %arg4[%c0_5, %c0_6], %5 {strides = array<i32>} : memref<12x4xf32, #tpu.memory_space<vmem>>, vector<12x4xf32>,
    return
  }
  func.func @transform_0(%arg0: i32) -> (i32, i32) {
    %c0_i32 = arith.constant 0 : i32
    %c0_i32_0 = arith.constant 0 : i32
    return %arg0, %c0_i32 : i32, i32
  }
  func.func @transform_1(%arg0: i32) -> (i32, i32) {
    %c0_i32 = arith.constant 0 : i32
    %c0_i32_0 = arith.constant 0 : i32
    %c0_i32_1 = arith.constant 0 : i32
    return %c0_i32, %c0_i32_0 : i32, i32
  }
  func.func @transform_2(%arg0: i32) -> (i32, i32) {
    %c0_i32 = arith.constant 0 : i32
    %c0_i32_0 = arith.constant 0 : i32
    %c0_i32_1 = arith.constant 0 : i32
    return %c0_i32, %c0_i32_0 : i32, i32
  }
  func.func @transform_3(%arg0: i32) -> (i32, i32) {
    %c0_i32 = arith.constant 0 : i32
    %c0_i32_0 = arith.constant 0 : i32
    return %arg0, %c0_i32 : i32, i32
  }
}

module attributes {stable_mosaic.version = 11 : i64} {
  func.func @_linear_kernel(%arg0: i32, %arg1: memref<6x6xf32, #tpu.memory_space<vmem>>, %arg2: memref<6x2xf32, #tpu.memory_space<vmem>>, %arg3: memref<1x2xf32, #tpu.memory_space<vmem>>, %arg4: memref<6x2xf32, #tpu.memory_space<vmem>>) attributes {dimension_semantics = [#tpu.dimension_semantics<parallel>], iteration_bounds = array<i64: 1>, scalar_prefetch = 0 : i64, scratch_operands = 0 : i64, tpu.core_type = #tpu.core_type<tc>, window_params = [{transform_indices = @transform_0, window_bounds = array<i64: 6, 6>}, {pipeline_mode = #tpu.pipeline_mode<synchronous>, transform_indices = @transform_1, window_bounds = array<i64: 6, 2>}, {pipeline_mode = #tpu.pipeline_mode<synchronous>, transform_indices = @transform_2, window_bounds = array<i64: 1, 2>}, {transform_indices = @transform_3, window_bounds = array<i64: 6, 2>}]} {
    %c0 = arith.constant 0 : index
    %c0_0 = arith.constant 0 : index
    %0 = vector.load %arg1[%c0, %c0_0] : memref<6x6xf32, #tpu.memory_space<vmem>>, vector<6x6xf32>
    %c0_1 = arith.constant 0 : index
    %c0_2 = arith.constant 0 : index
    %1 = vector.load %arg2[%c0_1, %c0_2] : memref<6x2xf32, #tpu.memory_space<vmem>>, vector<6x2xf32>
    %cst = arith.constant dense<0.000000e+00> : vector<6x2xf32>
    %2 = tpu.matmul %0, %1, %cst {dimension_numbers = #tpu.dot_dimension_numbers<[1], [0], [0], [1], [0, 0, 1, 1], [], []>} : vector<6x6xf32>, vector<6x2xf32>, vector<6x2xf32> -> vector<6x2xf32>
    %c0_3 = arith.constant 0 : index
    %c0_4 = arith.constant 0 : index
    %3 = vector.load %arg3[%c0_3, %c0_4] : memref<1x2xf32, #tpu.memory_space<vmem>>, vector<1x2xf32>
    %4 = vector.broadcast %3 : vector<1x2xf32> to vector<6x2xf32>
    %5 = arith.addf %2, %4 : vector<6x2xf32>
    %c0_5 = arith.constant 0 : index
    %c0_6 = arith.constant 0 : index
    %6 = vector.load %arg4[%c0_5, %c0_6] : memref<6x2xf32, #tpu.memory_space<vmem>>, vector<6x2xf32>
    tpu.vector_store %arg4[%c0_5, %c0_6], %5 {strides = array<i32>} : memref<6x2xf32, #tpu.memory_space<vmem>>, vector<6x2xf32>,
    return
  }
  func.func @transform_0(%arg0: i32) -> (i32, i32) {
    %c0_i32 = arith.constant 0 : i32
    %c0_i32_0 = arith.constant 0 : i32
    return %arg0, %c0_i32 : i32, i32
  }
  func.func @transform_1(%arg0: i32) -> (i32, i32) {
    %c0_i32 = arith.constant 0 : i32
    %c0_i32_0 = arith.constant 0 : i32
    %c0_i32_1 = arith.constant 0 : i32
    return %c0_i32, %c0_i32_0 : i32, i32
  }
  func.func @transform_2(%arg0: i32) -> (i32, i32) {
    %c0_i32 = arith.constant 0 : i32
    %c0_i32_0 = arith.constant 0 : i32
    %c0_i32_1 = arith.constant 0 : i32
    return %c0_i32, %c0_i32_0 : i32, i32
  }
  func.func @transform_3(%arg0: i32) -> (i32, i32) {
    %c0_i32 = arith.constant 0 : i32
    %c0_i32_0 = arith.constant 0 : i32
    return %arg0, %c0_i32 : i32, i32
  }
}

module attributes {stable_mosaic.version = 11 : i64} {
  func.func @_linear_kernel(%arg0: i32, %arg1: memref<4x6xf32, #tpu.memory_space<vmem>>, %arg2: memref<6x24xf32, #tpu.memory_space<vmem>>, %arg3: memref<1x24xf32, #tpu.memory_space<vmem>>, %arg4: memref<4x24xf32, #tpu.memory_space<vmem>>) attributes {dimension_semantics = [#tpu.dimension_semantics<parallel>], iteration_bounds = array<i64: 1>, scalar_prefetch = 0 : i64, scratch_operands = 0 : i64, tpu.core_type = #tpu.core_type<tc>, window_params = [{transform_indices = @transform_0, window_bounds = array<i64: 4, 6>}, {pipeline_mode = #tpu.pipeline_mode<synchronous>, transform_indices = @transform_1, window_bounds = array<i64: 6, 24>}, {pipeline_mode = #tpu.pipeline_mode<synchronous>, transform_indices = @transform_2, window_bounds = array<i64: 1, 24>}, {transform_indices = @transform_3, window_bounds = array<i64: 4, 24>}]} {
    %c0 = arith.constant 0 : index
    %c0_0 = arith.constant 0 : index
    %0 = vector.load %arg1[%c0, %c0_0] : memref<4x6xf32, #tpu.memory_space<vmem>>, vector<4x6xf32>
    %c0_1 = arith.constant 0 : index
    %c0_2 = arith.constant 0 : index
    %1 = vector.load %arg2[%c0_1, %c0_2] : memref<6x24xf32, #tpu.memory_space<vmem>>, vector<6x24xf32>
    %cst = arith.constant dense<0.000000e+00> : vector<4x24xf32>
    %2 = tpu.matmul %0, %1, %cst {dimension_numbers = #tpu.dot_dimension_numbers<[1], [0], [0], [1], [0, 0, 1, 1], [], []>} : vector<4x6xf32>, vector<6x24xf32>, vector<4x24xf32> -> vector<4x24xf32>
    %c0_3 = arith.constant 0 : index
    %c0_4 = arith.constant 0 : index
    %3 = vector.load %arg3[%c0_3, %c0_4] : memref<1x24xf32, #tpu.memory_space<vmem>>, vector<1x24xf32>
    %4 = vector.broadcast %3 : vector<1x24xf32> to vector<4x24xf32>
    %5 = arith.addf %2, %4 : vector<4x24xf32>
    %c0_5 = arith.constant 0 : index
    %c0_6 = arith.constant 0 : index
    %6 = vector.load %arg4[%c0_5, %c0_6] : memref<4x24xf32, #tpu.memory_space<vmem>>, vector<4x24xf32>
    tpu.vector_store %arg4[%c0_5, %c0_6], %5 {strides = array<i32>} : memref<4x24xf32, #tpu.memory_space<vmem>>, vector<4x24xf32>,
    return
  }
  func.func @transform_0(%arg0: i32) -> (i32, i32) {
    %c0_i32 = arith.constant 0 : i32
    %c0_i32_0 = arith.constant 0 : i32
    return %arg0, %c0_i32 : i32, i32
  }
  func.func @transform_1(%arg0: i32) -> (i32, i32) {
    %c0_i32 = arith.constant 0 : i32
    %c0_i32_0 = arith.constant 0 : i32
    %c0_i32_1 = arith.constant 0 : i32
    return %c0_i32, %c0_i32_0 : i32, i32
  }
  func.func @transform_2(%arg0: i32) -> (i32, i32) {
    %c0_i32 = arith.constant 0 : i32
    %c0_i32_0 = arith.constant 0 : i32
    %c0_i32_1 = arith.constant 0 : i32
    return %c0_i32, %c0_i32_0 : i32, i32
  }
  func.func @transform_3(%arg0: i32) -> (i32, i32) {
    %c0_i32 = arith.constant 0 : i32
    %c0_i32_0 = arith.constant 0 : i32
    return %arg0, %c0_i32 : i32, i32
  }
}

module attributes {stable_mosaic.version = 11 : i64} {
  func.func @_mlp_kernel(%arg0: i32, %arg1: memref<96x1xf32, #tpu.memory_space<vmem>>, %arg2: memref<1x32xf32, #tpu.memory_space<vmem>>, %arg3: memref<1x32xf32, #tpu.memory_space<vmem>>, %arg4: memref<32x32xf32, #tpu.memory_space<vmem>>, %arg5: memref<1x32xf32, #tpu.memory_space<vmem>>, %arg6: memref<96x32xf32, #tpu.memory_space<vmem>>) attributes {dimension_semantics = [#tpu.dimension_semantics<arbitrary>], iteration_bounds = array<i64: 1>, scalar_prefetch = 0 : i64, scratch_operands = 0 : i64, tpu.core_type = #tpu.core_type<tc>, window_params = [{pipeline_mode = #tpu.pipeline_mode<synchronous>, transform_indices = @transform_0, window_bounds = array<i64: 96, 1>}, {pipeline_mode = #tpu.pipeline_mode<synchronous>, transform_indices = @transform_1, window_bounds = array<i64: 1, 32>}, {pipeline_mode = #tpu.pipeline_mode<synchronous>, transform_indices = @transform_2, window_bounds = array<i64: 1, 32>}, {pipeline_mode = #tpu.pipeline_mode<synchronous>, transform_indices = @transform_3, window_bounds = array<i64: 32, 32>}, {pipeline_mode = #tpu.pipeline_mode<synchronous>, transform_indices = @transform_4, window_bounds = array<i64: 1, 32>}, {pipeline_mode = #tpu.pipeline_mode<synchronous>, transform_indices = @transform_5, window_bounds = array<i64: 96, 32>}]} {
    %c0 = arith.constant 0 : index
    %c0_0 = arith.constant 0 : index
    %0 = vector.load %arg1[%c0, %c0_0] : memref<96x1xf32, #tpu.memory_space<vmem>>, vector<96x1xf32>
    %c0_1 = arith.constant 0 : index
    %c0_2 = arith.constant 0 : index
    %1 = vector.load %arg2[%c0_1, %c0_2] : memref<1x32xf32, #tpu.memory_space<vmem>>, vector<1x32xf32>
    %c0_3 = arith.constant 0 : index
    %c0_4 = arith.constant 0 : index
    %2 = vector.load %arg3[%c0_3, %c0_4] : memref<1x32xf32, #tpu.memory_space<vmem>>, vector<1x32xf32>
    %cst = arith.constant dense<0.000000e+00> : vector<96x32xf32>
    %3 = tpu.matmul %0, %1, %cst {dimension_numbers = #tpu.dot_dimension_numbers<[1], [0], [0], [1], [0, 0, 1, 1], [], []>} : vector<96x1xf32>, vector<1x32xf32>, vector<96x32xf32> -> vector<96x32xf32>
    %4 = vector.broadcast %2 : vector<1x32xf32> to vector<96x32xf32>
    %5 = arith.addf %3, %4 : vector<96x32xf32>
    %cst_5 = arith.constant 0.000000e+00 : f32
    %6 = vector.broadcast %cst_5 : f32 to vector<96x32xf32>
    %7 = arith.maximumf %5, %6 : vector<96x32xf32>
    %c0_6 = arith.constant 0 : index
    %c0_7 = arith.constant 0 : index
    %8 = vector.load %arg4[%c0_6, %c0_7] : memref<32x32xf32, #tpu.memory_space<vmem>>, vector<32x32xf32>
    %c0_8 = arith.constant 0 : index
    %c0_9 = arith.constant 0 : index
    %9 = vector.load %arg5[%c0_8, %c0_9] : memref<1x32xf32, #tpu.memory_space<vmem>>, vector<1x32xf32>
    %cst_10 = arith.constant dense<0.000000e+00> : vector<96x32xf32>
    %10 = tpu.matmul %7, %8, %cst_10 {dimension_numbers = #tpu.dot_dimension_numbers<[1], [0], [0], [1], [0, 0, 1, 1], [], []>} : vector<96x32xf32>, vector<32x32xf32>, vector<96x32xf32> -> vector<96x32xf32>
    %11 = vector.broadcast %9 : vector<1x32xf32> to vector<96x32xf32>
    %12 = arith.addf %10, %11 : vector<96x32xf32>
    %cst_11 = arith.constant 0.000000e+00 : f32
    %13 = vector.broadcast %cst_11 : f32 to vector<96x32xf32>
    %14 = arith.maximumf %12, %13 : vector<96x32xf32>
    %c0_12 = arith.constant 0 : index
    %c0_13 = arith.constant 0 : index
    %15 = vector.load %arg6[%c0_12, %c0_13] : memref<96x32xf32, #tpu.memory_space<vmem>>, vector<96x32xf32>
    tpu.vector_store %arg6[%c0_12, %c0_13], %14 {strides = array<i32>} : memref<96x32xf32, #tpu.memory_space<vmem>>, vector<96x32xf32>,
    return
  }
  func.func @transform_0(%arg0: i32) -> (i32, i32) {
    %c0_i32 = arith.constant 0 : i32
    %c0_i32_0 = arith.constant 0 : i32
    %c0_i32_1 = arith.constant 0 : i32
    return %c0_i32, %c0_i32_0 : i32, i32
  }
  func.func @transform_1(%arg0: i32) -> (i32, i32) {
    %c0_i32 = arith.constant 0 : i32
    %c0_i32_0 = arith.constant 0 : i32
    %c0_i32_1 = arith.constant 0 : i32
    return %c0_i32, %c0_i32_0 : i32, i32
  }
  func.func @transform_2(%arg0: i32) -> (i32, i32) {
    %c0_i32 = arith.constant 0 : i32
    %c0_i32_0 = arith.constant 0 : i32
    %c0_i32_1 = arith.constant 0 : i32
    return %c0_i32, %c0_i32_0 : i32, i32
  }
  func.func @transform_3(%arg0: i32) -> (i32, i32) {
    %c0_i32 = arith.constant 0 : i32
    %c0_i32_0 = arith.constant 0 : i32
    %c0_i32_1 = arith.constant 0 : i32
    return %c0_i32, %c0_i32_0 : i32, i32
  }
  func.func @transform_4(%arg0: i32) -> (i32, i32) {
    %c0_i32 = arith.constant 0 : i32
    %c0_i32_0 = arith.constant 0 : i32
    %c0_i32_1 = arith.constant 0 : i32
    return %c0_i32, %c0_i32_0 : i32, i32
  }
  func.func @transform_5(%arg0: i32) -> (i32, i32) {
    %c0_i32 = arith.constant 0 : i32
    %c0_i32_0 = arith.constant 0 : i32
    %c0_i32_1 = arith.constant 0 : i32
    return %c0_i32, %c0_i32_0 : i32, i32
  }
}

module attributes {stable_mosaic.version = 11 : i64} {
  func.func @_mlp_kernel(%arg0: i32, %arg1: memref<96x32xf32, #tpu.memory_space<vmem>>, %arg2: memref<32x32xf32, #tpu.memory_space<vmem>>, %arg3: memref<1x32xf32, #tpu.memory_space<vmem>>, %arg4: memref<32x32xf32, #tpu.memory_space<vmem>>, %arg5: memref<1x32xf32, #tpu.memory_space<vmem>>, %arg6: memref<32x32xf32, #tpu.memory_space<vmem>>, %arg7: memref<1x32xf32, #tpu.memory_space<vmem>>, %arg8: memref<96x32xf32, #tpu.memory_space<vmem>>) attributes {dimension_semantics = [#tpu.dimension_semantics<arbitrary>], iteration_bounds = array<i64: 1>, scalar_prefetch = 0 : i64, scratch_operands = 0 : i64, tpu.core_type = #tpu.core_type<tc>, window_params = [{pipeline_mode = #tpu.pipeline_mode<synchronous>, transform_indices = @transform_0, window_bounds = array<i64: 96, 32>}, {pipeline_mode = #tpu.pipeline_mode<synchronous>, transform_indices = @transform_1, window_bounds = array<i64: 32, 32>}, {pipeline_mode = #tpu.pipeline_mode<synchronous>, transform_indices = @transform_2, window_bounds = array<i64: 1, 32>}, {pipeline_mode = #tpu.pipeline_mode<synchronous>, transform_indices = @transform_3, window_bounds = array<i64: 32, 32>}, {pipeline_mode = #tpu.pipeline_mode<synchronous>, transform_indices = @transform_4, window_bounds = array<i64: 1, 32>}, {pipeline_mode = #tpu.pipeline_mode<synchronous>, transform_indices = @transform_5, window_bounds = array<i64: 32, 32>}, {pipeline_mode = #tpu.pipeline_mode<synchronous>, transform_indices = @transform_6, window_bounds = array<i64: 1, 32>}, {pipeline_mode = #tpu.pipeline_mode<synchronous>, transform_indices = @transform_7, window_bounds = array<i64: 96, 32>}]} {
    %c0 = arith.constant 0 : index
    %c0_0 = arith.constant 0 : index
    %0 = vector.load %arg1[%c0, %c0_0] : memref<96x32xf32, #tpu.memory_space<vmem>>, vector<96x32xf32>
    %cst = arith.constant 0.000000e+00 : f32
    %1 = vector.broadcast %cst : f32 to vector<96x32xf32>
    %2 = arith.cmpf oge, %0, %1 : vector<96x32xf32>
    %cst_1 = arith.constant 0.00999999977 : f32
    %3 = vector.broadcast %cst_1 : f32 to vector<96x32xf32>
    %4 = arith.mulf %3, %0 : vector<96x32xf32>
    %5 = arith.select %2, %0, %4 : vector<96x32xi1>, vector<96x32xf32>
    %c0_2 = arith.constant 0 : index
    %c0_3 = arith.constant 0 : index
    %6 = vector.load %arg2[%c0_2, %c0_3] : memref<32x32xf32, #tpu.memory_space<vmem>>, vector<32x32xf32>
    %c0_4 = arith.constant 0 : index
    %c0_5 = arith.constant 0 : index
    %7 = vector.load %arg3[%c0_4, %c0_5] : memref<1x32xf32, #tpu.memory_space<vmem>>, vector<1x32xf32>
    %cst_6 = arith.constant dense<0.000000e+00> : vector<96x32xf32>
    %8 = tpu.matmul %5, %6, %cst_6 {dimension_numbers = #tpu.dot_dimension_numbers<[1], [0], [0], [1], [0, 0, 1, 1], [], []>} : vector<96x32xf32>, vector<32x32xf32>, vector<96x32xf32> -> vector<96x32xf32>
    %9 = vector.broadcast %7 : vector<1x32xf32> to vector<96x32xf32>
    %10 = arith.addf %8, %9 : vector<96x32xf32>
    %cst_7 = arith.constant 0.000000e+00 : f32
    %11 = vector.broadcast %cst_7 : f32 to vector<96x32xf32>
    %12 = arith.maximumf %10, %11 : vector<96x32xf32>
    %c0_8 = arith.constant 0 : index
    %c0_9 = arith.constant 0 : index
    %13 = vector.load %arg4[%c0_8, %c0_9] : memref<32x32xf32, #tpu.memory_space<vmem>>, vector<32x32xf32>
    %c0_10 = arith.constant 0 : index
    %c0_11 = arith.constant 0 : index
    %14 = vector.load %arg5[%c0_10, %c0_11] : memref<1x32xf32, #tpu.memory_space<vmem>>, vector<1x32xf32>
    %cst_12 = arith.constant dense<0.000000e+00> : vector<96x32xf32>
    %15 = tpu.matmul %12, %13, %cst_12 {dimension_numbers = #tpu.dot_dimension_numbers<[1], [0], [0], [1], [0, 0, 1, 1], [], []>} : vector<96x32xf32>, vector<32x32xf32>, vector<96x32xf32> -> vector<96x32xf32>
    %16 = vector.broadcast %14 : vector<1x32xf32> to vector<96x32xf32>
    %17 = arith.addf %15, %16 : vector<96x32xf32>
    %cst_13 = arith.constant 0.000000e+00 : f32
    %18 = vector.broadcast %cst_13 : f32 to vector<96x32xf32>
    %19 = arith.maximumf %17, %18 : vector<96x32xf32>
    %c0_14 = arith.constant 0 : index
    %c0_15 = arith.constant 0 : index
    %20 = vector.load %arg6[%c0_14, %c0_15] : memref<32x32xf32, #tpu.memory_space<vmem>>, vector<32x32xf32>
    %c0_16 = arith.constant 0 : index
    %c0_17 = arith.constant 0 : index
    %21 = vector.load %arg7[%c0_16, %c0_17] : memref<1x32xf32, #tpu.memory_space<vmem>>, vector<1x32xf32>
    %cst_18 = arith.constant dense<0.000000e+00> : vector<96x32xf32>
    %22 = tpu.matmul %19, %20, %cst_18 {dimension_numbers = #tpu.dot_dimension_numbers<[1], [0], [0], [1], [0, 0, 1, 1], [], []>} : vector<96x32xf32>, vector<32x32xf32>, vector<96x32xf32> -> vector<96x32xf32>
    %23 = vector.broadcast %21 : vector<1x32xf32> to vector<96x32xf32>
    %24 = arith.addf %22, %23 : vector<96x32xf32>
    %c0_19 = arith.constant 0 : index
    %c0_20 = arith.constant 0 : index
    %25 = vector.load %arg8[%c0_19, %c0_20] : memref<96x32xf32, #tpu.memory_space<vmem>>, vector<96x32xf32>
    tpu.vector_store %arg8[%c0_19, %c0_20], %24 {strides = array<i32>} : memref<96x32xf32, #tpu.memory_space<vmem>>, vector<96x32xf32>,
    return
  }
  func.func @transform_0(%arg0: i32) -> (i32, i32) {
    %c0_i32 = arith.constant 0 : i32
    %c0_i32_0 = arith.constant 0 : i32
    %c0_i32_1 = arith.constant 0 : i32
    return %c0_i32, %c0_i32_0 : i32, i32
  }
  func.func @transform_1(%arg0: i32) -> (i32, i32) {
    %c0_i32 = arith.constant 0 : i32
    %c0_i32_0 = arith.constant 0 : i32
    %c0_i32_1 = arith.constant 0 : i32
    return %c0_i32, %c0_i32_0 : i32, i32
  }
  func.func @transform_2(%arg0: i32) -> (i32, i32) {
    %c0_i32 = arith.constant 0 : i32
    %c0_i32_0 = arith.constant 0 : i32
    %c0_i32_1 = arith.constant 0 : i32
    return %c0_i32, %c0_i32_0 : i32, i32
  }
  func.func @transform_3(%arg0: i32) -> (i32, i32) {
    %c0_i32 = arith.constant 0 : i32
    %c0_i32_0 = arith.constant 0 : i32
    %c0_i32_1 = arith.constant 0 : i32
    return %c0_i32, %c0_i32_0 : i32, i32
  }
  func.func @transform_4(%arg0: i32) -> (i32, i32) {
    %c0_i32 = arith.constant 0 : i32
    %c0_i32_0 = arith.constant 0 : i32
    %c0_i32_1 = arith.constant 0 : i32
    return %c0_i32, %c0_i32_0 : i32, i32
  }
  func.func @transform_5(%arg0: i32) -> (i32, i32) {
    %c0_i32 = arith.constant 0 : i32
    %c0_i32_0 = arith.constant 0 : i32
    %c0_i32_1 = arith.constant 0 : i32
    return %c0_i32, %c0_i32_0 : i32, i32
  }
  func.func @transform_6(%arg0: i32) -> (i32, i32) {
    %c0_i32 = arith.constant 0 : i32
    %c0_i32_0 = arith.constant 0 : i32
    %c0_i32_1 = arith.constant 0 : i32
    return %c0_i32, %c0_i32_0 : i32, i32
  }
  func.func @transform_7(%arg0: i32) -> (i32, i32) {
    %c0_i32 = arith.constant 0 : i32
    %c0_i32_0 = arith.constant 0 : i32
    %c0_i32_1 = arith.constant 0 : i32
    return %c0_i32, %c0_i32_0 : i32, i32
  }
}

module attributes {stable_mosaic.version = 11 : i64} {
  func.func @_linear_kernel(%arg0: i32, %arg1: memref<24x1xf32, #tpu.memory_space<vmem>>, %arg2: memref<1x32xf32, #tpu.memory_space<vmem>>, %arg3: memref<1x32xf32, #tpu.memory_space<vmem>>, %arg4: memref<24x32xf32, #tpu.memory_space<vmem>>) attributes {dimension_semantics = [#tpu.dimension_semantics<parallel>], iteration_bounds = array<i64: 1>, scalar_prefetch = 0 : i64, scratch_operands = 0 : i64, tpu.core_type = #tpu.core_type<tc>, window_params = [{transform_indices = @transform_0, window_bounds = array<i64: 24, 1>}, {pipeline_mode = #tpu.pipeline_mode<synchronous>, transform_indices = @transform_1, window_bounds = array<i64: 1, 32>}, {pipeline_mode = #tpu.pipeline_mode<synchronous>, transform_indices = @transform_2, window_bounds = array<i64: 1, 32>}, {transform_indices = @transform_3, window_bounds = array<i64: 24, 32>}]} {
    %c0 = arith.constant 0 : index
    %c0_0 = arith.constant 0 : index
    %0 = vector.load %arg1[%c0, %c0_0] : memref<24x1xf32, #tpu.memory_space<vmem>>, vector<24x1xf32>
    %c0_1 = arith.constant 0 : index
    %c0_2 = arith.constant 0 : index
    %1 = vector.load %arg2[%c0_1, %c0_2] : memref<1x32xf32, #tpu.memory_space<vmem>>, vector<1x32xf32>
    %cst = arith.constant dense<0.000000e+00> : vector<24x32xf32>
    %2 = tpu.matmul %0, %1, %cst {dimension_numbers = #tpu.dot_dimension_numbers<[1], [0], [0], [1], [0, 0, 1, 1], [], []>} : vector<24x1xf32>, vector<1x32xf32>, vector<24x32xf32> -> vector<24x32xf32>
    %c0_3 = arith.constant 0 : index
    %c0_4 = arith.constant 0 : index
    %3 = vector.load %arg3[%c0_3, %c0_4] : memref<1x32xf32, #tpu.memory_space<vmem>>, vector<1x32xf32>
    %4 = vector.broadcast %3 : vector<1x32xf32> to vector<24x32xf32>
    %5 = arith.addf %2, %4 : vector<24x32xf32>
    %c0_5 = arith.constant 0 : index
    %c0_6 = arith.constant 0 : index
    %6 = vector.load %arg4[%c0_5, %c0_6] : memref<24x32xf32, #tpu.memory_space<vmem>>, vector<24x32xf32>
    tpu.vector_store %arg4[%c0_5, %c0_6], %5 {strides = array<i32>} : memref<24x32xf32, #tpu.memory_space<vmem>>, vector<24x32xf32>,
    return
  }
  func.func @transform_0(%arg0: i32) -> (i32, i32) {
    %c0_i32 = arith.constant 0 : i32
    %c0_i32_0 = arith.constant 0 : i32
    return %arg0, %c0_i32 : i32, i32
  }
  func.func @transform_1(%arg0: i32) -> (i32, i32) {
    %c0_i32 = arith.constant 0 : i32
    %c0_i32_0 = arith.constant 0 : i32
    %c0_i32_1 = arith.constant 0 : i32
    return %c0_i32, %c0_i32_0 : i32, i32
  }
  func.func @transform_2(%arg0: i32) -> (i32, i32) {
    %c0_i32 = arith.constant 0 : i32
    %c0_i32_0 = arith.constant 0 : i32
    %c0_i32_1 = arith.constant 0 : i32
    return %c0_i32, %c0_i32_0 : i32, i32
  }
  func.func @transform_3(%arg0: i32) -> (i32, i32) {
    %c0_i32 = arith.constant 0 : i32
    %c0_i32_0 = arith.constant 0 : i32
    return %arg0, %c0_i32 : i32, i32
  }
}

module attributes {stable_mosaic.version = 11 : i64} {
  func.func @_linear_kernel(%arg0: i32, %arg1: memref<96x1xf32, #tpu.memory_space<vmem>>, %arg2: memref<1x32xf32, #tpu.memory_space<vmem>>, %arg3: memref<1x32xf32, #tpu.memory_space<vmem>>, %arg4: memref<96x32xf32, #tpu.memory_space<vmem>>) attributes {dimension_semantics = [#tpu.dimension_semantics<parallel>], iteration_bounds = array<i64: 1>, scalar_prefetch = 0 : i64, scratch_operands = 0 : i64, tpu.core_type = #tpu.core_type<tc>, window_params = [{transform_indices = @transform_0, window_bounds = array<i64: 96, 1>}, {pipeline_mode = #tpu.pipeline_mode<synchronous>, transform_indices = @transform_1, window_bounds = array<i64: 1, 32>}, {pipeline_mode = #tpu.pipeline_mode<synchronous>, transform_indices = @transform_2, window_bounds = array<i64: 1, 32>}, {transform_indices = @transform_3, window_bounds = array<i64: 96, 32>}]} {
    %c0 = arith.constant 0 : index
    %c0_0 = arith.constant 0 : index
    %0 = vector.load %arg1[%c0, %c0_0] : memref<96x1xf32, #tpu.memory_space<vmem>>, vector<96x1xf32>
    %c0_1 = arith.constant 0 : index
    %c0_2 = arith.constant 0 : index
    %1 = vector.load %arg2[%c0_1, %c0_2] : memref<1x32xf32, #tpu.memory_space<vmem>>, vector<1x32xf32>
    %cst = arith.constant dense<0.000000e+00> : vector<96x32xf32>
    %2 = tpu.matmul %0, %1, %cst {dimension_numbers = #tpu.dot_dimension_numbers<[1], [0], [0], [1], [0, 0, 1, 1], [], []>} : vector<96x1xf32>, vector<1x32xf32>, vector<96x32xf32> -> vector<96x32xf32>
    %c0_3 = arith.constant 0 : index
    %c0_4 = arith.constant 0 : index
    %3 = vector.load %arg3[%c0_3, %c0_4] : memref<1x32xf32, #tpu.memory_space<vmem>>, vector<1x32xf32>
    %4 = vector.broadcast %3 : vector<1x32xf32> to vector<96x32xf32>
    %5 = arith.addf %2, %4 : vector<96x32xf32>
    %c0_5 = arith.constant 0 : index
    %c0_6 = arith.constant 0 : index
    %6 = vector.load %arg4[%c0_5, %c0_6] : memref<96x32xf32, #tpu.memory_space<vmem>>, vector<96x32xf32>
    tpu.vector_store %arg4[%c0_5, %c0_6], %5 {strides = array<i32>} : memref<96x32xf32, #tpu.memory_space<vmem>>, vector<96x32xf32>,
    return
  }
  func.func @transform_0(%arg0: i32) -> (i32, i32) {
    %c0_i32 = arith.constant 0 : i32
    %c0_i32_0 = arith.constant 0 : i32
    return %arg0, %c0_i32 : i32, i32
  }
  func.func @transform_1(%arg0: i32) -> (i32, i32) {
    %c0_i32 = arith.constant 0 : i32
    %c0_i32_0 = arith.constant 0 : i32
    %c0_i32_1 = arith.constant 0 : i32
    return %c0_i32, %c0_i32_0 : i32, i32
  }
  func.func @transform_2(%arg0: i32) -> (i32, i32) {
    %c0_i32 = arith.constant 0 : i32
    %c0_i32_0 = arith.constant 0 : i32
    %c0_i32_1 = arith.constant 0 : i32
    return %c0_i32, %c0_i32_0 : i32, i32
  }
  func.func @transform_3(%arg0: i32) -> (i32, i32) {
    %c0_i32 = arith.constant 0 : i32
    %c0_i32_0 = arith.constant 0 : i32
    return %arg0, %c0_i32 : i32, i32
  }
}

module attributes {stable_mosaic.version = 11 : i64} {
  func.func @_ln_kernel(%arg0: i32, %arg1: memref<96x32xf32, #tpu.memory_space<vmem>>, %arg2: memref<1x32xf32, #tpu.memory_space<vmem>>, %arg3: memref<1x32xf32, #tpu.memory_space<vmem>>, %arg4: memref<96x32xf32, #tpu.memory_space<vmem>>) attributes {dimension_semantics = [#tpu.dimension_semantics<arbitrary>], iteration_bounds = array<i64: 1>, scalar_prefetch = 0 : i64, scratch_operands = 0 : i64, tpu.core_type = #tpu.core_type<tc>, window_params = [{pipeline_mode = #tpu.pipeline_mode<synchronous>, transform_indices = @transform_0, window_bounds = array<i64: 96, 32>}, {pipeline_mode = #tpu.pipeline_mode<synchronous>, transform_indices = @transform_1, window_bounds = array<i64: 1, 32>}, {pipeline_mode = #tpu.pipeline_mode<synchronous>, transform_indices = @transform_2, window_bounds = array<i64: 1, 32>}, {pipeline_mode = #tpu.pipeline_mode<synchronous>, transform_indices = @transform_3, window_bounds = array<i64: 96, 32>}]} {
    %c0 = arith.constant 0 : index
    %c0_0 = arith.constant 0 : index
    %0 = vector.load %arg1[%c0, %c0_0] : memref<96x32xf32, #tpu.memory_space<vmem>>, vector<96x32xf32>
    %c0_1 = arith.constant 0 : index
    %c0_2 = arith.constant 0 : index
    %1 = vector.load %arg2[%c0_1, %c0_2] : memref<1x32xf32, #tpu.memory_space<vmem>>, vector<1x32xf32>
    %c0_3 = arith.constant 0 : index
    %c0_4 = arith.constant 0 : index
    %2 = vector.load %arg3[%c0_3, %c0_4] : memref<1x32xf32, #tpu.memory_space<vmem>>, vector<1x32xf32>
    %cst = arith.constant dense<0.000000e+00> : vector<96xf32>
    %3 = vector.multi_reduction <add>, %0, %cst [1] : vector<96x32xf32> to vector<96xf32>
    %4 = vector.shape_cast %3 : vector<96xf32> to vector<96x1xf32>
    %cst_5 = arith.constant 3.200000e+01 : f32
    %5 = vector.broadcast %cst_5 : f32 to vector<96x1xf32>
    %6 = arith.divf %4, %5 : vector<96x1xf32>
    %7 = vector.broadcast %6 : vector<96x1xf32> to vector<96x32xf32>
    %8 = arith.subf %0, %7 : vector<96x32xf32>
    %9 = arith.mulf %8, %8 : vector<96x32xf32>
    %cst_6 = arith.constant dense<0.000000e+00> : vector<96xf32>
    %10 = vector.multi_reduction <add>, %9, %cst_6 [1] : vector<96x32xf32> to vector<96xf32>
    %11 = vector.shape_cast %10 : vector<96xf32> to vector<96x1xf32>
    %cst_7 = arith.constant 3.200000e+01 : f32
    %12 = vector.broadcast %cst_7 : f32 to vector<96x1xf32>
    %13 = arith.divf %11, %12 : vector<96x1xf32>
    %14 = vector.broadcast %6 : vector<96x1xf32> to vector<96x32xf32>
    %15 = arith.subf %0, %14 : vector<96x32xf32>
    %cst_8 = arith.constant 9.99999974E-6 : f32
    %16 = vector.broadcast %cst_8 : f32 to vector<96x1xf32>
    %17 = arith.addf %13, %16 : vector<96x1xf32>
    %18 = math.rsqrt %17 : vector<96x1xf32>
    %19 = vector.broadcast %18 : vector<96x1xf32> to vector<96x32xf32>
    %20 = arith.mulf %15, %19 : vector<96x32xf32>
    %21 = vector.broadcast %1 : vector<1x32xf32> to vector<96x32xf32>
    %22 = arith.mulf %20, %21 : vector<96x32xf32>
    %23 = vector.broadcast %2 : vector<1x32xf32> to vector<96x32xf32>
    %24 = arith.addf %22, %23 : vector<96x32xf32>
    %c0_9 = arith.constant 0 : index
    %c0_10 = arith.constant 0 : index
    %25 = vector.load %arg4[%c0_9, %c0_10] : memref<96x32xf32, #tpu.memory_space<vmem>>, vector<96x32xf32>
    tpu.vector_store %arg4[%c0_9, %c0_10], %24 {strides = array<i32>} : memref<96x32xf32, #tpu.memory_space<vmem>>, vector<96x32xf32>,
    return
  }
  func.func @transform_0(%arg0: i32) -> (i32, i32) {
    %c0_i32 = arith.constant 0 : i32
    %c0_i32_0 = arith.constant 0 : i32
    %c0_i32_1 = arith.constant 0 : i32
    return %c0_i32, %c0_i32_0 : i32, i32
  }
  func.func @transform_1(%arg0: i32) -> (i32, i32) {
    %c0_i32 = arith.constant 0 : i32
    %c0_i32_0 = arith.constant 0 : i32
    %c0_i32_1 = arith.constant 0 : i32
    return %c0_i32, %c0_i32_0 : i32, i32
  }
  func.func @transform_2(%arg0: i32) -> (i32, i32) {
    %c0_i32 = arith.constant 0 : i32
    %c0_i32_0 = arith.constant 0 : i32
    %c0_i32_1 = arith.constant 0 : i32
    return %c0_i32, %c0_i32_0 : i32, i32
  }
  func.func @transform_3(%arg0: i32) -> (i32, i32) {
    %c0_i32 = arith.constant 0 : i32
    %c0_i32_0 = arith.constant 0 : i32
    %c0_i32_1 = arith.constant 0 : i32
    return %c0_i32, %c0_i32_0 : i32, i32
  }
}

module attributes {stable_mosaic.version = 11 : i64} {
  func.func @_linear_kernel(%arg0: i32, %arg1: memref<96x32xf32, #tpu.memory_space<vmem>>, %arg2: memref<32x128xf32, #tpu.memory_space<vmem>>, %arg3: memref<1x128xf32, #tpu.memory_space<vmem>>, %arg4: memref<96x128xf32, #tpu.memory_space<vmem>>) attributes {dimension_semantics = [#tpu.dimension_semantics<parallel>], iteration_bounds = array<i64: 1>, scalar_prefetch = 0 : i64, scratch_operands = 0 : i64, tpu.core_type = #tpu.core_type<tc>, window_params = [{transform_indices = @transform_0, window_bounds = array<i64: 96, 32>}, {pipeline_mode = #tpu.pipeline_mode<synchronous>, transform_indices = @transform_1, window_bounds = array<i64: 32, 128>}, {pipeline_mode = #tpu.pipeline_mode<synchronous>, transform_indices = @transform_2, window_bounds = array<i64: 1, 128>}, {transform_indices = @transform_3, window_bounds = array<i64: 96, 128>}]} {
    %c0 = arith.constant 0 : index
    %c0_0 = arith.constant 0 : index
    %0 = vector.load %arg1[%c0, %c0_0] : memref<96x32xf32, #tpu.memory_space<vmem>>, vector<96x32xf32>
    %c0_1 = arith.constant 0 : index
    %c0_2 = arith.constant 0 : index
    %1 = vector.load %arg2[%c0_1, %c0_2] : memref<32x128xf32, #tpu.memory_space<vmem>>, vector<32x128xf32>
    %cst = arith.constant dense<0.000000e+00> : vector<96x128xf32>
    %2 = tpu.matmul %0, %1, %cst {dimension_numbers = #tpu.dot_dimension_numbers<[1], [0], [0], [1], [0, 0, 1, 1], [], []>} : vector<96x32xf32>, vector<32x128xf32>, vector<96x128xf32> -> vector<96x128xf32>
    %c0_3 = arith.constant 0 : index
    %c0_4 = arith.constant 0 : index
    %3 = vector.load %arg3[%c0_3, %c0_4] : memref<1x128xf32, #tpu.memory_space<vmem>>, vector<1x128xf32>
    %4 = vector.broadcast %3 : vector<1x128xf32> to vector<96x128xf32>
    %5 = arith.addf %2, %4 : vector<96x128xf32>
    %c0_5 = arith.constant 0 : index
    %c0_6 = arith.constant 0 : index
    %6 = vector.load %arg4[%c0_5, %c0_6] : memref<96x128xf32, #tpu.memory_space<vmem>>, vector<96x128xf32>
    tpu.vector_store %arg4[%c0_5, %c0_6], %5 {strides = array<i32>} : memref<96x128xf32, #tpu.memory_space<vmem>>, vector<96x128xf32>,
    return
  }
  func.func @transform_0(%arg0: i32) -> (i32, i32) {
    %c0_i32 = arith.constant 0 : i32
    %c0_i32_0 = arith.constant 0 : i32
    return %arg0, %c0_i32 : i32, i32
  }
  func.func @transform_1(%arg0: i32) -> (i32, i32) {
    %c0_i32 = arith.constant 0 : i32
    %c0_i32_0 = arith.constant 0 : i32
    %c0_i32_1 = arith.constant 0 : i32
    return %c0_i32, %c0_i32_0 : i32, i32
  }
  func.func @transform_2(%arg0: i32) -> (i32, i32) {
    %c0_i32 = arith.constant 0 : i32
    %c0_i32_0 = arith.constant 0 : i32
    %c0_i32_1 = arith.constant 0 : i32
    return %c0_i32, %c0_i32_0 : i32, i32
  }
  func.func @transform_3(%arg0: i32) -> (i32, i32) {
    %c0_i32 = arith.constant 0 : i32
    %c0_i32_0 = arith.constant 0 : i32
    return %arg0, %c0_i32 : i32, i32
  }
}

module attributes {stable_mosaic.version = 11 : i64} {
  func.func @_ln_kernel(%arg0: i32, %arg1: memref<4x32xf32, #tpu.memory_space<vmem>>, %arg2: memref<1x32xf32, #tpu.memory_space<vmem>>, %arg3: memref<1x32xf32, #tpu.memory_space<vmem>>, %arg4: memref<4x32xf32, #tpu.memory_space<vmem>>) attributes {dimension_semantics = [#tpu.dimension_semantics<arbitrary>], iteration_bounds = array<i64: 1>, scalar_prefetch = 0 : i64, scratch_operands = 0 : i64, tpu.core_type = #tpu.core_type<tc>, window_params = [{pipeline_mode = #tpu.pipeline_mode<synchronous>, transform_indices = @transform_0, window_bounds = array<i64: 4, 32>}, {pipeline_mode = #tpu.pipeline_mode<synchronous>, transform_indices = @transform_1, window_bounds = array<i64: 1, 32>}, {pipeline_mode = #tpu.pipeline_mode<synchronous>, transform_indices = @transform_2, window_bounds = array<i64: 1, 32>}, {pipeline_mode = #tpu.pipeline_mode<synchronous>, transform_indices = @transform_3, window_bounds = array<i64: 4, 32>}]} {
    %c0 = arith.constant 0 : index
    %c0_0 = arith.constant 0 : index
    %0 = vector.load %arg1[%c0, %c0_0] : memref<4x32xf32, #tpu.memory_space<vmem>>, vector<4x32xf32>
    %c0_1 = arith.constant 0 : index
    %c0_2 = arith.constant 0 : index
    %1 = vector.load %arg2[%c0_1, %c0_2] : memref<1x32xf32, #tpu.memory_space<vmem>>, vector<1x32xf32>
    %c0_3 = arith.constant 0 : index
    %c0_4 = arith.constant 0 : index
    %2 = vector.load %arg3[%c0_3, %c0_4] : memref<1x32xf32, #tpu.memory_space<vmem>>, vector<1x32xf32>
    %cst = arith.constant dense<0.000000e+00> : vector<4xf32>
    %3 = vector.multi_reduction <add>, %0, %cst [1] : vector<4x32xf32> to vector<4xf32>
    %4 = vector.shape_cast %3 : vector<4xf32> to vector<4x1xf32>
    %cst_5 = arith.constant 3.200000e+01 : f32
    %5 = vector.broadcast %cst_5 : f32 to vector<4x1xf32>
    %6 = arith.divf %4, %5 : vector<4x1xf32>
    %7 = vector.broadcast %6 : vector<4x1xf32> to vector<4x32xf32>
    %8 = arith.subf %0, %7 : vector<4x32xf32>
    %9 = arith.mulf %8, %8 : vector<4x32xf32>
    %cst_6 = arith.constant dense<0.000000e+00> : vector<4xf32>
    %10 = vector.multi_reduction <add>, %9, %cst_6 [1] : vector<4x32xf32> to vector<4xf32>
    %11 = vector.shape_cast %10 : vector<4xf32> to vector<4x1xf32>
    %cst_7 = arith.constant 3.200000e+01 : f32
    %12 = vector.broadcast %cst_7 : f32 to vector<4x1xf32>
    %13 = arith.divf %11, %12 : vector<4x1xf32>
    %14 = vector.broadcast %6 : vector<4x1xf32> to vector<4x32xf32>
    %15 = arith.subf %0, %14 : vector<4x32xf32>
    %cst_8 = arith.constant 9.99999974E-6 : f32
    %16 = vector.broadcast %cst_8 : f32 to vector<4x1xf32>
    %17 = arith.addf %13, %16 : vector<4x1xf32>
    %18 = math.rsqrt %17 : vector<4x1xf32>
    %19 = vector.broadcast %18 : vector<4x1xf32> to vector<4x32xf32>
    %20 = arith.mulf %15, %19 : vector<4x32xf32>
    %21 = vector.broadcast %1 : vector<1x32xf32> to vector<4x32xf32>
    %22 = arith.mulf %20, %21 : vector<4x32xf32>
    %23 = vector.broadcast %2 : vector<1x32xf32> to vector<4x32xf32>
    %24 = arith.addf %22, %23 : vector<4x32xf32>
    %c0_9 = arith.constant 0 : index
    %c0_10 = arith.constant 0 : index
    %25 = vector.load %arg4[%c0_9, %c0_10] : memref<4x32xf32, #tpu.memory_space<vmem>>, vector<4x32xf32>
    tpu.vector_store %arg4[%c0_9, %c0_10], %24 {strides = array<i32>} : memref<4x32xf32, #tpu.memory_space<vmem>>, vector<4x32xf32>,
    return
  }
  func.func @transform_0(%arg0: i32) -> (i32, i32) {
    %c0_i32 = arith.constant 0 : i32
    %c0_i32_0 = arith.constant 0 : i32
    %c0_i32_1 = arith.constant 0 : i32
    return %c0_i32, %c0_i32_0 : i32, i32
  }
  func.func @transform_1(%arg0: i32) -> (i32, i32) {
    %c0_i32 = arith.constant 0 : i32
    %c0_i32_0 = arith.constant 0 : i32
    %c0_i32_1 = arith.constant 0 : i32
    return %c0_i32, %c0_i32_0 : i32, i32
  }
  func.func @transform_2(%arg0: i32) -> (i32, i32) {
    %c0_i32 = arith.constant 0 : i32
    %c0_i32_0 = arith.constant 0 : i32
    %c0_i32_1 = arith.constant 0 : i32
    return %c0_i32, %c0_i32_0 : i32, i32
  }
  func.func @transform_3(%arg0: i32) -> (i32, i32) {
    %c0_i32 = arith.constant 0 : i32
    %c0_i32_0 = arith.constant 0 : i32
    %c0_i32_1 = arith.constant 0 : i32
    return %c0_i32, %c0_i32_0 : i32, i32
  }
}

module attributes {stable_mosaic.version = 11 : i64} {
  func.func @_linear_kernel(%arg0: i32, %arg1: memref<8x32xf32, #tpu.memory_space<vmem>>, %arg2: memref<32x32xf32, #tpu.memory_space<vmem>>, %arg3: memref<1x32xf32, #tpu.memory_space<vmem>>, %arg4: memref<8x32xf32, #tpu.memory_space<vmem>>) attributes {dimension_semantics = [#tpu.dimension_semantics<parallel>], iteration_bounds = array<i64: 1>, scalar_prefetch = 0 : i64, scratch_operands = 0 : i64, tpu.core_type = #tpu.core_type<tc>, window_params = [{transform_indices = @transform_0, window_bounds = array<i64: 8, 32>}, {pipeline_mode = #tpu.pipeline_mode<synchronous>, transform_indices = @transform_1, window_bounds = array<i64: 32, 32>}, {pipeline_mode = #tpu.pipeline_mode<synchronous>, transform_indices = @transform_2, window_bounds = array<i64: 1, 32>}, {transform_indices = @transform_3, window_bounds = array<i64: 8, 32>}]} {
    %c0 = arith.constant 0 : index
    %c0_0 = arith.constant 0 : index
    %0 = vector.load %arg1[%c0, %c0_0] : memref<8x32xf32, #tpu.memory_space<vmem>>, vector<8x32xf32>
    %c0_1 = arith.constant 0 : index
    %c0_2 = arith.constant 0 : index
    %1 = vector.load %arg2[%c0_1, %c0_2] : memref<32x32xf32, #tpu.memory_space<vmem>>, vector<32x32xf32>
    %cst = arith.constant dense<0.000000e+00> : vector<8x32xf32>
    %2 = tpu.matmul %0, %1, %cst {dimension_numbers = #tpu.dot_dimension_numbers<[1], [0], [0], [1], [0, 0, 1, 1], [], []>} : vector<8x32xf32>, vector<32x32xf32>, vector<8x32xf32> -> vector<8x32xf32>
    %c0_3 = arith.constant 0 : index
    %c0_4 = arith.constant 0 : index
    %3 = vector.load %arg3[%c0_3, %c0_4] : memref<1x32xf32, #tpu.memory_space<vmem>>, vector<1x32xf32>
    %4 = vector.broadcast %3 : vector<1x32xf32> to vector<8x32xf32>
    %5 = arith.addf %2, %4 : vector<8x32xf32>
    %c0_5 = arith.constant 0 : index
    %c0_6 = arith.constant 0 : index
    %6 = vector.load %arg4[%c0_5, %c0_6] : memref<8x32xf32, #tpu.memory_space<vmem>>, vector<8x32xf32>
    tpu.vector_store %arg4[%c0_5, %c0_6], %5 {strides = array<i32>} : memref<8x32xf32, #tpu.memory_space<vmem>>, vector<8x32xf32>,
    return
  }
  func.func @transform_0(%arg0: i32) -> (i32, i32) {
    %c0_i32 = arith.constant 0 : i32
    %c0_i32_0 = arith.constant 0 : i32
    return %arg0, %c0_i32 : i32, i32
  }
  func.func @transform_1(%arg0: i32) -> (i32, i32) {
    %c0_i32 = arith.constant 0 : i32
    %c0_i32_0 = arith.constant 0 : i32
    %c0_i32_1 = arith.constant 0 : i32
    return %c0_i32, %c0_i32_0 : i32, i32
  }
  func.func @transform_2(%arg0: i32) -> (i32, i32) {
    %c0_i32 = arith.constant 0 : i32
    %c0_i32_0 = arith.constant 0 : i32
    %c0_i32_1 = arith.constant 0 : i32
    return %c0_i32, %c0_i32_0 : i32, i32
  }
  func.func @transform_3(%arg0: i32) -> (i32, i32) {
    %c0_i32 = arith.constant 0 : i32
    %c0_i32_0 = arith.constant 0 : i32
    return %arg0, %c0_i32 : i32, i32
  }
}

module attributes {stable_mosaic.version = 11 : i64} {
  func.func @_linear_kernel(%arg0: i32, %arg1: memref<4x32xf32, #tpu.memory_space<vmem>>, %arg2: memref<32x32xf32, #tpu.memory_space<vmem>>, %arg3: memref<1x32xf32, #tpu.memory_space<vmem>>, %arg4: memref<4x32xf32, #tpu.memory_space<vmem>>) attributes {dimension_semantics = [#tpu.dimension_semantics<parallel>], iteration_bounds = array<i64: 1>, scalar_prefetch = 0 : i64, scratch_operands = 0 : i64, tpu.core_type = #tpu.core_type<tc>, window_params = [{transform_indices = @transform_0, window_bounds = array<i64: 4, 32>}, {pipeline_mode = #tpu.pipeline_mode<synchronous>, transform_indices = @transform_1, window_bounds = array<i64: 32, 32>}, {pipeline_mode = #tpu.pipeline_mode<synchronous>, transform_indices = @transform_2, window_bounds = array<i64: 1, 32>}, {transform_indices = @transform_3, window_bounds = array<i64: 4, 32>}]} {
    %c0 = arith.constant 0 : index
    %c0_0 = arith.constant 0 : index
    %0 = vector.load %arg1[%c0, %c0_0] : memref<4x32xf32, #tpu.memory_space<vmem>>, vector<4x32xf32>
    %c0_1 = arith.constant 0 : index
    %c0_2 = arith.constant 0 : index
    %1 = vector.load %arg2[%c0_1, %c0_2] : memref<32x32xf32, #tpu.memory_space<vmem>>, vector<32x32xf32>
    %cst = arith.constant dense<0.000000e+00> : vector<4x32xf32>
    %2 = tpu.matmul %0, %1, %cst {dimension_numbers = #tpu.dot_dimension_numbers<[1], [0], [0], [1], [0, 0, 1, 1], [], []>} : vector<4x32xf32>, vector<32x32xf32>, vector<4x32xf32> -> vector<4x32xf32>
    %c0_3 = arith.constant 0 : index
    %c0_4 = arith.constant 0 : index
    %3 = vector.load %arg3[%c0_3, %c0_4] : memref<1x32xf32, #tpu.memory_space<vmem>>, vector<1x32xf32>
    %4 = vector.broadcast %3 : vector<1x32xf32> to vector<4x32xf32>
    %5 = arith.addf %2, %4 : vector<4x32xf32>
    %c0_5 = arith.constant 0 : index
    %c0_6 = arith.constant 0 : index
    %6 = vector.load %arg4[%c0_5, %c0_6] : memref<4x32xf32, #tpu.memory_space<vmem>>, vector<4x32xf32>
    tpu.vector_store %arg4[%c0_5, %c0_6], %5 {strides = array<i32>} : memref<4x32xf32, #tpu.memory_space<vmem>>, vector<4x32xf32>,
    return
  }
  func.func @transform_0(%arg0: i32) -> (i32, i32) {
    %c0_i32 = arith.constant 0 : i32
    %c0_i32_0 = arith.constant 0 : i32
    return %arg0, %c0_i32 : i32, i32
  }
  func.func @transform_1(%arg0: i32) -> (i32, i32) {
    %c0_i32 = arith.constant 0 : i32
    %c0_i32_0 = arith.constant 0 : i32
    %c0_i32_1 = arith.constant 0 : i32
    return %c0_i32, %c0_i32_0 : i32, i32
  }
  func.func @transform_2(%arg0: i32) -> (i32, i32) {
    %c0_i32 = arith.constant 0 : i32
    %c0_i32_0 = arith.constant 0 : i32
    %c0_i32_1 = arith.constant 0 : i32
    return %c0_i32, %c0_i32_0 : i32, i32
  }
  func.func @transform_3(%arg0: i32) -> (i32, i32) {
    %c0_i32 = arith.constant 0 : i32
    %c0_i32_0 = arith.constant 0 : i32
    return %arg0, %c0_i32 : i32, i32
  }
}

module attributes {stable_mosaic.version = 11 : i64} {
  func.func @_attn_z_kernel(%arg0: i32, %arg1: memref<1x4x1x32xf32, #tpu.memory_space<vmem>>, %arg2: memref<1x4x12x32xf32, #tpu.memory_space<vmem>>, %arg3: memref<1x4x12x32xf32, #tpu.memory_space<vmem>>, %arg4: memref<1x4x1x12xf32, #tpu.memory_space<vmem>>, %arg5: memref<1x4x1x32xf32, #tpu.memory_space<vmem>>, %arg6: memref<32x32xf32, #tpu.memory_space<vmem>>, %arg7: memref<32x32xf32, #tpu.memory_space<vmem>>, %arg8: memref<1x32xf32, #tpu.memory_space<vmem>>, %arg9: memref<1x32xf32, #tpu.memory_space<vmem>>, %arg10: memref<1x4x1x32xf32, #tpu.memory_space<vmem>>, %arg11: memref<1x4x1x32xf32, #tpu.memory_space<vmem>>) attributes {dimension_semantics = [#tpu.dimension_semantics<parallel>], iteration_bounds = array<i64: 2>, scalar_prefetch = 0 : i64, scratch_operands = 0 : i64, tpu.core_type = #tpu.core_type<tc>, window_params = [{transform_indices = @transform_0, window_bounds = array<i64: 1, 4, 1, 32>}, {transform_indices = @transform_1, window_bounds = array<i64: 1, 4, 12, 32>}, {transform_indices = @transform_2, window_bounds = array<i64: 1, 4, 12, 32>}, {transform_indices = @transform_3, window_bounds = array<i64: 1, 4, 1, 12>}, {transform_indices = @transform_4, window_bounds = array<i64: 1, 4, 1, 32>}, {pipeline_mode = #tpu.pipeline_mode<synchronous>, transform_indices = @transform_5, window_bounds = array<i64: 32, 32>}, {pipeline_mode = #tpu.pipeline_mode<synchronous>, transform_indices = @transform_6, window_bounds = array<i64: 32, 32>}, {pipeline_mode = #tpu.pipeline_mode<synchronous>, transform_indices = @transform_7, window_bounds = array<i64: 1, 32>}, {pipeline_mode = #tpu.pipeline_mode<synchronous>, transform_indices = @transform_8, window_bounds = array<i64: 1, 32>}, {transform_indices = @transform_9, window_bounds = array<i64: 1, 4, 1, 32>}, {transform_indices = @transform_10, window_bounds = array<i64: 1, 4, 1, 32>}]} {
    %c0 = arith.constant 0 : index
    %c0_0 = arith.constant 0 : index
    %c0_1 = arith.constant 0 : index
    %c0_2 = arith.constant 0 : index
    %0 = vector.load %arg1[%c0, %c0_0, %c0_1, %c0_2] : memref<1x4x1x32xf32, #tpu.memory_space<vmem>>, vector<1x4x1x32xf32>
    %1 = vector.shape_cast %0 : vector<1x4x1x32xf32> to vector<4x1x32xf32>
    %c0_3 = arith.constant 0 : index
    %c0_4 = arith.constant 0 : index
    %c0_5 = arith.constant 0 : index
    %c0_6 = arith.constant 0 : index
    %2 = vector.load %arg2[%c0_3, %c0_4, %c0_5, %c0_6] : memref<1x4x12x32xf32, #tpu.memory_space<vmem>>, vector<1x4x12x32xf32>
    %3 = vector.shape_cast %2 : vector<1x4x12x32xf32> to vector<4x12x32xf32>
    %c0_7 = arith.constant 0 : index
    %c0_8 = arith.constant 0 : index
    %c0_9 = arith.constant 0 : index
    %c0_10 = arith.constant 0 : index
    %4 = vector.load %arg3[%c0_7, %c0_8, %c0_9, %c0_10] : memref<1x4x12x32xf32, #tpu.memory_space<vmem>>, vector<1x4x12x32xf32>
    %5 = vector.shape_cast %4 : vector<1x4x12x32xf32> to vector<4x12x32xf32>
    "tpu.trace_start"() <{level = 10 : i32, message = "nqd,nkd->nqk"}> : () -> ()
    %cst = arith.constant dense<0.000000e+00> : vector<4x1x12xf32>
    %6 = tpu.matmul %1, %3, %cst {dimension_numbers = #tpu.dot_dimension_numbers<[2], [2], [1], [1], [0, 0, 0, 1, 1, 1], [0], [0]>} : vector<4x1x32xf32>, vector<4x12x32xf32>, vector<4x1x12xf32> -> vector<4x1x12xf32>
    "tpu.trace_stop"() : () -> ()
    %cst_11 = arith.constant 0.176776692 : f32
    %7 = vector.broadcast %cst_11 : f32 to vector<4x1x12xf32>
    %8 = arith.mulf %6, %7 : vector<4x1x12xf32>
    %c0_12 = arith.constant 0 : index
    %c0_13 = arith.constant 0 : index
    %c0_14 = arith.constant 0 : index
    %c0_15 = arith.constant 0 : index
    %9 = vector.load %arg4[%c0_12, %c0_13, %c0_14, %c0_15] : memref<1x4x1x12xf32, #tpu.memory_space<vmem>>, vector<1x4x1x12xf32>
    %10 = vector.shape_cast %9 : vector<1x4x1x12xf32> to vector<4x1x12xf32>
    %11 = arith.addf %8, %10 : vector<4x1x12xf32>
    %cst_16 = arith.constant dense<0xFF800000> : vector<4x1xf32>
    %12 = vector.multi_reduction <maximumf>, %11, %cst_16 [2] : vector<4x1x12xf32> to vector<4x1xf32>
    %13 = vector.shape_cast %12 : vector<4x1xf32> to vector<4x1x1xf32>
    %14 = vector.broadcast %13 : vector<4x1x1xf32> to vector<4x1x12xf32>
    %15 = arith.subf %11, %14 : vector<4x1x12xf32>
    %16 = math.exp %15 : vector<4x1x12xf32>
    %cst_17 = arith.constant dense<0.000000e+00> : vector<4x1xf32>
    %17 = vector.multi_reduction <add>, %16, %cst_17 [2] : vector<4x1x12xf32> to vector<4x1xf32>
    %18 = vector.shape_cast %17 : vector<4x1xf32> to vector<4x1x1xf32>
    %19 = tpu.reciprocal %18 {approx = true} : vector<4x1x1xf32> -> vector<4x1x1xf32>
    %20 = vector.broadcast %19 : vector<4x1x1xf32> to vector<4x1x12xf32>
    %21 = arith.mulf %16, %20 : vector<4x1x12xf32>
    "tpu.trace_start"() <{level = 10 : i32, message = "nqk,nkd->nqd"}> : () -> ()
    %cst_18 = arith.constant dense<0.000000e+00> : vector<4x1x32xf32>
    %22 = tpu.matmul %21, %5, %cst_18 {dimension_numbers = #tpu.dot_dimension_numbers<[2], [1], [1], [2], [0, 0, 0, 1, 1, 2], [0], [0]>} : vector<4x1x12xf32>, vector<4x12x32xf32>, vector<4x1x32xf32> -> vector<4x1x32xf32>
    "tpu.trace_stop"() : () -> ()
    %c0_19 = arith.constant 0 : index
    %c0_20 = arith.constant 0 : index
    %23 = vector.load %arg6[%c0_19, %c0_20] : memref<32x32xf32, #tpu.memory_space<vmem>>, vector<32x32xf32>
    %24 = vector.shape_cast %23 : vector<32x32xf32> to vector<1x32x32xf32>
    %25 = vector.broadcast %24 : vector<1x32x32xf32> to vector<4x32x32xf32>
    "tpu.trace_start"() <{level = 10 : i32, message = "nqd,nde->nqe"}> : () -> ()
    %cst_21 = arith.constant dense<0.000000e+00> : vector<4x1x32xf32>
    %26 = tpu.matmul %22, %25, %cst_21 {dimension_numbers = #tpu.dot_dimension_numbers<[2], [1], [1], [2], [0, 0, 0, 1, 1, 2], [0], [0]>} : vector<4x1x32xf32>, vector<4x32x32xf32>, vector<4x1x32xf32> -> vector<4x1x32xf32>
    "tpu.trace_stop"() : () -> ()
    %c0_22 = arith.constant 0 : index
    %c0_23 = arith.constant 0 : index
    %c0_24 = arith.constant 0 : index
    %c0_25 = arith.constant 0 : index
    %27 = vector.load %arg5[%c0_22, %c0_23, %c0_24, %c0_25] : memref<1x4x1x32xf32, #tpu.memory_space<vmem>>, vector<1x4x1x32xf32>
    %28 = vector.shape_cast %27 : vector<1x4x1x32xf32> to vector<4x1x32xf32>
    %29 = arith.addf %28, %26 : vector<4x1x32xf32>
    %cst_26 = arith.constant dense<0.000000e+00> : vector<4x1xf32>
    %30 = vector.multi_reduction <add>, %29, %cst_26 [2] : vector<4x1x32xf32> to vector<4x1xf32>
    %31 = vector.shape_cast %30 : vector<4x1xf32> to vector<4x1x1xf32>
    %cst_27 = arith.constant 3.200000e+01 : f32
    %32 = vector.broadcast %cst_27 : f32 to vector<4x1x1xf32>
    %33 = arith.divf %31, %32 : vector<4x1x1xf32>
    %34 = vector.broadcast %33 : vector<4x1x1xf32> to vector<4x1x32xf32>
    %35 = arith.subf %29, %34 : vector<4x1x32xf32>
    %36 = arith.mulf %35, %35 : vector<4x1x32xf32>
    %cst_28 = arith.constant dense<0.000000e+00> : vector<4x1xf32>
    %37 = vector.multi_reduction <add>, %36, %cst_28 [2] : vector<4x1x32xf32> to vector<4x1xf32>
    %38 = vector.shape_cast %37 : vector<4x1xf32> to vector<4x1x1xf32>
    %cst_29 = arith.constant 3.200000e+01 : f32
    %39 = vector.broadcast %cst_29 : f32 to vector<4x1x1xf32>
    %40 = arith.divf %38, %39 : vector<4x1x1xf32>
    %41 = vector.broadcast %33 : vector<4x1x1xf32> to vector<4x1x32xf32>
    %42 = arith.subf %29, %41 : vector<4x1x32xf32>
    %cst_30 = arith.constant 9.99999974E-6 : f32
    %43 = vector.broadcast %cst_30 : f32 to vector<4x1x1xf32>
    %44 = arith.addf %40, %43 : vector<4x1x1xf32>
    %45 = math.rsqrt %44 : vector<4x1x1xf32>
    %46 = vector.broadcast %45 : vector<4x1x1xf32> to vector<4x1x32xf32>
    %47 = arith.mulf %42, %46 : vector<4x1x32xf32>
    %c0_31 = arith.constant 0 : index
    %c0_32 = arith.constant 0 : index
    %48 = vector.load %arg8[%c0_31, %c0_32] : memref<1x32xf32, #tpu.memory_space<vmem>>, vector<1x32xf32>
    %49 = vector.shape_cast %48 : vector<1x32xf32> to vector<1x1x32xf32>
    %50 = vector.broadcast %49 : vector<1x1x32xf32> to vector<4x1x32xf32>
    %51 = arith.mulf %47, %50 : vector<4x1x32xf32>
    %c0_33 = arith.constant 0 : index
    %c0_34 = arith.constant 0 : index
    %52 = vector.load %arg9[%c0_33, %c0_34] : memref<1x32xf32, #tpu.memory_space<vmem>>, vector<1x32xf32>
    %53 = vector.shape_cast %52 : vector<1x32xf32> to vector<1x1x32xf32>
    %54 = vector.broadcast %53 : vector<1x1x32xf32> to vector<4x1x32xf32>
    %55 = arith.addf %51, %54 : vector<4x1x32xf32>
    %c0_35 = arith.constant 0 : index
    %c0_36 = arith.constant 0 : index
    %c0_37 = arith.constant 0 : index
    %c0_38 = arith.constant 0 : index
    %56 = vector.load %arg10[%c0_35, %c0_36, %c0_37, %c0_38] : memref<1x4x1x32xf32, #tpu.memory_space<vmem>>, vector<1x4x1x32xf32>
    %57 = vector.shape_cast %56 : vector<1x4x1x32xf32> to vector<4x1x32xf32>
    %58 = vector.shape_cast %55 : vector<4x1x32xf32> to vector<1x4x1x32xf32>
    tpu.vector_store %arg10[%c0_35, %c0_36, %c0_37, %c0_38], %58 {strides = array<i32>} : memref<1x4x1x32xf32, #tpu.memory_space<vmem>>, vector<1x4x1x32xf32>,
    %c0_39 = arith.constant 0 : index
    %c0_40 = arith.constant 0 : index
    %59 = vector.load %arg7[%c0_39, %c0_40] : memref<32x32xf32, #tpu.memory_space<vmem>>, vector<32x32xf32>
    %60 = vector.shape_cast %59 : vector<32x32xf32> to vector<1x32x32xf32>
    %61 = vector.broadcast %60 : vector<1x32x32xf32> to vector<4x32x32xf32>
    "tpu.trace_start"() <{level = 10 : i32, message = "nqe,nef->nqf"}> : () -> ()
    %cst_41 = arith.constant dense<0.000000e+00> : vector<4x1x32xf32>
    %62 = tpu.matmul %55, %61, %cst_41 {dimension_numbers = #tpu.dot_dimension_numbers<[2], [1], [1], [2], [0, 0, 0, 1, 1, 2], [0], [0]>} : vector<4x1x32xf32>, vector<4x32x32xf32>, vector<4x1x32xf32> -> vector<4x1x32xf32>
    "tpu.trace_stop"() : () -> ()
    %c0_42 = arith.constant 0 : index
    %c0_43 = arith.constant 0 : index
    %c0_44 = arith.constant 0 : index
    %c0_45 = arith.constant 0 : index
    %63 = vector.load %arg11[%c0_42, %c0_43, %c0_44, %c0_45] : memref<1x4x1x32xf32, #tpu.memory_space<vmem>>, vector<1x4x1x32xf32>
    %64 = vector.shape_cast %63 : vector<1x4x1x32xf32> to vector<4x1x32xf32>
    %65 = vector.shape_cast %62 : vector<4x1x32xf32> to vector<1x4x1x32xf32>
    tpu.vector_store %arg11[%c0_42, %c0_43, %c0_44, %c0_45], %65 {strides = array<i32>} : memref<1x4x1x32xf32, #tpu.memory_space<vmem>>, vector<1x4x1x32xf32>,
    return
  }
  func.func @transform_0(%arg0: i32) -> (i32, i32, i32, i32) {
    %c0_i32 = arith.constant 0 : i32
    %c0_i32_0 = arith.constant 0 : i32
    %c0_i32_1 = arith.constant 0 : i32
    %c0_i32_2 = arith.constant 0 : i32
    return %arg0, %c0_i32, %c0_i32_0, %c0_i32_1 : i32, i32, i32, i32
  }
  func.func @transform_1(%arg0: i32) -> (i32, i32, i32, i32) {
    %c0_i32 = arith.constant 0 : i32
    %c0_i32_0 = arith.constant 0 : i32
    %c0_i32_1 = arith.constant 0 : i32
    %c0_i32_2 = arith.constant 0 : i32
    return %arg0, %c0_i32, %c0_i32_0, %c0_i32_1 : i32, i32, i32, i32
  }
  func.func @transform_2(%arg0: i32) -> (i32, i32, i32, i32) {
    %c0_i32 = arith.constant 0 : i32
    %c0_i32_0 = arith.constant 0 : i32
    %c0_i32_1 = arith.constant 0 : i32
    %c0_i32_2 = arith.constant 0 : i32
    return %arg0, %c0_i32, %c0_i32_0, %c0_i32_1 : i32, i32, i32, i32
  }
  func.func @transform_3(%arg0: i32) -> (i32, i32, i32, i32) {
    %c0_i32 = arith.constant 0 : i32
    %c0_i32_0 = arith.constant 0 : i32
    %c0_i32_1 = arith.constant 0 : i32
    %c0_i32_2 = arith.constant 0 : i32
    return %arg0, %c0_i32, %c0_i32_0, %c0_i32_1 : i32, i32, i32, i32
  }
  func.func @transform_4(%arg0: i32) -> (i32, i32, i32, i32) {
    %c0_i32 = arith.constant 0 : i32
    %c0_i32_0 = arith.constant 0 : i32
    %c0_i32_1 = arith.constant 0 : i32
    %c0_i32_2 = arith.constant 0 : i32
    return %arg0, %c0_i32, %c0_i32_0, %c0_i32_1 : i32, i32, i32, i32
  }
  func.func @transform_5(%arg0: i32) -> (i32, i32) {
    %c0_i32 = arith.constant 0 : i32
    %c0_i32_0 = arith.constant 0 : i32
    %c0_i32_1 = arith.constant 0 : i32
    return %c0_i32, %c0_i32_0 : i32, i32
  }
  func.func @transform_6(%arg0: i32) -> (i32, i32) {
    %c0_i32 = arith.constant 0 : i32
    %c0_i32_0 = arith.constant 0 : i32
    %c0_i32_1 = arith.constant 0 : i32
    return %c0_i32, %c0_i32_0 : i32, i32
  }
  func.func @transform_7(%arg0: i32) -> (i32, i32) {
    %c0_i32 = arith.constant 0 : i32
    %c0_i32_0 = arith.constant 0 : i32
    %c0_i32_1 = arith.constant 0 : i32
    return %c0_i32, %c0_i32_0 : i32, i32
  }
  func.func @transform_8(%arg0: i32) -> (i32, i32) {
    %c0_i32 = arith.constant 0 : i32
    %c0_i32_0 = arith.constant 0 : i32
    %c0_i32_1 = arith.constant 0 : i32
    return %c0_i32, %c0_i32_0 : i32, i32
  }
  func.func @transform_9(%arg0: i32) -> (i32, i32, i32, i32) {
    %c0_i32 = arith.constant 0 : i32
    %c0_i32_0 = arith.constant 0 : i32
    %c0_i32_1 = arith.constant 0 : i32
    %c0_i32_2 = arith.constant 0 : i32
    return %arg0, %c0_i32, %c0_i32_0, %c0_i32_1 : i32, i32, i32, i32
  }
  func.func @transform_10(%arg0: i32) -> (i32, i32, i32, i32) {
    %c0_i32 = arith.constant 0 : i32
    %c0_i32_0 = arith.constant 0 : i32
    %c0_i32_1 = arith.constant 0 : i32
    %c0_i32_2 = arith.constant 0 : i32
    return %arg0, %c0_i32, %c0_i32_0, %c0_i32_1 : i32, i32, i32, i32
  }
}

module attributes {stable_mosaic.version = 11 : i64} {
  func.func @_linear_kernel(%arg0: i32, %arg1: memref<4x6xf32, #tpu.memory_space<vmem>>, %arg2: memref<6x6xf32, #tpu.memory_space<vmem>>, %arg3: memref<1x6xf32, #tpu.memory_space<vmem>>, %arg4: memref<4x6xf32, #tpu.memory_space<vmem>>) attributes {dimension_semantics = [#tpu.dimension_semantics<parallel>], iteration_bounds = array<i64: 1>, scalar_prefetch = 0 : i64, scratch_operands = 0 : i64, tpu.core_type = #tpu.core_type<tc>, window_params = [{transform_indices = @transform_0, window_bounds = array<i64: 4, 6>}, {pipeline_mode = #tpu.pipeline_mode<synchronous>, transform_indices = @transform_1, window_bounds = array<i64: 6, 6>}, {pipeline_mode = #tpu.pipeline_mode<synchronous>, transform_indices = @transform_2, window_bounds = array<i64: 1, 6>}, {transform_indices = @transform_3, window_bounds = array<i64: 4, 6>}]} {
    %c0 = arith.constant 0 : index
    %c0_0 = arith.constant 0 : index
    %0 = vector.load %arg1[%c0, %c0_0] : memref<4x6xf32, #tpu.memory_space<vmem>>, vector<4x6xf32>
    %c0_1 = arith.constant 0 : index
    %c0_2 = arith.constant 0 : index
    %1 = vector.load %arg2[%c0_1, %c0_2] : memref<6x6xf32, #tpu.memory_space<vmem>>, vector<6x6xf32>
    %cst = arith.constant dense<0.000000e+00> : vector<4x6xf32>
    %2 = tpu.matmul %0, %1, %cst {dimension_numbers = #tpu.dot_dimension_numbers<[1], [0], [0], [1], [0, 0, 1, 1], [], []>} : vector<4x6xf32>, vector<6x6xf32>, vector<4x6xf32> -> vector<4x6xf32>
    %c0_3 = arith.constant 0 : index
    %c0_4 = arith.constant 0 : index
    %3 = vector.load %arg3[%c0_3, %c0_4] : memref<1x6xf32, #tpu.memory_space<vmem>>, vector<1x6xf32>
    %4 = vector.broadcast %3 : vector<1x6xf32> to vector<4x6xf32>
    %5 = arith.addf %2, %4 : vector<4x6xf32>
    %c0_5 = arith.constant 0 : index
    %c0_6 = arith.constant 0 : index
    %6 = vector.load %arg4[%c0_5, %c0_6] : memref<4x6xf32, #tpu.memory_space<vmem>>, vector<4x6xf32>
    tpu.vector_store %arg4[%c0_5, %c0_6], %5 {strides = array<i32>} : memref<4x6xf32, #tpu.memory_space<vmem>>, vector<4x6xf32>,
    return
  }
  func.func @transform_0(%arg0: i32) -> (i32, i32) {
    %c0_i32 = arith.constant 0 : i32
    %c0_i32_0 = arith.constant 0 : i32
    return %arg0, %c0_i32 : i32, i32
  }
  func.func @transform_1(%arg0: i32) -> (i32, i32) {
    %c0_i32 = arith.constant 0 : i32
    %c0_i32_0 = arith.constant 0 : i32
    %c0_i32_1 = arith.constant 0 : i32
    return %c0_i32, %c0_i32_0 : i32, i32
  }
  func.func @transform_2(%arg0: i32) -> (i32, i32) {
    %c0_i32 = arith.constant 0 : i32
    %c0_i32_0 = arith.constant 0 : i32
    %c0_i32_1 = arith.constant 0 : i32
    return %c0_i32, %c0_i32_0 : i32, i32
  }
  func.func @transform_3(%arg0: i32) -> (i32, i32) {
    %c0_i32 = arith.constant 0 : i32
    %c0_i32_0 = arith.constant 0 : i32
    return %arg0, %c0_i32 : i32, i32
  }
}

module attributes {stable_mosaic.version = 11 : i64} {
  func.func @_linear_kernel(%arg0: i32, %arg1: memref<4x6xf32, #tpu.memory_space<vmem>>, %arg2: memref<6x4xf32, #tpu.memory_space<vmem>>, %arg3: memref<1x4xf32, #tpu.memory_space<vmem>>, %arg4: memref<4x4xf32, #tpu.memory_space<vmem>>) attributes {dimension_semantics = [#tpu.dimension_semantics<parallel>], iteration_bounds = array<i64: 1>, scalar_prefetch = 0 : i64, scratch_operands = 0 : i64, tpu.core_type = #tpu.core_type<tc>, window_params = [{transform_indices = @transform_0, window_bounds = array<i64: 4, 6>}, {pipeline_mode = #tpu.pipeline_mode<synchronous>, transform_indices = @transform_1, window_bounds = array<i64: 6, 4>}, {pipeline_mode = #tpu.pipeline_mode<synchronous>, transform_indices = @transform_2, window_bounds = array<i64: 1, 4>}, {transform_indices = @transform_3, window_bounds = array<i64: 4, 4>}]} {
    %c0 = arith.constant 0 : index
    %c0_0 = arith.constant 0 : index
    %0 = vector.load %arg1[%c0, %c0_0] : memref<4x6xf32, #tpu.memory_space<vmem>>, vector<4x6xf32>
    %c0_1 = arith.constant 0 : index
    %c0_2 = arith.constant 0 : index
    %1 = vector.load %arg2[%c0_1, %c0_2] : memref<6x4xf32, #tpu.memory_space<vmem>>, vector<6x4xf32>
    %cst = arith.constant dense<0.000000e+00> : vector<4x4xf32>
    %2 = tpu.matmul %0, %1, %cst {dimension_numbers = #tpu.dot_dimension_numbers<[1], [0], [0], [1], [0, 0, 1, 1], [], []>} : vector<4x6xf32>, vector<6x4xf32>, vector<4x4xf32> -> vector<4x4xf32>
    %c0_3 = arith.constant 0 : index
    %c0_4 = arith.constant 0 : index
    %3 = vector.load %arg3[%c0_3, %c0_4] : memref<1x4xf32, #tpu.memory_space<vmem>>, vector<1x4xf32>
    %4 = vector.broadcast %3 : vector<1x4xf32> to vector<4x4xf32>
    %5 = arith.addf %2, %4 : vector<4x4xf32>
    %c0_5 = arith.constant 0 : index
    %c0_6 = arith.constant 0 : index
    %6 = vector.load %arg4[%c0_5, %c0_6] : memref<4x4xf32, #tpu.memory_space<vmem>>, vector<4x4xf32>
    tpu.vector_store %arg4[%c0_5, %c0_6], %5 {strides = array<i32>} : memref<4x4xf32, #tpu.memory_space<vmem>>, vector<4x4xf32>,
    return
  }
  func.func @transform_0(%arg0: i32) -> (i32, i32) {
    %c0_i32 = arith.constant 0 : i32
    %c0_i32_0 = arith.constant 0 : i32
    return %arg0, %c0_i32 : i32, i32
  }
  func.func @transform_1(%arg0: i32) -> (i32, i32) {
    %c0_i32 = arith.constant 0 : i32
    %c0_i32_0 = arith.constant 0 : i32
    %c0_i32_1 = arith.constant 0 : i32
    return %c0_i32, %c0_i32_0 : i32, i32
  }
  func.func @transform_2(%arg0: i32) -> (i32, i32) {
    %c0_i32 = arith.constant 0 : i32
    %c0_i32_0 = arith.constant 0 : i32
    %c0_i32_1 = arith.constant 0 : i32
    return %c0_i32, %c0_i32_0 : i32, i32
  }
  func.func @transform_3(%arg0: i32) -> (i32, i32) {
    %c0_i32 = arith.constant 0 : i32
    %c0_i32_0 = arith.constant 0 : i32
    return %arg0, %c0_i32 : i32, i32
  }
}

module attributes {stable_mosaic.version = 11 : i64} {
  func.func @_linear_kernel(%arg0: i32, %arg1: memref<4x4xf32, #tpu.memory_space<vmem>>, %arg2: memref<4x64xf32, #tpu.memory_space<vmem>>, %arg3: memref<1x64xf32, #tpu.memory_space<vmem>>, %arg4: memref<4x64xf32, #tpu.memory_space<vmem>>) attributes {dimension_semantics = [#tpu.dimension_semantics<parallel>], iteration_bounds = array<i64: 1>, scalar_prefetch = 0 : i64, scratch_operands = 0 : i64, tpu.core_type = #tpu.core_type<tc>, window_params = [{transform_indices = @transform_0, window_bounds = array<i64: 4, 4>}, {pipeline_mode = #tpu.pipeline_mode<synchronous>, transform_indices = @transform_1, window_bounds = array<i64: 4, 64>}, {pipeline_mode = #tpu.pipeline_mode<synchronous>, transform_indices = @transform_2, window_bounds = array<i64: 1, 64>}, {transform_indices = @transform_3, window_bounds = array<i64: 4, 64>}]} {
    %c0 = arith.constant 0 : index
    %c0_0 = arith.constant 0 : index
    %0 = vector.load %arg1[%c0, %c0_0] : memref<4x4xf32, #tpu.memory_space<vmem>>, vector<4x4xf32>
    %c0_1 = arith.constant 0 : index
    %c0_2 = arith.constant 0 : index
    %1 = vector.load %arg2[%c0_1, %c0_2] : memref<4x64xf32, #tpu.memory_space<vmem>>, vector<4x64xf32>
    %cst = arith.constant dense<0.000000e+00> : vector<4x64xf32>
    %2 = tpu.matmul %0, %1, %cst {dimension_numbers = #tpu.dot_dimension_numbers<[1], [0], [0], [1], [0, 0, 1, 1], [], []>} : vector<4x4xf32>, vector<4x64xf32>, vector<4x64xf32> -> vector<4x64xf32>
    %c0_3 = arith.constant 0 : index
    %c0_4 = arith.constant 0 : index
    %3 = vector.load %arg3[%c0_3, %c0_4] : memref<1x64xf32, #tpu.memory_space<vmem>>, vector<1x64xf32>
    %4 = vector.broadcast %3 : vector<1x64xf32> to vector<4x64xf32>
    %5 = arith.addf %2, %4 : vector<4x64xf32>
    %c0_5 = arith.constant 0 : index
    %c0_6 = arith.constant 0 : index
    %6 = vector.load %arg4[%c0_5, %c0_6] : memref<4x64xf32, #tpu.memory_space<vmem>>, vector<4x64xf32>
    tpu.vector_store %arg4[%c0_5, %c0_6], %5 {strides = array<i32>} : memref<4x64xf32, #tpu.memory_space<vmem>>, vector<4x64xf32>,
    return
  }
  func.func @transform_0(%arg0: i32) -> (i32, i32) {
    %c0_i32 = arith.constant 0 : i32
    %c0_i32_0 = arith.constant 0 : i32
    return %arg0, %c0_i32 : i32, i32
  }
  func.func @transform_1(%arg0: i32) -> (i32, i32) {
    %c0_i32 = arith.constant 0 : i32
    %c0_i32_0 = arith.constant 0 : i32
    %c0_i32_1 = arith.constant 0 : i32
    return %c0_i32, %c0_i32_0 : i32, i32
  }
  func.func @transform_2(%arg0: i32) -> (i32, i32) {
    %c0_i32 = arith.constant 0 : i32
    %c0_i32_0 = arith.constant 0 : i32
    %c0_i32_1 = arith.constant 0 : i32
    return %c0_i32, %c0_i32_0 : i32, i32
  }
  func.func @transform_3(%arg0: i32) -> (i32, i32) {
    %c0_i32 = arith.constant 0 : i32
    %c0_i32_0 = arith.constant 0 : i32
    return %arg0, %c0_i32 : i32, i32
  }
}

module attributes {stable_mosaic.version = 11 : i64} {
  func.func @_ln_res_proj_kernel(%arg0: i32, %arg1: memref<8x32xf32, #tpu.memory_space<vmem>>, %arg2: memref<8x32xf32, #tpu.memory_space<vmem>>, %arg3: memref<1x32xf32, #tpu.memory_space<vmem>>, %arg4: memref<1x32xf32, #tpu.memory_space<vmem>>, %arg5: memref<32x64xf32, #tpu.memory_space<vmem>>, %arg6: memref<8x32xf32, #tpu.memory_space<vmem>>, %arg7: memref<8x64xf32, #tpu.memory_space<vmem>>) attributes {dimension_semantics = [#tpu.dimension_semantics<arbitrary>], iteration_bounds = array<i64: 1>, scalar_prefetch = 0 : i64, scratch_operands = 0 : i64, tpu.core_type = #tpu.core_type<tc>, window_params = [{pipeline_mode = #tpu.pipeline_mode<synchronous>, transform_indices = @transform_0, window_bounds = array<i64: 8, 32>}, {pipeline_mode = #tpu.pipeline_mode<synchronous>, transform_indices = @transform_1, window_bounds = array<i64: 8, 32>}, {pipeline_mode = #tpu.pipeline_mode<synchronous>, transform_indices = @transform_2, window_bounds = array<i64: 1, 32>}, {pipeline_mode = #tpu.pipeline_mode<synchronous>, transform_indices = @transform_3, window_bounds = array<i64: 1, 32>}, {pipeline_mode = #tpu.pipeline_mode<synchronous>, transform_indices = @transform_4, window_bounds = array<i64: 32, 64>}, {pipeline_mode = #tpu.pipeline_mode<synchronous>, transform_indices = @transform_5, window_bounds = array<i64: 8, 32>}, {pipeline_mode = #tpu.pipeline_mode<synchronous>, transform_indices = @transform_6, window_bounds = array<i64: 8, 64>}]} {
    %c0 = arith.constant 0 : index
    %c0_0 = arith.constant 0 : index
    %0 = vector.load %arg1[%c0, %c0_0] : memref<8x32xf32, #tpu.memory_space<vmem>>, vector<8x32xf32>
    %c0_1 = arith.constant 0 : index
    %c0_2 = arith.constant 0 : index
    %1 = vector.load %arg2[%c0_1, %c0_2] : memref<8x32xf32, #tpu.memory_space<vmem>>, vector<8x32xf32>
    %2 = arith.addf %0, %1 : vector<8x32xf32>
    %cst = arith.constant dense<0.000000e+00> : vector<8xf32>
    %3 = vector.multi_reduction <add>, %2, %cst [1] : vector<8x32xf32> to vector<8xf32>
    %4 = vector.shape_cast %3 : vector<8xf32> to vector<8x1xf32>
    %cst_3 = arith.constant 3.200000e+01 : f32
    %5 = vector.broadcast %cst_3 : f32 to vector<8x1xf32>
    %6 = arith.divf %4, %5 : vector<8x1xf32>
    %7 = vector.broadcast %6 : vector<8x1xf32> to vector<8x32xf32>
    %8 = arith.subf %2, %7 : vector<8x32xf32>
    %9 = arith.mulf %8, %8 : vector<8x32xf32>
    %cst_4 = arith.constant dense<0.000000e+00> : vector<8xf32>
    %10 = vector.multi_reduction <add>, %9, %cst_4 [1] : vector<8x32xf32> to vector<8xf32>
    %11 = vector.shape_cast %10 : vector<8xf32> to vector<8x1xf32>
    %cst_5 = arith.constant 3.200000e+01 : f32
    %12 = vector.broadcast %cst_5 : f32 to vector<8x1xf32>
    %13 = arith.divf %11, %12 : vector<8x1xf32>
    %14 = vector.broadcast %6 : vector<8x1xf32> to vector<8x32xf32>
    %15 = arith.subf %2, %14 : vector<8x32xf32>
    %cst_6 = arith.constant 9.99999974E-6 : f32
    %16 = vector.broadcast %cst_6 : f32 to vector<8x1xf32>
    %17 = arith.addf %13, %16 : vector<8x1xf32>
    %18 = math.rsqrt %17 : vector<8x1xf32>
    %19 = vector.broadcast %18 : vector<8x1xf32> to vector<8x32xf32>
    %20 = arith.mulf %15, %19 : vector<8x32xf32>
    %c0_7 = arith.constant 0 : index
    %c0_8 = arith.constant 0 : index
    %21 = vector.load %arg3[%c0_7, %c0_8] : memref<1x32xf32, #tpu.memory_space<vmem>>, vector<1x32xf32>
    %22 = vector.broadcast %21 : vector<1x32xf32> to vector<8x32xf32>
    %23 = arith.mulf %20, %22 : vector<8x32xf32>
    %c0_9 = arith.constant 0 : index
    %c0_10 = arith.constant 0 : index
    %24 = vector.load %arg4[%c0_9, %c0_10] : memref<1x32xf32, #tpu.memory_space<vmem>>, vector<1x32xf32>
    %25 = vector.broadcast %24 : vector<1x32xf32> to vector<8x32xf32>
    %26 = arith.addf %23, %25 : vector<8x32xf32>
    %c0_11 = arith.constant 0 : index
    %c0_12 = arith.constant 0 : index
    %27 = vector.load %arg6[%c0_11, %c0_12] : memref<8x32xf32, #tpu.memory_space<vmem>>, vector<8x32xf32>
    tpu.vector_store %arg6[%c0_11, %c0_12], %26 {strides = array<i32>} : memref<8x32xf32, #tpu.memory_space<vmem>>, vector<8x32xf32>,
    %c0_13 = arith.constant 0 : index
    %c0_14 = arith.constant 0 : index
    %28 = vector.load %arg5[%c0_13, %c0_14] : memref<32x64xf32, #tpu.memory_space<vmem>>, vector<32x64xf32>
    %cst_15 = arith.constant dense<0.000000e+00> : vector<8x64xf32>
    %29 = tpu.matmul %26, %28, %cst_15 {dimension_numbers = #tpu.dot_dimension_numbers<[1], [0], [0], [1], [0, 0, 1, 1], [], []>} : vector<8x32xf32>, vector<32x64xf32>, vector<8x64xf32> -> vector<8x64xf32>
    %c0_16 = arith.constant 0 : index
    %c0_17 = arith.constant 0 : index
    %30 = vector.load %arg7[%c0_16, %c0_17] : memref<8x64xf32, #tpu.memory_space<vmem>>, vector<8x64xf32>
    tpu.vector_store %arg7[%c0_16, %c0_17], %29 {strides = array<i32>} : memref<8x64xf32, #tpu.memory_space<vmem>>, vector<8x64xf32>,
    return
  }
  func.func @transform_0(%arg0: i32) -> (i32, i32) {
    %c0_i32 = arith.constant 0 : i32
    %c0_i32_0 = arith.constant 0 : i32
    %c0_i32_1 = arith.constant 0 : i32
    return %c0_i32, %c0_i32_0 : i32, i32
  }
  func.func @transform_1(%arg0: i32) -> (i32, i32) {
    %c0_i32 = arith.constant 0 : i32
    %c0_i32_0 = arith.constant 0 : i32
    %c0_i32_1 = arith.constant 0 : i32
    return %c0_i32, %c0_i32_0 : i32, i32
  }
  func.func @transform_2(%arg0: i32) -> (i32, i32) {
    %c0_i32 = arith.constant 0 : i32
    %c0_i32_0 = arith.constant 0 : i32
    %c0_i32_1 = arith.constant 0 : i32
    return %c0_i32, %c0_i32_0 : i32, i32
  }
  func.func @transform_3(%arg0: i32) -> (i32, i32) {
    %c0_i32 = arith.constant 0 : i32
    %c0_i32_0 = arith.constant 0 : i32
    %c0_i32_1 = arith.constant 0 : i32
    return %c0_i32, %c0_i32_0 : i32, i32
  }
  func.func @transform_4(%arg0: i32) -> (i32, i32) {
    %c0_i32 = arith.constant 0 : i32
    %c0_i32_0 = arith.constant 0 : i32
    %c0_i32_1 = arith.constant 0 : i32
    return %c0_i32, %c0_i32_0 : i32, i32
  }
  func.func @transform_5(%arg0: i32) -> (i32, i32) {
    %c0_i32 = arith.constant 0 : i32
    %c0_i32_0 = arith.constant 0 : i32
    %c0_i32_1 = arith.constant 0 : i32
    return %c0_i32, %c0_i32_0 : i32, i32
  }
  func.func @transform_6(%arg0: i32) -> (i32, i32) {
    %c0_i32 = arith.constant 0 : i32
    %c0_i32_0 = arith.constant 0 : i32
    %c0_i32_1 = arith.constant 0 : i32
    return %c0_i32, %c0_i32_0 : i32, i32
  }
}

module attributes {stable_mosaic.version = 11 : i64} {
  func.func @_attn_h_kernel(%arg0: i32, %arg1: memref<1x4x12x32xf32, #tpu.memory_space<vmem>>, %arg2: memref<1x4x1x32xf32, #tpu.memory_space<vmem>>, %arg3: memref<1x4x1x32xf32, #tpu.memory_space<vmem>>, %arg4: memref<1x4x12x32xf32, #tpu.memory_space<vmem>>, %arg5: memref<1x4x12x32xf32, #tpu.memory_space<vmem>>, %arg6: memref<1x32xf32, #tpu.memory_space<vmem>>, %arg7: memref<1x32xf32, #tpu.memory_space<vmem>>, %arg8: memref<1x4x12x32xf32, #tpu.memory_space<vmem>>) attributes {dimension_semantics = [#tpu.dimension_semantics<parallel>], iteration_bounds = array<i64: 2>, scalar_prefetch = 0 : i64, scratch_operands = 0 : i64, tpu.core_type = #tpu.core_type<tc>, window_params = [{transform_indices = @transform_0, window_bounds = array<i64: 1, 4, 12, 32>}, {transform_indices = @transform_1, window_bounds = array<i64: 1, 4, 1, 32>}, {transform_indices = @transform_2, window_bounds = array<i64: 1, 4, 1, 32>}, {transform_indices = @transform_3, window_bounds = array<i64: 1, 4, 12, 32>}, {transform_indices = @transform_4, window_bounds = array<i64: 1, 4, 12, 32>}, {pipeline_mode = #tpu.pipeline_mode<synchronous>, transform_indices = @transform_5, window_bounds = array<i64: 1, 32>}, {pipeline_mode = #tpu.pipeline_mode<synchronous>, transform_indices = @transform_6, window_bounds = array<i64: 1, 32>}, {transform_indices = @transform_7, window_bounds = array<i64: 1, 4, 12, 32>}]} {
    %c0 = arith.constant 0 : index
    %c0_0 = arith.constant 0 : index
    %c0_1 = arith.constant 0 : index
    %c0_2 = arith.constant 0 : index
    %0 = vector.load %arg1[%c0, %c0_0, %c0_1, %c0_2] : memref<1x4x12x32xf32, #tpu.memory_space<vmem>>, vector<1x4x12x32xf32>
    %1 = vector.shape_cast %0 : vector<1x4x12x32xf32> to vector<4x12x32xf32>
    %c0_3 = arith.constant 0 : index
    %c0_4 = arith.constant 0 : index
    %c0_5 = arith.constant 0 : index
    %c0_6 = arith.constant 0 : index
    %2 = vector.load %arg2[%c0_3, %c0_4, %c0_5, %c0_6] : memref<1x4x1x32xf32, #tpu.memory_space<vmem>>, vector<1x4x1x32xf32>
    %3 = vector.shape_cast %2 : vector<1x4x1x32xf32> to vector<4x1x32xf32>
    %c0_7 = arith.constant 0 : index
    %c0_8 = arith.constant 0 : index
    %c0_9 = arith.constant 0 : index
    %c0_10 = arith.constant 0 : index
    %4 = vector.load %arg3[%c0_7, %c0_8, %c0_9, %c0_10] : memref<1x4x1x32xf32, #tpu.memory_space<vmem>>, vector<1x4x1x32xf32>
    %5 = vector.shape_cast %4 : vector<1x4x1x32xf32> to vector<4x1x32xf32>
    "tpu.trace_start"() <{level = 10 : i32, message = "nqd,nkd->nqk"}> : () -> ()
    %cst = arith.constant dense<0.000000e+00> : vector<4x12x1xf32>
    %6 = tpu.matmul %1, %3, %cst {dimension_numbers = #tpu.dot_dimension_numbers<[2], [2], [1], [1], [0, 0, 0, 1, 1, 1], [0], [0]>} : vector<4x12x32xf32>, vector<4x1x32xf32>, vector<4x12x1xf32> -> vector<4x12x1xf32>
    "tpu.trace_stop"() : () -> ()
    %cst_11 = arith.constant 0.176776692 : f32
    %7 = vector.broadcast %cst_11 : f32 to vector<4x12x1xf32>
    %8 = arith.mulf %6, %7 : vector<4x12x1xf32>
    %cst_12 = arith.constant dense<0xFF800000> : vector<4x12xf32>
    %9 = vector.multi_reduction <maximumf>, %8, %cst_12 [2] : vector<4x12x1xf32> to vector<4x12xf32>
    %10 = vector.shape_cast %9 : vector<4x12xf32> to vector<4x12x1xf32>
    %11 = arith.subf %8, %10 : vector<4x12x1xf32>
    %12 = math.exp %11 : vector<4x12x1xf32>
    %cst_13 = arith.constant dense<0.000000e+00> : vector<4x12xf32>
    %13 = vector.multi_reduction <add>, %12, %cst_13 [2] : vector<4x12x1xf32> to vector<4x12xf32>
    %14 = vector.shape_cast %13 : vector<4x12xf32> to vector<4x12x1xf32>
    %15 = tpu.reciprocal %14 {approx = true} : vector<4x12x1xf32> -> vector<4x12x1xf32>
    %16 = arith.mulf %12, %15 : vector<4x12x1xf32>
    "tpu.trace_start"() <{level = 10 : i32, message = "nqk,nkd->nqd"}> : () -> ()
    %cst_14 = arith.constant dense<0.000000e+00> : vector<4x12x32xf32>
    %17 = tpu.matmul %16, %5, %cst_14 {dimension_numbers = #tpu.dot_dimension_numbers<[2], [1], [1], [2], [0, 0, 0, 1, 1, 2], [0], [0]>} : vector<4x12x1xf32>, vector<4x1x32xf32>, vector<4x12x32xf32> -> vector<4x12x32xf32>
    "tpu.trace_stop"() : () -> ()
    %c0_15 = arith.constant 0 : index
    %c0_16 = arith.constant 0 : index
    %c0_17 = arith.constant 0 : index
    %c0_18 = arith.constant 0 : index
    %18 = vector.load %arg4[%c0_15, %c0_16, %c0_17, %c0_18] : memref<1x4x12x32xf32, #tpu.memory_space<vmem>>, vector<1x4x12x32xf32>
    %19 = vector.shape_cast %18 : vector<1x4x12x32xf32> to vector<4x12x32xf32>
    %c0_19 = arith.constant 0 : index
    %c0_20 = arith.constant 0 : index
    %c0_21 = arith.constant 0 : index
    %c0_22 = arith.constant 0 : index
    %20 = vector.load %arg5[%c0_19, %c0_20, %c0_21, %c0_22] : memref<1x4x12x32xf32, #tpu.memory_space<vmem>>, vector<1x4x12x32xf32>
    %21 = vector.shape_cast %20 : vector<1x4x12x32xf32> to vector<4x12x32xf32>
    %22 = arith.addf %19, %21 : vector<4x12x32xf32>
    %23 = arith.addf %22, %17 : vector<4x12x32xf32>
    %cst_23 = arith.constant dense<0.000000e+00> : vector<4x12xf32>
    %24 = vector.multi_reduction <add>, %23, %cst_23 [2] : vector<4x12x32xf32> to vector<4x12xf32>
    %25 = vector.shape_cast %24 : vector<4x12xf32> to vector<4x12x1xf32>
    %cst_24 = arith.constant 3.200000e+01 : f32
    %26 = vector.broadcast %cst_24 : f32 to vector<4x12x1xf32>
    %27 = arith.divf %25, %26 : vector<4x12x1xf32>
    %28 = vector.broadcast %27 : vector<4x12x1xf32> to vector<4x12x32xf32>
    %29 = arith.subf %23, %28 : vector<4x12x32xf32>
    %30 = arith.mulf %29, %29 : vector<4x12x32xf32>
    %cst_25 = arith.constant dense<0.000000e+00> : vector<4x12xf32>
    %31 = vector.multi_reduction <add>, %30, %cst_25 [2] : vector<4x12x32xf32> to vector<4x12xf32>
    %32 = vector.shape_cast %31 : vector<4x12xf32> to vector<4x12x1xf32>
    %cst_26 = arith.constant 3.200000e+01 : f32
    %33 = vector.broadcast %cst_26 : f32 to vector<4x12x1xf32>
    %34 = arith.divf %32, %33 : vector<4x12x1xf32>
    %35 = vector.broadcast %27 : vector<4x12x1xf32> to vector<4x12x32xf32>
    %36 = arith.subf %23, %35 : vector<4x12x32xf32>
    %cst_27 = arith.constant 9.99999974E-6 : f32
    %37 = vector.broadcast %cst_27 : f32 to vector<4x12x1xf32>
    %38 = arith.addf %34, %37 : vector<4x12x1xf32>
    %39 = math.rsqrt %38 : vector<4x12x1xf32>
    %40 = vector.broadcast %39 : vector<4x12x1xf32> to vector<4x12x32xf32>
    %41 = arith.mulf %36, %40 : vector<4x12x32xf32>
    %c0_28 = arith.constant 0 : index
    %c0_29 = arith.constant 0 : index
    %42 = vector.load %arg6[%c0_28, %c0_29] : memref<1x32xf32, #tpu.memory_space<vmem>>, vector<1x32xf32>
    %43 = vector.shape_cast %42 : vector<1x32xf32> to vector<1x1x32xf32>
    %44 = vector.broadcast %43 : vector<1x1x32xf32> to vector<4x12x32xf32>
    %45 = arith.mulf %41, %44 : vector<4x12x32xf32>
    %c0_30 = arith.constant 0 : index
    %c0_31 = arith.constant 0 : index
    %46 = vector.load %arg7[%c0_30, %c0_31] : memref<1x32xf32, #tpu.memory_space<vmem>>, vector<1x32xf32>
    %47 = vector.shape_cast %46 : vector<1x32xf32> to vector<1x1x32xf32>
    %48 = vector.broadcast %47 : vector<1x1x32xf32> to vector<4x12x32xf32>
    %49 = arith.addf %45, %48 : vector<4x12x32xf32>
    %c0_32 = arith.constant 0 : index
    %c0_33 = arith.constant 0 : index
    %c0_34 = arith.constant 0 : index
    %c0_35 = arith.constant 0 : index
    %50 = vector.load %arg8[%c0_32, %c0_33, %c0_34, %c0_35] : memref<1x4x12x32xf32, #tpu.memory_space<vmem>>, vector<1x4x12x32xf32>
    %51 = vector.shape_cast %50 : vector<1x4x12x32xf32> to vector<4x12x32xf32>
    %52 = vector.shape_cast %49 : vector<4x12x32xf32> to vector<1x4x12x32xf32>
    tpu.vector_store %arg8[%c0_32, %c0_33, %c0_34, %c0_35], %52 {strides = array<i32>} : memref<1x4x12x32xf32, #tpu.memory_space<vmem>>, vector<1x4x12x32xf32>,
    return
  }
  func.func @transform_0(%arg0: i32) -> (i32, i32, i32, i32) {
    %c0_i32 = arith.constant 0 : i32
    %c0_i32_0 = arith.constant 0 : i32
    %c0_i32_1 = arith.constant 0 : i32
    %c0_i32_2 = arith.constant 0 : i32
    return %arg0, %c0_i32, %c0_i32_0, %c0_i32_1 : i32, i32, i32, i32
  }
  func.func @transform_1(%arg0: i32) -> (i32, i32, i32, i32) {
    %c0_i32 = arith.constant 0 : i32
    %c0_i32_0 = arith.constant 0 : i32
    %c0_i32_1 = arith.constant 0 : i32
    %c0_i32_2 = arith.constant 0 : i32
    return %arg0, %c0_i32, %c0_i32_0, %c0_i32_1 : i32, i32, i32, i32
  }
  func.func @transform_2(%arg0: i32) -> (i32, i32, i32, i32) {
    %c0_i32 = arith.constant 0 : i32
    %c0_i32_0 = arith.constant 0 : i32
    %c0_i32_1 = arith.constant 0 : i32
    %c0_i32_2 = arith.constant 0 : i32
    return %arg0, %c0_i32, %c0_i32_0, %c0_i32_1 : i32, i32, i32, i32
  }
  func.func @transform_3(%arg0: i32) -> (i32, i32, i32, i32) {
    %c0_i32 = arith.constant 0 : i32
    %c0_i32_0 = arith.constant 0 : i32
    %c0_i32_1 = arith.constant 0 : i32
    %c0_i32_2 = arith.constant 0 : i32
    return %arg0, %c0_i32, %c0_i32_0, %c0_i32_1 : i32, i32, i32, i32
  }
  func.func @transform_4(%arg0: i32) -> (i32, i32, i32, i32) {
    %c0_i32 = arith.constant 0 : i32
    %c0_i32_0 = arith.constant 0 : i32
    %c0_i32_1 = arith.constant 0 : i32
    %c0_i32_2 = arith.constant 0 : i32
    return %arg0, %c0_i32, %c0_i32_0, %c0_i32_1 : i32, i32, i32, i32
  }
  func.func @transform_5(%arg0: i32) -> (i32, i32) {
    %c0_i32 = arith.constant 0 : i32
    %c0_i32_0 = arith.constant 0 : i32
    %c0_i32_1 = arith.constant 0 : i32
    return %c0_i32, %c0_i32_0 : i32, i32
  }
  func.func @transform_6(%arg0: i32) -> (i32, i32) {
    %c0_i32 = arith.constant 0 : i32
    %c0_i32_0 = arith.constant 0 : i32
    %c0_i32_1 = arith.constant 0 : i32
    return %c0_i32, %c0_i32_0 : i32, i32
  }
  func.func @transform_7(%arg0: i32) -> (i32, i32, i32, i32) {
    %c0_i32 = arith.constant 0 : i32
    %c0_i32_0 = arith.constant 0 : i32
    %c0_i32_1 = arith.constant 0 : i32
    %c0_i32_2 = arith.constant 0 : i32
    return %arg0, %c0_i32, %c0_i32_0, %c0_i32_1 : i32, i32, i32, i32
  }
}

module attributes {stable_mosaic.version = 11 : i64} {
  func.func @_mlp_kernel(%arg0: i32, %arg1: memref<96x32xf32, #tpu.memory_space<vmem>>, %arg2: memref<32x32xf32, #tpu.memory_space<vmem>>, %arg3: memref<1x32xf32, #tpu.memory_space<vmem>>, %arg4: memref<32x32xf32, #tpu.memory_space<vmem>>, %arg5: memref<1x32xf32, #tpu.memory_space<vmem>>, %arg6: memref<32x1xf32, #tpu.memory_space<vmem>>, %arg7: memref<1x1xf32, #tpu.memory_space<vmem>>, %arg8: memref<96x1xf32, #tpu.memory_space<vmem>>) attributes {dimension_semantics = [#tpu.dimension_semantics<arbitrary>], iteration_bounds = array<i64: 1>, scalar_prefetch = 0 : i64, scratch_operands = 0 : i64, tpu.core_type = #tpu.core_type<tc>, window_params = [{pipeline_mode = #tpu.pipeline_mode<synchronous>, transform_indices = @transform_0, window_bounds = array<i64: 96, 32>}, {pipeline_mode = #tpu.pipeline_mode<synchronous>, transform_indices = @transform_1, window_bounds = array<i64: 32, 32>}, {pipeline_mode = #tpu.pipeline_mode<synchronous>, transform_indices = @transform_2, window_bounds = array<i64: 1, 32>}, {pipeline_mode = #tpu.pipeline_mode<synchronous>, transform_indices = @transform_3, window_bounds = array<i64: 32, 32>}, {pipeline_mode = #tpu.pipeline_mode<synchronous>, transform_indices = @transform_4, window_bounds = array<i64: 1, 32>}, {pipeline_mode = #tpu.pipeline_mode<synchronous>, transform_indices = @transform_5, window_bounds = array<i64: 32, 1>}, {pipeline_mode = #tpu.pipeline_mode<synchronous>, transform_indices = @transform_6, window_bounds = array<i64: 1, 1>}, {pipeline_mode = #tpu.pipeline_mode<synchronous>, transform_indices = @transform_7, window_bounds = array<i64: 96, 1>}]} {
    %c0 = arith.constant 0 : index
    %c0_0 = arith.constant 0 : index
    %0 = vector.load %arg1[%c0, %c0_0] : memref<96x32xf32, #tpu.memory_space<vmem>>, vector<96x32xf32>
    %c0_1 = arith.constant 0 : index
    %c0_2 = arith.constant 0 : index
    %1 = vector.load %arg2[%c0_1, %c0_2] : memref<32x32xf32, #tpu.memory_space<vmem>>, vector<32x32xf32>
    %c0_3 = arith.constant 0 : index
    %c0_4 = arith.constant 0 : index
    %2 = vector.load %arg3[%c0_3, %c0_4] : memref<1x32xf32, #tpu.memory_space<vmem>>, vector<1x32xf32>
    %cst = arith.constant dense<0.000000e+00> : vector<96x32xf32>
    %3 = tpu.matmul %0, %1, %cst {dimension_numbers = #tpu.dot_dimension_numbers<[1], [0], [0], [1], [0, 0, 1, 1], [], []>} : vector<96x32xf32>, vector<32x32xf32>, vector<96x32xf32> -> vector<96x32xf32>
    %4 = vector.broadcast %2 : vector<1x32xf32> to vector<96x32xf32>
    %5 = arith.addf %3, %4 : vector<96x32xf32>
    %cst_5 = arith.constant 0.000000e+00 : f32
    %6 = vector.broadcast %cst_5 : f32 to vector<96x32xf32>
    %7 = arith.maximumf %5, %6 : vector<96x32xf32>
    %c0_6 = arith.constant 0 : index
    %c0_7 = arith.constant 0 : index
    %8 = vector.load %arg4[%c0_6, %c0_7] : memref<32x32xf32, #tpu.memory_space<vmem>>, vector<32x32xf32>
    %c0_8 = arith.constant 0 : index
    %c0_9 = arith.constant 0 : index
    %9 = vector.load %arg5[%c0_8, %c0_9] : memref<1x32xf32, #tpu.memory_space<vmem>>, vector<1x32xf32>
    %cst_10 = arith.constant dense<0.000000e+00> : vector<96x32xf32>
    %10 = tpu.matmul %7, %8, %cst_10 {dimension_numbers = #tpu.dot_dimension_numbers<[1], [0], [0], [1], [0, 0, 1, 1], [], []>} : vector<96x32xf32>, vector<32x32xf32>, vector<96x32xf32> -> vector<96x32xf32>
    %11 = vector.broadcast %9 : vector<1x32xf32> to vector<96x32xf32>
    %12 = arith.addf %10, %11 : vector<96x32xf32>
    %cst_11 = arith.constant 0.000000e+00 : f32
    %13 = vector.broadcast %cst_11 : f32 to vector<96x32xf32>
    %14 = arith.maximumf %12, %13 : vector<96x32xf32>
    %c0_12 = arith.constant 0 : index
    %c0_13 = arith.constant 0 : index
    %15 = vector.load %arg6[%c0_12, %c0_13] : memref<32x1xf32, #tpu.memory_space<vmem>>, vector<32x1xf32>
    %c0_14 = arith.constant 0 : index
    %c0_15 = arith.constant 0 : index
    %16 = vector.load %arg7[%c0_14, %c0_15] : memref<1x1xf32, #tpu.memory_space<vmem>>, vector<1x1xf32>
    %cst_16 = arith.constant dense<0.000000e+00> : vector<96x1xf32>
    %17 = tpu.matmul %14, %15, %cst_16 {dimension_numbers = #tpu.dot_dimension_numbers<[1], [0], [0], [1], [0, 0, 1, 1], [], []>} : vector<96x32xf32>, vector<32x1xf32>, vector<96x1xf32> -> vector<96x1xf32>
    %18 = vector.broadcast %16 : vector<1x1xf32> to vector<96x1xf32>
    %19 = arith.addf %17, %18 : vector<96x1xf32>
    %c0_17 = arith.constant 0 : index
    %c0_18 = arith.constant 0 : index
    %20 = vector.load %arg8[%c0_17, %c0_18] : memref<96x1xf32, #tpu.memory_space<vmem>>, vector<96x1xf32>
    tpu.vector_store %arg8[%c0_17, %c0_18], %19 {strides = array<i32>} : memref<96x1xf32, #tpu.memory_space<vmem>>, vector<96x1xf32>,
    return
  }
  func.func @transform_0(%arg0: i32) -> (i32, i32) {
    %c0_i32 = arith.constant 0 : i32
    %c0_i32_0 = arith.constant 0 : i32
    %c0_i32_1 = arith.constant 0 : i32
    return %c0_i32, %c0_i32_0 : i32, i32
  }
  func.func @transform_1(%arg0: i32) -> (i32, i32) {
    %c0_i32 = arith.constant 0 : i32
    %c0_i32_0 = arith.constant 0 : i32
    %c0_i32_1 = arith.constant 0 : i32
    return %c0_i32, %c0_i32_0 : i32, i32
  }
  func.func @transform_2(%arg0: i32) -> (i32, i32) {
    %c0_i32 = arith.constant 0 : i32
    %c0_i32_0 = arith.constant 0 : i32
    %c0_i32_1 = arith.constant 0 : i32
    return %c0_i32, %c0_i32_0 : i32, i32
  }
  func.func @transform_3(%arg0: i32) -> (i32, i32) {
    %c0_i32 = arith.constant 0 : i32
    %c0_i32_0 = arith.constant 0 : i32
    %c0_i32_1 = arith.constant 0 : i32
    return %c0_i32, %c0_i32_0 : i32, i32
  }
  func.func @transform_4(%arg0: i32) -> (i32, i32) {
    %c0_i32 = arith.constant 0 : i32
    %c0_i32_0 = arith.constant 0 : i32
    %c0_i32_1 = arith.constant 0 : i32
    return %c0_i32, %c0_i32_0 : i32, i32
  }
  func.func @transform_5(%arg0: i32) -> (i32, i32) {
    %c0_i32 = arith.constant 0 : i32
    %c0_i32_0 = arith.constant 0 : i32
    %c0_i32_1 = arith.constant 0 : i32
    return %c0_i32, %c0_i32_0 : i32, i32
  }
  func.func @transform_6(%arg0: i32) -> (i32, i32) {
    %c0_i32 = arith.constant 0 : i32
    %c0_i32_0 = arith.constant 0 : i32
    %c0_i32_1 = arith.constant 0 : i32
    return %c0_i32, %c0_i32_0 : i32, i32
  }
  func.func @transform_7(%arg0: i32) -> (i32, i32) {
    %c0_i32 = arith.constant 0 : i32
    %c0_i32_0 = arith.constant 0 : i32
    %c0_i32_1 = arith.constant 0 : i32
    return %c0_i32, %c0_i32_0 : i32, i32
  }
}

module attributes {stable_mosaic.version = 11 : i64} {
  func.func @_linear_kernel(%arg0: i32, %arg1: memref<4x4xf32, #tpu.memory_space<vmem>>, %arg2: memref<4x2xf32, #tpu.memory_space<vmem>>, %arg3: memref<1x2xf32, #tpu.memory_space<vmem>>, %arg4: memref<4x2xf32, #tpu.memory_space<vmem>>) attributes {dimension_semantics = [#tpu.dimension_semantics<parallel>], iteration_bounds = array<i64: 1>, scalar_prefetch = 0 : i64, scratch_operands = 0 : i64, tpu.core_type = #tpu.core_type<tc>, window_params = [{transform_indices = @transform_0, window_bounds = array<i64: 4, 4>}, {pipeline_mode = #tpu.pipeline_mode<synchronous>, transform_indices = @transform_1, window_bounds = array<i64: 4, 2>}, {pipeline_mode = #tpu.pipeline_mode<synchronous>, transform_indices = @transform_2, window_bounds = array<i64: 1, 2>}, {transform_indices = @transform_3, window_bounds = array<i64: 4, 2>}]} {
    %c0 = arith.constant 0 : index
    %c0_0 = arith.constant 0 : index
    %0 = vector.load %arg1[%c0, %c0_0] : memref<4x4xf32, #tpu.memory_space<vmem>>, vector<4x4xf32>
    %c0_1 = arith.constant 0 : index
    %c0_2 = arith.constant 0 : index
    %1 = vector.load %arg2[%c0_1, %c0_2] : memref<4x2xf32, #tpu.memory_space<vmem>>, vector<4x2xf32>
    %cst = arith.constant dense<0.000000e+00> : vector<4x2xf32>
    %2 = tpu.matmul %0, %1, %cst {dimension_numbers = #tpu.dot_dimension_numbers<[1], [0], [0], [1], [0, 0, 1, 1], [], []>} : vector<4x4xf32>, vector<4x2xf32>, vector<4x2xf32> -> vector<4x2xf32>
    %c0_3 = arith.constant 0 : index
    %c0_4 = arith.constant 0 : index
    %3 = vector.load %arg3[%c0_3, %c0_4] : memref<1x2xf32, #tpu.memory_space<vmem>>, vector<1x2xf32>
    %4 = vector.broadcast %3 : vector<1x2xf32> to vector<4x2xf32>
    %5 = arith.addf %2, %4 : vector<4x2xf32>
    %c0_5 = arith.constant 0 : index
    %c0_6 = arith.constant 0 : index
    %6 = vector.load %arg4[%c0_5, %c0_6] : memref<4x2xf32, #tpu.memory_space<vmem>>, vector<4x2xf32>
    tpu.vector_store %arg4[%c0_5, %c0_6], %5 {strides = array<i32>} : memref<4x2xf32, #tpu.memory_space<vmem>>, vector<4x2xf32>,
    return
  }
  func.func @transform_0(%arg0: i32) -> (i32, i32) {
    %c0_i32 = arith.constant 0 : i32
    %c0_i32_0 = arith.constant 0 : i32
    return %arg0, %c0_i32 : i32, i32
  }
  func.func @transform_1(%arg0: i32) -> (i32, i32) {
    %c0_i32 = arith.constant 0 : i32
    %c0_i32_0 = arith.constant 0 : i32
    %c0_i32_1 = arith.constant 0 : i32
    return %c0_i32, %c0_i32_0 : i32, i32
  }
  func.func @transform_2(%arg0: i32) -> (i32, i32) {
    %c0_i32 = arith.constant 0 : i32
    %c0_i32_0 = arith.constant 0 : i32
    %c0_i32_1 = arith.constant 0 : i32
    return %c0_i32, %c0_i32_0 : i32, i32
  }
  func.func @transform_3(%arg0: i32) -> (i32, i32) {
    %c0_i32 = arith.constant 0 : i32
    %c0_i32_0 = arith.constant 0 : i32
    return %arg0, %c0_i32 : i32, i32
  }
}

module attributes {stable_mosaic.version = 11 : i64} {
  func.func @_linear_kernel(%arg0: i32, %arg1: memref<6x4xf32, #tpu.memory_space<vmem>>, %arg2: memref<4x24xf32, #tpu.memory_space<vmem>>, %arg3: memref<1x24xf32, #tpu.memory_space<vmem>>, %arg4: memref<6x24xf32, #tpu.memory_space<vmem>>) attributes {dimension_semantics = [#tpu.dimension_semantics<parallel>], iteration_bounds = array<i64: 1>, scalar_prefetch = 0 : i64, scratch_operands = 0 : i64, tpu.core_type = #tpu.core_type<tc>, window_params = [{transform_indices = @transform_0, window_bounds = array<i64: 6, 4>}, {pipeline_mode = #tpu.pipeline_mode<synchronous>, transform_indices = @transform_1, window_bounds = array<i64: 4, 24>}, {pipeline_mode = #tpu.pipeline_mode<synchronous>, transform_indices = @transform_2, window_bounds = array<i64: 1, 24>}, {transform_indices = @transform_3, window_bounds = array<i64: 6, 24>}]} {
    %c0 = arith.constant 0 : index
    %c0_0 = arith.constant 0 : index
    %0 = vector.load %arg1[%c0, %c0_0] : memref<6x4xf32, #tpu.memory_space<vmem>>, vector<6x4xf32>
    %c0_1 = arith.constant 0 : index
    %c0_2 = arith.constant 0 : index
    %1 = vector.load %arg2[%c0_1, %c0_2] : memref<4x24xf32, #tpu.memory_space<vmem>>, vector<4x24xf32>
    %cst = arith.constant dense<0.000000e+00> : vector<6x24xf32>
    %2 = tpu.matmul %0, %1, %cst {dimension_numbers = #tpu.dot_dimension_numbers<[1], [0], [0], [1], [0, 0, 1, 1], [], []>} : vector<6x4xf32>, vector<4x24xf32>, vector<6x24xf32> -> vector<6x24xf32>
    %c0_3 = arith.constant 0 : index
    %c0_4 = arith.constant 0 : index
    %3 = vector.load %arg3[%c0_3, %c0_4] : memref<1x24xf32, #tpu.memory_space<vmem>>, vector<1x24xf32>
    %4 = vector.broadcast %3 : vector<1x24xf32> to vector<6x24xf32>
    %5 = arith.addf %2, %4 : vector<6x24xf32>
    %c0_5 = arith.constant 0 : index
    %c0_6 = arith.constant 0 : index
    %6 = vector.load %arg4[%c0_5, %c0_6] : memref<6x24xf32, #tpu.memory_space<vmem>>, vector<6x24xf32>
    tpu.vector_store %arg4[%c0_5, %c0_6], %5 {strides = array<i32>} : memref<6x24xf32, #tpu.memory_space<vmem>>, vector<6x24xf32>,
    return
  }
  func.func @transform_0(%arg0: i32) -> (i32, i32) {
    %c0_i32 = arith.constant 0 : i32
    %c0_i32_0 = arith.constant 0 : i32
    return %arg0, %c0_i32 : i32, i32
  }
  func.func @transform_1(%arg0: i32) -> (i32, i32) {
    %c0_i32 = arith.constant 0 : i32
    %c0_i32_0 = arith.constant 0 : i32
    %c0_i32_1 = arith.constant 0 : i32
    return %c0_i32, %c0_i32_0 : i32, i32
  }
  func.func @transform_2(%arg0: i32) -> (i32, i32) {
    %c0_i32 = arith.constant 0 : i32
    %c0_i32_0 = arith.constant 0 : i32
    %c0_i32_1 = arith.constant 0 : i32
    return %c0_i32, %c0_i32_0 : i32, i32
  }
  func.func @transform_3(%arg0: i32) -> (i32, i32) {
    %c0_i32 = arith.constant 0 : i32
    %c0_i32_0 = arith.constant 0 : i32
    return %arg0, %c0_i32 : i32, i32
  }
}

module attributes {stable_mosaic.version = 11 : i64} {
  func.func @_linear_kernel(%arg0: i32, %arg1: memref<8x1xf32, #tpu.memory_space<vmem>>, %arg2: memref<1x6xf32, #tpu.memory_space<vmem>>, %arg3: memref<1x6xf32, #tpu.memory_space<vmem>>, %arg4: memref<8x6xf32, #tpu.memory_space<vmem>>) attributes {dimension_semantics = [#tpu.dimension_semantics<parallel>], iteration_bounds = array<i64: 1>, scalar_prefetch = 0 : i64, scratch_operands = 0 : i64, tpu.core_type = #tpu.core_type<tc>, window_params = [{transform_indices = @transform_0, window_bounds = array<i64: 8, 1>}, {pipeline_mode = #tpu.pipeline_mode<synchronous>, transform_indices = @transform_1, window_bounds = array<i64: 1, 6>}, {pipeline_mode = #tpu.pipeline_mode<synchronous>, transform_indices = @transform_2, window_bounds = array<i64: 1, 6>}, {transform_indices = @transform_3, window_bounds = array<i64: 8, 6>}]} {
    %c0 = arith.constant 0 : index
    %c0_0 = arith.constant 0 : index
    %0 = vector.load %arg1[%c0, %c0_0] : memref<8x1xf32, #tpu.memory_space<vmem>>, vector<8x1xf32>
    %c0_1 = arith.constant 0 : index
    %c0_2 = arith.constant 0 : index
    %1 = vector.load %arg2[%c0_1, %c0_2] : memref<1x6xf32, #tpu.memory_space<vmem>>, vector<1x6xf32>
    %cst = arith.constant dense<0.000000e+00> : vector<8x6xf32>
    %2 = tpu.matmul %0, %1, %cst {dimension_numbers = #tpu.dot_dimension_numbers<[1], [0], [0], [1], [0, 0, 1, 1], [], []>} : vector<8x1xf32>, vector<1x6xf32>, vector<8x6xf32> -> vector<8x6xf32>
    %c0_3 = arith.constant 0 : index
    %c0_4 = arith.constant 0 : index
    %3 = vector.load %arg3[%c0_3, %c0_4] : memref<1x6xf32, #tpu.memory_space<vmem>>, vector<1x6xf32>
    %4 = vector.broadcast %3 : vector<1x6xf32> to vector<8x6xf32>
    %5 = arith.addf %2, %4 : vector<8x6xf32>
    %c0_5 = arith.constant 0 : index
    %c0_6 = arith.constant 0 : index
    %6 = vector.load %arg4[%c0_5, %c0_6] : memref<8x6xf32, #tpu.memory_space<vmem>>, vector<8x6xf32>
    tpu.vector_store %arg4[%c0_5, %c0_6], %5 {strides = array<i32>} : memref<8x6xf32, #tpu.memory_space<vmem>>, vector<8x6xf32>,
    return
  }
  func.func @transform_0(%arg0: i32) -> (i32, i32) {
    %c0_i32 = arith.constant 0 : i32
    %c0_i32_0 = arith.constant 0 : i32
    return %arg0, %c0_i32 : i32, i32
  }
  func.func @transform_1(%arg0: i32) -> (i32, i32) {
    %c0_i32 = arith.constant 0 : i32
    %c0_i32_0 = arith.constant 0 : i32
    %c0_i32_1 = arith.constant 0 : i32
    return %c0_i32, %c0_i32_0 : i32, i32
  }
  func.func @transform_2(%arg0: i32) -> (i32, i32) {
    %c0_i32 = arith.constant 0 : i32
    %c0_i32_0 = arith.constant 0 : i32
    %c0_i32_1 = arith.constant 0 : i32
    return %c0_i32, %c0_i32_0 : i32, i32
  }
  func.func @transform_3(%arg0: i32) -> (i32, i32) {
    %c0_i32 = arith.constant 0 : i32
    %c0_i32_0 = arith.constant 0 : i32
    return %arg0, %c0_i32 : i32, i32
  }
}

module attributes {stable_mosaic.version = 11 : i64} {
  func.func @_ln_res_proj_kernel(%arg0: i32, %arg1: memref<8x32xf32, #tpu.memory_space<vmem>>, %arg2: memref<8x32xf32, #tpu.memory_space<vmem>>, %arg3: memref<1x32xf32, #tpu.memory_space<vmem>>, %arg4: memref<1x32xf32, #tpu.memory_space<vmem>>, %arg5: memref<32x64xf32, #tpu.memory_space<vmem>>, %arg6: memref<8x32xf32, #tpu.memory_space<vmem>>, %arg7: memref<8x64xf32, #tpu.memory_space<vmem>>) attributes {dimension_semantics = [#tpu.dimension_semantics<arbitrary>], iteration_bounds = array<i64: 1>, scalar_prefetch = 0 : i64, scratch_operands = 0 : i64, tpu.core_type = #tpu.core_type<tc>, window_params = [{pipeline_mode = #tpu.pipeline_mode<synchronous>, transform_indices = @transform_0, window_bounds = array<i64: 8, 32>}, {pipeline_mode = #tpu.pipeline_mode<synchronous>, transform_indices = @transform_1, window_bounds = array<i64: 8, 32>}, {pipeline_mode = #tpu.pipeline_mode<synchronous>, transform_indices = @transform_2, window_bounds = array<i64: 1, 32>}, {pipeline_mode = #tpu.pipeline_mode<synchronous>, transform_indices = @transform_3, window_bounds = array<i64: 1, 32>}, {pipeline_mode = #tpu.pipeline_mode<synchronous>, transform_indices = @transform_4, window_bounds = array<i64: 32, 64>}, {pipeline_mode = #tpu.pipeline_mode<synchronous>, transform_indices = @transform_5, window_bounds = array<i64: 8, 32>}, {pipeline_mode = #tpu.pipeline_mode<synchronous>, transform_indices = @transform_6, window_bounds = array<i64: 8, 64>}]} {
    %c0 = arith.constant 0 : index
    %c0_0 = arith.constant 0 : index
    %0 = vector.load %arg1[%c0, %c0_0] : memref<8x32xf32, #tpu.memory_space<vmem>>, vector<8x32xf32>
    %c0_1 = arith.constant 0 : index
    %c0_2 = arith.constant 0 : index
    %1 = vector.load %arg2[%c0_1, %c0_2] : memref<8x32xf32, #tpu.memory_space<vmem>>, vector<8x32xf32>
    %2 = arith.addf %0, %1 : vector<8x32xf32>
    %cst = arith.constant dense<0.000000e+00> : vector<8xf32>
    %3 = vector.multi_reduction <add>, %2, %cst [1] : vector<8x32xf32> to vector<8xf32>
    %4 = vector.shape_cast %3 : vector<8xf32> to vector<8x1xf32>
    %cst_3 = arith.constant 3.200000e+01 : f32
    %5 = vector.broadcast %cst_3 : f32 to vector<8x1xf32>
    %6 = arith.divf %4, %5 : vector<8x1xf32>
    %7 = vector.broadcast %6 : vector<8x1xf32> to vector<8x32xf32>
    %8 = arith.subf %2, %7 : vector<8x32xf32>
    %9 = arith.mulf %8, %8 : vector<8x32xf32>
    %cst_4 = arith.constant dense<0.000000e+00> : vector<8xf32>
    %10 = vector.multi_reduction <add>, %9, %cst_4 [1] : vector<8x32xf32> to vector<8xf32>
    %11 = vector.shape_cast %10 : vector<8xf32> to vector<8x1xf32>
    %cst_5 = arith.constant 3.200000e+01 : f32
    %12 = vector.broadcast %cst_5 : f32 to vector<8x1xf32>
    %13 = arith.divf %11, %12 : vector<8x1xf32>
    %14 = vector.broadcast %6 : vector<8x1xf32> to vector<8x32xf32>
    %15 = arith.subf %2, %14 : vector<8x32xf32>
    %cst_6 = arith.constant 9.99999974E-6 : f32
    %16 = vector.broadcast %cst_6 : f32 to vector<8x1xf32>
    %17 = arith.addf %13, %16 : vector<8x1xf32>
    %18 = math.rsqrt %17 : vector<8x1xf32>
    %19 = vector.broadcast %18 : vector<8x1xf32> to vector<8x32xf32>
    %20 = arith.mulf %15, %19 : vector<8x32xf32>
    %c0_7 = arith.constant 0 : index
    %c0_8 = arith.constant 0 : index
    %21 = vector.load %arg3[%c0_7, %c0_8] : memref<1x32xf32, #tpu.memory_space<vmem>>, vector<1x32xf32>
    %22 = vector.broadcast %21 : vector<1x32xf32> to vector<8x32xf32>
    %23 = arith.mulf %20, %22 : vector<8x32xf32>
    %c0_9 = arith.constant 0 : index
    %c0_10 = arith.constant 0 : index
    %24 = vector.load %arg4[%c0_9, %c0_10] : memref<1x32xf32, #tpu.memory_space<vmem>>, vector<1x32xf32>
    %25 = vector.broadcast %24 : vector<1x32xf32> to vector<8x32xf32>
    %26 = arith.addf %23, %25 : vector<8x32xf32>
    %c0_11 = arith.constant 0 : index
    %c0_12 = arith.constant 0 : index
    %27 = vector.load %arg6[%c0_11, %c0_12] : memref<8x32xf32, #tpu.memory_space<vmem>>, vector<8x32xf32>
    tpu.vector_store %arg6[%c0_11, %c0_12], %26 {strides = array<i32>} : memref<8x32xf32, #tpu.memory_space<vmem>>, vector<8x32xf32>,
    %c0_13 = arith.constant 0 : index
    %c0_14 = arith.constant 0 : index
    %28 = vector.load %arg5[%c0_13, %c0_14] : memref<32x64xf32, #tpu.memory_space<vmem>>, vector<32x64xf32>
    %cst_15 = arith.constant dense<0.000000e+00> : vector<8x64xf32>
    %29 = tpu.matmul %26, %28, %cst_15 {dimension_numbers = #tpu.dot_dimension_numbers<[1], [0], [0], [1], [0, 0, 1, 1], [], []>} : vector<8x32xf32>, vector<32x64xf32>, vector<8x64xf32> -> vector<8x64xf32>
    %c0_16 = arith.constant 0 : index
    %c0_17 = arith.constant 0 : index
    %30 = vector.load %arg7[%c0_16, %c0_17] : memref<8x64xf32, #tpu.memory_space<vmem>>, vector<8x64xf32>
    tpu.vector_store %arg7[%c0_16, %c0_17], %29 {strides = array<i32>} : memref<8x64xf32, #tpu.memory_space<vmem>>, vector<8x64xf32>,
    return
  }
  func.func @transform_0(%arg0: i32) -> (i32, i32) {
    %c0_i32 = arith.constant 0 : i32
    %c0_i32_0 = arith.constant 0 : i32
    %c0_i32_1 = arith.constant 0 : i32
    return %c0_i32, %c0_i32_0 : i32, i32
  }
  func.func @transform_1(%arg0: i32) -> (i32, i32) {
    %c0_i32 = arith.constant 0 : i32
    %c0_i32_0 = arith.constant 0 : i32
    %c0_i32_1 = arith.constant 0 : i32
    return %c0_i32, %c0_i32_0 : i32, i32
  }
  func.func @transform_2(%arg0: i32) -> (i32, i32) {
    %c0_i32 = arith.constant 0 : i32
    %c0_i32_0 = arith.constant 0 : i32
    %c0_i32_1 = arith.constant 0 : i32
    return %c0_i32, %c0_i32_0 : i32, i32
  }
  func.func @transform_3(%arg0: i32) -> (i32, i32) {
    %c0_i32 = arith.constant 0 : i32
    %c0_i32_0 = arith.constant 0 : i32
    %c0_i32_1 = arith.constant 0 : i32
    return %c0_i32, %c0_i32_0 : i32, i32
  }
  func.func @transform_4(%arg0: i32) -> (i32, i32) {
    %c0_i32 = arith.constant 0 : i32
    %c0_i32_0 = arith.constant 0 : i32
    %c0_i32_1 = arith.constant 0 : i32
    return %c0_i32, %c0_i32_0 : i32, i32
  }
  func.func @transform_5(%arg0: i32) -> (i32, i32) {
    %c0_i32 = arith.constant 0 : i32
    %c0_i32_0 = arith.constant 0 : i32
    %c0_i32_1 = arith.constant 0 : i32
    return %c0_i32, %c0_i32_0 : i32, i32
  }
  func.func @transform_6(%arg0: i32) -> (i32, i32) {
    %c0_i32 = arith.constant 0 : i32
    %c0_i32_0 = arith.constant 0 : i32
    %c0_i32_1 = arith.constant 0 : i32
    return %c0_i32, %c0_i32_0 : i32, i32
  }
}

</mosaic_0001>

<llo_original>
// kernel: _lambda_.68
$region0: #{_lambda_.68}
  #allocation0 [shape = 'u32[]', space=smem, size = 0x4, offset = 0x4, fixed_abs, tag = 'smem constant byte address 0x4 - core index']
  #allocation1 [shape = 'u32[144,128]{1,0:T(1,128)}', space=vmem, size = 0x12000, scoped, tag = 'internal scratch']
  %s0 = inlined_call_operand.vmem [shape: f32[12,1], index: 0, kind: input, shape index: {}]
  %s1 = inlined_call_operand.vmem [shape: f32[1,4], index: 1, kind: input, shape index: {}]
  %s2 = inlined_call_operand.vmem [shape: f32[1,4], index: 2, kind: input, shape index: {}]
  %s3 = inlined_call_operand.vmem [shape: f32[12,4], index: 3, kind: output, shape index: {}]
  %s4 = sld [smem:[#allocation0]]
  $region22: #{_lambda_.68} parent=0
    _
  %s6 = ssub.s32 1, %s4
  %s7 = scalar_select 0, %s6, %s4
  // Predicated region
  $region2: #{_lambda_.68} parent=0 // pred_check
    _
  $region3: #{_lambda_.68} parent=0 // pred_check_branch
    %9 = sbr.rel (0) target = $region5
  $region4: #{_lambda_.68} parent=0 // pred_region
    _
  $region5: #{_lambda_.68} parent=0 // pred_fallthru
    _
  // Predicated region
  $region6: #{_lambda_.68} parent=0 // pred_check
    _
  $region7: #{_lambda_.68} parent=0 // pred_check_branch
    %11 = sbr.rel (0) target = $region9
  $region8: #{_lambda_.68} parent=0 // pred_region
    _
  $region9: #{_lambda_.68} parent=0 // pred_fallthru
    _
  // Predicated region
  $region10: #{_lambda_.68} parent=0 // pred_check
    _
  $region11: #{_lambda_.68} parent=0 // pred_check_branch
    %13 = sbr.rel (0) target = $region13
  $region12: #{_lambda_.68} parent=0 // pred_region
    _
  $region13: #{_lambda_.68} parent=0 // pred_fallthru
    _
  %v14 = vld [vmem:[%s0] sm:$0xff]
  %v15 = vld [vmem:[%s0 + $0x8] sm:$0xf]
  %v16 = vld [vmem:[%s1] sm:$0x1]
  %v17 = vld [vmem:[%s2] sm:$0x1]
  %v19 = vlaneseq
  %v20 = vshrl.u32 %v19, 7
  %v21 = vsub.s32 0, %v20
  %v22 = vrot.slane %v17, %v21
  %vm24 = vcmask 7168
  %v26 = vsel %vm24, %v14, 0
  %v29 = vsel %vm24, %v15, 0
  %vm31 = vcmask 1040384
  %v33 = vsel %vm31, %v16, 0
  %35 = vmatprep.subr.mxu0 0.0
  %36 = vmatpush1.msra.mxu0 0.0
  %37 = vmatprep.subr.mxu0 0.0
  %38 = vmatpush1.msra.mxu0 0.0
  %39 = vmatprep.subr.mxu0 0.0
  %40 = vmatpush1.msra.mxu0 0.0
  %41 = vmatprep.subr.mxu0 0.0
  %42 = vmatpush1.msra.mxu0 0.0
  %43 = vmatprep.subr.mxu0 0.0
  %44 = vmatpush1.msra.mxu0 0.0
  %45 = vmatprep.subr.mxu0 0.0
  %46 = vmatpush1.msra.mxu0 0.0
  %47 = vmatprep.subr.mxu0 0.0
  %48 = vmatpush1.msra.mxu0 0.0
  %49 = vmatprep.subr.mxu0 0.0
  %50 = vmatpush1.msra.mxu0 0.0
  %51 = vmatprep.subr.mxu0 0.0
  %52 = vmatpush1.msra.mxu0 0.0
  %53 = vmatprep.subr.mxu0 0.0
  %54 = vmatpush1.msra.mxu0 0.0
  %55 = vmatprep.subr.mxu0 0.0
  %56 = vmatpush1.msra.mxu0 0.0
  %57 = vmatprep.subr.mxu0 0.0
  %58 = vmatpush1.msra.mxu0 0.0
  %59 = vmatprep.subr.mxu0 0.0
  %60 = vmatpush1.msra.mxu0 0.0
  %61 = vmatprep.subr.mxu0 0.0
  %62 = vmatpush1.msra.mxu0 0.0
  %63 = vmatprep.subr.mxu0 0.0
  %64 = vmatpush1.msra.mxu0 0.0
  %65 = vmatprep.subr.mxu0 0.0
  %66 = vmatpush1.msra.mxu0 %v33
  %67 = vmatprep.subr.mxu0 0.0
  %68 = vmatpush2.msra.mxu0 0.0
  %69 = vmatprep.subr.mxu0 0.0
  %70 = vmatpush2.msra.mxu0 0.0
  %71 = vmatprep.subr.mxu0 0.0
  %72 = vmatpush2.msra.mxu0 0.0
  %73 = vmatprep.subr.mxu0 0.0
  %74 = vmatpush2.msra.mxu0 0.0
  %75 = vmatprep.subr.mxu0 0.0
  %76 = vmatpush2.msra.mxu0 0.0
  %77 = vmatprep.subr.mxu0 0.0
  %78 = vmatpush2.msra.mxu0 0.0
  %79 = vmatprep.subr.mxu0 0.0
  %80 = vmatpush2.msra.mxu0 0.0
  %81 = vmatprep.subr.mxu0 0.0
  %82 = vmatpush2.msra.mxu0 0.0
  %83 = vmatprep.subr.mxu0 0.0
  %84 = vmatpush2.msra.mxu0 0.0
  %85 = vmatprep.subr.mxu0 0.0
  %86 = vmatpush2.msra.mxu0 0.0
  %87 = vmatprep.subr.mxu0 0.0
  %88 = vmatpush2.msra.mxu0 0.0
  %89 = vmatprep.subr.mxu0 0.0
  %90 = vmatpush2.msra.mxu0 0.0
  %91 = vmatprep.subr.mxu0 0.0
  %92 = vmatpush2.msra.mxu0 0.0
  %93 = vmatprep.subr.mxu0 0.0
  %94 = vmatpush2.msra.mxu0 0.0
  %95 = vmatprep.subr.mxu0 0.0
  %96 = vmatpush2.msra.mxu0 0.0
  %97 = vmatprep.subr.mxu0 0.0
  %98 = vmatpush2.msra.mxu0 0.0
  %99 = vmatprep.mubr.f32.mxu0 0.0
  %100 = vmatmul.mubr.f32.gmra.mxu0 %v26
  %v101 = vpop.f32.mrf.mxu0
  %v102 = vadd.f32 %v22, %v101
  %v103 = vpop.f32.mrf.mxu0
  %104 = vmatprep.mubr.f32.mxu0 0.0
  %105 = vmatmul.mubr.f32.gmra.mxu0 %v29
  %v106 = vpop.f32.mrf.mxu0
  %v107 = vadd.f32 %v22, %v106
  %v108 = vpop.f32.mrf.mxu0
  %109 = vdwg.mxu0
  %vm110 = vcmask 31744
  %111 = vst.msk [vmem:[%s3] sm:$0xff] %vm110, %v102
  %vm112 = vcmask 27648
  %113 = vst.msk [vmem:[%s3 + $0x8] sm:$0xf] %vm112, %v107
  // Predicated region
  $region14: #{_lambda_.68} parent=0 // pred_check
    _
  $region15: #{_lambda_.68} parent=0 // pred_check_branch
    %115 = sbr.rel (0) target = $region17
  $region16: #{_lambda_.68} parent=0 // pred_region
    _
  $region17: #{_lambda_.68} parent=0 // pred_fallthru
    _
  // Predicated region
  $region18: #{_lambda_.68} parent=0 // pred_check
    _
  $region19: #{_lambda_.68} parent=0 // pred_check_branch
    %117 = sbr.rel (0) target = $region21
  $region20: #{_lambda_.68} parent=0 // pred_region
    _
  $region21: #{_lambda_.68} parent=0 // pred_fallthru
    _

// kernel: _lambda_.67
$region0: #{_lambda_.67}
  #allocation0 [shape = 'u32[]', space=smem, size = 0x4, offset = 0x4, fixed_abs, tag = 'smem constant byte address 0x4 - core index']
  #allocation1 [shape = 'u32[144,128]{1,0:T(1,128)}', space=vmem, size = 0x12000, scoped, tag = 'internal scratch']
  %s0 = inlined_call_operand.vmem [shape: f32[6,6], index: 0, kind: input, shape index: {}]
  %s1 = inlined_call_operand.vmem [shape: f32[6,2], index: 1, kind: input, shape index: {}]
  %s2 = inlined_call_operand.vmem [shape: f32[1,2], index: 2, kind: input, shape index: {}]
  %s3 = inlined_call_operand.vmem [shape: f32[6,2], index: 3, kind: output, shape index: {}]
  %s4 = sld [smem:[#allocation0]]
  $region22: #{_lambda_.67} parent=0
    _
  %s6 = ssub.s32 1, %s4
  %s7 = scalar_select 0, %s6, %s4
  // Predicated region
  $region2: #{_lambda_.67} parent=0 // pred_check
    _
  $region3: #{_lambda_.67} parent=0 // pred_check_branch
    %9 = sbr.rel (0) target = $region5
  $region4: #{_lambda_.67} parent=0 // pred_region
    _
  $region5: #{_lambda_.67} parent=0 // pred_fallthru
    _
  // Predicated region
  $region6: #{_lambda_.67} parent=0 // pred_check
    _
  $region7: #{_lambda_.67} parent=0 // pred_check_branch
    %11 = sbr.rel (0) target = $region9
  $region8: #{_lambda_.67} parent=0 // pred_region
    _
  $region9: #{_lambda_.67} parent=0 // pred_fallthru
    _
  // Predicated region
  $region10: #{_lambda_.67} parent=0 // pred_check
    _
  $region11: #{_lambda_.67} parent=0 // pred_check_branch
    %13 = sbr.rel (0) target = $region13
  $region12: #{_lambda_.67} parent=0 // pred_region
    _
  $region13: #{_lambda_.67} parent=0 // pred_fallthru
    _
  %v14 = vld [vmem:[%s0] sm:$0x3f]
  %v15 = vld [vmem:[%s1] sm:$0x3f]
  %v16 = vld [vmem:[%s2] sm:$0x1]
  %v18 = vlaneseq
  %v19 = vshrl.u32 %v18, 7
  %v20 = vsub.s32 0, %v19
  %v21 = vrot.slane %v16, %v20
  %vm23 = vcmask 48128
  %v25 = vsel %vm23, %v14, 0
  %vm27 = vcmask 1045504
  %v29 = vsel %vm27, %v15, 0
  %31 = vmatprep.subr.mxu0 0.0
  %32 = vmatpush1.msra.mxu0 0.0
  %33 = vmatprep.subr.mxu0 0.0
  %34 = vmatpush1.msra.mxu0 0.0
  %35 = vmatprep.subr.mxu0 0.0
  %36 = vmatpush1.msra.mxu0 0.0
  %37 = vmatprep.subr.mxu0 0.0
  %38 = vmatpush1.msra.mxu0 0.0
  %39 = vmatprep.subr.mxu0 0.0
  %40 = vmatpush1.msra.mxu0 0.0
  %41 = vmatprep.subr.mxu0 0.0
  %42 = vmatpush1.msra.mxu0 0.0
  %43 = vmatprep.subr.mxu0 0.0
  %44 = vmatpush1.msra.mxu0 0.0
  %45 = vmatprep.subr.mxu0 0.0
  %46 = vmatpush1.msra.mxu0 0.0
  %47 = vmatprep.subr.mxu0 0.0
  %48 = vmatpush1.msra.mxu0 0.0
  %49 = vmatprep.subr.mxu0 0.0
  %50 = vmatpush1.msra.mxu0 0.0
  %51 = vmatprep.subr.mxu0 0.0
  %52 = vmatpush1.msra.mxu0 0.0
  %53 = vmatprep.subr.mxu0 0.0
  %54 = vmatpush1.msra.mxu0 0.0
  %55 = vmatprep.subr.mxu0 0.0
  %56 = vmatpush1.msra.mxu0 0.0
  %57 = vmatprep.subr.mxu0 0.0
  %58 = vmatpush1.msra.mxu0 0.0
  %59 = vmatprep.subr.mxu0 0.0
  %60 = vmatpush1.msra.mxu0 0.0
  %61 = vmatprep.subr.mxu0 0.0
  %62 = vmatpush1.msra.mxu0 %v29
  %63 = vmatprep.subr.mxu0 0.0
  %64 = vmatpush2.msra.mxu0 0.0
  %65 = vmatprep.subr.mxu0 0.0
  %66 = vmatpush2.msra.mxu0 0.0
  %67 = vmatprep.subr.mxu0 0.0
  %68 = vmatpush2.msra.mxu0 0.0
  %69 = vmatprep.subr.mxu0 0.0
  %70 = vmatpush2.msra.mxu0 0.0
  %71 = vmatprep.subr.mxu0 0.0
  %72 = vmatpush2.msra.mxu0 0.0
  %73 = vmatprep.subr.mxu0 0.0
  %74 = vmatpush2.msra.mxu0 0.0
  %75 = vmatprep.subr.mxu0 0.0
  %76 = vmatpush2.msra.mxu0 0.0
  %77 = vmatprep.subr.mxu0 0.0
  %78 = vmatpush2.msra.mxu0 0.0
  %79 = vmatprep.subr.mxu0 0.0
  %80 = vmatpush2.msra.mxu0 0.0
  %81 = vmatprep.subr.mxu0 0.0
  %82 = vmatpush2.msra.mxu0 0.0
  %83 = vmatprep.subr.mxu0 0.0
  %84 = vmatpush2.msra.mxu0 0.0
  %85 = vmatprep.subr.mxu0 0.0
  %86 = vmatpush2.msra.mxu0 0.0
  %87 = vmatprep.subr.mxu0 0.0
  %88 = vmatpush2.msra.mxu0 0.0
  %89 = vmatprep.subr.mxu0 0.0
  %90 = vmatpush2.msra.mxu0 0.0
  %91 = vmatprep.subr.mxu0 0.0
  %92 = vmatpush2.msra.mxu0 0.0
  %93 = vmatprep.subr.mxu0 0.0
  %94 = vmatpush2.msra.mxu0 0.0
  %95 = vmatprep.mubr.f32.mxu0 0.0
  %96 = vmatmul.mubr.f32.gmra.mxu0 %v25
  %v97 = vpop.f32.mrf.mxu0
  %v98 = vadd.f32 %v21, %v97
  %v99 = vpop.f32.mrf.mxu0
  %100 = vdwg.mxu0
  %vm101 = vcmask 13312
  %102 = vst.msk [vmem:[%s3] sm:$0x3f] %vm101, %v98
  // Predicated region
  $region14: #{_lambda_.67} parent=0 // pred_check
    _
  $region15: #{_lambda_.67} parent=0 // pred_check_branch
    %104 = sbr.rel (0) target = $region17
  $region16: #{_lambda_.67} parent=0 // pred_region
    _
  $region17: #{_lambda_.67} parent=0 // pred_fallthru
    _
  // Predicated region
  $region18: #{_lambda_.67} parent=0 // pred_check
    _
  $region19: #{_lambda_.67} parent=0 // pred_check_branch
    %106 = sbr.rel (0) target = $region21
  $region20: #{_lambda_.67} parent=0 // pred_region
    _
  $region21: #{_lambda_.67} parent=0 // pred_fallthru
    _

// kernel: _lambda_.69
$region0: #{_lambda_.69}
  #allocation0 [shape = 'u32[]', space=smem, size = 0x4, offset = 0x4, fixed_abs, tag = 'smem constant byte address 0x4 - core index']
  #allocation1 [shape = 'u32[144,128]{1,0:T(1,128)}', space=vmem, size = 0x12000, scoped, tag = 'internal scratch']
  %s0 = inlined_call_operand.vmem [shape: f32[4,6], index: 0, kind: input, shape index: {}]
  %s1 = inlined_call_operand.vmem [shape: f32[6,24], index: 1, kind: input, shape index: {}]
  %s2 = inlined_call_operand.vmem [shape: f32[1,24], index: 2, kind: input, shape index: {}]
  %s3 = inlined_call_operand.vmem [shape: f32[4,24], index: 3, kind: output, shape index: {}]
  %s4 = sld [smem:[#allocation0]]
  $region22: #{_lambda_.69} parent=0
    _
  %s6 = ssub.s32 1, %s4
  %s7 = scalar_select 0, %s6, %s4
  // Predicated region
  $region2: #{_lambda_.69} parent=0 // pred_check
    _
  $region3: #{_lambda_.69} parent=0 // pred_check_branch
    %9 = sbr.rel (0) target = $region5
  $region4: #{_lambda_.69} parent=0 // pred_region
    _
  $region5: #{_lambda_.69} parent=0 // pred_fallthru
    _
  // Predicated region
  $region6: #{_lambda_.69} parent=0 // pred_check
    _
  $region7: #{_lambda_.69} parent=0 // pred_check_branch
    %11 = sbr.rel (0) target = $region9
  $region8: #{_lambda_.69} parent=0 // pred_region
    _
  $region9: #{_lambda_.69} parent=0 // pred_fallthru
    _
  // Predicated region
  $region10: #{_lambda_.69} parent=0 // pred_check
    _
  $region11: #{_lambda_.69} parent=0 // pred_check_branch
    %13 = sbr.rel (0) target = $region13
  $region12: #{_lambda_.69} parent=0 // pred_region
    _
  $region13: #{_lambda_.69} parent=0 // pred_fallthru
    _
  %v14 = vld [vmem:[%s0] sm:$0xf]
  %v15 = vld [vmem:[%s1] sm:$0x3f]
  %v16 = vld [vmem:[%s2] sm:$0x1]
  %v18 = vlaneseq
  %v19 = vshrl.u32 %v18, 7
  %v20 = vsub.s32 0, %v19
  %v21 = vrot.slane %v16, %v20
  %vm23 = vcmask 48128
  %v25 = vsel %vm23, %v14, 0
  %vm27 = vcmask 1045504
  %v29 = vsel %vm27, %v15, 0
  %31 = vmatprep.subr.mxu0 0.0
  %32 = vmatpush1.msra.mxu0 0.0
  %33 = vmatprep.subr.mxu0 0.0
  %34 = vmatpush1.msra.mxu0 0.0
  %35 = vmatprep.subr.mxu0 0.0
  %36 = vmatpush1.msra.mxu0 0.0
  %37 = vmatprep.subr.mxu0 0.0
  %38 = vmatpush1.msra.mxu0 0.0
  %39 = vmatprep.subr.mxu0 0.0
  %40 = vmatpush1.msra.mxu0 0.0
  %41 = vmatprep.subr.mxu0 0.0
  %42 = vmatpush1.msra.mxu0 0.0
  %43 = vmatprep.subr.mxu0 0.0
  %44 = vmatpush1.msra.mxu0 0.0
  %45 = vmatprep.subr.mxu0 0.0
  %46 = vmatpush1.msra.mxu0 0.0
  %47 = vmatprep.subr.mxu0 0.0
  %48 = vmatpush1.msra.mxu0 0.0
  %49 = vmatprep.subr.mxu0 0.0
  %50 = vmatpush1.msra.mxu0 0.0
  %51 = vmatprep.subr.mxu0 0.0
  %52 = vmatpush1.msra.mxu0 0.0
  %53 = vmatprep.subr.mxu0 0.0
  %54 = vmatpush1.msra.mxu0 0.0
  %55 = vmatprep.subr.mxu0 0.0
  %56 = vmatpush1.msra.mxu0 0.0
  %57 = vmatprep.subr.mxu0 0.0
  %58 = vmatpush1.msra.mxu0 0.0
  %59 = vmatprep.subr.mxu0 0.0
  %60 = vmatpush1.msra.mxu0 0.0
  %61 = vmatprep.subr.mxu0 0.0
  %62 = vmatpush1.msra.mxu0 %v29
  %63 = vmatprep.subr.mxu0 0.0
  %64 = vmatpush2.msra.mxu0 0.0
  %65 = vmatprep.subr.mxu0 0.0
  %66 = vmatpush2.msra.mxu0 0.0
  %67 = vmatprep.subr.mxu0 0.0
  %68 = vmatpush2.msra.mxu0 0.0
  %69 = vmatprep.subr.mxu0 0.0
  %70 = vmatpush2.msra.mxu0 0.0
  %71 = vmatprep.subr.mxu0 0.0
  %72 = vmatpush2.msra.mxu0 0.0
  %73 = vmatprep.subr.mxu0 0.0
  %74 = vmatpush2.msra.mxu0 0.0
  %75 = vmatprep.subr.mxu0 0.0
  %76 = vmatpush2.msra.mxu0 0.0
  %77 = vmatprep.subr.mxu0 0.0
  %78 = vmatpush2.msra.mxu0 0.0
  %79 = vmatprep.subr.mxu0 0.0
  %80 = vmatpush2.msra.mxu0 0.0
  %81 = vmatprep.subr.mxu0 0.0
  %82 = vmatpush2.msra.mxu0 0.0
  %83 = vmatprep.subr.mxu0 0.0
  %84 = vmatpush2.msra.mxu0 0.0
  %85 = vmatprep.subr.mxu0 0.0
  %86 = vmatpush2.msra.mxu0 0.0
  %87 = vmatprep.subr.mxu0 0.0
  %88 = vmatpush2.msra.mxu0 0.0
  %89 = vmatprep.subr.mxu0 0.0
  %90 = vmatpush2.msra.mxu0 0.0
  %91 = vmatprep.subr.mxu0 0.0
  %92 = vmatpush2.msra.mxu0 0.0
  %93 = vmatprep.subr.mxu0 0.0
  %94 = vmatpush2.msra.mxu0 0.0
  %95 = vmatprep.mubr.f32.mxu0 0.0
  %96 = vmatmul.mubr.f32.gmra.mxu0 %v25
  %v97 = vpop.f32.mrf.mxu0
  %v98 = vadd.f32 %v21, %v97
  %v99 = vpop.f32.mrf.mxu0
  %100 = vdwg.mxu0
  %vm101 = vcmask 191488
  %102 = vst.msk [vmem:[%s3] sm:$0xf] %vm101, %v98
  // Predicated region
  $region14: #{_lambda_.69} parent=0 // pred_check
    _
  $region15: #{_lambda_.69} parent=0 // pred_check_branch
    %104 = sbr.rel (0) target = $region17
  $region16: #{_lambda_.69} parent=0 // pred_region
    _
  $region17: #{_lambda_.69} parent=0 // pred_fallthru
    _
  // Predicated region
  $region18: #{_lambda_.69} parent=0 // pred_check
    _
  $region19: #{_lambda_.69} parent=0 // pred_check_branch
    %106 = sbr.rel (0) target = $region21
  $region20: #{_lambda_.69} parent=0 // pred_region
    _
  $region21: #{_lambda_.69} parent=0 // pred_fallthru
    _

// kernel: _lambda_.74
$region0: #{_lambda_.74}
  #allocation0 [shape = 'u32[]', space=smem, size = 0x4, offset = 0x4, fixed_abs, tag = 'smem constant byte address 0x4 - core index']
  #allocation1 [shape = 'u32[144,128]{1,0:T(1,128)}', space=vmem, size = 0x12000, scoped, tag = 'internal scratch']
  %s0 = inlined_call_operand.vmem [shape: f32[24,1], index: 0, kind: input, shape index: {}]
  %s1 = inlined_call_operand.vmem [shape: f32[1,32], index: 1, kind: input, shape index: {}]
  %s2 = inlined_call_operand.vmem [shape: f32[1,32], index: 2, kind: input, shape index: {}]
  %s3 = inlined_call_operand.vmem [shape: f32[24,32], index: 3, kind: output, shape index: {}]
  %s4 = sld [smem:[#allocation0]]
  $region22: #{_lambda_.74} parent=0
    _
  %s6 = ssub.s32 1, %s4
  %s7 = scalar_select 0, %s6, %s4
  // Predicated region
  $region2: #{_lambda_.74} parent=0 // pred_check
    _
  $region3: #{_lambda_.74} parent=0 // pred_check_branch
    %9 = sbr.rel (0) target = $region5
  $region4: #{_lambda_.74} parent=0 // pred_region
    _
  $region5: #{_lambda_.74} parent=0 // pred_fallthru
    _
  // Predicated region
  $region6: #{_lambda_.74} parent=0 // pred_check
    _
  $region7: #{_lambda_.74} parent=0 // pred_check_branch
    %11 = sbr.rel (0) target = $region9
  $region8: #{_lambda_.74} parent=0 // pred_region
    _
  $region9: #{_lambda_.74} parent=0 // pred_fallthru
    _
  // Predicated region
  $region10: #{_lambda_.74} parent=0 // pred_check
    _
  $region11: #{_lambda_.74} parent=0 // pred_check_branch
    %13 = sbr.rel (0) target = $region13
  $region12: #{_lambda_.74} parent=0 // pred_region
    _
  $region13: #{_lambda_.74} parent=0 // pred_fallthru
    _
  %v14 = vld [vmem:[%s0] sm:$0xff]
  %v15 = vld [vmem:[%s0 + $0x8] sm:$0xff]
  %v16 = vld [vmem:[%s0 + $0x10] sm:$0xff]
  %v17 = vld [vmem:[%s1] sm:$0x1]
  %v18 = vld [vmem:[%s2] sm:$0x1]
  %v20 = vlaneseq
  %v21 = vshrl.u32 %v20, 7
  %v22 = vsub.s32 0, %v21
  %v23 = vrot.slane %v18, %v22
  %vm25 = vcmask 7168
  %v27 = vsel %vm25, %v14, 0
  %v30 = vsel %vm25, %v15, 0
  %v33 = vsel %vm25, %v16, 0
  %vm35 = vcmask 1040384
  %v37 = vsel %vm35, %v17, 0
  %39 = vmatprep.subr.mxu0 0.0
  %40 = vmatpush1.msra.mxu0 0.0
  %41 = vmatprep.subr.mxu0 0.0
  %42 = vmatpush1.msra.mxu0 0.0
  %43 = vmatprep.subr.mxu0 0.0
  %44 = vmatpush1.msra.mxu0 0.0
  %45 = vmatprep.subr.mxu0 0.0
  %46 = vmatpush1.msra.mxu0 0.0
  %47 = vmatprep.subr.mxu0 0.0
  %48 = vmatpush1.msra.mxu0 0.0
  %49 = vmatprep.subr.mxu0 0.0
  %50 = vmatpush1.msra.mxu0 0.0
  %51 = vmatprep.subr.mxu0 0.0
  %52 = vmatpush1.msra.mxu0 0.0
  %53 = vmatprep.subr.mxu0 0.0
  %54 = vmatpush1.msra.mxu0 0.0
  %55 = vmatprep.subr.mxu0 0.0
  %56 = vmatpush1.msra.mxu0 0.0
  %57 = vmatprep.subr.mxu0 0.0
  %58 = vmatpush1.msra.mxu0 0.0
  %59 = vmatprep.subr.mxu0 0.0
  %60 = vmatpush1.msra.mxu0 0.0
  %61 = vmatprep.subr.mxu0 0.0
  %62 = vmatpush1.msra.mxu0 0.0
  %63 = vmatprep.subr.mxu0 0.0
  %64 = vmatpush1.msra.mxu0 0.0
  %65 = vmatprep.subr.mxu0 0.0
  %66 = vmatpush1.msra.mxu0 0.0
  %67 = vmatprep.subr.mxu0 0.0
  %68 = vmatpush1.msra.mxu0 0.0
  %69 = vmatprep.subr.mxu0 0.0
  %70 = vmatpush1.msra.mxu0 %v37
  %71 = vmatprep.subr.mxu0 0.0
  %72 = vmatpush2.msra.mxu0 0.0
  %73 = vmatprep.subr.mxu0 0.0
  %74 = vmatpush2.msra.mxu0 0.0
  %75 = vmatprep.subr.mxu0 0.0
  %76 = vmatpush2.msra.mxu0 0.0
  %77 = vmatprep.subr.mxu0 0.0
  %78 = vmatpush2.msra.mxu0 0.0
  %79 = vmatprep.subr.mxu0 0.0
  %80 = vmatpush2.msra.mxu0 0.0
  %81 = vmatprep.subr.mxu0 0.0
  %82 = vmatpush2.msra.mxu0 0.0
  %83 = vmatprep.subr.mxu0 0.0
  %84 = vmatpush2.msra.mxu0 0.0
  %85 = vmatprep.subr.mxu0 0.0
  %86 = vmatpush2.msra.mxu0 0.0
  %87 = vmatprep.subr.mxu0 0.0
  %88 = vmatpush2.msra.mxu0 0.0
  %89 = vmatprep.subr.mxu0 0.0
  %90 = vmatpush2.msra.mxu0 0.0
  %91 = vmatprep.subr.mxu0 0.0
  %92 = vmatpush2.msra.mxu0 0.0
  %93 = vmatprep.subr.mxu0 0.0
  %94 = vmatpush2.msra.mxu0 0.0
  %95 = vmatprep.subr.mxu0 0.0
  %96 = vmatpush2.msra.mxu0 0.0
  %97 = vmatprep.subr.mxu0 0.0
  %98 = vmatpush2.msra.mxu0 0.0
  %99 = vmatprep.subr.mxu0 0.0
  %100 = vmatpush2.msra.mxu0 0.0
  %101 = vmatprep.subr.mxu0 0.0
  %102 = vmatpush2.msra.mxu0 0.0
  %103 = vmatprep.mubr.f32.mxu0 0.0
  %104 = vmatmul.mubr.f32.gmra.mxu0 %v27
  %v105 = vpop.f32.mrf.mxu0
  %v106 = vadd.f32 %v23, %v105
  %v107 = vpop.f32.mrf.mxu0
  %108 = vmatprep.mubr.f32.mxu0 0.0
  %109 = vmatmul.mubr.f32.gmra.mxu0 %v30
  %v110 = vpop.f32.mrf.mxu0
  %v111 = vadd.f32 %v23, %v110
  %v112 = vpop.f32.mrf.mxu0
  %113 = vmatprep.mubr.f32.mxu0 0.0
  %114 = vmatmul.mubr.f32.gmra.mxu0 %v33
  %v115 = vpop.f32.mrf.mxu0
  %v116 = vadd.f32 %v23, %v115
  %v117 = vpop.f32.mrf.mxu0
  %118 = vdwg.mxu0
  %vm119 = vcmask 261120
  %120 = vst.msk [vmem:[%s3] sm:$0xff] %vm119, %v106
  %121 = vst.msk [vmem:[%s3 + $0x8] sm:$0xff] %vm119, %v111
  %122 = vst.msk [vmem:[%s3 + $0x10] sm:$0xff] %vm119, %v116
  // Predicated region
  $region14: #{_lambda_.74} parent=0 // pred_check
    _
  $region15: #{_lambda_.74} parent=0 // pred_check_branch
    %124 = sbr.rel (0) target = $region17
  $region16: #{_lambda_.74} parent=0 // pred_region
    _
  $region17: #{_lambda_.74} parent=0 // pred_fallthru
    _
  // Predicated region
  $region18: #{_lambda_.74} parent=0 // pred_check
    _
  $region19: #{_lambda_.74} parent=0 // pred_check_branch
    %126 = sbr.rel (0) target = $region21
  $region20: #{_lambda_.74} parent=0 // pred_region
    _
  $region21: #{_lambda_.74} parent=0 // pred_fallthru
    _

// kernel: _lambda_.76
$region0: #{_lambda_.76}
  #allocation0 [shape = 'u32[]', space=smem, size = 0x4, offset = 0x4, fixed_abs, tag = 'smem constant byte address 0x4 - core index']
  #allocation1 [shape = 'u32[144,128]{1,0:T(1,128)}', space=vmem, size = 0x12000, scoped, tag = 'internal scratch']
  %s0 = inlined_call_operand.vmem [shape: f32[96,1], index: 0, kind: input, shape index: {}]
  %s1 = inlined_call_operand.vmem [shape: f32[1,32], index: 1, kind: input, shape index: {}]
  %s2 = inlined_call_operand.vmem [shape: f32[1,32], index: 2, kind: input, shape index: {}]
  %s3 = inlined_call_operand.vmem [shape: f32[32,32], index: 3, kind: input, shape index: {}]
  %s4 = inlined_call_operand.vmem [shape: f32[1,32], index: 4, kind: input, shape index: {}]
  %s5 = inlined_call_operand.vmem [shape: f32[96,32], index: 5, kind: output, shape index: {}]
  %s6 = sld [smem:[#allocation0]]
  $region30: #{_lambda_.76} parent=0
    _
  %s8 = ssub.s32 1, %s6
  %s9 = scalar_select 0, %s8, %s6
  // Predicated region
  $region2: #{_lambda_.76} parent=0 // pred_check
    _
  $region3: #{_lambda_.76} parent=0 // pred_check_branch
    %11 = sbr.rel (0) target = $region5
  $region4: #{_lambda_.76} parent=0 // pred_region
    _
  $region5: #{_lambda_.76} parent=0 // pred_fallthru
    _
  // Predicated region
  $region6: #{_lambda_.76} parent=0 // pred_check
    _
  $region7: #{_lambda_.76} parent=0 // pred_check_branch
    %13 = sbr.rel (0) target = $region9
  $region8: #{_lambda_.76} parent=0 // pred_region
    _
  $region9: #{_lambda_.76} parent=0 // pred_fallthru
    _
  // Predicated region
  $region10: #{_lambda_.76} parent=0 // pred_check
    _
  $region11: #{_lambda_.76} parent=0 // pred_check_branch
    %15 = sbr.rel (0) target = $region13
  $region12: #{_lambda_.76} parent=0 // pred_region
    _
  $region13: #{_lambda_.76} parent=0 // pred_fallthru
    _
  // Predicated region
  $region14: #{_lambda_.76} parent=0 // pred_check
    _
  $region15: #{_lambda_.76} parent=0 // pred_check_branch
    %17 = sbr.rel (0) target = $region17
  $region16: #{_lambda_.76} parent=0 // pred_region
    _
  $region17: #{_lambda_.76} parent=0 // pred_fallthru
    _
  // Predicated region
  $region18: #{_lambda_.76} parent=0 // pred_check
    _
  $region19: #{_lambda_.76} parent=0 // pred_check_branch
    %19 = sbr.rel (0) target = $region21
  $region20: #{_lambda_.76} parent=0 // pred_region
    _
  $region21: #{_lambda_.76} parent=0 // pred_fallthru
    _
  %v20 = vld [vmem:[%s0] sm:$0xff]
  %v21 = vld [vmem:[%s0 + $0x8] sm:$0xff]
  %v22 = vld [vmem:[%s0 + $0x10] sm:$0xff]
  %v23 = vld [vmem:[%s0 + $0x18] sm:$0xff]
  %v24 = vld [vmem:[%s0 + $0x20] sm:$0xff]
  %v25 = vld [vmem:[%s0 + $0x28] sm:$0xff]
  %v26 = vld [vmem:[%s0 + $0x30] sm:$0xff]
  %v27 = vld [vmem:[%s0 + $0x38] sm:$0xff]
  %v28 = vld [vmem:[%s0 + $0x40] sm:$0xff]
  %v29 = vld [vmem:[%s0 + $0x48] sm:$0xff]
  %v30 = vld [vmem:[%s0 + $0x50] sm:$0xff]
  %v31 = vld [vmem:[%s0 + $0x58] sm:$0xff]
  %v32 = vld [vmem:[%s1] sm:$0x1]
  %v33 = vld [vmem:[%s2] sm:$0x1]
  %v35 = vlaneseq
  %v36 = vshrl.u32 %v35, 7
  %v37 = vsub.s32 0, %v36
  %v38 = vrot.slane %v33, %v37
  %vm40 = vcmask 7168
  %v42 = vsel %vm40, %v20, 0
  %v45 = vsel %vm40, %v21, 0
  %v48 = vsel %vm40, %v22, 0
  %v51 = vsel %vm40, %v23, 0
  %v54 = vsel %vm40, %v24, 0
  %v57 = vsel %vm40, %v25, 0
  %v60 = vsel %vm40, %v26, 0
  %v63 = vsel %vm40, %v27, 0
  %v66 = vsel %vm40, %v28, 0
  %v69 = vsel %vm40, %v29, 0
  %v72 = vsel %vm40, %v30, 0
  %v75 = vsel %vm40, %v31, 0
  %vm77 = vcmask 1040384
  %v79 = vsel %vm77, %v32, 0
  %81 = vmatprep.subr.mxu0 0.0
  %82 = vmatpush1.msra.mxu0 0.0
  %83 = vmatprep.subr.mxu0 0.0
  %84 = vmatpush1.msra.mxu0 0.0
  %85 = vmatprep.subr.mxu0 0.0
  %86 = vmatpush1.msra.mxu0 0.0
  %87 = vmatprep.subr.mxu0 0.0
  %88 = vmatpush1.msra.mxu0 0.0
  %89 = vmatprep.subr.mxu0 0.0
  %90 = vmatpush1.msra.mxu0 0.0
  %91 = vmatprep.subr.mxu0 0.0
  %92 = vmatpush1.msra.mxu0 0.0
  %93 = vmatprep.subr.mxu0 0.0
  %94 = vmatpush1.msra.mxu0 0.0
  %95 = vmatprep.subr.mxu0 0.0
  %96 = vmatpush1.msra.mxu0 0.0
  %97 = vmatprep.subr.mxu0 0.0
  %98 = vmatpush1.msra.mxu0 0.0
  %99 = vmatprep.subr.mxu0 0.0
  %100 = vmatpush1.msra.mxu0 0.0
  %101 = vmatprep.subr.mxu0 0.0
  %102 = vmatpush1.msra.mxu0 0.0
  %103 = vmatprep.subr.mxu0 0.0
  %104 = vmatpush1.msra.mxu0 0.0
  %105 = vmatprep.subr.mxu0 0.0
  %106 = vmatpush1.msra.mxu0 0.0
  %107 = vmatprep.subr.mxu0 0.0
  %108 = vmatpush1.msra.mxu0 0.0
  %109 = vmatprep.subr.mxu0 0.0
  %110 = vmatpush1.msra.mxu0 0.0
  %111 = vmatprep.subr.mxu0 0.0
  %112 = vmatpush1.msra.mxu0 %v79
  %113 = vmatprep.subr.mxu0 0.0
  %114 = vmatpush2.msra.mxu0 0.0
  %115 = vmatprep.subr.mxu0 0.0
  %116 = vmatpush2.msra.mxu0 0.0
  %117 = vmatprep.subr.mxu0 0.0
  %118 = vmatpush2.msra.mxu0 0.0
  %119 = vmatprep.subr.mxu0 0.0
  %120 = vmatpush2.msra.mxu0 0.0
  %121 = vmatprep.subr.mxu0 0.0
  %122 = vmatpush2.msra.mxu0 0.0
  %123 = vmatprep.subr.mxu0 0.0
  %124 = vmatpush2.msra.mxu0 0.0
  %125 = vmatprep.subr.mxu0 0.0
  %126 = vmatpush2.msra.mxu0 0.0
  %127 = vmatprep.subr.mxu0 0.0
  %128 = vmatpush2.msra.mxu0 0.0
  %129 = vmatprep.subr.mxu0 0.0
  %130 = vmatpush2.msra.mxu0 0.0
  %131 = vmatprep.subr.mxu0 0.0
  %132 = vmatpush2.msra.mxu0 0.0
  %133 = vmatprep.subr.mxu0 0.0
  %134 = vmatpush2.msra.mxu0 0.0
  %135 = vmatprep.subr.mxu0 0.0
  %136 = vmatpush2.msra.mxu0 0.0
  %137 = vmatprep.subr.mxu0 0.0
  %138 = vmatpush2.msra.mxu0 0.0
  %139 = vmatprep.subr.mxu0 0.0
  %140 = vmatpush2.msra.mxu0 0.0
  %141 = vmatprep.subr.mxu0 0.0
  %142 = vmatpush2.msra.mxu0 0.0
  %143 = vmatprep.subr.mxu0 0.0
  %144 = vmatpush2.msra.mxu0 0.0
  %145 = vmatprep.mubr.f32.mxu0 0.0
  %146 = vmatmul.mubr.f32.gmra.mxu0 %v42
  %v147 = vpop.f32.mrf.mxu0
  %v148 = vadd.f32 %v38, %v147
  %v149 = vpop.f32.mrf.mxu0
  %150 = vmatprep.mubr.f32.mxu0 0.0
  %151 = vmatmul.mubr.f32.gmra.mxu0 %v45
  %v152 = vpop.f32.mrf.mxu0
  %v153 = vadd.f32 %v38, %v152
  %v154 = vpop.f32.mrf.mxu0
  %155 = vmatprep.mubr.f32.mxu0 0.0
  %156 = vmatmul.mubr.f32.gmra.mxu0 %v48
  %v157 = vpop.f32.mrf.mxu0
  %v158 = vadd.f32 %v38, %v157
  %v159 = vpop.f32.mrf.mxu0
  %160 = vmatprep.mubr.f32.mxu0 0.0
  %161 = vmatmul.mubr.f32.gmra.mxu0 %v51
  %v162 = vpop.f32.mrf.mxu0
  %v163 = vadd.f32 %v38, %v162
  %v164 = vpop.f32.mrf.mxu0
  %165 = vmatprep.mubr.f32.mxu0 0.0
  %166 = vmatmul.mubr.f32.gmra.mxu0 %v54
  %v167 = vpop.f32.mrf.mxu0
  %v168 = vadd.f32 %v38, %v167
  %v169 = vpop.f32.mrf.mxu0
  %170 = vmatprep.mubr.f32.mxu0 0.0
  %171 = vmatmul.mubr.f32.gmra.mxu0 %v57
  %v172 = vpop.f32.mrf.mxu0
  %v173 = vadd.f32 %v38, %v172
  %v174 = vpop.f32.mrf.mxu0
  %175 = vmatprep.mubr.f32.mxu0 0.0
  %176 = vmatmul.mubr.f32.gmra.mxu0 %v60
  %v177 = vpop.f32.mrf.mxu0
  %v178 = vadd.f32 %v38, %v177
  %v179 = vpop.f32.mrf.mxu0
  %180 = vmatprep.mubr.f32.mxu0 0.0
  %181 = vmatmul.mubr.f32.gmra.mxu0 %v63
  %v182 = vpop.f32.mrf.mxu0
  %v183 = vadd.f32 %v38, %v182
  %v184 = vpop.f32.mrf.mxu0
  %185 = vmatprep.mubr.f32.mxu0 0.0
  %186 = vmatmul.mubr.f32.gmra.mxu0 %v66
  %v187 = vpop.f32.mrf.mxu0
  %v188 = vadd.f32 %v38, %v187
  %v189 = vpop.f32.mrf.mxu0
  %190 = vmatprep.mubr.f32.mxu0 0.0
  %191 = vmatmul.mubr.f32.gmra.mxu0 %v69
  %v192 = vpop.f32.mrf.mxu0
  %v193 = vadd.f32 %v38, %v192
  %v194 = vpop.f32.mrf.mxu0
  %195 = vmatprep.mubr.f32.mxu0 0.0
  %196 = vmatmul.mubr.f32.gmra.mxu0 %v72
  %v197 = vpop.f32.mrf.mxu0
  %v198 = vadd.f32 %v38, %v197
  %v199 = vpop.f32.mrf.mxu0
  %200 = vmatprep.mubr.f32.mxu0 0.0
  %201 = vmatmul.mubr.f32.gmra.mxu0 %v75
  %v202 = vpop.f32.mrf.mxu0
  %v203 = vadd.f32 %v38, %v202
  %v204 = vpop.f32.mrf.mxu0
  %205 = vdwg.mxu0
  %v206 = vmax.f32 %v148, 0.0
  %v207 = vmax.f32 %v153, 0.0
  %v208 = vmax.f32 %v158, 0.0
  %v209 = vmax.f32 %v163, 0.0
  %v210 = vmax.f32 %v168, 0.0
  %v211 = vmax.f32 %v173, 0.0
  %v212 = vmax.f32 %v178, 0.0
  %v213 = vmax.f32 %v183, 0.0
  %v214 = vmax.f32 %v188, 0.0
  %v215 = vmax.f32 %v193, 0.0
  %v216 = vmax.f32 %v198, 0.0
  %v217 = vmax.f32 %v203, 0.0
  %v218 = vld [vmem:[%s3] sm:$0xff]
  %v219 = vld [vmem:[%s3 + $0x8] sm:$0xff]
  %v220 = vld [vmem:[%s3 + $0x10] sm:$0xff]
  %v221 = vld [vmem:[%s3 + $0x18] sm:$0xff]
  %v222 = vld [vmem:[%s4] sm:$0x1]
  %v224 = vlaneseq
  %v225 = vshrl.u32 %v224, 7
  %v226 = vsub.s32 0, %v225
  %v227 = vrot.slane %v222, %v226
  %vm229 = vcmask 261120
  %v231 = vsel %vm229, %v206, 0
  %v234 = vsel %vm229, %v207, 0
  %v237 = vsel %vm229, %v208, 0
  %v240 = vsel %vm229, %v209, 0
  %v243 = vsel %vm229, %v210, 0
  %v246 = vsel %vm229, %v211, 0
  %v249 = vsel %vm229, %v212, 0
  %v252 = vsel %vm229, %v213, 0
  %v255 = vsel %vm229, %v214, 0
  %v258 = vsel %vm229, %v215, 0
  %v261 = vsel %vm229, %v216, 0
  %v264 = vsel %vm229, %v217, 0
  %266 = vmatprep.subr.mxu0 0.0
  %267 = vmatpush1.msra.mxu0 0.0
  %268 = vmatprep.subr.mxu0 0.0
  %269 = vmatpush1.msra.mxu0 0.0
  %270 = vmatprep.subr.mxu0 0.0
  %271 = vmatpush1.msra.mxu0 0.0
  %272 = vmatprep.subr.mxu0 0.0
  %273 = vmatpush1.msra.mxu0 0.0
  %274 = vmatprep.subr.mxu0 0.0
  %275 = vmatpush1.msra.mxu0 0.0
  %276 = vmatprep.subr.mxu0 0.0
  %277 = vmatpush1.msra.mxu0 0.0
  %278 = vmatprep.subr.mxu0 0.0
  %279 = vmatpush1.msra.mxu0 0.0
  %280 = vmatprep.subr.mxu0 0.0
  %281 = vmatpush1.msra.mxu0 0.0
  %282 = vmatprep.subr.mxu0 0.0
  %283 = vmatpush1.msra.mxu0 0.0
  %284 = vmatprep.subr.mxu0 0.0
  %285 = vmatpush1.msra.mxu0 0.0
  %286 = vmatprep.subr.mxu0 0.0
  %287 = vmatpush1.msra.mxu0 0.0
  %288 = vmatprep.subr.mxu0 0.0
  %289 = vmatpush1.msra.mxu0 0.0
  %290 = vmatprep.subr.mxu0 0.0
  %291 = vmatpush1.msra.mxu0 %v221
  %292 = vmatprep.subr.mxu0 0.0
  %293 = vmatpush1.msra.mxu0 %v220
  %294 = vmatprep.subr.mxu0 0.0
  %295 = vmatpush1.msra.mxu0 %v219
  %296 = vmatprep.subr.mxu0 0.0
  %297 = vmatpush1.msra.mxu0 %v218
  %298 = vmatprep.subr.mxu0 0.0
  %299 = vmatpush2.msra.mxu0 0.0
  %300 = vmatprep.subr.mxu0 0.0
  %301 = vmatpush2.msra.mxu0 0.0
  %302 = vmatprep.subr.mxu0 0.0
  %303 = vmatpush2.msra.mxu0 0.0
  %304 = vmatprep.subr.mxu0 0.0
  %305 = vmatpush2.msra.mxu0 0.0
  %306 = vmatprep.subr.mxu0 0.0
  %307 = vmatpush2.msra.mxu0 0.0
  %308 = vmatprep.subr.mxu0 0.0
  %309 = vmatpush2.msra.mxu0 0.0
  %310 = vmatprep.subr.mxu0 0.0
  %311 = vmatpush2.msra.mxu0 0.0
  %312 = vmatprep.subr.mxu0 0.0
  %313 = vmatpush2.msra.mxu0 0.0
  %314 = vmatprep.subr.mxu0 0.0
  %315 = vmatpush2.msra.mxu0 0.0
  %316 = vmatprep.subr.mxu0 0.0
  %317 = vmatpush2.msra.mxu0 0.0
  %318 = vmatprep.subr.mxu0 0.0
  %319 = vmatpush2.msra.mxu0 0.0
  %320 = vmatprep.subr.mxu0 0.0
  %321 = vmatpush2.msra.mxu0 0.0
  %322 = vmatprep.subr.mxu0 0.0
  %323 = vmatpush2.msra.mxu0 0.0
  %324 = vmatprep.subr.mxu0 0.0
  %325 = vmatpush2.msra.mxu0 0.0
  %326 = vmatprep.subr.mxu0 0.0
  %327 = vmatpush2.msra.mxu0 0.0
  %328 = vmatprep.subr.mxu0 0.0
  %329 = vmatpush2.msra.mxu0 0.0
  %330 = vmatprep.mubr.f32.mxu0 0.0
  %331 = vmatmul.mubr.f32.gmra.mxu0 %v231
  %v332 = vpop.f32.mrf.mxu0
  %v333 = vadd.f32 %v227, %v332
  %v334 = vpop.f32.mrf.mxu0
  %335 = vmatprep.mubr.f32.mxu0 0.0
  %336 = vmatmul.mubr.f32.gmra.mxu0 %v234
  %v337 = vpop.f32.mrf.mxu0
  %v338 = vadd.f32 %v227, %v337
  %v339 = vpop.f32.mrf.mxu0
  %340 = vmatprep.mubr.f32.mxu0 0.0
  %341 = vmatmul.mubr.f32.gmra.mxu0 %v237
  %v342 = vpop.f32.mrf.mxu0
  %v343 = vadd.f32 %v227, %v342
  %v344 = vpop.f32.mrf.mxu0
  %345 = vmatprep.mubr.f32.mxu0 0.0
  %346 = vmatmul.mubr.f32.gmra.mxu0 %v240
  %v347 = vpop.f32.mrf.mxu0
  %v348 = vadd.f32 %v227, %v347
  %v349 = vpop.f32.mrf.mxu0
  %350 = vmatprep.mubr.f32.mxu0 0.0
  %351 = vmatmul.mubr.f32.gmra.mxu0 %v243
  %v352 = vpop.f32.mrf.mxu0
  %v353 = vadd.f32 %v227, %v352
  %v354 = vpop.f32.mrf.mxu0
  %355 = vmatprep.mubr.f32.mxu0 0.0
  %356 = vmatmul.mubr.f32.gmra.mxu0 %v246
  %v357 = vpop.f32.mrf.mxu0
  %v358 = vadd.f32 %v227, %v357
  %v359 = vpop.f32.mrf.mxu0
  %360 = vmatprep.mubr.f32.mxu0 0.0
  %361 = vmatmul.mubr.f32.gmra.mxu0 %v249
  %v362 = vpop.f32.mrf.mxu0
  %v363 = vadd.f32 %v227, %v362
  %v364 = vpop.f32.mrf.mxu0
  %365 = vmatprep.mubr.f32.mxu0 0.0
  %366 = vmatmul.mubr.f32.gmra.mxu0 %v252
  %v367 = vpop.f32.mrf.mxu0
  %v368 = vadd.f32 %v227, %v367
  %v369 = vpop.f32.mrf.mxu0
  %370 = vmatprep.mubr.f32.mxu0 0.0
  %371 = vmatmul.mubr.f32.gmra.mxu0 %v255
  %v372 = vpop.f32.mrf.mxu0
  %v373 = vadd.f32 %v227, %v372
  %v374 = vpop.f32.mrf.mxu0
  %375 = vmatprep.mubr.f32.mxu0 0.0
  %376 = vmatmul.mubr.f32.gmra.mxu0 %v258
  %v377 = vpop.f32.mrf.mxu0
  %v378 = vadd.f32 %v227, %v377
  %v379 = vpop.f32.mrf.mxu0
  %380 = vmatprep.mubr.f32.mxu0 0.0
  %381 = vmatmul.mubr.f32.gmra.mxu0 %v261
  %v382 = vpop.f32.mrf.mxu0
  %v383 = vadd.f32 %v227, %v382
  %v384 = vpop.f32.mrf.mxu0
  %385 = vmatprep.mubr.f32.mxu0 0.0
  %386 = vmatmul.mubr.f32.gmra.mxu0 %v264
  %v387 = vpop.f32.mrf.mxu0
  %v388 = vadd.f32 %v227, %v387
  %v389 = vpop.f32.mrf.mxu0
  %390 = vdwg.mxu0
  %v391 = vmax.f32 %v333, 0.0
  %v392 = vmax.f32 %v338, 0.0
  %v393 = vmax.f32 %v343, 0.0
  %v394 = vmax.f32 %v348, 0.0
  %v395 = vmax.f32 %v353, 0.0
  %v396 = vmax.f32 %v358, 0.0
  %v397 = vmax.f32 %v363, 0.0
  %v398 = vmax.f32 %v368, 0.0
  %v399 = vmax.f32 %v373, 0.0
  %v400 = vmax.f32 %v378, 0.0
  %v401 = vmax.f32 %v383, 0.0
  %v402 = vmax.f32 %v388, 0.0
  %403 = vst.msk [vmem:[%s5] sm:$0xff] %vm229, %v391
  %404 = vst.msk [vmem:[%s5 + $0x8] sm:$0xff] %vm229, %v392
  %405 = vst.msk [vmem:[%s5 + $0x10] sm:$0xff] %vm229, %v393
  %406 = vst.msk [vmem:[%s5 + $0x18] sm:$0xff] %vm229, %v394
  %407 = vst.msk [vmem:[%s5 + $0x20] sm:$0xff] %vm229, %v395
  %408 = vst.msk [vmem:[%s5 + $0x28] sm:$0xff] %vm229, %v396
  %409 = vst.msk [vmem:[%s5 + $0x30] sm:$0xff] %vm229, %v397
  %410 = vst.msk [vmem:[%s5 + $0x38] sm:$0xff] %vm229, %v398
  %411 = vst.msk [vmem:[%s5 + $0x40] sm:$0xff] %vm229, %v399
  %412 = vst.msk [vmem:[%s5 + $0x48] sm:$0xff] %vm229, %v400
  %413 = vst.msk [vmem:[%s5 + $0x50] sm:$0xff] %vm229, %v401
  %414 = vst.msk [vmem:[%s5 + $0x58] sm:$0xff] %vm229, %v402
  // Predicated region
  $region22: #{_lambda_.76} parent=0 // pred_check
    _
  $region23: #{_lambda_.76} parent=0 // pred_check_branch
    %416 = sbr.rel (0) target = $region25
  $region24: #{_lambda_.76} parent=0 // pred_region
    _
  $region25: #{_lambda_.76} parent=0 // pred_fallthru
    _
  // Predicated region
  $region26: #{_lambda_.76} parent=0 // pred_check
    _
  $region27: #{_lambda_.76} parent=0 // pred_check_branch
    %418 = sbr.rel (0) target = $region29
  $region28: #{_lambda_.76} parent=0 // pred_region
    _
  $region29: #{_lambda_.76} parent=0 // pred_fallthru
    _

// kernel: _lambda_.75
$region0: #{_lambda_.75}
  #allocation0 [shape = 'u32[]', space=smem, size = 0x4, offset = 0x4, fixed_abs, tag = 'smem constant byte address 0x4 - core index']
  #allocation1 [shape = 'u32[144,128]{1,0:T(1,128)}', space=vmem, size = 0x12000, scoped, tag = 'internal scratch']
  %s0 = inlined_call_operand.vmem [shape: f32[96,32], index: 0, kind: input, shape index: {}]
  %s1 = inlined_call_operand.vmem [shape: f32[32,32], index: 1, kind: input, shape index: {}]
  %s2 = inlined_call_operand.vmem [shape: f32[1,32], index: 2, kind: input, shape index: {}]
  %s3 = inlined_call_operand.vmem [shape: f32[32,32], index: 3, kind: input, shape index: {}]
  %s4 = inlined_call_operand.vmem [shape: f32[1,32], index: 4, kind: input, shape index: {}]
  %s5 = inlined_call_operand.vmem [shape: f32[32,32], index: 5, kind: input, shape index: {}]
  %s6 = inlined_call_operand.vmem [shape: f32[1,32], index: 6, kind: input, shape index: {}]
  %s7 = inlined_call_operand.vmem [shape: f32[96,32], index: 7, kind: output, shape index: {}]
  %s8 = sld [smem:[#allocation0]]
  $region38: #{_lambda_.75} parent=0
    _
  %s10 = ssub.s32 1, %s8
  %s11 = scalar_select 0, %s10, %s8
  // Predicated region
  $region2: #{_lambda_.75} parent=0 // pred_check
    _
  $region3: #{_lambda_.75} parent=0 // pred_check_branch
    %13 = sbr.rel (0) target = $region5
  $region4: #{_lambda_.75} parent=0 // pred_region
    _
  $region5: #{_lambda_.75} parent=0 // pred_fallthru
    _
  // Predicated region
  $region6: #{_lambda_.75} parent=0 // pred_check
    _
  $region7: #{_lambda_.75} parent=0 // pred_check_branch
    %15 = sbr.rel (0) target = $region9
  $region8: #{_lambda_.75} parent=0 // pred_region
    _
  $region9: #{_lambda_.75} parent=0 // pred_fallthru
    _
  // Predicated region
  $region10: #{_lambda_.75} parent=0 // pred_check
    _
  $region11: #{_lambda_.75} parent=0 // pred_check_branch
    %17 = sbr.rel (0) target = $region13
  $region12: #{_lambda_.75} parent=0 // pred_region
    _
  $region13: #{_lambda_.75} parent=0 // pred_fallthru
    _
  // Predicated region
  $region14: #{_lambda_.75} parent=0 // pred_check
    _
  $region15: #{_lambda_.75} parent=0 // pred_check_branch
    %19 = sbr.rel (0) target = $region17
  $region16: #{_lambda_.75} parent=0 // pred_region
    _
  $region17: #{_lambda_.75} parent=0 // pred_fallthru
    _
  // Predicated region
  $region18: #{_lambda_.75} parent=0 // pred_check
    _
  $region19: #{_lambda_.75} parent=0 // pred_check_branch
    %21 = sbr.rel (0) target = $region21
  $region20: #{_lambda_.75} parent=0 // pred_region
    _
  $region21: #{_lambda_.75} parent=0 // pred_fallthru
    _
  // Predicated region
  $region22: #{_lambda_.75} parent=0 // pred_check
    _
  $region23: #{_lambda_.75} parent=0 // pred_check_branch
    %23 = sbr.rel (0) target = $region25
  $region24: #{_lambda_.75} parent=0 // pred_region
    _
  $region25: #{_lambda_.75} parent=0 // pred_fallthru
    _
  // Predicated region
  $region26: #{_lambda_.75} parent=0 // pred_check
    _
  $region27: #{_lambda_.75} parent=0 // pred_check_branch
    %25 = sbr.rel (0) target = $region29
  $region28: #{_lambda_.75} parent=0 // pred_region
    _
  $region29: #{_lambda_.75} parent=0 // pred_fallthru
    _
  %v26 = vld [vmem:[%s0] sm:$0xff]
  %v27 = vld [vmem:[%s0 + $0x8] sm:$0xff]
  %v28 = vld [vmem:[%s0 + $0x10] sm:$0xff]
  %v29 = vld [vmem:[%s0 + $0x18] sm:$0xff]
  %v30 = vld [vmem:[%s0 + $0x20] sm:$0xff]
  %v31 = vld [vmem:[%s0 + $0x28] sm:$0xff]
  %v32 = vld [vmem:[%s0 + $0x30] sm:$0xff]
  %v33 = vld [vmem:[%s0 + $0x38] sm:$0xff]
  %v34 = vld [vmem:[%s0 + $0x40] sm:$0xff]
  %v35 = vld [vmem:[%s0 + $0x48] sm:$0xff]
  %v36 = vld [vmem:[%s0 + $0x50] sm:$0xff]
  %v37 = vld [vmem:[%s0 + $0x58] sm:$0xff]
  %vm38 = vcmp.ge.f32.partialorder %v26, 0.0
  %vm39 = vcmp.ge.f32.partialorder %v27, 0.0
  %vm40 = vcmp.ge.f32.partialorder %v28, 0.0
  %vm41 = vcmp.ge.f32.partialorder %v29, 0.0
  %vm42 = vcmp.ge.f32.partialorder %v30, 0.0
  %vm43 = vcmp.ge.f32.partialorder %v31, 0.0
  %vm44 = vcmp.ge.f32.partialorder %v32, 0.0
  %vm45 = vcmp.ge.f32.partialorder %v33, 0.0
  %vm46 = vcmp.ge.f32.partialorder %v34, 0.0
  %vm47 = vcmp.ge.f32.partialorder %v35, 0.0
  %vm48 = vcmp.ge.f32.partialorder %v36, 0.0
  %vm49 = vcmp.ge.f32.partialorder %v37, 0.0
  %v50 = vmul.f32 %v26, 0.01
  %v51 = vmul.f32 %v27, 0.01
  %v52 = vmul.f32 %v28, 0.01
  %v53 = vmul.f32 %v29, 0.01
  %v54 = vmul.f32 %v30, 0.01
  %v55 = vmul.f32 %v31, 0.01
  %v56 = vmul.f32 %v32, 0.01
  %v57 = vmul.f32 %v33, 0.01
  %v58 = vmul.f32 %v34, 0.01
  %v59 = vmul.f32 %v35, 0.01
  %v60 = vmul.f32 %v36, 0.01
  %v61 = vmul.f32 %v37, 0.01
  %v62 = vsel %vm38, %v26, %v50
  %v63 = vsel %vm39, %v27, %v51
  %v64 = vsel %vm40, %v28, %v52
  %v65 = vsel %vm41, %v29, %v53
  %v66 = vsel %vm42, %v30, %v54
  %v67 = vsel %vm43, %v31, %v55
  %v68 = vsel %vm44, %v32, %v56
  %v69 = vsel %vm45, %v33, %v57
  %v70 = vsel %vm46, %v34, %v58
  %v71 = vsel %vm47, %v35, %v59
  %v72 = vsel %vm48, %v36, %v60
  %v73 = vsel %vm49, %v37, %v61
  %v74 = vld [vmem:[%s1] sm:$0xff]
  %v75 = vld [vmem:[%s1 + $0x8] sm:$0xff]
  %v76 = vld [vmem:[%s1 + $0x10] sm:$0xff]
  %v77 = vld [vmem:[%s1 + $0x18] sm:$0xff]
  %v78 = vld [vmem:[%s2] sm:$0x1]
  %v80 = vlaneseq
  %v81 = vshrl.u32 %v80, 7
  %v82 = vsub.s32 0, %v81
  %v83 = vrot.slane %v78, %v82
  %vm85 = vcmask 261120
  %v87 = vsel %vm85, %v62, 0
  %v90 = vsel %vm85, %v63, 0
  %v93 = vsel %vm85, %v64, 0
  %v96 = vsel %vm85, %v65, 0
  %v99 = vsel %vm85, %v66, 0
  %v102 = vsel %vm85, %v67, 0
  %v105 = vsel %vm85, %v68, 0
  %v108 = vsel %vm85, %v69, 0
  %v111 = vsel %vm85, %v70, 0
  %v114 = vsel %vm85, %v71, 0
  %v117 = vsel %vm85, %v72, 0
  %v120 = vsel %vm85, %v73, 0
  %122 = vmatprep.subr.mxu0 0.0
  %123 = vmatpush1.msra.mxu0 0.0
  %124 = vmatprep.subr.mxu0 0.0
  %125 = vmatpush1.msra.mxu0 0.0
  %126 = vmatprep.subr.mxu0 0.0
  %127 = vmatpush1.msra.mxu0 0.0
  %128 = vmatprep.subr.mxu0 0.0
  %129 = vmatpush1.msra.mxu0 0.0
  %130 = vmatprep.subr.mxu0 0.0
  %131 = vmatpush1.msra.mxu0 0.0
  %132 = vmatprep.subr.mxu0 0.0
  %133 = vmatpush1.msra.mxu0 0.0
  %134 = vmatprep.subr.mxu0 0.0
  %135 = vmatpush1.msra.mxu0 0.0
  %136 = vmatprep.subr.mxu0 0.0
  %137 = vmatpush1.msra.mxu0 0.0
  %138 = vmatprep.subr.mxu0 0.0
  %139 = vmatpush1.msra.mxu0 0.0
  %140 = vmatprep.subr.mxu0 0.0
  %141 = vmatpush1.msra.mxu0 0.0
  %142 = vmatprep.subr.mxu0 0.0
  %143 = vmatpush1.msra.mxu0 0.0
  %144 = vmatprep.subr.mxu0 0.0
  %145 = vmatpush1.msra.mxu0 0.0
  %146 = vmatprep.subr.mxu0 0.0
  %147 = vmatpush1.msra.mxu0 %v77
  %148 = vmatprep.subr.mxu0 0.0
  %149 = vmatpush1.msra.mxu0 %v76
  %150 = vmatprep.subr.mxu0 0.0
  %151 = vmatpush1.msra.mxu0 %v75
  %152 = vmatprep.subr.mxu0 0.0
  %153 = vmatpush1.msra.mxu0 %v74
  %154 = vmatprep.subr.mxu0 0.0
  %155 = vmatpush2.msra.mxu0 0.0
  %156 = vmatprep.subr.mxu0 0.0
  %157 = vmatpush2.msra.mxu0 0.0
  %158 = vmatprep.subr.mxu0 0.0
  %159 = vmatpush2.msra.mxu0 0.0
  %160 = vmatprep.subr.mxu0 0.0
  %161 = vmatpush2.msra.mxu0 0.0
  %162 = vmatprep.subr.mxu0 0.0
  %163 = vmatpush2.msra.mxu0 0.0
  %164 = vmatprep.subr.mxu0 0.0
  %165 = vmatpush2.msra.mxu0 0.0
  %166 = vmatprep.subr.mxu0 0.0
  %167 = vmatpush2.msra.mxu0 0.0
  %168 = vmatprep.subr.mxu0 0.0
  %169 = vmatpush2.msra.mxu0 0.0
  %170 = vmatprep.subr.mxu0 0.0
  %171 = vmatpush2.msra.mxu0 0.0
  %172 = vmatprep.subr.mxu0 0.0
  %173 = vmatpush2.msra.mxu0 0.0
  %174 = vmatprep.subr.mxu0 0.0
  %175 = vmatpush2.msra.mxu0 0.0
  %176 = vmatprep.subr.mxu0 0.0
  %177 = vmatpush2.msra.mxu0 0.0
  %178 = vmatprep.subr.mxu0 0.0
  %179 = vmatpush2.msra.mxu0 0.0
  %180 = vmatprep.subr.mxu0 0.0
  %181 = vmatpush2.msra.mxu0 0.0
  %182 = vmatprep.subr.mxu0 0.0
  %183 = vmatpush2.msra.mxu0 0.0
  %184 = vmatprep.subr.mxu0 0.0
  %185 = vmatpush2.msra.mxu0 0.0
  %186 = vmatprep.mubr.f32.mxu0 0.0
  %187 = vmatmul.mubr.f32.gmra.mxu0 %v87
  %v188 = vpop.f32.mrf.mxu0
  %v189 = vadd.f32 %v83, %v188
  %v190 = vpop.f32.mrf.mxu0
  %191 = vmatprep.mubr.f32.mxu0 0.0
  %192 = vmatmul.mubr.f32.gmra.mxu0 %v90
  %v193 = vpop.f32.mrf.mxu0
  %v194 = vadd.f32 %v83, %v193
  %v195 = vpop.f32.mrf.mxu0
  %196 = vmatprep.mubr.f32.mxu0 0.0
  %197 = vmatmul.mubr.f32.gmra.mxu0 %v93
  %v198 = vpop.f32.mrf.mxu0
  %v199 = vadd.f32 %v83, %v198
  %v200 = vpop.f32.mrf.mxu0
  %201 = vmatprep.mubr.f32.mxu0 0.0
  %202 = vmatmul.mubr.f32.gmra.mxu0 %v96
  %v203 = vpop.f32.mrf.mxu0
  %v204 = vadd.f32 %v83, %v203
  %v205 = vpop.f32.mrf.mxu0
  %206 = vmatprep.mubr.f32.mxu0 0.0
  %207 = vmatmul.mubr.f32.gmra.mxu0 %v99
  %v208 = vpop.f32.mrf.mxu0
  %v209 = vadd.f32 %v83, %v208
  %v210 = vpop.f32.mrf.mxu0
  %211 = vmatprep.mubr.f32.mxu0 0.0
  %212 = vmatmul.mubr.f32.gmra.mxu0 %v102
  %v213 = vpop.f32.mrf.mxu0
  %v214 = vadd.f32 %v83, %v213
  %v215 = vpop.f32.mrf.mxu0
  %216 = vmatprep.mubr.f32.mxu0 0.0
  %217 = vmatmul.mubr.f32.gmra.mxu0 %v105
  %v218 = vpop.f32.mrf.mxu0
  %v219 = vadd.f32 %v83, %v218
  %v220 = vpop.f32.mrf.mxu0
  %221 = vmatprep.mubr.f32.mxu0 0.0
  %222 = vmatmul.mubr.f32.gmra.mxu0 %v108
  %v223 = vpop.f32.mrf.mxu0
  %v224 = vadd.f32 %v83, %v223
  %v225 = vpop.f32.mrf.mxu0
  %226 = vmatprep.mubr.f32.mxu0 0.0
  %227 = vmatmul.mubr.f32.gmra.mxu0 %v111
  %v228 = vpop.f32.mrf.mxu0
  %v229 = vadd.f32 %v83, %v228
  %v230 = vpop.f32.mrf.mxu0
  %231 = vmatprep.mubr.f32.mxu0 0.0
  %232 = vmatmul.mubr.f32.gmra.mxu0 %v114
  %v233 = vpop.f32.mrf.mxu0
  %v234 = vadd.f32 %v83, %v233
  %v235 = vpop.f32.mrf.mxu0
  %236 = vmatprep.mubr.f32.mxu0 0.0
  %237 = vmatmul.mubr.f32.gmra.mxu0 %v117
  %v238 = vpop.f32.mrf.mxu0
  %v239 = vadd.f32 %v83, %v238
  %v240 = vpop.f32.mrf.mxu0
  %241 = vmatprep.mubr.f32.mxu0 0.0
  %242 = vmatmul.mubr.f32.gmra.mxu0 %v120
  %v243 = vpop.f32.mrf.mxu0
  %v244 = vadd.f32 %v83, %v243
  %v245 = vpop.f32.mrf.mxu0
  %246 = vdwg.mxu0
  %v247 = vmax.f32 %v189, 0.0
  %v248 = vmax.f32 %v194, 0.0
  %v249 = vmax.f32 %v199, 0.0
  %v250 = vmax.f32 %v204, 0.0
  %v251 = vmax.f32 %v209, 0.0
  %v252 = vmax.f32 %v214, 0.0
  %v253 = vmax.f32 %v219, 0.0
  %v254 = vmax.f32 %v224, 0.0
  %v255 = vmax.f32 %v229, 0.0
  %v256 = vmax.f32 %v234, 0.0
  %v257 = vmax.f32 %v239, 0.0
  %v258 = vmax.f32 %v244, 0.0
  %v259 = vld [vmem:[%s3] sm:$0xff]
  %v260 = vld [vmem:[%s3 + $0x8] sm:$0xff]
  %v261 = vld [vmem:[%s3 + $0x10] sm:$0xff]
  %v262 = vld [vmem:[%s3 + $0x18] sm:$0xff]
  %v263 = vld [vmem:[%s4] sm:$0x1]
  %v265 = vlaneseq
  %v266 = vshrl.u32 %v265, 7
  %v267 = vsub.s32 0, %v266
  %v268 = vrot.slane %v263, %v267
  %v271 = vsel %vm85, %v247, 0
  %v274 = vsel %vm85, %v248, 0
  %v277 = vsel %vm85, %v249, 0
  %v280 = vsel %vm85, %v250, 0
  %v283 = vsel %vm85, %v251, 0
  %v286 = vsel %vm85, %v252, 0
  %v289 = vsel %vm85, %v253, 0
  %v292 = vsel %vm85, %v254, 0
  %v295 = vsel %vm85, %v255, 0
  %v298 = vsel %vm85, %v256, 0
  %v301 = vsel %vm85, %v257, 0
  %v304 = vsel %vm85, %v258, 0
  %306 = vmatprep.subr.mxu0 0.0
  %307 = vmatpush1.msra.mxu0 0.0
  %308 = vmatprep.subr.mxu0 0.0
  %309 = vmatpush1.msra.mxu0 0.0
  %310 = vmatprep.subr.mxu0 0.0
  %311 = vmatpush1.msra.mxu0 0.0
  %312 = vmatprep.subr.mxu0 0.0
  %313 = vmatpush1.msra.mxu0 0.0
  %314 = vmatprep.subr.mxu0 0.0
  %315 = vmatpush1.msra.mxu0 0.0
  %316 = vmatprep.subr.mxu0 0.0
  %317 = vmatpush1.msra.mxu0 0.0
  %318 = vmatprep.subr.mxu0 0.0
  %319 = vmatpush1.msra.mxu0 0.0
  %320 = vmatprep.subr.mxu0 0.0
  %321 = vmatpush1.msra.mxu0 0.0
  %322 = vmatprep.subr.mxu0 0.0
  %323 = vmatpush1.msra.mxu0 0.0
  %324 = vmatprep.subr.mxu0 0.0
  %325 = vmatpush1.msra.mxu0 0.0
  %326 = vmatprep.subr.mxu0 0.0
  %327 = vmatpush1.msra.mxu0 0.0
  %328 = vmatprep.subr.mxu0 0.0
  %329 = vmatpush1.msra.mxu0 0.0
  %330 = vmatprep.subr.mxu0 0.0
  %331 = vmatpush1.msra.mxu0 %v262
  %332 = vmatprep.subr.mxu0 0.0
  %333 = vmatpush1.msra.mxu0 %v261
  %334 = vmatprep.subr.mxu0 0.0
  %335 = vmatpush1.msra.mxu0 %v260
  %336 = vmatprep.subr.mxu0 0.0
  %337 = vmatpush1.msra.mxu0 %v259
  %338 = vmatprep.subr.mxu0 0.0
  %339 = vmatpush2.msra.mxu0 0.0
  %340 = vmatprep.subr.mxu0 0.0
  %341 = vmatpush2.msra.mxu0 0.0
  %342 = vmatprep.subr.mxu0 0.0
  %343 = vmatpush2.msra.mxu0 0.0
  %344 = vmatprep.subr.mxu0 0.0
  %345 = vmatpush2.msra.mxu0 0.0
  %346 = vmatprep.subr.mxu0 0.0
  %347 = vmatpush2.msra.mxu0 0.0
  %348 = vmatprep.subr.mxu0 0.0
  %349 = vmatpush2.msra.mxu0 0.0
  %350 = vmatprep.subr.mxu0 0.0
  %351 = vmatpush2.msra.mxu0 0.0
  %352 = vmatprep.subr.mxu0 0.0
  %353 = vmatpush2.msra.mxu0 0.0
  %354 = vmatprep.subr.mxu0 0.0
  %355 = vmatpush2.msra.mxu0 0.0
  %356 = vmatprep.subr.mxu0 0.0
  %357 = vmatpush2.msra.mxu0 0.0
  %358 = vmatprep.subr.mxu0 0.0
  %359 = vmatpush2.msra.mxu0 0.0
  %360 = vmatprep.subr.mxu0 0.0
  %361 = vmatpush2.msra.mxu0 0.0
  %362 = vmatprep.subr.mxu0 0.0
  %363 = vmatpush2.msra.mxu0 0.0
  %364 = vmatprep.subr.mxu0 0.0
  %365 = vmatpush2.msra.mxu0 0.0
  %366 = vmatprep.subr.mxu0 0.0
  %367 = vmatpush2.msra.mxu0 0.0
  %368 = vmatprep.subr.mxu0 0.0
  %369 = vmatpush2.msra.mxu0 0.0
  %370 = vmatprep.mubr.f32.mxu0 0.0
  %371 = vmatmul.mubr.f32.gmra.mxu0 %v271
  %v372 = vpop.f32.mrf.mxu0
  %v373 = vadd.f32 %v268, %v372
  %v374 = vpop.f32.mrf.mxu0
  %375 = vmatprep.mubr.f32.mxu0 0.0
  %376 = vmatmul.mubr.f32.gmra.mxu0 %v274
  %v377 = vpop.f32.mrf.mxu0
  %v378 = vadd.f32 %v268, %v377
  %v379 = vpop.f32.mrf.mxu0
  %380 = vmatprep.mubr.f32.mxu0 0.0
  %381 = vmatmul.mubr.f32.gmra.mxu0 %v277
  %v382 = vpop.f32.mrf.mxu0
  %v383 = vadd.f32 %v268, %v382
  %v384 = vpop.f32.mrf.mxu0
  %385 = vmatprep.mubr.f32.mxu0 0.0
  %386 = vmatmul.mubr.f32.gmra.mxu0 %v280
  %v387 = vpop.f32.mrf.mxu0
  %v388 = vadd.f32 %v268, %v387
  %v389 = vpop.f32.mrf.mxu0
  %390 = vmatprep.mubr.f32.mxu0 0.0
  %391 = vmatmul.mubr.f32.gmra.mxu0 %v283
  %v392 = vpop.f32.mrf.mxu0
  %v393 = vadd.f32 %v268, %v392
  %v394 = vpop.f32.mrf.mxu0
  %395 = vmatprep.mubr.f32.mxu0 0.0
  %396 = vmatmul.mubr.f32.gmra.mxu0 %v286
  %v397 = vpop.f32.mrf.mxu0
  %v398 = vadd.f32 %v268, %v397
  %v399 = vpop.f32.mrf.mxu0
  %400 = vmatprep.mubr.f32.mxu0 0.0
  %401 = vmatmul.mubr.f32.gmra.mxu0 %v289
  %v402 = vpop.f32.mrf.mxu0
  %v403 = vadd.f32 %v268, %v402
  %v404 = vpop.f32.mrf.mxu0
  %405 = vmatprep.mubr.f32.mxu0 0.0
  %406 = vmatmul.mubr.f32.gmra.mxu0 %v292
  %v407 = vpop.f32.mrf.mxu0
  %v408 = vadd.f32 %v268, %v407
  %v409 = vpop.f32.mrf.mxu0
  %410 = vmatprep.mubr.f32.mxu0 0.0
  %411 = vmatmul.mubr.f32.gmra.mxu0 %v295
  %v412 = vpop.f32.mrf.mxu0
  %v413 = vadd.f32 %v268, %v412
  %v414 = vpop.f32.mrf.mxu0
  %415 = vmatprep.mubr.f32.mxu0 0.0
  %416 = vmatmul.mubr.f32.gmra.mxu0 %v298
  %v417 = vpop.f32.mrf.mxu0
  %v418 = vadd.f32 %v268, %v417
  %v419 = vpop.f32.mrf.mxu0
  %420 = vmatprep.mubr.f32.mxu0 0.0
  %421 = vmatmul.mubr.f32.gmra.mxu0 %v301
  %v422 = vpop.f32.mrf.mxu0
  %v423 = vadd.f32 %v268, %v422
  %v424 = vpop.f32.mrf.mxu0
  %425 = vmatprep.mubr.f32.mxu0 0.0
  %426 = vmatmul.mubr.f32.gmra.mxu0 %v304
  %v427 = vpop.f32.mrf.mxu0
  %v428 = vadd.f32 %v268, %v427
  %v429 = vpop.f32.mrf.mxu0
  %430 = vdwg.mxu0
  %v431 = vmax.f32 %v373, 0.0
  %v432 = vmax.f32 %v378, 0.0
  %v433 = vmax.f32 %v383, 0.0
  %v434 = vmax.f32 %v388, 0.0
  %v435 = vmax.f32 %v393, 0.0
  %v436 = vmax.f32 %v398, 0.0
  %v437 = vmax.f32 %v403, 0.0
  %v438 = vmax.f32 %v408, 0.0
  %v439 = vmax.f32 %v413, 0.0
  %v440 = vmax.f32 %v418, 0.0
  %v441 = vmax.f32 %v423, 0.0
  %v442 = vmax.f32 %v428, 0.0
  %v443 = vld [vmem:[%s5] sm:$0xff]
  %v444 = vld [vmem:[%s5 + $0x8] sm:$0xff]
  %v445 = vld [vmem:[%s5 + $0x10] sm:$0xff]
  %v446 = vld [vmem:[%s5 + $0x18] sm:$0xff]
  %v447 = vld [vmem:[%s6] sm:$0x1]
  %v449 = vlaneseq
  %v450 = vshrl.u32 %v449, 7
  %v451 = vsub.s32 0, %v450
  %v452 = vrot.slane %v447, %v451
  %v455 = vsel %vm85, %v431, 0
  %v458 = vsel %vm85, %v432, 0
  %v461 = vsel %vm85, %v433, 0
  %v464 = vsel %vm85, %v434, 0
  %v467 = vsel %vm85, %v435, 0
  %v470 = vsel %vm85, %v436, 0
  %v473 = vsel %vm85, %v437, 0
  %v476 = vsel %vm85, %v438, 0
  %v479 = vsel %vm85, %v439, 0
  %v482 = vsel %vm85, %v440, 0
  %v485 = vsel %vm85, %v441, 0
  %v488 = vsel %vm85, %v442, 0
  %490 = vmatprep.subr.mxu0 0.0
  %491 = vmatpush1.msra.mxu0 0.0
  %492 = vmatprep.subr.mxu0 0.0
  %493 = vmatpush1.msra.mxu0 0.0
  %494 = vmatprep.subr.mxu0 0.0
  %495 = vmatpush1.msra.mxu0 0.0
  %496 = vmatprep.subr.mxu0 0.0
  %497 = vmatpush1.msra.mxu0 0.0
  %498 = vmatprep.subr.mxu0 0.0
  %499 = vmatpush1.msra.mxu0 0.0
  %500 = vmatprep.subr.mxu0 0.0
  %501 = vmatpush1.msra.mxu0 0.0
  %502 = vmatprep.subr.mxu0 0.0
  %503 = vmatpush1.msra.mxu0 0.0
  %504 = vmatprep.subr.mxu0 0.0
  %505 = vmatpush1.msra.mxu0 0.0
  %506 = vmatprep.subr.mxu0 0.0
  %507 = vmatpush1.msra.mxu0 0.0
  %508 = vmatprep.subr.mxu0 0.0
  %509 = vmatpush1.msra.mxu0 0.0
  %510 = vmatprep.subr.mxu0 0.0
  %511 = vmatpush1.msra.mxu0 0.0
  %512 = vmatprep.subr.mxu0 0.0
  %513 = vmatpush1.msra.mxu0 0.0
  %514 = vmatprep.subr.mxu0 0.0
  %515 = vmatpush1.msra.mxu0 %v446
  %516 = vmatprep.subr.mxu0 0.0
  %517 = vmatpush1.msra.mxu0 %v445
  %518 = vmatprep.subr.mxu0 0.0
  %519 = vmatpush1.msra.mxu0 %v444
  %520 = vmatprep.subr.mxu0 0.0
  %521 = vmatpush1.msra.mxu0 %v443
  %522 = vmatprep.subr.mxu0 0.0
  %523 = vmatpush2.msra.mxu0 0.0
  %524 = vmatprep.subr.mxu0 0.0
  %525 = vmatpush2.msra.mxu0 0.0
  %526 = vmatprep.subr.mxu0 0.0
  %527 = vmatpush2.msra.mxu0 0.0
  %528 = vmatprep.subr.mxu0 0.0
  %529 = vmatpush2.msra.mxu0 0.0
  %530 = vmatprep.subr.mxu0 0.0
  %531 = vmatpush2.msra.mxu0 0.0
  %532 = vmatprep.subr.mxu0 0.0
  %533 = vmatpush2.msra.mxu0 0.0
  %534 = vmatprep.subr.mxu0 0.0
  %535 = vmatpush2.msra.mxu0 0.0
  %536 = vmatprep.subr.mxu0 0.0
  %537 = vmatpush2.msra.mxu0 0.0
  %538 = vmatprep.subr.mxu0 0.0
  %539 = vmatpush2.msra.mxu0 0.0
  %540 = vmatprep.subr.mxu0 0.0
  %541 = vmatpush2.msra.mxu0 0.0
  %542 = vmatprep.subr.mxu0 0.0
  %543 = vmatpush2.msra.mxu0 0.0
  %544 = vmatprep.subr.mxu0 0.0
  %545 = vmatpush2.msra.mxu0 0.0
  %546 = vmatprep.subr.mxu0 0.0
  %547 = vmatpush2.msra.mxu0 0.0
  %548 = vmatprep.subr.mxu0 0.0
  %549 = vmatpush2.msra.mxu0 0.0
  %550 = vmatprep.subr.mxu0 0.0
  %551 = vmatpush2.msra.mxu0 0.0
  %552 = vmatprep.subr.mxu0 0.0
  %553 = vmatpush2.msra.mxu0 0.0
  %554 = vmatprep.mubr.f32.mxu0 0.0
  %555 = vmatmul.mubr.f32.gmra.mxu0 %v455
  %v556 = vpop.f32.mrf.mxu0
  %v557 = vadd.f32 %v452, %v556
  %v558 = vpop.f32.mrf.mxu0
  %559 = vmatprep.mubr.f32.mxu0 0.0
  %560 = vmatmul.mubr.f32.gmra.mxu0 %v458
  %v561 = vpop.f32.mrf.mxu0
  %v562 = vadd.f32 %v452, %v561
  %v563 = vpop.f32.mrf.mxu0
  %564 = vmatprep.mubr.f32.mxu0 0.0
  %565 = vmatmul.mubr.f32.gmra.mxu0 %v461
  %v566 = vpop.f32.mrf.mxu0
  %v567 = vadd.f32 %v452, %v566
  %v568 = vpop.f32.mrf.mxu0
  %569 = vmatprep.mubr.f32.mxu0 0.0
  %570 = vmatmul.mubr.f32.gmra.mxu0 %v464
  %v571 = vpop.f32.mrf.mxu0
  %v572 = vadd.f32 %v452, %v571
  %v573 = vpop.f32.mrf.mxu0
  %574 = vmatprep.mubr.f32.mxu0 0.0
  %575 = vmatmul.mubr.f32.gmra.mxu0 %v467
  %v576 = vpop.f32.mrf.mxu0
  %v577 = vadd.f32 %v452, %v576
  %v578 = vpop.f32.mrf.mxu0
  %579 = vmatprep.mubr.f32.mxu0 0.0
  %580 = vmatmul.mubr.f32.gmra.mxu0 %v470
  %v581 = vpop.f32.mrf.mxu0
  %v582 = vadd.f32 %v452, %v581
  %v583 = vpop.f32.mrf.mxu0
  %584 = vmatprep.mubr.f32.mxu0 0.0
  %585 = vmatmul.mubr.f32.gmra.mxu0 %v473
  %v586 = vpop.f32.mrf.mxu0
  %v587 = vadd.f32 %v452, %v586
  %v588 = vpop.f32.mrf.mxu0
  %589 = vmatprep.mubr.f32.mxu0 0.0
  %590 = vmatmul.mubr.f32.gmra.mxu0 %v476
  %v591 = vpop.f32.mrf.mxu0
  %v592 = vadd.f32 %v452, %v591
  %v593 = vpop.f32.mrf.mxu0
  %594 = vmatprep.mubr.f32.mxu0 0.0
  %595 = vmatmul.mubr.f32.gmra.mxu0 %v479
  %v596 = vpop.f32.mrf.mxu0
  %v597 = vadd.f32 %v452, %v596
  %v598 = vpop.f32.mrf.mxu0
  %599 = vmatprep.mubr.f32.mxu0 0.0
  %600 = vmatmul.mubr.f32.gmra.mxu0 %v482
  %v601 = vpop.f32.mrf.mxu0
  %v602 = vadd.f32 %v452, %v601
  %v603 = vpop.f32.mrf.mxu0
  %604 = vmatprep.mubr.f32.mxu0 0.0
  %605 = vmatmul.mubr.f32.gmra.mxu0 %v485
  %v606 = vpop.f32.mrf.mxu0
  %v607 = vadd.f32 %v452, %v606
  %v608 = vpop.f32.mrf.mxu0
  %609 = vmatprep.mubr.f32.mxu0 0.0
  %610 = vmatmul.mubr.f32.gmra.mxu0 %v488
  %v611 = vpop.f32.mrf.mxu0
  %v612 = vadd.f32 %v452, %v611
  %v613 = vpop.f32.mrf.mxu0
  %614 = vdwg.mxu0
  %615 = vst.msk [vmem:[%s7] sm:$0xff] %vm85, %v557
  %616 = vst.msk [vmem:[%s7 + $0x8] sm:$0xff] %vm85, %v562
  %617 = vst.msk [vmem:[%s7 + $0x10] sm:$0xff] %vm85, %v567
  %618 = vst.msk [vmem:[%s7 + $0x18] sm:$0xff] %vm85, %v572
  %619 = vst.msk [vmem:[%s7 + $0x20] sm:$0xff] %vm85, %v577
  %620 = vst.msk [vmem:[%s7 + $0x28] sm:$0xff] %vm85, %v582
  %621 = vst.msk [vmem:[%s7 + $0x30] sm:$0xff] %vm85, %v587
  %622 = vst.msk [vmem:[%s7 + $0x38] sm:$0xff] %vm85, %v592
  %623 = vst.msk [vmem:[%s7 + $0x40] sm:$0xff] %vm85, %v597
  %624 = vst.msk [vmem:[%s7 + $0x48] sm:$0xff] %vm85, %v602
  %625 = vst.msk [vmem:[%s7 + $0x50] sm:$0xff] %vm85, %v607
  %626 = vst.msk [vmem:[%s7 + $0x58] sm:$0xff] %vm85, %v612
  // Predicated region
  $region30: #{_lambda_.75} parent=0 // pred_check
    _
  $region31: #{_lambda_.75} parent=0 // pred_check_branch
    %628 = sbr.rel (0) target = $region33
  $region32: #{_lambda_.75} parent=0 // pred_region
    _
  $region33: #{_lambda_.75} parent=0 // pred_fallthru
    _
  // Predicated region
  $region34: #{_lambda_.75} parent=0 // pred_check
    _
  $region35: #{_lambda_.75} parent=0 // pred_check_branch
    %630 = sbr.rel (0) target = $region37
  $region36: #{_lambda_.75} parent=0 // pred_region
    _
  $region37: #{_lambda_.75} parent=0 // pred_fallthru
    _

// kernel: _lambda_.79
$region0: #{_lambda_.79}
  #allocation0 [shape = 'u32[]', space=smem, size = 0x4, offset = 0x4, fixed_abs, tag = 'smem constant byte address 0x4 - core index']
  #allocation1 [shape = 'u32[144,128]{1,0:T(1,128)}', space=vmem, size = 0x12000, scoped, tag = 'internal scratch']
  %s0 = inlined_call_operand.vmem [shape: f32[96,1], index: 0, kind: input, shape index: {}]
  %s1 = inlined_call_operand.vmem [shape: f32[1,32], index: 1, kind: input, shape index: {}]
  %s2 = inlined_call_operand.vmem [shape: f32[1,32], index: 2, kind: input, shape index: {}]
  %s3 = inlined_call_operand.vmem [shape: f32[96,32], index: 3, kind: output, shape index: {}]
  %s4 = sld [smem:[#allocation0]]
  $region22: #{_lambda_.79} parent=0
    _
  %s6 = ssub.s32 1, %s4
  %s7 = scalar_select 0, %s6, %s4
  // Predicated region
  $region2: #{_lambda_.79} parent=0 // pred_check
    _
  $region3: #{_lambda_.79} parent=0 // pred_check_branch
    %9 = sbr.rel (0) target = $region5
  $region4: #{_lambda_.79} parent=0 // pred_region
    _
  $region5: #{_lambda_.79} parent=0 // pred_fallthru
    _
  // Predicated region
  $region6: #{_lambda_.79} parent=0 // pred_check
    _
  $region7: #{_lambda_.79} parent=0 // pred_check_branch
    %11 = sbr.rel (0) target = $region9
  $region8: #{_lambda_.79} parent=0 // pred_region
    _
  $region9: #{_lambda_.79} parent=0 // pred_fallthru
    _
  // Predicated region
  $region10: #{_lambda_.79} parent=0 // pred_check
    _
  $region11: #{_lambda_.79} parent=0 // pred_check_branch
    %13 = sbr.rel (0) target = $region13
  $region12: #{_lambda_.79} parent=0 // pred_region
    _
  $region13: #{_lambda_.79} parent=0 // pred_fallthru
    _
  %v14 = vld [vmem:[%s0] sm:$0xff]
  %v15 = vld [vmem:[%s0 + $0x8] sm:$0xff]
  %v16 = vld [vmem:[%s0 + $0x10] sm:$0xff]
  %v17 = vld [vmem:[%s0 + $0x18] sm:$0xff]
  %v18 = vld [vmem:[%s0 + $0x20] sm:$0xff]
  %v19 = vld [vmem:[%s0 + $0x28] sm:$0xff]
  %v20 = vld [vmem:[%s0 + $0x30] sm:$0xff]
  %v21 = vld [vmem:[%s0 + $0x38] sm:$0xff]
  %v22 = vld [vmem:[%s0 + $0x40] sm:$0xff]
  %v23 = vld [vmem:[%s0 + $0x48] sm:$0xff]
  %v24 = vld [vmem:[%s0 + $0x50] sm:$0xff]
  %v25 = vld [vmem:[%s0 + $0x58] sm:$0xff]
  %v26 = vld [vmem:[%s1] sm:$0x1]
  %v27 = vld [vmem:[%s2] sm:$0x1]
  %v29 = vlaneseq
  %v30 = vshrl.u32 %v29, 7
  %v31 = vsub.s32 0, %v30
  %v32 = vrot.slane %v27, %v31
  %vm34 = vcmask 7168
  %v36 = vsel %vm34, %v14, 0
  %v39 = vsel %vm34, %v15, 0
  %v42 = vsel %vm34, %v16, 0
  %v45 = vsel %vm34, %v17, 0
  %v48 = vsel %vm34, %v18, 0
  %v51 = vsel %vm34, %v19, 0
  %v54 = vsel %vm34, %v20, 0
  %v57 = vsel %vm34, %v21, 0
  %v60 = vsel %vm34, %v22, 0
  %v63 = vsel %vm34, %v23, 0
  %v66 = vsel %vm34, %v24, 0
  %v69 = vsel %vm34, %v25, 0
  %vm71 = vcmask 1040384
  %v73 = vsel %vm71, %v26, 0
  %75 = vmatprep.subr.mxu0 0.0
  %76 = vmatpush1.msra.mxu0 0.0
  %77 = vmatprep.subr.mxu0 0.0
  %78 = vmatpush1.msra.mxu0 0.0
  %79 = vmatprep.subr.mxu0 0.0
  %80 = vmatpush1.msra.mxu0 0.0
  %81 = vmatprep.subr.mxu0 0.0
  %82 = vmatpush1.msra.mxu0 0.0
  %83 = vmatprep.subr.mxu0 0.0
  %84 = vmatpush1.msra.mxu0 0.0
  %85 = vmatprep.subr.mxu0 0.0
  %86 = vmatpush1.msra.mxu0 0.0
  %87 = vmatprep.subr.mxu0 0.0
  %88 = vmatpush1.msra.mxu0 0.0
  %89 = vmatprep.subr.mxu0 0.0
  %90 = vmatpush1.msra.mxu0 0.0
  %91 = vmatprep.subr.mxu0 0.0
  %92 = vmatpush1.msra.mxu0 0.0
  %93 = vmatprep.subr.mxu0 0.0
  %94 = vmatpush1.msra.mxu0 0.0
  %95 = vmatprep.subr.mxu0 0.0
  %96 = vmatpush1.msra.mxu0 0.0
  %97 = vmatprep.subr.mxu0 0.0
  %98 = vmatpush1.msra.mxu0 0.0
  %99 = vmatprep.subr.mxu0 0.0
  %100 = vmatpush1.msra.mxu0 0.0
  %101 = vmatprep.subr.mxu0 0.0
  %102 = vmatpush1.msra.mxu0 0.0
  %103 = vmatprep.subr.mxu0 0.0
  %104 = vmatpush1.msra.mxu0 0.0
  %105 = vmatprep.subr.mxu0 0.0
  %106 = vmatpush1.msra.mxu0 %v73
  %107 = vmatprep.subr.mxu0 0.0
  %108 = vmatpush2.msra.mxu0 0.0
  %109 = vmatprep.subr.mxu0 0.0
  %110 = vmatpush2.msra.mxu0 0.0
  %111 = vmatprep.subr.mxu0 0.0
  %112 = vmatpush2.msra.mxu0 0.0
  %113 = vmatprep.subr.mxu0 0.0
  %114 = vmatpush2.msra.mxu0 0.0
  %115 = vmatprep.subr.mxu0 0.0
  %116 = vmatpush2.msra.mxu0 0.0
  %117 = vmatprep.subr.mxu0 0.0
  %118 = vmatpush2.msra.mxu0 0.0
  %119 = vmatprep.subr.mxu0 0.0
  %120 = vmatpush2.msra.mxu0 0.0
  %121 = vmatprep.subr.mxu0 0.0
  %122 = vmatpush2.msra.mxu0 0.0
  %123 = vmatprep.subr.mxu0 0.0
  %124 = vmatpush2.msra.mxu0 0.0
  %125 = vmatprep.subr.mxu0 0.0
  %126 = vmatpush2.msra.mxu0 0.0
  %127 = vmatprep.subr.mxu0 0.0
  %128 = vmatpush2.msra.mxu0 0.0
  %129 = vmatprep.subr.mxu0 0.0
  %130 = vmatpush2.msra.mxu0 0.0
  %131 = vmatprep.subr.mxu0 0.0
  %132 = vmatpush2.msra.mxu0 0.0
  %133 = vmatprep.subr.mxu0 0.0
  %134 = vmatpush2.msra.mxu0 0.0
  %135 = vmatprep.subr.mxu0 0.0
  %136 = vmatpush2.msra.mxu0 0.0
  %137 = vmatprep.subr.mxu0 0.0
  %138 = vmatpush2.msra.mxu0 0.0
  %139 = vmatprep.mubr.f32.mxu0 0.0
  %140 = vmatmul.mubr.f32.gmra.mxu0 %v36
  %v141 = vpop.f32.mrf.mxu0
  %v142 = vadd.f32 %v32, %v141
  %v143 = vpop.f32.mrf.mxu0
  %144 = vmatprep.mubr.f32.mxu0 0.0
  %145 = vmatmul.mubr.f32.gmra.mxu0 %v39
  %v146 = vpop.f32.mrf.mxu0
  %v147 = vadd.f32 %v32, %v146
  %v148 = vpop.f32.mrf.mxu0
  %149 = vmatprep.mubr.f32.mxu0 0.0
  %150 = vmatmul.mubr.f32.gmra.mxu0 %v42
  %v151 = vpop.f32.mrf.mxu0
  %v152 = vadd.f32 %v32, %v151
  %v153 = vpop.f32.mrf.mxu0
  %154 = vmatprep.mubr.f32.mxu0 0.0
  %155 = vmatmul.mubr.f32.gmra.mxu0 %v45
  %v156 = vpop.f32.mrf.mxu0
  %v157 = vadd.f32 %v32, %v156
  %v158 = vpop.f32.mrf.mxu0
  %159 = vmatprep.mubr.f32.mxu0 0.0
  %160 = vmatmul.mubr.f32.gmra.mxu0 %v48
  %v161 = vpop.f32.mrf.mxu0
  %v162 = vadd.f32 %v32, %v161
  %v163 = vpop.f32.mrf.mxu0
  %164 = vmatprep.mubr.f32.mxu0 0.0
  %165 = vmatmul.mubr.f32.gmra.mxu0 %v51
  %v166 = vpop.f32.mrf.mxu0
  %v167 = vadd.f32 %v32, %v166
  %v168 = vpop.f32.mrf.mxu0
  %169 = vmatprep.mubr.f32.mxu0 0.0
  %170 = vmatmul.mubr.f32.gmra.mxu0 %v54
  %v171 = vpop.f32.mrf.mxu0
  %v172 = vadd.f32 %v32, %v171
  %v173 = vpop.f32.mrf.mxu0
  %174 = vmatprep.mubr.f32.mxu0 0.0
  %175 = vmatmul.mubr.f32.gmra.mxu0 %v57
  %v176 = vpop.f32.mrf.mxu0
  %v177 = vadd.f32 %v32, %v176
  %v178 = vpop.f32.mrf.mxu0
  %179 = vmatprep.mubr.f32.mxu0 0.0
  %180 = vmatmul.mubr.f32.gmra.mxu0 %v60
  %v181 = vpop.f32.mrf.mxu0
  %v182 = vadd.f32 %v32, %v181
  %v183 = vpop.f32.mrf.mxu0
  %184 = vmatprep.mubr.f32.mxu0 0.0
  %185 = vmatmul.mubr.f32.gmra.mxu0 %v63
  %v186 = vpop.f32.mrf.mxu0
  %v187 = vadd.f32 %v32, %v186
  %v188 = vpop.f32.mrf.mxu0
  %189 = vmatprep.mubr.f32.mxu0 0.0
  %190 = vmatmul.mubr.f32.gmra.mxu0 %v66
  %v191 = vpop.f32.mrf.mxu0
  %v192 = vadd.f32 %v32, %v191
  %v193 = vpop.f32.mrf.mxu0
  %194 = vmatprep.mubr.f32.mxu0 0.0
  %195 = vmatmul.mubr.f32.gmra.mxu0 %v69
  %v196 = vpop.f32.mrf.mxu0
  %v197 = vadd.f32 %v32, %v196
  %v198 = vpop.f32.mrf.mxu0
  %199 = vdwg.mxu0
  %vm200 = vcmask 261120
  %201 = vst.msk [vmem:[%s3] sm:$0xff] %vm200, %v142
  %202 = vst.msk [vmem:[%s3 + $0x8] sm:$0xff] %vm200, %v147
  %203 = vst.msk [vmem:[%s3 + $0x10] sm:$0xff] %vm200, %v152
  %204 = vst.msk [vmem:[%s3 + $0x18] sm:$0xff] %vm200, %v157
  %205 = vst.msk [vmem:[%s3 + $0x20] sm:$0xff] %vm200, %v162
  %206 = vst.msk [vmem:[%s3 + $0x28] sm:$0xff] %vm200, %v167
  %207 = vst.msk [vmem:[%s3 + $0x30] sm:$0xff] %vm200, %v172
  %208 = vst.msk [vmem:[%s3 + $0x38] sm:$0xff] %vm200, %v177
  %209 = vst.msk [vmem:[%s3 + $0x40] sm:$0xff] %vm200, %v182
  %210 = vst.msk [vmem:[%s3 + $0x48] sm:$0xff] %vm200, %v187
  %211 = vst.msk [vmem:[%s3 + $0x50] sm:$0xff] %vm200, %v192
  %212 = vst.msk [vmem:[%s3 + $0x58] sm:$0xff] %vm200, %v197
  // Predicated region
  $region14: #{_lambda_.79} parent=0 // pred_check
    _
  $region15: #{_lambda_.79} parent=0 // pred_check_branch
    %214 = sbr.rel (0) target = $region17
  $region16: #{_lambda_.79} parent=0 // pred_region
    _
  $region17: #{_lambda_.79} parent=0 // pred_fallthru
    _
  // Predicated region
  $region18: #{_lambda_.79} parent=0 // pred_check
    _
  $region19: #{_lambda_.79} parent=0 // pred_check_branch
    %216 = sbr.rel (0) target = $region21
  $region20: #{_lambda_.79} parent=0 // pred_region
    _
  $region21: #{_lambda_.79} parent=0 // pred_fallthru
    _

// kernel: _lambda_.77
$region0: #{_lambda_.77}
  #allocation0 [shape = 'u32[]', space=smem, size = 0x4, offset = 0x4, fixed_abs, tag = 'smem constant byte address 0x4 - core index']
  #allocation1 [shape = 'u32[144,128]{1,0:T(1,128)}', space=vmem, size = 0x12000, scoped, tag = 'internal scratch']
  %s0 = inlined_call_operand.vmem [shape: f32[96,32], index: 0, kind: input, shape index: {}]
  %s1 = inlined_call_operand.vmem [shape: f32[1,32], index: 1, kind: input, shape index: {}]
  %s2 = inlined_call_operand.vmem [shape: f32[1,32], index: 2, kind: input, shape index: {}]
  %s3 = inlined_call_operand.vmem [shape: f32[96,32], index: 3, kind: output, shape index: {}]
  %s4 = sld [smem:[#allocation0]]
  $region22: #{_lambda_.77} parent=0
    _
  %s6 = ssub.s32 1, %s4
  %s7 = scalar_select 0, %s6, %s4
  // Predicated region
  $region2: #{_lambda_.77} parent=0 // pred_check
    _
  $region3: #{_lambda_.77} parent=0 // pred_check_branch
    %9 = sbr.rel (0) target = $region5
  $region4: #{_lambda_.77} parent=0 // pred_region
    _
  $region5: #{_lambda_.77} parent=0 // pred_fallthru
    _
  // Predicated region
  $region6: #{_lambda_.77} parent=0 // pred_check
    _
  $region7: #{_lambda_.77} parent=0 // pred_check_branch
    %11 = sbr.rel (0) target = $region9
  $region8: #{_lambda_.77} parent=0 // pred_region
    _
  $region9: #{_lambda_.77} parent=0 // pred_fallthru
    _
  // Predicated region
  $region10: #{_lambda_.77} parent=0 // pred_check
    _
  $region11: #{_lambda_.77} parent=0 // pred_check_branch
    %13 = sbr.rel (0) target = $region13
  $region12: #{_lambda_.77} parent=0 // pred_region
    _
  $region13: #{_lambda_.77} parent=0 // pred_fallthru
    _
  %v14 = vld [vmem:[%s0] sm:$0xff]
  %v15 = vld [vmem:[%s0 + $0x8] sm:$0xff]
  %v16 = vld [vmem:[%s0 + $0x10] sm:$0xff]
  %v17 = vld [vmem:[%s0 + $0x18] sm:$0xff]
  %v18 = vld [vmem:[%s0 + $0x20] sm:$0xff]
  %v19 = vld [vmem:[%s0 + $0x28] sm:$0xff]
  %v20 = vld [vmem:[%s0 + $0x30] sm:$0xff]
  %v21 = vld [vmem:[%s0 + $0x38] sm:$0xff]
  %v22 = vld [vmem:[%s0 + $0x40] sm:$0xff]
  %v23 = vld [vmem:[%s0 + $0x48] sm:$0xff]
  %v24 = vld [vmem:[%s0 + $0x50] sm:$0xff]
  %v25 = vld [vmem:[%s0 + $0x58] sm:$0xff]
  %v26 = vld [vmem:[%s1] sm:$0x1]
  %v27 = vld [vmem:[%s2] sm:$0x1]
  %vm28 = vcmask 261120
  %v29 = vsel %vm28, %v14, 0.0
  %30 = vadd.xlane.f32.xlu0 %v29
  %v31 = vpop.xlane.xlu0 %30
  %v32 = vsel %vm28, %v15, 0.0
  %33 = vadd.xlane.f32.xlu0 %v32
  %v34 = vpop.xlane.xlu0 %33
  %v35 = vsel %vm28, %v16, 0.0
  %36 = vadd.xlane.f32.xlu0 %v35
  %v37 = vpop.xlane.xlu0 %36
  %v38 = vsel %vm28, %v17, 0.0
  %39 = vadd.xlane.f32.xlu0 %v38
  %v40 = vpop.xlane.xlu0 %39
  %v41 = vsel %vm28, %v18, 0.0
  %42 = vadd.xlane.f32.xlu0 %v41
  %v43 = vpop.xlane.xlu0 %42
  %v44 = vsel %vm28, %v19, 0.0
  %45 = vadd.xlane.f32.xlu0 %v44
  %v46 = vpop.xlane.xlu0 %45
  %v47 = vsel %vm28, %v20, 0.0
  %48 = vadd.xlane.f32.xlu0 %v47
  %v49 = vpop.xlane.xlu0 %48
  %v50 = vsel %vm28, %v21, 0.0
  %51 = vadd.xlane.f32.xlu0 %v50
  %v52 = vpop.xlane.xlu0 %51
  %v53 = vsel %vm28, %v22, 0.0
  %54 = vadd.xlane.f32.xlu0 %v53
  %v55 = vpop.xlane.xlu0 %54
  %v56 = vsel %vm28, %v23, 0.0
  %57 = vadd.xlane.f32.xlu0 %v56
  %v58 = vpop.xlane.xlu0 %57
  %v59 = vsel %vm28, %v24, 0.0
  %60 = vadd.xlane.f32.xlu0 %v59
  %v61 = vpop.xlane.xlu0 %60
  %v62 = vsel %vm28, %v25, 0.0
  %63 = vadd.xlane.f32.xlu0 %v62
  %v64 = vpop.xlane.xlu0 %63
  %v65 = vrcp.pop 32.0
  %v66 = vmul.f32 %v31, %v65
  %v67 = vmul.f32 %v34, %v65
  %v68 = vmul.f32 %v37, %v65
  %v69 = vmul.f32 %v40, %v65
  %v70 = vmul.f32 %v43, %v65
  %v71 = vmul.f32 %v46, %v65
  %v72 = vmul.f32 %v49, %v65
  %v73 = vmul.f32 %v52, %v65
  %v74 = vmul.f32 %v55, %v65
  %v75 = vmul.f32 %v58, %v65
  %v76 = vmul.f32 %v61, %v65
  %v77 = vmul.f32 %v64, %v65
  %v78 = vsub.f32 %v14, %v66
  %v79 = vsub.f32 %v15, %v67
  %v80 = vsub.f32 %v16, %v68
  %v81 = vsub.f32 %v17, %v69
  %v82 = vsub.f32 %v18, %v70
  %v83 = vsub.f32 %v19, %v71
  %v84 = vsub.f32 %v20, %v72
  %v85 = vsub.f32 %v21, %v73
  %v86 = vsub.f32 %v22, %v74
  %v87 = vsub.f32 %v23, %v75
  %v88 = vsub.f32 %v24, %v76
  %v89 = vsub.f32 %v25, %v77
  %v90 = vmul.f32 %v78, %v78
  %v91 = vmul.f32 %v79, %v79
  %v92 = vmul.f32 %v80, %v80
  %v93 = vmul.f32 %v81, %v81
  %v94 = vmul.f32 %v82, %v82
  %v95 = vmul.f32 %v83, %v83
  %v96 = vmul.f32 %v84, %v84
  %v97 = vmul.f32 %v85, %v85
  %v98 = vmul.f32 %v86, %v86
  %v99 = vmul.f32 %v87, %v87
  %v100 = vmul.f32 %v88, %v88
  %v101 = vmul.f32 %v89, %v89
  %v102 = vsel %vm28, %v90, 0.0
  %103 = vadd.xlane.f32.xlu0 %v102
  %v104 = vpop.xlane.xlu0 %103
  %v105 = vsel %vm28, %v91, 0.0
  %106 = vadd.xlane.f32.xlu0 %v105
  %v107 = vpop.xlane.xlu0 %106
  %v108 = vsel %vm28, %v92, 0.0
  %109 = vadd.xlane.f32.xlu0 %v108
  %v110 = vpop.xlane.xlu0 %109
  %v111 = vsel %vm28, %v93, 0.0
  %112 = vadd.xlane.f32.xlu0 %v111
  %v113 = vpop.xlane.xlu0 %112
  %v114 = vsel %vm28, %v94, 0.0
  %115 = vadd.xlane.f32.xlu0 %v114
  %v116 = vpop.xlane.xlu0 %115
  %v117 = vsel %vm28, %v95, 0.0
  %118 = vadd.xlane.f32.xlu0 %v117
  %v119 = vpop.xlane.xlu0 %118
  %v120 = vsel %vm28, %v96, 0.0
  %121 = vadd.xlane.f32.xlu0 %v120
  %v122 = vpop.xlane.xlu0 %121
  %v123 = vsel %vm28, %v97, 0.0
  %124 = vadd.xlane.f32.xlu0 %v123
  %v125 = vpop.xlane.xlu0 %124
  %v126 = vsel %vm28, %v98, 0.0
  %127 = vadd.xlane.f32.xlu0 %v126
  %v128 = vpop.xlane.xlu0 %127
  %v129 = vsel %vm28, %v99, 0.0
  %130 = vadd.xlane.f32.xlu0 %v129
  %v131 = vpop.xlane.xlu0 %130
  %v132 = vsel %vm28, %v100, 0.0
  %133 = vadd.xlane.f32.xlu0 %v132
  %v134 = vpop.xlane.xlu0 %133
  %v135 = vsel %vm28, %v101, 0.0
  %136 = vadd.xlane.f32.xlu0 %v135
  %v137 = vpop.xlane.xlu0 %136
  %v138 = vmul.f32 %v104, %v65
  %v139 = vmul.f32 %v107, %v65
  %v140 = vmul.f32 %v110, %v65
  %v141 = vmul.f32 %v113, %v65
  %v142 = vmul.f32 %v116, %v65
  %v143 = vmul.f32 %v119, %v65
  %v144 = vmul.f32 %v122, %v65
  %v145 = vmul.f32 %v125, %v65
  %v146 = vmul.f32 %v128, %v65
  %v147 = vmul.f32 %v131, %v65
  %v148 = vmul.f32 %v134, %v65
  %v149 = vmul.f32 %v137, %v65
  %v150 = vadd.f32 %v138, 1e-05
  %v151 = vadd.f32 %v139, 1e-05
  %v152 = vadd.f32 %v140, 1e-05
  %v153 = vadd.f32 %v141, 1e-05
  %v154 = vadd.f32 %v142, 1e-05
  %v155 = vadd.f32 %v143, 1e-05
  %v156 = vadd.f32 %v144, 1e-05
  %v157 = vadd.f32 %v145, 1e-05
  %v158 = vadd.f32 %v146, 1e-05
  %v159 = vadd.f32 %v147, 1e-05
  %v160 = vadd.f32 %v148, 1e-05
  %v161 = vadd.f32 %v149, 1e-05
  %v162 = vrsqrt.pop %v150
  %v163 = vrsqrt.pop %v151
  %v164 = vrsqrt.pop %v152
  %v165 = vrsqrt.pop %v153
  %v166 = vrsqrt.pop %v154
  %v167 = vrsqrt.pop %v155
  %v168 = vrsqrt.pop %v156
  %v169 = vrsqrt.pop %v157
  %v170 = vrsqrt.pop %v158
  %v171 = vrsqrt.pop %v159
  %v172 = vrsqrt.pop %v160
  %v173 = vrsqrt.pop %v161
  %v174 = vmul.f32 %v78, %v162
  %v175 = vmul.f32 %v79, %v163
  %v176 = vmul.f32 %v80, %v164
  %v177 = vmul.f32 %v81, %v165
  %v178 = vmul.f32 %v82, %v166
  %v179 = vmul.f32 %v83, %v167
  %v180 = vmul.f32 %v84, %v168
  %v181 = vmul.f32 %v85, %v169
  %v182 = vmul.f32 %v86, %v170
  %v183 = vmul.f32 %v87, %v171
  %v184 = vmul.f32 %v88, %v172
  %v185 = vmul.f32 %v89, %v173
  %v187 = vlaneseq
  %v188 = vshrl.u32 %v187, 7
  %v189 = vsub.s32 0, %v188
  %v190 = vrot.slane %v26, %v189
  %v192 = vmul.f32 %v174, %v190
  %v193 = vmul.f32 %v175, %v190
  %v194 = vmul.f32 %v176, %v190
  %v195 = vmul.f32 %v177, %v190
  %v196 = vmul.f32 %v178, %v190
  %v197 = vmul.f32 %v179, %v190
  %v198 = vmul.f32 %v180, %v190
  %v199 = vmul.f32 %v181, %v190
  %v200 = vmul.f32 %v182, %v190
  %v201 = vmul.f32 %v183, %v190
  %v202 = vmul.f32 %v184, %v190
  %v203 = vmul.f32 %v185, %v190
  %v205 = vlaneseq
  %v206 = vshrl.u32 %v205, 7
  %v207 = vsub.s32 0, %v206
  %v208 = vrot.slane %v27, %v207
  %v210 = vadd.f32 %v192, %v208
  %v211 = vadd.f32 %v193, %v208
  %v212 = vadd.f32 %v194, %v208
  %v213 = vadd.f32 %v195, %v208
  %v214 = vadd.f32 %v196, %v208
  %v215 = vadd.f32 %v197, %v208
  %v216 = vadd.f32 %v198, %v208
  %v217 = vadd.f32 %v199, %v208
  %v218 = vadd.f32 %v200, %v208
  %v219 = vadd.f32 %v201, %v208
  %v220 = vadd.f32 %v202, %v208
  %v221 = vadd.f32 %v203, %v208
  %222 = vst.msk [vmem:[%s3] sm:$0xff] %vm28, %v210
  %223 = vst.msk [vmem:[%s3 + $0x8] sm:$0xff] %vm28, %v211
  %224 = vst.msk [vmem:[%s3 + $0x10] sm:$0xff] %vm28, %v212
  %225 = vst.msk [vmem:[%s3 + $0x18] sm:$0xff] %vm28, %v213
  %226 = vst.msk [vmem:[%s3 + $0x20] sm:$0xff] %vm28, %v214
  %227 = vst.msk [vmem:[%s3 + $0x28] sm:$0xff] %vm28, %v215
  %228 = vst.msk [vmem:[%s3 + $0x30] sm:$0xff] %vm28, %v216
  %229 = vst.msk [vmem:[%s3 + $0x38] sm:$0xff] %vm28, %v217
  %230 = vst.msk [vmem:[%s3 + $0x40] sm:$0xff] %vm28, %v218
  %231 = vst.msk [vmem:[%s3 + $0x48] sm:$0xff] %vm28, %v219
  %232 = vst.msk [vmem:[%s3 + $0x50] sm:$0xff] %vm28, %v220
  %233 = vst.msk [vmem:[%s3 + $0x58] sm:$0xff] %vm28, %v221
  // Predicated region
  $region14: #{_lambda_.77} parent=0 // pred_check
    _
  $region15: #{_lambda_.77} parent=0 // pred_check_branch
    %235 = sbr.rel (0) target = $region17
  $region16: #{_lambda_.77} parent=0 // pred_region
    _
  $region17: #{_lambda_.77} parent=0 // pred_fallthru
    _
  // Predicated region
  $region18: #{_lambda_.77} parent=0 // pred_check
    _
  $region19: #{_lambda_.77} parent=0 // pred_check_branch
    %237 = sbr.rel (0) target = $region21
  $region20: #{_lambda_.77} parent=0 // pred_region
    _
  $region21: #{_lambda_.77} parent=0 // pred_fallthru
    _

// kernel: _lambda_.80
$region0: #{_lambda_.80}
  #allocation0 [shape = 'u32[]', space=smem, size = 0x4, offset = 0x4, fixed_abs, tag = 'smem constant byte address 0x4 - core index']
  #allocation1 [shape = 'u32[144,128]{1,0:T(1,128)}', space=vmem, size = 0x12000, scoped, tag = 'internal scratch']
  %s0 = inlined_call_operand.vmem [shape: f32[96,32], index: 0, kind: input, shape index: {}]
  %s1 = inlined_call_operand.vmem [shape: f32[32,128], index: 1, kind: input, shape index: {}]
  %s2 = inlined_call_operand.vmem [shape: f32[1,128], index: 2, kind: input, shape index: {}]
  %s3 = inlined_call_operand.vmem [shape: f32[96,128], index: 3, kind: output, shape index: {}]
  %s4 = sld [smem:[#allocation0]]
  $region22: #{_lambda_.80} parent=0
    _
  %s6 = ssub.s32 1, %s4
  %s7 = scalar_select 0, %s6, %s4
  // Predicated region
  $region2: #{_lambda_.80} parent=0 // pred_check
    _
  $region3: #{_lambda_.80} parent=0 // pred_check_branch
    %9 = sbr.rel (0) target = $region5
  $region4: #{_lambda_.80} parent=0 // pred_region
    _
  $region5: #{_lambda_.80} parent=0 // pred_fallthru
    _
  // Predicated region
  $region6: #{_lambda_.80} parent=0 // pred_check
    _
  $region7: #{_lambda_.80} parent=0 // pred_check_branch
    %11 = sbr.rel (0) target = $region9
  $region8: #{_lambda_.80} parent=0 // pred_region
    _
  $region9: #{_lambda_.80} parent=0 // pred_fallthru
    _
  // Predicated region
  $region10: #{_lambda_.80} parent=0 // pred_check
    _
  $region11: #{_lambda_.80} parent=0 // pred_check_branch
    %13 = sbr.rel (0) target = $region13
  $region12: #{_lambda_.80} parent=0 // pred_region
    _
  $region13: #{_lambda_.80} parent=0 // pred_fallthru
    _
  %v14 = vld [vmem:[%s0] sm:$0xff]
  %v15 = vld [vmem:[%s0 + $0x8] sm:$0xff]
  %v16 = vld [vmem:[%s0 + $0x10] sm:$0xff]
  %v17 = vld [vmem:[%s0 + $0x18] sm:$0xff]
  %v18 = vld [vmem:[%s0 + $0x20] sm:$0xff]
  %v19 = vld [vmem:[%s0 + $0x28] sm:$0xff]
  %v20 = vld [vmem:[%s0 + $0x30] sm:$0xff]
  %v21 = vld [vmem:[%s0 + $0x38] sm:$0xff]
  %v22 = vld [vmem:[%s0 + $0x40] sm:$0xff]
  %v23 = vld [vmem:[%s0 + $0x48] sm:$0xff]
  %v24 = vld [vmem:[%s0 + $0x50] sm:$0xff]
  %v25 = vld [vmem:[%s0 + $0x58] sm:$0xff]
  %v26 = vld [vmem:[%s1] sm:$0xff]
  %v27 = vld [vmem:[%s1 + $0x8] sm:$0xff]
  %v28 = vld [vmem:[%s1 + $0x10] sm:$0xff]
  %v29 = vld [vmem:[%s1 + $0x18] sm:$0xff]
  %v30 = vld [vmem:[%s2] sm:$0x1]
  %v32 = vlaneseq
  %v33 = vshrl.u32 %v32, 7
  %v34 = vsub.s32 0, %v33
  %v35 = vrot.slane %v30, %v34
  %vm37 = vcmask 261120
  %v39 = vsel %vm37, %v14, 0
  %v42 = vsel %vm37, %v15, 0
  %v45 = vsel %vm37, %v16, 0
  %v48 = vsel %vm37, %v17, 0
  %v51 = vsel %vm37, %v18, 0
  %v54 = vsel %vm37, %v19, 0
  %v57 = vsel %vm37, %v20, 0
  %v60 = vsel %vm37, %v21, 0
  %v63 = vsel %vm37, %v22, 0
  %v66 = vsel %vm37, %v23, 0
  %v69 = vsel %vm37, %v24, 0
  %v72 = vsel %vm37, %v25, 0
  %74 = vmatprep.subr.mxu0 0.0
  %75 = vmatpush1.msra.mxu0 0.0
  %76 = vmatprep.subr.mxu0 0.0
  %77 = vmatpush1.msra.mxu0 0.0
  %78 = vmatprep.subr.mxu0 0.0
  %79 = vmatpush1.msra.mxu0 0.0
  %80 = vmatprep.subr.mxu0 0.0
  %81 = vmatpush1.msra.mxu0 0.0
  %82 = vmatprep.subr.mxu0 0.0
  %83 = vmatpush1.msra.mxu0 0.0
  %84 = vmatprep.subr.mxu0 0.0
  %85 = vmatpush1.msra.mxu0 0.0
  %86 = vmatprep.subr.mxu0 0.0
  %87 = vmatpush1.msra.mxu0 0.0
  %88 = vmatprep.subr.mxu0 0.0
  %89 = vmatpush1.msra.mxu0 0.0
  %90 = vmatprep.subr.mxu0 0.0
  %91 = vmatpush1.msra.mxu0 0.0
  %92 = vmatprep.subr.mxu0 0.0
  %93 = vmatpush1.msra.mxu0 0.0
  %94 = vmatprep.subr.mxu0 0.0
  %95 = vmatpush1.msra.mxu0 0.0
  %96 = vmatprep.subr.mxu0 0.0
  %97 = vmatpush1.msra.mxu0 0.0
  %98 = vmatprep.subr.mxu0 0.0
  %99 = vmatpush1.msra.mxu0 %v29
  %100 = vmatprep.subr.mxu0 0.0
  %101 = vmatpush1.msra.mxu0 %v28
  %102 = vmatprep.subr.mxu0 0.0
  %103 = vmatpush1.msra.mxu0 %v27
  %104 = vmatprep.subr.mxu0 0.0
  %105 = vmatpush1.msra.mxu0 %v26
  %106 = vmatprep.subr.mxu0 0.0
  %107 = vmatpush2.msra.mxu0 0.0
  %108 = vmatprep.subr.mxu0 0.0
  %109 = vmatpush2.msra.mxu0 0.0
  %110 = vmatprep.subr.mxu0 0.0
  %111 = vmatpush2.msra.mxu0 0.0
  %112 = vmatprep.subr.mxu0 0.0
  %113 = vmatpush2.msra.mxu0 0.0
  %114 = vmatprep.subr.mxu0 0.0
  %115 = vmatpush2.msra.mxu0 0.0
  %116 = vmatprep.subr.mxu0 0.0
  %117 = vmatpush2.msra.mxu0 0.0
  %118 = vmatprep.subr.mxu0 0.0
  %119 = vmatpush2.msra.mxu0 0.0
  %120 = vmatprep.subr.mxu0 0.0
  %121 = vmatpush2.msra.mxu0 0.0
  %122 = vmatprep.subr.mxu0 0.0
  %123 = vmatpush2.msra.mxu0 0.0
  %124 = vmatprep.subr.mxu0 0.0
  %125 = vmatpush2.msra.mxu0 0.0
  %126 = vmatprep.subr.mxu0 0.0
  %127 = vmatpush2.msra.mxu0 0.0
  %128 = vmatprep.subr.mxu0 0.0
  %129 = vmatpush2.msra.mxu0 0.0
  %130 = vmatprep.subr.mxu0 0.0
  %131 = vmatpush2.msra.mxu0 0.0
  %132 = vmatprep.subr.mxu0 0.0
  %133 = vmatpush2.msra.mxu0 0.0
  %134 = vmatprep.subr.mxu0 0.0
  %135 = vmatpush2.msra.mxu0 0.0
  %136 = vmatprep.subr.mxu0 0.0
  %137 = vmatpush2.msra.mxu0 0.0
  %138 = vmatprep.mubr.f32.mxu0 0.0
  %139 = vmatmul.mubr.f32.gmra.mxu0 %v39
  %v140 = vpop.f32.mrf.mxu0
  %v141 = vadd.f32 %v35, %v140
  %v142 = vpop.f32.mrf.mxu0
  %143 = vmatprep.mubr.f32.mxu0 0.0
  %144 = vmatmul.mubr.f32.gmra.mxu0 %v42
  %v145 = vpop.f32.mrf.mxu0
  %v146 = vadd.f32 %v35, %v145
  %v147 = vpop.f32.mrf.mxu0
  %148 = vmatprep.mubr.f32.mxu0 0.0
  %149 = vmatmul.mubr.f32.gmra.mxu0 %v45
  %v150 = vpop.f32.mrf.mxu0
  %v151 = vadd.f32 %v35, %v150
  %v152 = vpop.f32.mrf.mxu0
  %153 = vmatprep.mubr.f32.mxu0 0.0
  %154 = vmatmul.mubr.f32.gmra.mxu0 %v48
  %v155 = vpop.f32.mrf.mxu0
  %v156 = vadd.f32 %v35, %v155
  %v157 = vpop.f32.mrf.mxu0
  %158 = vmatprep.mubr.f32.mxu0 0.0
  %159 = vmatmul.mubr.f32.gmra.mxu0 %v51
  %v160 = vpop.f32.mrf.mxu0
  %v161 = vadd.f32 %v35, %v160
  %v162 = vpop.f32.mrf.mxu0
  %163 = vmatprep.mubr.f32.mxu0 0.0
  %164 = vmatmul.mubr.f32.gmra.mxu0 %v54
  %v165 = vpop.f32.mrf.mxu0
  %v166 = vadd.f32 %v35, %v165
  %v167 = vpop.f32.mrf.mxu0
  %168 = vmatprep.mubr.f32.mxu0 0.0
  %169 = vmatmul.mubr.f32.gmra.mxu0 %v57
  %v170 = vpop.f32.mrf.mxu0
  %v171 = vadd.f32 %v35, %v170
  %v172 = vpop.f32.mrf.mxu0
  %173 = vmatprep.mubr.f32.mxu0 0.0
  %174 = vmatmul.mubr.f32.gmra.mxu0 %v60
  %v175 = vpop.f32.mrf.mxu0
  %v176 = vadd.f32 %v35, %v175
  %v177 = vpop.f32.mrf.mxu0
  %178 = vmatprep.mubr.f32.mxu0 0.0
  %179 = vmatmul.mubr.f32.gmra.mxu0 %v63
  %v180 = vpop.f32.mrf.mxu0
  %v181 = vadd.f32 %v35, %v180
  %v182 = vpop.f32.mrf.mxu0
  %183 = vmatprep.mubr.f32.mxu0 0.0
  %184 = vmatmul.mubr.f32.gmra.mxu0 %v66
  %v185 = vpop.f32.mrf.mxu0
  %v186 = vadd.f32 %v35, %v185
  %v187 = vpop.f32.mrf.mxu0
  %188 = vmatprep.mubr.f32.mxu0 0.0
  %189 = vmatmul.mubr.f32.gmra.mxu0 %v69
  %v190 = vpop.f32.mrf.mxu0
  %v191 = vadd.f32 %v35, %v190
  %v192 = vpop.f32.mrf.mxu0
  %193 = vmatprep.mubr.f32.mxu0 0.0
  %194 = vmatmul.mubr.f32.gmra.mxu0 %v72
  %v195 = vpop.f32.mrf.mxu0
  %v196 = vadd.f32 %v35, %v195
  %v197 = vpop.f32.mrf.mxu0
  %198 = vdwg.mxu0
  %199 = vst [vmem:[%s3] sm:$0xff] %v141
  %200 = vst [vmem:[%s3 + $0x8] sm:$0xff] %v146
  %201 = vst [vmem:[%s3 + $0x10] sm:$0xff] %v151
  %202 = vst [vmem:[%s3 + $0x18] sm:$0xff] %v156
  %203 = vst [vmem:[%s3 + $0x20] sm:$0xff] %v161
  %204 = vst [vmem:[%s3 + $0x28] sm:$0xff] %v166
  %205 = vst [vmem:[%s3 + $0x30] sm:$0xff] %v171
  %206 = vst [vmem:[%s3 + $0x38] sm:$0xff] %v176
  %207 = vst [vmem:[%s3 + $0x40] sm:$0xff] %v181
  %208 = vst [vmem:[%s3 + $0x48] sm:$0xff] %v186
  %209 = vst [vmem:[%s3 + $0x50] sm:$0xff] %v191
  %210 = vst [vmem:[%s3 + $0x58] sm:$0xff] %v196
  // Predicated region
  $region14: #{_lambda_.80} parent=0 // pred_check
    _
  $region15: #{_lambda_.80} parent=0 // pred_check_branch
    %212 = sbr.rel (0) target = $region17
  $region16: #{_lambda_.80} parent=0 // pred_region
    _
  $region17: #{_lambda_.80} parent=0 // pred_fallthru
    _
  // Predicated region
  $region18: #{_lambda_.80} parent=0 // pred_check
    _
  $region19: #{_lambda_.80} parent=0 // pred_check_branch
    %214 = sbr.rel (0) target = $region21
  $region20: #{_lambda_.80} parent=0 // pred_region
    _
  $region21: #{_lambda_.80} parent=0 // pred_fallthru
    _

// kernel: _lambda_.78
$region0: #{_lambda_.78}
  #allocation0 [shape = 'u32[]', space=smem, size = 0x4, offset = 0x4, fixed_abs, tag = 'smem constant byte address 0x4 - core index']
  #allocation1 [shape = 'u32[144,128]{1,0:T(1,128)}', space=vmem, size = 0x12000, scoped, tag = 'internal scratch']
  %s0 = inlined_call_operand.vmem [shape: f32[4,32], index: 0, kind: input, shape index: {}]
  %s1 = inlined_call_operand.vmem [shape: f32[1,32], index: 1, kind: input, shape index: {}]
  %s2 = inlined_call_operand.vmem [shape: f32[1,32], index: 2, kind: input, shape index: {}]
  %s3 = inlined_call_operand.vmem [shape: f32[4,32], index: 3, kind: output, shape index: {}]
  %s4 = sld [smem:[#allocation0]]
  $region22: #{_lambda_.78} parent=0
    _
  %s6 = ssub.s32 1, %s4
  %s7 = scalar_select 0, %s6, %s4
  // Predicated region
  $region2: #{_lambda_.78} parent=0 // pred_check
    _
  $region3: #{_lambda_.78} parent=0 // pred_check_branch
    %9 = sbr.rel (0) target = $region5
  $region4: #{_lambda_.78} parent=0 // pred_region
    _
  $region5: #{_lambda_.78} parent=0 // pred_fallthru
    _
  // Predicated region
  $region6: #{_lambda_.78} parent=0 // pred_check
    _
  $region7: #{_lambda_.78} parent=0 // pred_check_branch
    %11 = sbr.rel (0) target = $region9
  $region8: #{_lambda_.78} parent=0 // pred_region
    _
  $region9: #{_lambda_.78} parent=0 // pred_fallthru
    _
  // Predicated region
  $region10: #{_lambda_.78} parent=0 // pred_check
    _
  $region11: #{_lambda_.78} parent=0 // pred_check_branch
    %13 = sbr.rel (0) target = $region13
  $region12: #{_lambda_.78} parent=0 // pred_region
    _
  $region13: #{_lambda_.78} parent=0 // pred_fallthru
    _
  %v14 = vld [vmem:[%s0] sm:$0xf]
  %v15 = vld [vmem:[%s1] sm:$0x1]
  %v16 = vld [vmem:[%s2] sm:$0x1]
  %vm17 = vcmask 257024
  %v18 = vsel %vm17, %v14, 0.0
  %19 = vadd.xlane.f32.xlu0 %v18
  %v20 = vpop.xlane.xlu0 %19
  %v21 = vrcp.pop 32.0
  %v22 = vmul.f32 %v20, %v21
  %v23 = vsub.f32 %v14, %v22
  %v24 = vmul.f32 %v23, %v23
  %v25 = vsel %vm17, %v24, 0.0
  %26 = vadd.xlane.f32.xlu0 %v25
  %v27 = vpop.xlane.xlu0 %26
  %v28 = vmul.f32 %v27, %v21
  %v29 = vadd.f32 %v28, 1e-05
  %v30 = vrsqrt.pop %v29
  %v31 = vmul.f32 %v23, %v30
  %v33 = vlaneseq
  %v34 = vshrl.u32 %v33, 7
  %v35 = vsub.s32 0, %v34
  %v36 = vrot.slane %v15, %v35
  %v38 = vmul.f32 %v31, %v36
  %v40 = vlaneseq
  %v41 = vshrl.u32 %v40, 7
  %v42 = vsub.s32 0, %v41
  %v43 = vrot.slane %v16, %v42
  %v45 = vadd.f32 %v38, %v43
  %46 = vst.msk [vmem:[%s3] sm:$0xf] %vm17, %v45
  // Predicated region
  $region14: #{_lambda_.78} parent=0 // pred_check
    _
  $region15: #{_lambda_.78} parent=0 // pred_check_branch
    %48 = sbr.rel (0) target = $region17
  $region16: #{_lambda_.78} parent=0 // pred_region
    _
  $region17: #{_lambda_.78} parent=0 // pred_fallthru
    _
  // Predicated region
  $region18: #{_lambda_.78} parent=0 // pred_check
    _
  $region19: #{_lambda_.78} parent=0 // pred_check_branch
    %50 = sbr.rel (0) target = $region21
  $region20: #{_lambda_.78} parent=0 // pred_region
    _
  $region21: #{_lambda_.78} parent=0 // pred_fallthru
    _

// kernel: _lambda_.81
$region0: #{_lambda_.81}
  #allocation0 [shape = 'u32[]', space=smem, size = 0x4, offset = 0x4, fixed_abs, tag = 'smem constant byte address 0x4 - core index']
  #allocation1 [shape = 'u32[144,128]{1,0:T(1,128)}', space=vmem, size = 0x12000, scoped, tag = 'internal scratch']
  %s0 = inlined_call_operand.vmem [shape: f32[8,32], index: 0, kind: input, shape index: {}]
  %s1 = inlined_call_operand.vmem [shape: f32[32,32], index: 1, kind: input, shape index: {}]
  %s2 = inlined_call_operand.vmem [shape: f32[1,32], index: 2, kind: input, shape index: {}]
  %s3 = inlined_call_operand.vmem [shape: f32[8,32], index: 3, kind: output, shape index: {}]
  %s4 = sld [smem:[#allocation0]]
  $region22: #{_lambda_.81} parent=0
    _
  %s6 = ssub.s32 1, %s4
  %s7 = scalar_select 0, %s6, %s4
  // Predicated region
  $region2: #{_lambda_.81} parent=0 // pred_check
    _
  $region3: #{_lambda_.81} parent=0 // pred_check_branch
    %9 = sbr.rel (0) target = $region5
  $region4: #{_lambda_.81} parent=0 // pred_region
    _
  $region5: #{_lambda_.81} parent=0 // pred_fallthru
    _
  // Predicated region
  $region6: #{_lambda_.81} parent=0 // pred_check
    _
  $region7: #{_lambda_.81} parent=0 // pred_check_branch
    %11 = sbr.rel (0) target = $region9
  $region8: #{_lambda_.81} parent=0 // pred_region
    _
  $region9: #{_lambda_.81} parent=0 // pred_fallthru
    _
  // Predicated region
  $region10: #{_lambda_.81} parent=0 // pred_check
    _
  $region11: #{_lambda_.81} parent=0 // pred_check_branch
    %13 = sbr.rel (0) target = $region13
  $region12: #{_lambda_.81} parent=0 // pred_region
    _
  $region13: #{_lambda_.81} parent=0 // pred_fallthru
    _
  %v14 = vld [vmem:[%s0] sm:$0xff]
  %v15 = vld [vmem:[%s1] sm:$0xff]
  %v16 = vld [vmem:[%s1 + $0x8] sm:$0xff]
  %v17 = vld [vmem:[%s1 + $0x10] sm:$0xff]
  %v18 = vld [vmem:[%s1 + $0x18] sm:$0xff]
  %v19 = vld [vmem:[%s2] sm:$0x1]
  %v21 = vlaneseq
  %v22 = vshrl.u32 %v21, 7
  %v23 = vsub.s32 0, %v22
  %v24 = vrot.slane %v19, %v23
  %vm26 = vcmask 261120
  %v28 = vsel %vm26, %v14, 0
  %30 = vmatprep.subr.mxu0 0.0
  %31 = vmatpush1.msra.mxu0 0.0
  %32 = vmatprep.subr.mxu0 0.0
  %33 = vmatpush1.msra.mxu0 0.0
  %34 = vmatprep.subr.mxu0 0.0
  %35 = vmatpush1.msra.mxu0 0.0
  %36 = vmatprep.subr.mxu0 0.0
  %37 = vmatpush1.msra.mxu0 0.0
  %38 = vmatprep.subr.mxu0 0.0
  %39 = vmatpush1.msra.mxu0 0.0
  %40 = vmatprep.subr.mxu0 0.0
  %41 = vmatpush1.msra.mxu0 0.0
  %42 = vmatprep.subr.mxu0 0.0
  %43 = vmatpush1.msra.mxu0 0.0
  %44 = vmatprep.subr.mxu0 0.0
  %45 = vmatpush1.msra.mxu0 0.0
  %46 = vmatprep.subr.mxu0 0.0
  %47 = vmatpush1.msra.mxu0 0.0
  %48 = vmatprep.subr.mxu0 0.0
  %49 = vmatpush1.msra.mxu0 0.0
  %50 = vmatprep.subr.mxu0 0.0
  %51 = vmatpush1.msra.mxu0 0.0
  %52 = vmatprep.subr.mxu0 0.0
  %53 = vmatpush1.msra.mxu0 0.0
  %54 = vmatprep.subr.mxu0 0.0
  %55 = vmatpush1.msra.mxu0 %v18
  %56 = vmatprep.subr.mxu0 0.0
  %57 = vmatpush1.msra.mxu0 %v17
  %58 = vmatprep.subr.mxu0 0.0
  %59 = vmatpush1.msra.mxu0 %v16
  %60 = vmatprep.subr.mxu0 0.0
  %61 = vmatpush1.msra.mxu0 %v15
  %62 = vmatprep.subr.mxu0 0.0
  %63 = vmatpush2.msra.mxu0 0.0
  %64 = vmatprep.subr.mxu0 0.0
  %65 = vmatpush2.msra.mxu0 0.0
  %66 = vmatprep.subr.mxu0 0.0
  %67 = vmatpush2.msra.mxu0 0.0
  %68 = vmatprep.subr.mxu0 0.0
  %69 = vmatpush2.msra.mxu0 0.0
  %70 = vmatprep.subr.mxu0 0.0
  %71 = vmatpush2.msra.mxu0 0.0
  %72 = vmatprep.subr.mxu0 0.0
  %73 = vmatpush2.msra.mxu0 0.0
  %74 = vmatprep.subr.mxu0 0.0
  %75 = vmatpush2.msra.mxu0 0.0
  %76 = vmatprep.subr.mxu0 0.0
  %77 = vmatpush2.msra.mxu0 0.0
  %78 = vmatprep.subr.mxu0 0.0
  %79 = vmatpush2.msra.mxu0 0.0
  %80 = vmatprep.subr.mxu0 0.0
  %81 = vmatpush2.msra.mxu0 0.0
  %82 = vmatprep.subr.mxu0 0.0
  %83 = vmatpush2.msra.mxu0 0.0
  %84 = vmatprep.subr.mxu0 0.0
  %85 = vmatpush2.msra.mxu0 0.0
  %86 = vmatprep.subr.mxu0 0.0
  %87 = vmatpush2.msra.mxu0 0.0
  %88 = vmatprep.subr.mxu0 0.0
  %89 = vmatpush2.msra.mxu0 0.0
  %90 = vmatprep.subr.mxu0 0.0
  %91 = vmatpush2.msra.mxu0 0.0
  %92 = vmatprep.subr.mxu0 0.0
  %93 = vmatpush2.msra.mxu0 0.0
  %94 = vmatprep.mubr.f32.mxu0 0.0
  %95 = vmatmul.mubr.f32.gmra.mxu0 %v28
  %v96 = vpop.f32.mrf.mxu0
  %v97 = vadd.f32 %v24, %v96
  %v98 = vpop.f32.mrf.mxu0
  %99 = vdwg.mxu0
  %100 = vst.msk [vmem:[%s3] sm:$0xff] %vm26, %v97
  // Predicated region
  $region14: #{_lambda_.81} parent=0 // pred_check
    _
  $region15: #{_lambda_.81} parent=0 // pred_check_branch
    %102 = sbr.rel (0) target = $region17
  $region16: #{_lambda_.81} parent=0 // pred_region
    _
  $region17: #{_lambda_.81} parent=0 // pred_fallthru
    _
  // Predicated region
  $region18: #{_lambda_.81} parent=0 // pred_check
    _
  $region19: #{_lambda_.81} parent=0 // pred_check_branch
    %104 = sbr.rel (0) target = $region21
  $region20: #{_lambda_.81} parent=0 // pred_region
    _
  $region21: #{_lambda_.81} parent=0 // pred_fallthru
    _

// kernel: _lambda_.73
$region0: #{_lambda_.73}
  #allocation0 [shape = 'u32[]', space=smem, size = 0x4, offset = 0x4, fixed_abs, tag = 'smem constant byte address 0x4 - core index']
  #allocation1 [shape = 'u32[144,128]{1,0:T(1,128)}', space=vmem, size = 0x12000, scoped, tag = 'internal scratch']
  %s0 = inlined_call_operand.vmem [shape: f32[4,32], index: 0, kind: input, shape index: {}]
  %s1 = inlined_call_operand.vmem [shape: f32[32,32], index: 1, kind: input, shape index: {}]
  %s2 = inlined_call_operand.vmem [shape: f32[1,32], index: 2, kind: input, shape index: {}]
  %s3 = inlined_call_operand.vmem [shape: f32[4,32], index: 3, kind: output, shape index: {}]
  %s4 = sld [smem:[#allocation0]]
  $region22: #{_lambda_.73} parent=0
    _
  %s6 = ssub.s32 1, %s4
  %s7 = scalar_select 0, %s6, %s4
  // Predicated region
  $region2: #{_lambda_.73} parent=0 // pred_check
    _
  $region3: #{_lambda_.73} parent=0 // pred_check_branch
    %9 = sbr.rel (0) target = $region5
  $region4: #{_lambda_.73} parent=0 // pred_region
    _
  $region5: #{_lambda_.73} parent=0 // pred_fallthru
    _
  // Predicated region
  $region6: #{_lambda_.73} parent=0 // pred_check
    _
  $region7: #{_lambda_.73} parent=0 // pred_check_branch
    %11 = sbr.rel (0) target = $region9
  $region8: #{_lambda_.73} parent=0 // pred_region
    _
  $region9: #{_lambda_.73} parent=0 // pred_fallthru
    _
  // Predicated region
  $region10: #{_lambda_.73} parent=0 // pred_check
    _
  $region11: #{_lambda_.73} parent=0 // pred_check_branch
    %13 = sbr.rel (0) target = $region13
  $region12: #{_lambda_.73} parent=0 // pred_region
    _
  $region13: #{_lambda_.73} parent=0 // pred_fallthru
    _
  %v14 = vld [vmem:[%s0] sm:$0xf]
  %v15 = vld [vmem:[%s1] sm:$0xff]
  %v16 = vld [vmem:[%s1 + $0x8] sm:$0xff]
  %v17 = vld [vmem:[%s1 + $0x10] sm:$0xff]
  %v18 = vld [vmem:[%s1 + $0x18] sm:$0xff]
  %v19 = vld [vmem:[%s2] sm:$0x1]
  %v21 = vlaneseq
  %v22 = vshrl.u32 %v21, 7
  %v23 = vsub.s32 0, %v22
  %v24 = vrot.slane %v19, %v23
  %vm26 = vcmask 261120
  %v28 = vsel %vm26, %v14, 0
  %30 = vmatprep.subr.mxu0 0.0
  %31 = vmatpush1.msra.mxu0 0.0
  %32 = vmatprep.subr.mxu0 0.0
  %33 = vmatpush1.msra.mxu0 0.0
  %34 = vmatprep.subr.mxu0 0.0
  %35 = vmatpush1.msra.mxu0 0.0
  %36 = vmatprep.subr.mxu0 0.0
  %37 = vmatpush1.msra.mxu0 0.0
  %38 = vmatprep.subr.mxu0 0.0
  %39 = vmatpush1.msra.mxu0 0.0
  %40 = vmatprep.subr.mxu0 0.0
  %41 = vmatpush1.msra.mxu0 0.0
  %42 = vmatprep.subr.mxu0 0.0
  %43 = vmatpush1.msra.mxu0 0.0
  %44 = vmatprep.subr.mxu0 0.0
  %45 = vmatpush1.msra.mxu0 0.0
  %46 = vmatprep.subr.mxu0 0.0
  %47 = vmatpush1.msra.mxu0 0.0
  %48 = vmatprep.subr.mxu0 0.0
  %49 = vmatpush1.msra.mxu0 0.0
  %50 = vmatprep.subr.mxu0 0.0
  %51 = vmatpush1.msra.mxu0 0.0
  %52 = vmatprep.subr.mxu0 0.0
  %53 = vmatpush1.msra.mxu0 0.0
  %54 = vmatprep.subr.mxu0 0.0
  %55 = vmatpush1.msra.mxu0 %v18
  %56 = vmatprep.subr.mxu0 0.0
  %57 = vmatpush1.msra.mxu0 %v17
  %58 = vmatprep.subr.mxu0 0.0
  %59 = vmatpush1.msra.mxu0 %v16
  %60 = vmatprep.subr.mxu0 0.0
  %61 = vmatpush1.msra.mxu0 %v15
  %62 = vmatprep.subr.mxu0 0.0
  %63 = vmatpush2.msra.mxu0 0.0
  %64 = vmatprep.subr.mxu0 0.0
  %65 = vmatpush2.msra.mxu0 0.0
  %66 = vmatprep.subr.mxu0 0.0
  %67 = vmatpush2.msra.mxu0 0.0
  %68 = vmatprep.subr.mxu0 0.0
  %69 = vmatpush2.msra.mxu0 0.0
  %70 = vmatprep.subr.mxu0 0.0
  %71 = vmatpush2.msra.mxu0 0.0
  %72 = vmatprep.subr.mxu0 0.0
  %73 = vmatpush2.msra.mxu0 0.0
  %74 = vmatprep.subr.mxu0 0.0
  %75 = vmatpush2.msra.mxu0 0.0
  %76 = vmatprep.subr.mxu0 0.0
  %77 = vmatpush2.msra.mxu0 0.0
  %78 = vmatprep.subr.mxu0 0.0
  %79 = vmatpush2.msra.mxu0 0.0
  %80 = vmatprep.subr.mxu0 0.0
  %81 = vmatpush2.msra.mxu0 0.0
  %82 = vmatprep.subr.mxu0 0.0
  %83 = vmatpush2.msra.mxu0 0.0
  %84 = vmatprep.subr.mxu0 0.0
  %85 = vmatpush2.msra.mxu0 0.0
  %86 = vmatprep.subr.mxu0 0.0
  %87 = vmatpush2.msra.mxu0 0.0
  %88 = vmatprep.subr.mxu0 0.0
  %89 = vmatpush2.msra.mxu0 0.0
  %90 = vmatprep.subr.mxu0 0.0
  %91 = vmatpush2.msra.mxu0 0.0
  %92 = vmatprep.subr.mxu0 0.0
  %93 = vmatpush2.msra.mxu0 0.0
  %94 = vmatprep.mubr.f32.mxu0 0.0
  %95 = vmatmul.mubr.f32.gmra.mxu0 %v28
  %v96 = vpop.f32.mrf.mxu0
  %v97 = vadd.f32 %v24, %v96
  %v98 = vpop.f32.mrf.mxu0
  %99 = vdwg.mxu0
  %vm100 = vcmask 257024
  %101 = vst.msk [vmem:[%s3] sm:$0xf] %vm100, %v97
  // Predicated region
  $region14: #{_lambda_.73} parent=0 // pred_check
    _
  $region15: #{_lambda_.73} parent=0 // pred_check_branch
    %103 = sbr.rel (0) target = $region17
  $region16: #{_lambda_.73} parent=0 // pred_region
    _
  $region17: #{_lambda_.73} parent=0 // pred_fallthru
    _
  // Predicated region
  $region18: #{_lambda_.73} parent=0 // pred_check
    _
  $region19: #{_lambda_.73} parent=0 // pred_check_branch
    %105 = sbr.rel (0) target = $region21
  $region20: #{_lambda_.73} parent=0 // pred_region
    _
  $region21: #{_lambda_.73} parent=0 // pred_fallthru
    _

// kernel: _lambda_.71
$region0: #{_lambda_.71}
  #allocation0 [shape = 'u32[]', space=smem, size = 0x4, offset = 0x4, fixed_abs, tag = 'smem constant byte address 0x4 - core index']
  #allocation1 [shape = 'u32[144,128]{1,0:T(1,128)}', space=vmem, size = 0x12000, scoped, tag = 'internal scratch']
  %s0 = inlined_call_operand.vmem [shape: f32[4,6], index: 0, kind: input, shape index: {}]
  %s1 = inlined_call_operand.vmem [shape: f32[6,4], index: 1, kind: input, shape index: {}]
  %s2 = inlined_call_operand.vmem [shape: f32[1,4], index: 2, kind: input, shape index: {}]
  %s3 = inlined_call_operand.vmem [shape: f32[4,4], index: 3, kind: output, shape index: {}]
  %s4 = sld [smem:[#allocation0]]
  $region22: #{_lambda_.71} parent=0
    _
  %s6 = ssub.s32 1, %s4
  %s7 = scalar_select 0, %s6, %s4
  // Predicated region
  $region2: #{_lambda_.71} parent=0 // pred_check
    _
  $region3: #{_lambda_.71} parent=0 // pred_check_branch
    %9 = sbr.rel (0) target = $region5
  $region4: #{_lambda_.71} parent=0 // pred_region
    _
  $region5: #{_lambda_.71} parent=0 // pred_fallthru
    _
  // Predicated region
  $region6: #{_lambda_.71} parent=0 // pred_check
    _
  $region7: #{_lambda_.71} parent=0 // pred_check_branch
    %11 = sbr.rel (0) target = $region9
  $region8: #{_lambda_.71} parent=0 // pred_region
    _
  $region9: #{_lambda_.71} parent=0 // pred_fallthru
    _
  // Predicated region
  $region10: #{_lambda_.71} parent=0 // pred_check
    _
  $region11: #{_lambda_.71} parent=0 // pred_check_branch
    %13 = sbr.rel (0) target = $region13
  $region12: #{_lambda_.71} parent=0 // pred_region
    _
  $region13: #{_lambda_.71} parent=0 // pred_fallthru
    _
  %v14 = vld [vmem:[%s0] sm:$0xf]
  %v15 = vld [vmem:[%s1] sm:$0x3f]
  %v16 = vld [vmem:[%s2] sm:$0x1]
  %v18 = vlaneseq
  %v19 = vshrl.u32 %v18, 7
  %v20 = vsub.s32 0, %v19
  %v21 = vrot.slane %v16, %v20
  %vm23 = vcmask 48128
  %v25 = vsel %vm23, %v14, 0
  %vm27 = vcmask 1045504
  %v29 = vsel %vm27, %v15, 0
  %31 = vmatprep.subr.mxu0 0.0
  %32 = vmatpush1.msra.mxu0 0.0
  %33 = vmatprep.subr.mxu0 0.0
  %34 = vmatpush1.msra.mxu0 0.0
  %35 = vmatprep.subr.mxu0 0.0
  %36 = vmatpush1.msra.mxu0 0.0
  %37 = vmatprep.subr.mxu0 0.0
  %38 = vmatpush1.msra.mxu0 0.0
  %39 = vmatprep.subr.mxu0 0.0
  %40 = vmatpush1.msra.mxu0 0.0
  %41 = vmatprep.subr.mxu0 0.0
  %42 = vmatpush1.msra.mxu0 0.0
  %43 = vmatprep.subr.mxu0 0.0
  %44 = vmatpush1.msra.mxu0 0.0
  %45 = vmatprep.subr.mxu0 0.0
  %46 = vmatpush1.msra.mxu0 0.0
  %47 = vmatprep.subr.mxu0 0.0
  %48 = vmatpush1.msra.mxu0 0.0
  %49 = vmatprep.subr.mxu0 0.0
  %50 = vmatpush1.msra.mxu0 0.0
  %51 = vmatprep.subr.mxu0 0.0
  %52 = vmatpush1.msra.mxu0 0.0
  %53 = vmatprep.subr.mxu0 0.0
  %54 = vmatpush1.msra.mxu0 0.0
  %55 = vmatprep.subr.mxu0 0.0
  %56 = vmatpush1.msra.mxu0 0.0
  %57 = vmatprep.subr.mxu0 0.0
  %58 = vmatpush1.msra.mxu0 0.0
  %59 = vmatprep.subr.mxu0 0.0
  %60 = vmatpush1.msra.mxu0 0.0
  %61 = vmatprep.subr.mxu0 0.0
  %62 = vmatpush1.msra.mxu0 %v29
  %63 = vmatprep.subr.mxu0 0.0
  %64 = vmatpush2.msra.mxu0 0.0
  %65 = vmatprep.subr.mxu0 0.0
  %66 = vmatpush2.msra.mxu0 0.0
  %67 = vmatprep.subr.mxu0 0.0
  %68 = vmatpush2.msra.mxu0 0.0
  %69 = vmatprep.subr.mxu0 0.0
  %70 = vmatpush2.msra.mxu0 0.0
  %71 = vmatprep.subr.mxu0 0.0
  %72 = vmatpush2.msra.mxu0 0.0
  %73 = vmatprep.subr.mxu0 0.0
  %74 = vmatpush2.msra.mxu0 0.0
  %75 = vmatprep.subr.mxu0 0.0
  %76 = vmatpush2.msra.mxu0 0.0
  %77 = vmatprep.subr.mxu0 0.0
  %78 = vmatpush2.msra.mxu0 0.0
  %79 = vmatprep.subr.mxu0 0.0
  %80 = vmatpush2.msra.mxu0 0.0
  %81 = vmatprep.subr.mxu0 0.0
  %82 = vmatpush2.msra.mxu0 0.0
  %83 = vmatprep.subr.mxu0 0.0
  %84 = vmatpush2.msra.mxu0 0.0
  %85 = vmatprep.subr.mxu0 0.0
  %86 = vmatpush2.msra.mxu0 0.0
  %87 = vmatprep.subr.mxu0 0.0
  %88 = vmatpush2.msra.mxu0 0.0
  %89 = vmatprep.subr.mxu0 0.0
  %90 = vmatpush2.msra.mxu0 0.0
  %91 = vmatprep.subr.mxu0 0.0
  %92 = vmatpush2.msra.mxu0 0.0
  %93 = vmatprep.subr.mxu0 0.0
  %94 = vmatpush2.msra.mxu0 0.0
  %95 = vmatprep.mubr.f32.mxu0 0.0
  %96 = vmatmul.mubr.f32.gmra.mxu0 %v25
  %v97 = vpop.f32.mrf.mxu0
  %v98 = vadd.f32 %v21, %v97
  %v99 = vpop.f32.mrf.mxu0
  %100 = vdwg.mxu0
  %vm101 = vcmask 27648
  %102 = vst.msk [vmem:[%s3] sm:$0xf] %vm101, %v98
  // Predicated region
  $region14: #{_lambda_.71} parent=0 // pred_check
    _
  $region15: #{_lambda_.71} parent=0 // pred_check_branch
    %104 = sbr.rel (0) target = $region17
  $region16: #{_lambda_.71} parent=0 // pred_region
    _
  $region17: #{_lambda_.71} parent=0 // pred_fallthru
    _
  // Predicated region
  $region18: #{_lambda_.71} parent=0 // pred_check
    _
  $region19: #{_lambda_.71} parent=0 // pred_check_branch
    %106 = sbr.rel (0) target = $region21
  $region20: #{_lambda_.71} parent=0 // pred_region
    _
  $region21: #{_lambda_.71} parent=0 // pred_fallthru
    _

// kernel: _lambda_.82
$region0: #{_lambda_.82}
  #allocation0 [shape = 'u32[]', space=smem, size = 0x4, offset = 0x4, fixed_abs, tag = 'smem constant byte address 0x4 - core index']
  #allocation1 [shape = 'u32[144,128]{1,0:T(1,128)}', space=vmem, size = 0x12000, scoped, tag = 'internal scratch']
  %s0 = inlined_call_operand.vmem [shape: f32[2,4,1,32], index: 0, kind: input, shape index: {}]
  %s1 = inlined_call_operand.vmem [shape: f32[2,4,12,32], index: 1, kind: input, shape index: {}]
  %s2 = inlined_call_operand.vmem [shape: f32[2,4,12,32], index: 2, kind: input, shape index: {}]
  %s3 = inlined_call_operand.vmem [shape: f32[2,4,1,12], index: 3, kind: input, shape index: {}]
  %s4 = inlined_call_operand.vmem [shape: f32[2,4,1,32], index: 4, kind: input, shape index: {}]
  %s5 = inlined_call_operand.vmem [shape: f32[32,32], index: 5, kind: input, shape index: {}]
  %s6 = inlined_call_operand.vmem [shape: f32[32,32], index: 6, kind: input, shape index: {}]
  %s7 = inlined_call_operand.vmem [shape: f32[1,32], index: 7, kind: input, shape index: {}]
  %s8 = inlined_call_operand.vmem [shape: f32[1,32], index: 8, kind: input, shape index: {}]
  %s9 = inlined_call_operand.vmem [shape: f32[2,4,1,32], index: 9, kind: output, shape index: {0}]
  %s10 = inlined_call_operand.vmem [shape: f32[2,4,1,32], index: 10, kind: output, shape index: {1}]
  %11 = xla_tuple %s9, %s10
  %s12 = sld [smem:[#allocation0]]
  $region77: #{_lambda_.82} parent=0
    _
  %s14 = ssub.s32 1, %s12
  %s15 = scalar_select 0, %s14, %s12
  loop: start=0, step=1, limit=4
  $region2: #{_lambda_.82} parent=0 // loop_pre_header
    _
  $region3: #{_lambda_.82} parent=0 // loop_header
    %s17 = sphi 0, %s21
    %p18 = scmp.ge.s32.totalorder %s17, 4
    %s27 = sphi 0, %s29
    %s30 = sphi 0, %s27
    %s31 = sphi 0, %s30
    %s47 = sphi 0, %s31
    %s53 = sphi 0, %s55
    %s56 = sphi 0, %s53
    %s57 = sphi 0, %s56
    %s73 = sphi 0, %s57
    %s79 = sphi 0, %s81
    %s82 = sphi 0, %s79
    %s83 = sphi 0, %s82
    %s99 = sphi 0, %s83
    %s105 = sphi 0, %s107
    %s108 = sphi 0, %s105
    %s109 = sphi 0, %s108
    %s125 = sphi 0, %s109
    %s131 = sphi 0, %s133
    %s134 = sphi 0, %s131
    %s135 = sphi 0, %s134
    %s151 = sphi 0, %s135
    %s155 = sphi 0, %s155
    %s157 = sphi 0, %s155
    %s158 = sphi 0, %s157
    %s172 = sphi 0, %s158
    %s176 = sphi 0, %s176
    %s178 = sphi 0, %s176
    %s179 = sphi 0, %s178
    %s193 = sphi 0, %s179
    %s197 = sphi 0, %s197
    %s199 = sphi 0, %s197
    %s200 = sphi 0, %s199
    %s214 = sphi 0, %s200
    %s218 = sphi 0, %s218
    %s220 = sphi 0, %s218
    %s221 = sphi 0, %s220
    %s235 = sphi 0, %s221
    %s241 = sphi 0, %s243
    %s244 = sphi 0, %s241
    %s245 = sphi 0, %s244
    %s261 = sphi 0, %s245
    %s267 = sphi 0, %s269
    %s270 = sphi 0, %s267
    %s271 = sphi 0, %s270
    %s287 = sphi 0, %s271
  $region4: #{_lambda_.82} parent=0 // loop_header_branch
    %20 = sbr.rel (%p18) target = $region8
  $region5: #{_lambda_.82} parent=0 // loop_body
    %s22 = ssub.s32 %s17, 1
    %s23 = ssub.s32 %s17, 2
    %s24 = sadd.s32 %s17, 1
    %s25 = ssub.s32 %s17, %s24
    %p26 = scmp.eq.s32.totalorder %s25, 0
    %s28 = sadd.s32 %s27, 1
    %s29 = scalar_select %p26, %s27, %s28
    %p32 = pneg %p26
    %p33 = scmp.eq.s32.totalorder %s17, 1
    %p34 = por %p32, %p33
    %p35 = scmp.ne.s32.totalorder %s27, %s30
    %p36 = scmp.eq.s32.totalorder %s17, 0
    %p37 = por %p35, %p36
    %p38 = scmp.ne.s32.totalorder %s27, %s30
    %p39 = scmp.eq.s32.totalorder %s22, 1
    %p40 = por %p38, %p39
    %p41 = scmp.ne.s32.totalorder %s30, %s31
    %p42 = scmp.eq.s32.totalorder %s22, 0
    %p43 = por %p41, %p42
    %p44 = scmp.ne.s32.totalorder %s30, %s31
    %p45 = scmp.eq.s32.totalorder %s23, 1
    %p46 = por %p44, %p45
    %p48 = scmp.ne.s32.totalorder %s31, %s47
    %p49 = scmp.eq.s32.totalorder %s23, 0
    %p50 = por %p48, %p49
    %s51 = ssub.s32 %s17, %s24
    %p52 = scmp.eq.s32.totalorder %s51, 0
    %s54 = sadd.s32 %s53, 1
    %s55 = scalar_select %p52, %s53, %s54
    %p58 = pneg %p52
    %p59 = scmp.eq.s32.totalorder %s17, 1
    %p60 = por %p58, %p59
    %p61 = scmp.ne.s32.totalorder %s53, %s56
    %p62 = scmp.eq.s32.totalorder %s17, 0
    %p63 = por %p61, %p62
    %p64 = scmp.ne.s32.totalorder %s53, %s56
    %p65 = scmp.eq.s32.totalorder %s22, 1
    %p66 = por %p64, %p65
    %p67 = scmp.ne.s32.totalorder %s56, %s57
    %p68 = scmp.eq.s32.totalorder %s22, 0
    %p69 = por %p67, %p68
    %p70 = scmp.ne.s32.totalorder %s56, %s57
    %p71 = scmp.eq.s32.totalorder %s23, 1
    %p72 = por %p70, %p71
    %p74 = scmp.ne.s32.totalorder %s57, %s73
    %p75 = scmp.eq.s32.totalorder %s23, 0
    %p76 = por %p74, %p75
    %s77 = ssub.s32 %s17, %s24
    %p78 = scmp.eq.s32.totalorder %s77, 0
    %s80 = sadd.s32 %s79, 1
    %s81 = scalar_select %p78, %s79, %s80
    %p84 = pneg %p78
    %p85 = scmp.eq.s32.totalorder %s17, 1
    %p86 = por %p84, %p85
    %p87 = scmp.ne.s32.totalorder %s79, %s82
    %p88 = scmp.eq.s32.totalorder %s17, 0
    %p89 = por %p87, %p88
    %p90 = scmp.ne.s32.totalorder %s79, %s82
    %p91 = scmp.eq.s32.totalorder %s22, 1
    %p92 = por %p90, %p91
    %p93 = scmp.ne.s32.totalorder %s82, %s83
    %p94 = scmp.eq.s32.totalorder %s22, 0
    %p95 = por %p93, %p94
    %p96 = scmp.ne.s32.totalorder %s82, %s83
    %p97 = scmp.eq.s32.totalorder %s23, 1
    %p98 = por %p96, %p97
    %p100 = scmp.ne.s32.totalorder %s83, %s99
    %p101 = scmp.eq.s32.totalorder %s23, 0
    %p102 = por %p100, %p101
    %s103 = ssub.s32 %s17, %s24
    %p104 = scmp.eq.s32.totalorder %s103, 0
    %s106 = sadd.s32 %s105, 1
    %s107 = scalar_select %p104, %s105, %s106
    %p110 = pneg %p104
    %p111 = scmp.eq.s32.totalorder %s17, 1
    %p112 = por %p110, %p111
    %p113 = scmp.ne.s32.totalorder %s105, %s108
    %p114 = scmp.eq.s32.totalorder %s17, 0
    %p115 = por %p113, %p114
    %p116 = scmp.ne.s32.totalorder %s105, %s108
    %p117 = scmp.eq.s32.totalorder %s22, 1
    %p118 = por %p116, %p117
    %p119 = scmp.ne.s32.totalorder %s108, %s109
    %p120 = scmp.eq.s32.totalorder %s22, 0
    %p121 = por %p119, %p120
    %p122 = scmp.ne.s32.totalorder %s108, %s109
    %p123 = scmp.eq.s32.totalorder %s23, 1
    %p124 = por %p122, %p123
    %p126 = scmp.ne.s32.totalorder %s109, %s125
    %p127 = scmp.eq.s32.totalorder %s23, 0
    %p128 = por %p126, %p127
    %s129 = ssub.s32 %s17, %s24
    %p130 = scmp.eq.s32.totalorder %s129, 0
    %s132 = sadd.s32 %s131, 1
    %s133 = scalar_select %p130, %s131, %s132
    %p136 = pneg %p130
    %p137 = scmp.eq.s32.totalorder %s17, 1
    %p138 = por %p136, %p137
    %p139 = scmp.ne.s32.totalorder %s131, %s134
    %p140 = scmp.eq.s32.totalorder %s17, 0
    %p141 = por %p139, %p140
    %p142 = scmp.ne.s32.totalorder %s131, %s134
    %p143 = scmp.eq.s32.totalorder %s22, 1
    %p144 = por %p142, %p143
    %p145 = scmp.ne.s32.totalorder %s134, %s135
    %p146 = scmp.eq.s32.totalorder %s22, 0
    %p147 = por %p145, %p146
    %p148 = scmp.ne.s32.totalorder %s134, %s135
    %p149 = scmp.eq.s32.totalorder %s23, 1
    %p150 = por %p148, %p149
    %p152 = scmp.ne.s32.totalorder %s135, %s151
    %p153 = scmp.eq.s32.totalorder %s23, 0
    %p154 = por %p152, %p153
    %s156 = sadd.s32 %s155, 1
    %p159 = scmp.eq.s32.totalorder %s17, 1
    %p160 = scmp.ne.s32.totalorder %s155, %s157
    %p161 = scmp.eq.s32.totalorder %s17, 0
    %p162 = por %p160, %p161
    %p163 = scmp.ne.s32.totalorder %s155, %s157
    %p164 = scmp.eq.s32.totalorder %s22, 1
    %p165 = por %p163, %p164
    %p166 = scmp.ne.s32.totalorder %s157, %s158
    %p167 = scmp.eq.s32.totalorder %s22, 0
    %p168 = por %p166, %p167
    %p169 = scmp.ne.s32.totalorder %s157, %s158
    %p170 = scmp.eq.s32.totalorder %s23, 1
    %p171 = por %p169, %p170
    %p173 = scmp.ne.s32.totalorder %s158, %s172
    %p174 = scmp.eq.s32.totalorder %s23, 0
    %p175 = por %p173, %p174
    %s177 = sadd.s32 %s176, 1
    %p180 = scmp.eq.s32.totalorder %s17, 1
    %p181 = scmp.ne.s32.totalorder %s176, %s178
    %p182 = scmp.eq.s32.totalorder %s17, 0
    %p183 = por %p181, %p182
    %p184 = scmp.ne.s32.totalorder %s176, %s178
    %p185 = scmp.eq.s32.totalorder %s22, 1
    %p186 = por %p184, %p185
    %p187 = scmp.ne.s32.totalorder %s178, %s179
    %p188 = scmp.eq.s32.totalorder %s22, 0
    %p189 = por %p187, %p188
    %p190 = scmp.ne.s32.totalorder %s178, %s179
    %p191 = scmp.eq.s32.totalorder %s23, 1
    %p192 = por %p190, %p191
    %p194 = scmp.ne.s32.totalorder %s179, %s193
    %p195 = scmp.eq.s32.totalorder %s23, 0
    %p196 = por %p194, %p195
    %s198 = sadd.s32 %s197, 1
    %p201 = scmp.eq.s32.totalorder %s17, 1
    %p202 = scmp.ne.s32.totalorder %s197, %s199
    %p203 = scmp.eq.s32.totalorder %s17, 0
    %p204 = por %p202, %p203
    %p205 = scmp.ne.s32.totalorder %s197, %s199
    %p206 = scmp.eq.s32.totalorder %s22, 1
    %p207 = por %p205, %p206
    %p208 = scmp.ne.s32.totalorder %s199, %s200
    %p209 = scmp.eq.s32.totalorder %s22, 0
    %p210 = por %p208, %p209
    %p211 = scmp.ne.s32.totalorder %s199, %s200
    %p212 = scmp.eq.s32.totalorder %s23, 1
    %p213 = por %p211, %p212
    %p215 = scmp.ne.s32.totalorder %s200, %s214
    %p216 = scmp.eq.s32.totalorder %s23, 0
    %p217 = por %p215, %p216
    %s219 = sadd.s32 %s218, 1
    %p222 = scmp.eq.s32.totalorder %s17, 1
    %p223 = scmp.ne.s32.totalorder %s218, %s220
    %p224 = scmp.eq.s32.totalorder %s17, 0
    %p225 = por %p223, %p224
    %p226 = scmp.ne.s32.totalorder %s218, %s220
    %p227 = scmp.eq.s32.totalorder %s22, 1
    %p228 = por %p226, %p227
    %p229 = scmp.ne.s32.totalorder %s220, %s221
    %p230 = scmp.eq.s32.totalorder %s22, 0
    %p231 = por %p229, %p230
    %p232 = scmp.ne.s32.totalorder %s220, %s221
    %p233 = scmp.eq.s32.totalorder %s23, 1
    %p234 = por %p232, %p233
    %p236 = scmp.ne.s32.totalorder %s221, %s235
    %p237 = scmp.eq.s32.totalorder %s23, 0
    %p238 = por %p236, %p237
    %s239 = ssub.s32 %s17, %s24
    %p240 = scmp.eq.s32.totalorder %s239, 0
    %s242 = sadd.s32 %s241, 1
    %s243 = scalar_select %p240, %s241, %s242
    %p246 = pneg %p240
    %p247 = scmp.eq.s32.totalorder %s17, 1
    %p248 = por %p246, %p247
    %p249 = scmp.ne.s32.totalorder %s241, %s244
    %p250 = scmp.eq.s32.totalorder %s17, 0
    %p251 = por %p249, %p250
    %p252 = scmp.ne.s32.totalorder %s241, %s244
    %p253 = scmp.eq.s32.totalorder %s22, 1
    %p254 = por %p252, %p253
    %p255 = scmp.ne.s32.totalorder %s244, %s245
    %p256 = scmp.eq.s32.totalorder %s22, 0
    %p257 = por %p255, %p256
    %p258 = scmp.ne.s32.totalorder %s244, %s245
    %p259 = scmp.eq.s32.totalorder %s23, 1
    %p260 = por %p258, %p259
    %p262 = scmp.ne.s32.totalorder %s245, %s261
    %p263 = scmp.eq.s32.totalorder %s23, 0
    %p264 = por %p262, %p263
    %s265 = ssub.s32 %s17, %s24
    %p266 = scmp.eq.s32.totalorder %s265, 0
    %s268 = sadd.s32 %s267, 1
    %s269 = scalar_select %p266, %s267, %s268
    %p272 = pneg %p266
    %p273 = scmp.eq.s32.totalorder %s17, 1
    %p274 = por %p272, %p273
    %p275 = scmp.ne.s32.totalorder %s267, %s270
    %p276 = scmp.eq.s32.totalorder %s17, 0
    %p277 = por %p275, %p276
    %p278 = scmp.ne.s32.totalorder %s267, %s270
    %p279 = scmp.eq.s32.totalorder %s22, 1
    %p280 = por %p278, %p279
    %p281 = scmp.ne.s32.totalorder %s270, %s271
    %p282 = scmp.eq.s32.totalorder %s22, 0
    %p283 = por %p281, %p282
    %p284 = scmp.ne.s32.totalorder %s270, %s271
    %p285 = scmp.eq.s32.totalorder %s23, 1
    %p286 = por %p284, %p285
    %p288 = scmp.ne.s32.totalorder %s271, %s287
    %p289 = scmp.eq.s32.totalorder %s23, 0
    %p290 = por %p288, %p289
    %p291 = scmp.le.s32.totalorder 1, %s17
    %p292 = scmp.lt.s32.totalorder %s17, 3
    %p293 = pnand %p291, %p292
    %p294 = pneg %p293
    // Predicated region
    $region9: #{_lambda_.82} parent=5 // pred_check
      _
    $region10: #{_lambda_.82} parent=5 // pred_check_branch
      %296 = sbr.rel (%p293) target = $region12
    $region11: #{_lambda_.82} parent=5 // pred_region
      %s297 = ssub.s32 %s17, 1
      // Predicated region
      $region13: #{_lambda_.82} parent=11 // pred_check
        %p298 = pneg %p168
      $region14: #{_lambda_.82} parent=11 // pred_check_branch
        %300 = sbr.rel (%p298) target = $region16
      $region15: #{_lambda_.82} parent=11 // pred_region
        _
      $region16: #{_lambda_.82} parent=11 // pred_fallthru
        _
      // Predicated region
      $region17: #{_lambda_.82} parent=11 // pred_check
        %p301 = pneg %p189
      $region18: #{_lambda_.82} parent=11 // pred_check_branch
        %303 = sbr.rel (%p301) target = $region20
      $region19: #{_lambda_.82} parent=11 // pred_region
        _
      $region20: #{_lambda_.82} parent=11 // pred_fallthru
        _
      // Predicated region
      $region21: #{_lambda_.82} parent=11 // pred_check
        %p304 = pneg %p210
      $region22: #{_lambda_.82} parent=11 // pred_check_branch
        %306 = sbr.rel (%p304) target = $region24
      $region23: #{_lambda_.82} parent=11 // pred_region
        _
      $region24: #{_lambda_.82} parent=11 // pred_fallthru
        _
      // Predicated region
      $region25: #{_lambda_.82} parent=11 // pred_check
        %p307 = pneg %p231
      $region26: #{_lambda_.82} parent=11 // pred_check_branch
        %309 = sbr.rel (%p307) target = $region28
      $region27: #{_lambda_.82} parent=11 // pred_region
        _
      $region28: #{_lambda_.82} parent=11 // pred_fallthru
        _
    $region12: #{_lambda_.82} parent=5 // pred_fallthru
      _
    %p310 = scmp.lt.s32.totalorder %s17, 2
    // Predicated region
    $region29: #{_lambda_.82} parent=5 // pred_check
      %p311 = pneg %p310
    $region30: #{_lambda_.82} parent=5 // pred_check_branch
      %313 = sbr.rel (%p311) target = $region32
    $region31: #{_lambda_.82} parent=5 // pred_region
      // Predicated region
      $region33: #{_lambda_.82} parent=31 // pred_check
        %p314 = pneg %p37
      $region34: #{_lambda_.82} parent=31 // pred_check_branch
        %316 = sbr.rel (%p314) target = $region36
      $region35: #{_lambda_.82} parent=31 // pred_region
        %p317 = scmp.lt.s32.totalorder %s17, 1
        %s318 = scalar_select %p317, %s17, 1
        %s319 = smul.addr %s318, 4
        %s320 = scalar_lea.vmem %s0, %s319
      $region36: #{_lambda_.82} parent=31 // pred_fallthru
        _
      // Predicated region
      $region37: #{_lambda_.82} parent=31 // pred_check
        %p321 = pneg %p63
      $region38: #{_lambda_.82} parent=31 // pred_check_branch
        %323 = sbr.rel (%p321) target = $region40
      $region39: #{_lambda_.82} parent=31 // pred_region
        %p324 = scmp.lt.s32.totalorder %s17, 1
        %s325 = scalar_select %p324, %s17, 1
        %s326 = smul.addr %s325, 8
        %s327 = smul.addr %s326, 8
        %s328 = scalar_lea.vmem %s1, %s327
      $region40: #{_lambda_.82} parent=31 // pred_fallthru
        _
      // Predicated region
      $region41: #{_lambda_.82} parent=31 // pred_check
        %p329 = pneg %p89
      $region42: #{_lambda_.82} parent=31 // pred_check_branch
        %331 = sbr.rel (%p329) target = $region44
      $region43: #{_lambda_.82} parent=31 // pred_region
        %p332 = scmp.lt.s32.totalorder %s17, 1
        %s333 = scalar_select %p332, %s17, 1
        %s334 = smul.addr %s333, 8
        %s335 = smul.addr %s334, 8
        %s336 = scalar_lea.vmem %s2, %s335
      $region44: #{_lambda_.82} parent=31 // pred_fallthru
        _
      // Predicated region
      $region45: #{_lambda_.82} parent=31 // pred_check
        %p337 = pneg %p115
      $region46: #{_lambda_.82} parent=31 // pred_check_branch
        %339 = sbr.rel (%p337) target = $region48
      $region47: #{_lambda_.82} parent=31 // pred_region
        %p340 = scmp.lt.s32.totalorder %s17, 1
        %s341 = scalar_select %p340, %s17, 1
        %s342 = smul.addr %s341, 4
        %s343 = scalar_lea.vmem %s3, %s342
      $region48: #{_lambda_.82} parent=31 // pred_fallthru
        _
      // Predicated region
      $region49: #{_lambda_.82} parent=31 // pred_check
        %p344 = pneg %p141
      $region50: #{_lambda_.82} parent=31 // pred_check_branch
        %346 = sbr.rel (%p344) target = $region52
      $region51: #{_lambda_.82} parent=31 // pred_region
        %p347 = scmp.lt.s32.totalorder %s17, 1
        %s348 = scalar_select %p347, %s17, 1
        %s349 = smul.addr %s348, 4
        %s350 = scalar_lea.vmem %s4, %s349
      $region52: #{_lambda_.82} parent=31 // pred_fallthru
        _
    $region32: #{_lambda_.82} parent=5 // pred_fallthru
      _
    %p351 = scmp.le.s32.totalorder 1, %s17
    %p352 = scmp.lt.s32.totalorder %s17, 3
    %p353 = pnand %p351, %p352
    %p354 = pneg %p353
    // Predicated region
    $region53: #{_lambda_.82} parent=5 // pred_check
      _
    $region54: #{_lambda_.82} parent=5 // pred_check_branch
      %356 = sbr.rel (%p353) target = $region56
    $region55: #{_lambda_.82} parent=5 // pred_region
      %s357 = ssub.s32 %s17, 1
      %p358 = scmp.lt.s32.totalorder %s22, 1
      %s359 = scalar_select %p358, %s22, 1
      %s360 = smul.addr %s359, 4
      %s361 = scalar_lea.vmem %s0, %s360
      %p362 = pneg %p43
      %p363 = pneg %p40
      %p364 = scmp.lt.s32.totalorder %s22, 1
      %s365 = scalar_select %p364, %s22, 1
      %s366 = smul.addr %s365, 8
      %s367 = smul.addr %s366, 8
      %s368 = scalar_lea.vmem %s1, %s367
      %p369 = pneg %p69
      %p370 = pneg %p66
      %p371 = scmp.lt.s32.totalorder %s22, 1
      %s372 = scalar_select %p371, %s22, 1
      %s373 = smul.addr %s372, 8
      %s374 = smul.addr %s373, 8
      %s375 = scalar_lea.vmem %s2, %s374
      %p376 = pneg %p95
      %p377 = pneg %p92
      %p378 = scmp.lt.s32.totalorder %s22, 1
      %s379 = scalar_select %p378, %s22, 1
      %s380 = smul.addr %s379, 4
      %s381 = scalar_lea.vmem %s3, %s380
      %p382 = pneg %p121
      %p383 = pneg %p118
      %p384 = scmp.lt.s32.totalorder %s22, 1
      %s385 = scalar_select %p384, %s22, 1
      %s386 = smul.addr %s385, 4
      %s387 = scalar_lea.vmem %s4, %s386
      %p388 = pneg %p147
      %p389 = pneg %p144
      %p390 = pneg %p168
      %p391 = pneg %p165
      %p392 = pneg %p189
      %p393 = pneg %p186
      %p394 = pneg %p210
      %p395 = pneg %p207
      %p396 = pneg %p231
      %p397 = pneg %p228
      %p398 = pneg %p257
      %p399 = pneg %p254
      %p400 = scmp.lt.s32.totalorder %s22, 1
      %s401 = scalar_select %p400, %s22, 1
      %s402 = smul.addr %s401, 4
      %s403 = scalar_lea.vmem %s9, %s402
      %p404 = pneg %p283
      %p405 = pneg %p280
      %p406 = scmp.lt.s32.totalorder %s22, 1
      %s407 = scalar_select %p406, %s22, 1
      %s408 = smul.addr %s407, 4
      %s409 = scalar_lea.vmem %s10, %s408
      %p410 = scmp.lt.s32.totalorder %s22, 1
      %s411 = scalar_select %p410, %s22, 1
      %s412 = smul.addr %s411, 4
      %s413 = scalar_lea.vmem %s0, %s412
      %p414 = scmp.lt.s32.totalorder %s22, 1
      %s415 = scalar_select %p414, %s22, 1
      %s416 = smul.addr %s415, 8
      %s417 = smul.addr %s416, 8
      %s418 = scalar_lea.vmem %s1, %s417
      %p419 = scmp.lt.s32.totalorder %s22, 1
      %s420 = scalar_select %p419, %s22, 1
      %s421 = smul.addr %s420, 8
      %s422 = smul.addr %s421, 8
      %s423 = scalar_lea.vmem %s2, %s422
      %p424 = scmp.lt.s32.totalorder %s22, 1
      %s425 = scalar_select %p424, %s22, 1
      %s426 = smul.addr %s425, 4
      %s427 = scalar_lea.vmem %s3, %s426
      %p428 = scmp.lt.s32.totalorder %s22, 1
      %s429 = scalar_select %p428, %s22, 1
      %s430 = smul.addr %s429, 4
      %s431 = scalar_lea.vmem %s4, %s430
      %p432 = scmp.lt.s32.totalorder %s22, 1
      %s433 = scalar_select %p432, %s22, 1
      %s434 = smul.addr %s433, 4
      %s435 = scalar_lea.vmem %s9, %s434
      %p436 = scmp.lt.s32.totalorder %s22, 1
      %s437 = scalar_select %p436, %s22, 1
      %s438 = smul.addr %s437, 4
      %s439 = scalar_lea.vmem %s10, %s438
      %v440 = vld [vmem:[%s413] sm:$0x1]
      %v441 = vld [vmem:[%s413 + $0x1] sm:$0x1]
      %v442 = vld [vmem:[%s413 + $0x2] sm:$0x1]
      %v443 = vld [vmem:[%s413 + $0x3] sm:$0x1]
      %v444 = vld [vmem:[%s418] sm:$0xff]
      %v445 = vld [vmem:[%s418 + $0x8] sm:$0xf]
      %v446 = vld [vmem:[%s418 + $0x10] sm:$0xff]
      %v447 = vld [vmem:[%s418 + $0x18] sm:$0xf]
      %v448 = vld [vmem:[%s418 + $0x20] sm:$0xff]
      %v449 = vld [vmem:[%s418 + $0x28] sm:$0xf]
      %v450 = vld [vmem:[%s418 + $0x30] sm:$0xff]
      %v451 = vld [vmem:[%s418 + $0x38] sm:$0xf]
      %v452 = vld [vmem:[%s423] sm:$0xff]
      %v453 = vld [vmem:[%s423 + $0x8] sm:$0xf]
      %v454 = vld [vmem:[%s423 + $0x10] sm:$0xff]
      %v455 = vld [vmem:[%s423 + $0x18] sm:$0xf]
      %v456 = vld [vmem:[%s423 + $0x20] sm:$0xff]
      %v457 = vld [vmem:[%s423 + $0x28] sm:$0xf]
      %v458 = vld [vmem:[%s423 + $0x30] sm:$0xff]
      %v459 = vld [vmem:[%s423 + $0x38] sm:$0xf]
      %vm460 = vcmask 261120
      %v462 = vsel %vm460, %v440, 0
      %v465 = vsel %vm460, %v444, 0
      %v468 = vsel %vm460, %v445, 0
      %470 = vmatprep.subr.mxu0 0.0
      %471 = vmatpush1.xpose.msra.mxu0 0.0
      %472 = vmatprep.subr.mxu0 0.0
      %473 = vmatpush1.xpose.msra.mxu0 0.0
      %474 = vmatprep.subr.mxu0 0.0
      %475 = vmatpush1.xpose.msra.mxu0 0.0
      %476 = vmatprep.subr.mxu0 0.0
      %477 = vmatpush1.xpose.msra.mxu0 0.0
      %478 = vmatprep.subr.mxu0 0.0
      %479 = vmatpush1.xpose.msra.mxu0 0.0
      %480 = vmatprep.subr.mxu0 0.0
      %481 = vmatpush1.xpose.msra.mxu0 0.0
      %482 = vmatprep.subr.mxu0 0.0
      %483 = vmatpush1.xpose.msra.mxu0 0.0
      %484 = vmatprep.subr.mxu0 0.0
      %485 = vmatpush1.xpose.msra.mxu0 0.0
      %486 = vmatprep.subr.mxu0 0.0
      %487 = vmatpush1.xpose.msra.mxu0 0.0
      %488 = vmatprep.subr.mxu0 0.0
      %489 = vmatpush1.xpose.msra.mxu0 0.0
      %490 = vmatprep.subr.mxu0 0.0
      %491 = vmatpush1.xpose.msra.mxu0 0.0
      %492 = vmatprep.subr.mxu0 0.0
      %493 = vmatpush1.xpose.msra.mxu0 0.0
      %494 = vmatprep.subr.mxu0 0.0
      %495 = vmatpush1.xpose.msra.mxu0 0.0
      %496 = vmatprep.subr.mxu0 0.0
      %497 = vmatpush1.xpose.msra.mxu0 0.0
      %498 = vmatprep.subr.mxu0 0.0
      %499 = vmatpush1.xpose.msra.mxu0 %v468
      %500 = vmatprep.subr.mxu0 0.0
      %501 = vmatpush1.xpose.msra.mxu0 %v465
      %502 = vmatprep.subr.mxu0 0.0
      %503 = vmatpush2.xpose.msra.mxu0 0.0
      %504 = vmatprep.subr.mxu0 0.0
      %505 = vmatpush2.xpose.msra.mxu0 0.0
      %506 = vmatprep.subr.mxu0 0.0
      %507 = vmatpush2.xpose.msra.mxu0 0.0
      %508 = vmatprep.subr.mxu0 0.0
      %509 = vmatpush2.xpose.msra.mxu0 0.0
      %510 = vmatprep.subr.mxu0 0.0
      %511 = vmatpush2.xpose.msra.mxu0 0.0
      %512 = vmatprep.subr.mxu0 0.0
      %513 = vmatpush2.xpose.msra.mxu0 0.0
      %514 = vmatprep.subr.mxu0 0.0
      %515 = vmatpush2.xpose.msra.mxu0 0.0
      %516 = vmatprep.subr.mxu0 0.0
      %517 = vmatpush2.xpose.msra.mxu0 0.0
      %518 = vmatprep.subr.mxu0 0.0
      %519 = vmatpush2.xpose.msra.mxu0 0.0
      %520 = vmatprep.subr.mxu0 0.0
      %521 = vmatpush2.xpose.msra.mxu0 0.0
      %522 = vmatprep.subr.mxu0 0.0
      %523 = vmatpush2.xpose.msra.mxu0 0.0
      %524 = vmatprep.subr.mxu0 0.0
      %525 = vmatpush2.xpose.msra.mxu0 0.0
      %526 = vmatprep.subr.mxu0 0.0
      %527 = vmatpush2.xpose.msra.mxu0 0.0
      %528 = vmatprep.subr.mxu0 0.0
      %529 = vmatpush2.xpose.msra.mxu0 0.0
      %530 = vmatprep.subr.mxu0 0.0
      %531 = vmatpush2.xpose.msra.mxu0 0.0
      %532 = vmatprep.subr.mxu0 0.0
      %533 = vmatpush2.xpose.msra.mxu0 0.0
      %534 = vmatprep.mubr.f32.mxu0 0.0
      %535 = vmatmul.mubr.f32.gmra.mxu0 %v462
      %v536 = vpop.f32.mrf.mxu0
      %v537 = vadd.f32 0.0, %v536
      %v538 = vpop.f32.mrf.mxu0
      %539 = vdwg.mxu0
      %v541 = vsel %vm460, %v441, 0
      %v544 = vsel %vm460, %v446, 0
      %v547 = vsel %vm460, %v447, 0
      %549 = vmatprep.subr.mxu0 0.0
      %550 = vmatpush1.xpose.msra.mxu0 0.0
      %551 = vmatprep.subr.mxu0 0.0
      %552 = vmatpush1.xpose.msra.mxu0 0.0
      %553 = vmatprep.subr.mxu0 0.0
      %554 = vmatpush1.xpose.msra.mxu0 0.0
      %555 = vmatprep.subr.mxu0 0.0
      %556 = vmatpush1.xpose.msra.mxu0 0.0
      %557 = vmatprep.subr.mxu0 0.0
      %558 = vmatpush1.xpose.msra.mxu0 0.0
      %559 = vmatprep.subr.mxu0 0.0
      %560 = vmatpush1.xpose.msra.mxu0 0.0
      %561 = vmatprep.subr.mxu0 0.0
      %562 = vmatpush1.xpose.msra.mxu0 0.0
      %563 = vmatprep.subr.mxu0 0.0
      %564 = vmatpush1.xpose.msra.mxu0 0.0
      %565 = vmatprep.subr.mxu0 0.0
      %566 = vmatpush1.xpose.msra.mxu0 0.0
      %567 = vmatprep.subr.mxu0 0.0
      %568 = vmatpush1.xpose.msra.mxu0 0.0
      %569 = vmatprep.subr.mxu0 0.0
      %570 = vmatpush1.xpose.msra.mxu0 0.0
      %571 = vmatprep.subr.mxu0 0.0
      %572 = vmatpush1.xpose.msra.mxu0 0.0
      %573 = vmatprep.subr.mxu0 0.0
      %574 = vmatpush1.xpose.msra.mxu0 0.0
      %575 = vmatprep.subr.mxu0 0.0
      %576 = vmatpush1.xpose.msra.mxu0 0.0
      %577 = vmatprep.subr.mxu0 0.0
      %578 = vmatpush1.xpose.msra.mxu0 %v547
      %579 = vmatprep.subr.mxu0 0.0
      %580 = vmatpush1.xpose.msra.mxu0 %v544
      %581 = vmatprep.subr.mxu0 0.0
      %582 = vmatpush2.xpose.msra.mxu0 0.0
      %583 = vmatprep.subr.mxu0 0.0
      %584 = vmatpush2.xpose.msra.mxu0 0.0
      %585 = vmatprep.subr.mxu0 0.0
      %586 = vmatpush2.xpose.msra.mxu0 0.0
      %587 = vmatprep.subr.mxu0 0.0
      %588 = vmatpush2.xpose.msra.mxu0 0.0
      %589 = vmatprep.subr.mxu0 0.0
      %590 = vmatpush2.xpose.msra.mxu0 0.0
      %591 = vmatprep.subr.mxu0 0.0
      %592 = vmatpush2.xpose.msra.mxu0 0.0
      %593 = vmatprep.subr.mxu0 0.0
      %594 = vmatpush2.xpose.msra.mxu0 0.0
      %595 = vmatprep.subr.mxu0 0.0
      %596 = vmatpush2.xpose.msra.mxu0 0.0
      %597 = vmatprep.subr.mxu0 0.0
      %598 = vmatpush2.xpose.msra.mxu0 0.0
      %599 = vmatprep.subr.mxu0 0.0
      %600 = vmatpush2.xpose.msra.mxu0 0.0
      %601 = vmatprep.subr.mxu0 0.0
      %602 = vmatpush2.xpose.msra.mxu0 0.0
      %603 = vmatprep.subr.mxu0 0.0
      %604 = vmatpush2.xpose.msra.mxu0 0.0
      %605 = vmatprep.subr.mxu0 0.0
      %606 = vmatpush2.xpose.msra.mxu0 0.0
      %607 = vmatprep.subr.mxu0 0.0
      %608 = vmatpush2.xpose.msra.mxu0 0.0
      %609 = vmatprep.subr.mxu0 0.0
      %610 = vmatpush2.xpose.msra.mxu0 0.0
      %611 = vmatprep.subr.mxu0 0.0
      %612 = vmatpush2.xpose.msra.mxu0 0.0
      %613 = vmatprep.mubr.f32.mxu0 0.0
      %614 = vmatmul.mubr.f32.gmra.mxu0 %v541
      %v615 = vpop.f32.mrf.mxu0
      %v616 = vadd.f32 0.0, %v615
      %v617 = vpop.f32.mrf.mxu0
      %618 = vdwg.mxu0
      %v620 = vsel %vm460, %v442, 0
      %v623 = vsel %vm460, %v448, 0
      %v626 = vsel %vm460, %v449, 0
      %628 = vmatprep.subr.mxu0 0.0
      %629 = vmatpush1.xpose.msra.mxu0 0.0
      %630 = vmatprep.subr.mxu0 0.0
      %631 = vmatpush1.xpose.msra.mxu0 0.0
      %632 = vmatprep.subr.mxu0 0.0
      %633 = vmatpush1.xpose.msra.mxu0 0.0
      %634 = vmatprep.subr.mxu0 0.0
      %635 = vmatpush1.xpose.msra.mxu0 0.0
      %636 = vmatprep.subr.mxu0 0.0
      %637 = vmatpush1.xpose.msra.mxu0 0.0
      %638 = vmatprep.subr.mxu0 0.0
      %639 = vmatpush1.xpose.msra.mxu0 0.0
      %640 = vmatprep.subr.mxu0 0.0
      %641 = vmatpush1.xpose.msra.mxu0 0.0
      %642 = vmatprep.subr.mxu0 0.0
      %643 = vmatpush1.xpose.msra.mxu0 0.0
      %644 = vmatprep.subr.mxu0 0.0
      %645 = vmatpush1.xpose.msra.mxu0 0.0
      %646 = vmatprep.subr.mxu0 0.0
      %647 = vmatpush1.xpose.msra.mxu0 0.0
      %648 = vmatprep.subr.mxu0 0.0
      %649 = vmatpush1.xpose.msra.mxu0 0.0
      %650 = vmatprep.subr.mxu0 0.0
      %651 = vmatpush1.xpose.msra.mxu0 0.0
      %652 = vmatprep.subr.mxu0 0.0
      %653 = vmatpush1.xpose.msra.mxu0 0.0
      %654 = vmatprep.subr.mxu0 0.0
      %655 = vmatpush1.xpose.msra.mxu0 0.0
      %656 = vmatprep.subr.mxu0 0.0
      %657 = vmatpush1.xpose.msra.mxu0 %v626
      %658 = vmatprep.subr.mxu0 0.0
      %659 = vmatpush1.xpose.msra.mxu0 %v623
      %660 = vmatprep.subr.mxu0 0.0
      %661 = vmatpush2.xpose.msra.mxu0 0.0
      %662 = vmatprep.subr.mxu0 0.0
      %663 = vmatpush2.xpose.msra.mxu0 0.0
      %664 = vmatprep.subr.mxu0 0.0
      %665 = vmatpush2.xpose.msra.mxu0 0.0
      %666 = vmatprep.subr.mxu0 0.0
      %667 = vmatpush2.xpose.msra.mxu0 0.0
      %668 = vmatprep.subr.mxu0 0.0
      %669 = vmatpush2.xpose.msra.mxu0 0.0
      %670 = vmatprep.subr.mxu0 0.0
      %671 = vmatpush2.xpose.msra.mxu0 0.0
      %672 = vmatprep.subr.mxu0 0.0
      %673 = vmatpush2.xpose.msra.mxu0 0.0
      %674 = vmatprep.subr.mxu0 0.0
      %675 = vmatpush2.xpose.msra.mxu0 0.0
      %676 = vmatprep.subr.mxu0 0.0
      %677 = vmatpush2.xpose.msra.mxu0 0.0
      %678 = vmatprep.subr.mxu0 0.0
      %679 = vmatpush2.xpose.msra.mxu0 0.0
      %680 = vmatprep.subr.mxu0 0.0
      %681 = vmatpush2.xpose.msra.mxu0 0.0
      %682 = vmatprep.subr.mxu0 0.0
      %683 = vmatpush2.xpose.msra.mxu0 0.0
      %684 = vmatprep.subr.mxu0 0.0
      %685 = vmatpush2.xpose.msra.mxu0 0.0
      %686 = vmatprep.subr.mxu0 0.0
      %687 = vmatpush2.xpose.msra.mxu0 0.0
      %688 = vmatprep.subr.mxu0 0.0
      %689 = vmatpush2.xpose.msra.mxu0 0.0
      %690 = vmatprep.subr.mxu0 0.0
      %691 = vmatpush2.xpose.msra.mxu0 0.0
      %692 = vmatprep.mubr.f32.mxu0 0.0
      %693 = vmatmul.mubr.f32.gmra.mxu0 %v620
      %v694 = vpop.f32.mrf.mxu0
      %v695 = vadd.f32 0.0, %v694
      %v696 = vpop.f32.mrf.mxu0
      %697 = vdwg.mxu0
      %v699 = vsel %vm460, %v443, 0
      %v702 = vsel %vm460, %v450, 0
      %v705 = vsel %vm460, %v451, 0
      %707 = vmatprep.subr.mxu0 0.0
      %708 = vmatpush1.xpose.msra.mxu0 0.0
      %709 = vmatprep.subr.mxu0 0.0
      %710 = vmatpush1.xpose.msra.mxu0 0.0
      %711 = vmatprep.subr.mxu0 0.0
      %712 = vmatpush1.xpose.msra.mxu0 0.0
      %713 = vmatprep.subr.mxu0 0.0
      %714 = vmatpush1.xpose.msra.mxu0 0.0
      %715 = vmatprep.subr.mxu0 0.0
      %716 = vmatpush1.xpose.msra.mxu0 0.0
      %717 = vmatprep.subr.mxu0 0.0
      %718 = vmatpush1.xpose.msra.mxu0 0.0
      %719 = vmatprep.subr.mxu0 0.0
      %720 = vmatpush1.xpose.msra.mxu0 0.0
      %721 = vmatprep.subr.mxu0 0.0
      %722 = vmatpush1.xpose.msra.mxu0 0.0
      %723 = vmatprep.subr.mxu0 0.0
      %724 = vmatpush1.xpose.msra.mxu0 0.0
      %725 = vmatprep.subr.mxu0 0.0
      %726 = vmatpush1.xpose.msra.mxu0 0.0
      %727 = vmatprep.subr.mxu0 0.0
      %728 = vmatpush1.xpose.msra.mxu0 0.0
      %729 = vmatprep.subr.mxu0 0.0
      %730 = vmatpush1.xpose.msra.mxu0 0.0
      %731 = vmatprep.subr.mxu0 0.0
      %732 = vmatpush1.xpose.msra.mxu0 0.0
      %733 = vmatprep.subr.mxu0 0.0
      %734 = vmatpush1.xpose.msra.mxu0 0.0
      %735 = vmatprep.subr.mxu0 0.0
      %736 = vmatpush1.xpose.msra.mxu0 %v705
      %737 = vmatprep.subr.mxu0 0.0
      %738 = vmatpush1.xpose.msra.mxu0 %v702
      %739 = vmatprep.subr.mxu0 0.0
      %740 = vmatpush2.xpose.msra.mxu0 0.0
      %741 = vmatprep.subr.mxu0 0.0
      %742 = vmatpush2.xpose.msra.mxu0 0.0
      %743 = vmatprep.subr.mxu0 0.0
      %744 = vmatpush2.xpose.msra.mxu0 0.0
      %745 = vmatprep.subr.mxu0 0.0
      %746 = vmatpush2.xpose.msra.mxu0 0.0
      %747 = vmatprep.subr.mxu0 0.0
      %748 = vmatpush2.xpose.msra.mxu0 0.0
      %749 = vmatprep.subr.mxu0 0.0
      %750 = vmatpush2.xpose.msra.mxu0 0.0
      %751 = vmatprep.subr.mxu0 0.0
      %752 = vmatpush2.xpose.msra.mxu0 0.0
      %753 = vmatprep.subr.mxu0 0.0
      %754 = vmatpush2.xpose.msra.mxu0 0.0
      %755 = vmatprep.subr.mxu0 0.0
      %756 = vmatpush2.xpose.msra.mxu0 0.0
      %757 = vmatprep.subr.mxu0 0.0
      %758 = vmatpush2.xpose.msra.mxu0 0.0
      %759 = vmatprep.subr.mxu0 0.0
      %760 = vmatpush2.xpose.msra.mxu0 0.0
      %761 = vmatprep.subr.mxu0 0.0
      %762 = vmatpush2.xpose.msra.mxu0 0.0
      %763 = vmatprep.subr.mxu0 0.0
      %764 = vmatpush2.xpose.msra.mxu0 0.0
      %765 = vmatprep.subr.mxu0 0.0
      %766 = vmatpush2.xpose.msra.mxu0 0.0
      %767 = vmatprep.subr.mxu0 0.0
      %768 = vmatpush2.xpose.msra.mxu0 0.0
      %769 = vmatprep.subr.mxu0 0.0
      %770 = vmatpush2.xpose.msra.mxu0 0.0
      %771 = vmatprep.mubr.f32.mxu0 0.0
      %772 = vmatmul.mubr.f32.gmra.mxu0 %v699
      %v773 = vpop.f32.mrf.mxu0
      %v774 = vadd.f32 0.0, %v773
      %v775 = vpop.f32.mrf.mxu0
      %776 = vdwg.mxu0
      %v777 = vmul.f32 %v537, 0.17677669
      %v778 = vmul.f32 %v616, 0.17677669
      %v779 = vmul.f32 %v695, 0.17677669
      %v780 = vmul.f32 %v774, 0.17677669
      %v781 = vld [vmem:[%s427] sm:$0x1]
      %v782 = vld [vmem:[%s427 + $0x1] sm:$0x1]
      %v783 = vld [vmem:[%s427 + $0x2] sm:$0x1]
      %v784 = vld [vmem:[%s427 + $0x3] sm:$0x1]
      %v785 = vadd.f32 %v777, %v781
      %v786 = vadd.f32 %v778, %v782
      %v787 = vadd.f32 %v779, %v783
      %v788 = vadd.f32 %v780, %v784
      %vm789 = vcmask 90112
      %v790 = vsel %vm789, %v785, -inf
      %791 = vmax.xlane.f32.xlu0 %v790
      %v792 = vpop.xlane.xlu0 %791
      %v793 = vsel %vm789, %v786, -inf
      %794 = vmax.xlane.f32.xlu0 %v793
      %v795 = vpop.xlane.xlu0 %794
      %v796 = vsel %vm789, %v787, -inf
      %797 = vmax.xlane.f32.xlu0 %v796
      %v798 = vpop.xlane.xlu0 %797
      %v799 = vsel %vm789, %v788, -inf
      %800 = vmax.xlane.f32.xlu0 %v799
      %v801 = vpop.xlane.xlu0 %800
      %v802 = vsub.f32 %v785, %v792
      %v803 = vsub.f32 %v786, %v795
      %v804 = vsub.f32 %v787, %v798
      %v805 = vsub.f32 %v788, %v801
      %v806 = vmul.f32 %v802, 1.442695
      %v807 = vpow.pop %v806
      %v808 = vmul.f32 %v803, 1.442695
      %v809 = vpow.pop %v808
      %v810 = vmul.f32 %v804, 1.442695
      %v811 = vpow.pop %v810
      %v812 = vmul.f32 %v805, 1.442695
      %v813 = vpow.pop %v812
      %v814 = vsel %vm789, %v807, 0.0
      %815 = vadd.xlane.f32.xlu0 %v814
      %v816 = vpop.xlane.xlu0 %815
      %v817 = vsel %vm789, %v809, 0.0
      %818 = vadd.xlane.f32.xlu0 %v817
      %v819 = vpop.xlane.xlu0 %818
      %v820 = vsel %vm789, %v811, 0.0
      %821 = vadd.xlane.f32.xlu0 %v820
      %v822 = vpop.xlane.xlu0 %821
      %v823 = vsel %vm789, %v813, 0.0
      %824 = vadd.xlane.f32.xlu0 %v823
      %v825 = vpop.xlane.xlu0 %824
      %v826 = vrcp.pop %v816
      %v827 = vrcp.pop %v819
      %v828 = vrcp.pop %v822
      %v829 = vrcp.pop %v825
      %v830 = vmul.f32 %v807, %v826
      %v831 = vmul.f32 %v809, %v827
      %v832 = vmul.f32 %v811, %v828
      %v833 = vmul.f32 %v813, %v829
      %vm834 = vcmask 97280
      %v836 = vsel %vm834, %v830, 0
      %vm838 = vcmask 1043456
      %v840 = vsel %vm838, %v453, 0
      %842 = vmatprep.subr.mxu0 0.0
      %843 = vmatpush1.msra.mxu0 0.0
      %844 = vmatprep.subr.mxu0 0.0
      %845 = vmatpush1.msra.mxu0 0.0
      %846 = vmatprep.subr.mxu0 0.0
      %847 = vmatpush1.msra.mxu0 0.0
      %848 = vmatprep.subr.mxu0 0.0
      %849 = vmatpush1.msra.mxu0 0.0
      %850 = vmatprep.subr.mxu0 0.0
      %851 = vmatpush1.msra.mxu0 0.0
      %852 = vmatprep.subr.mxu0 0.0
      %853 = vmatpush1.msra.mxu0 0.0
      %854 = vmatprep.subr.mxu0 0.0
      %855 = vmatpush1.msra.mxu0 0.0
      %856 = vmatprep.subr.mxu0 0.0
      %857 = vmatpush1.msra.mxu0 0.0
      %858 = vmatprep.subr.mxu0 0.0
      %859 = vmatpush1.msra.mxu0 0.0
      %860 = vmatprep.subr.mxu0 0.0
      %861 = vmatpush1.msra.mxu0 0.0
      %862 = vmatprep.subr.mxu0 0.0
      %863 = vmatpush1.msra.mxu0 0.0
      %864 = vmatprep.subr.mxu0 0.0
      %865 = vmatpush1.msra.mxu0 0.0
      %866 = vmatprep.subr.mxu0 0.0
      %867 = vmatpush1.msra.mxu0 0.0
      %868 = vmatprep.subr.mxu0 0.0
      %869 = vmatpush1.msra.mxu0 0.0
      %870 = vmatprep.subr.mxu0 0.0
      %871 = vmatpush1.msra.mxu0 %v840
      %872 = vmatprep.subr.mxu0 0.0
      %873 = vmatpush1.msra.mxu0 %v452
      %874 = vmatprep.subr.mxu0 0.0
      %875 = vmatpush2.msra.mxu0 0.0
      %876 = vmatprep.subr.mxu0 0.0
      %877 = vmatpush2.msra.mxu0 0.0
      %878 = vmatprep.subr.mxu0 0.0
      %879 = vmatpush2.msra.mxu0 0.0
      %880 = vmatprep.subr.mxu0 0.0
      %881 = vmatpush2.msra.mxu0 0.0
      %882 = vmatprep.subr.mxu0 0.0
      %883 = vmatpush2.msra.mxu0 0.0
      %884 = vmatprep.subr.mxu0 0.0
      %885 = vmatpush2.msra.mxu0 0.0
      %886 = vmatprep.subr.mxu0 0.0
      %887 = vmatpush2.msra.mxu0 0.0
      %888 = vmatprep.subr.mxu0 0.0
      %889 = vmatpush2.msra.mxu0 0.0
      %890 = vmatprep.subr.mxu0 0.0
      %891 = vmatpush2.msra.mxu0 0.0
      %892 = vmatprep.subr.mxu0 0.0
      %893 = vmatpush2.msra.mxu0 0.0
      %894 = vmatprep.subr.mxu0 0.0
      %895 = vmatpush2.msra.mxu0 0.0
      %896 = vmatprep.subr.mxu0 0.0
      %897 = vmatpush2.msra.mxu0 0.0
      %898 = vmatprep.subr.mxu0 0.0
      %899 = vmatpush2.msra.mxu0 0.0
      %900 = vmatprep.subr.mxu0 0.0
      %901 = vmatpush2.msra.mxu0 0.0
      %902 = vmatprep.subr.mxu0 0.0
      %903 = vmatpush2.msra.mxu0 0.0
      %904 = vmatprep.subr.mxu0 0.0
      %905 = vmatpush2.msra.mxu0 0.0
      %906 = vmatprep.mubr.f32.mxu0 0.0
      %907 = vmatmul.mubr.f32.gmra.mxu0 %v836
      %v908 = vpop.f32.mrf.mxu0
      %v909 = vadd.f32 0.0, %v908
      %v910 = vpop.f32.mrf.mxu0
      %911 = vdwg.mxu0
      %v913 = vsel %vm834, %v831, 0
      %v916 = vsel %vm838, %v455, 0
      %918 = vmatprep.subr.mxu0 0.0
      %919 = vmatpush1.msra.mxu0 0.0
      %920 = vmatprep.subr.mxu0 0.0
      %921 = vmatpush1.msra.mxu0 0.0
      %922 = vmatprep.subr.mxu0 0.0
      %923 = vmatpush1.msra.mxu0 0.0
      %924 = vmatprep.subr.mxu0 0.0
      %925 = vmatpush1.msra.mxu0 0.0
      %926 = vmatprep.subr.mxu0 0.0
      %927 = vmatpush1.msra.mxu0 0.0
      %928 = vmatprep.subr.mxu0 0.0
      %929 = vmatpush1.msra.mxu0 0.0
      %930 = vmatprep.subr.mxu0 0.0
      %931 = vmatpush1.msra.mxu0 0.0
      %932 = vmatprep.subr.mxu0 0.0
      %933 = vmatpush1.msra.mxu0 0.0
      %934 = vmatprep.subr.mxu0 0.0
      %935 = vmatpush1.msra.mxu0 0.0
      %936 = vmatprep.subr.mxu0 0.0
      %937 = vmatpush1.msra.mxu0 0.0
      %938 = vmatprep.subr.mxu0 0.0
      %939 = vmatpush1.msra.mxu0 0.0
      %940 = vmatprep.subr.mxu0 0.0
      %941 = vmatpush1.msra.mxu0 0.0
      %942 = vmatprep.subr.mxu0 0.0
      %943 = vmatpush1.msra.mxu0 0.0
      %944 = vmatprep.subr.mxu0 0.0
      %945 = vmatpush1.msra.mxu0 0.0
      %946 = vmatprep.subr.mxu0 0.0
      %947 = vmatpush1.msra.mxu0 %v916
      %948 = vmatprep.subr.mxu0 0.0
      %949 = vmatpush1.msra.mxu0 %v454
      %950 = vmatprep.subr.mxu0 0.0
      %951 = vmatpush2.msra.mxu0 0.0
      %952 = vmatprep.subr.mxu0 0.0
      %953 = vmatpush2.msra.mxu0 0.0
      %954 = vmatprep.subr.mxu0 0.0
      %955 = vmatpush2.msra.mxu0 0.0
      %956 = vmatprep.subr.mxu0 0.0
      %957 = vmatpush2.msra.mxu0 0.0
      %958 = vmatprep.subr.mxu0 0.0
      %959 = vmatpush2.msra.mxu0 0.0
      %960 = vmatprep.subr.mxu0 0.0
      %961 = vmatpush2.msra.mxu0 0.0
      %962 = vmatprep.subr.mxu0 0.0
      %963 = vmatpush2.msra.mxu0 0.0
      %964 = vmatprep.subr.mxu0 0.0
      %965 = vmatpush2.msra.mxu0 0.0
      %966 = vmatprep.subr.mxu0 0.0
      %967 = vmatpush2.msra.mxu0 0.0
      %968 = vmatprep.subr.mxu0 0.0
      %969 = vmatpush2.msra.mxu0 0.0
      %970 = vmatprep.subr.mxu0 0.0
      %971 = vmatpush2.msra.mxu0 0.0
      %972 = vmatprep.subr.mxu0 0.0
      %973 = vmatpush2.msra.mxu0 0.0
      %974 = vmatprep.subr.mxu0 0.0
      %975 = vmatpush2.msra.mxu0 0.0
      %976 = vmatprep.subr.mxu0 0.0
      %977 = vmatpush2.msra.mxu0 0.0
      %978 = vmatprep.subr.mxu0 0.0
      %979 = vmatpush2.msra.mxu0 0.0
      %980 = vmatprep.subr.mxu0 0.0
      %981 = vmatpush2.msra.mxu0 0.0
      %982 = vmatprep.mubr.f32.mxu0 0.0
      %983 = vmatmul.mubr.f32.gmra.mxu0 %v913
      %v984 = vpop.f32.mrf.mxu0
      %v985 = vadd.f32 0.0, %v984
      %v986 = vpop.f32.mrf.mxu0
      %987 = vdwg.mxu0
      %v989 = vsel %vm834, %v832, 0
      %v992 = vsel %vm838, %v457, 0
      %994 = vmatprep.subr.mxu0 0.0
      %995 = vmatpush1.msra.mxu0 0.0
      %996 = vmatprep.subr.mxu0 0.0
      %997 = vmatpush1.msra.mxu0 0.0
      %998 = vmatprep.subr.mxu0 0.0
      %999 = vmatpush1.msra.mxu0 0.0
      %1000 = vmatprep.subr.mxu0 0.0
      %1001 = vmatpush1.msra.mxu0 0.0
      %1002 = vmatprep.subr.mxu0 0.0
      %1003 = vmatpush1.msra.mxu0 0.0
      %1004 = vmatprep.subr.mxu0 0.0
      %1005 = vmatpush1.msra.mxu0 0.0
      %1006 = vmatprep.subr.mxu0 0.0
      %1007 = vmatpush1.msra.mxu0 0.0
      %1008 = vmatprep.subr.mxu0 0.0
      %1009 = vmatpush1.msra.mxu0 0.0
      %1010 = vmatprep.subr.mxu0 0.0
      %1011 = vmatpush1.msra.mxu0 0.0
      %1012 = vmatprep.subr.mxu0 0.0
      %1013 = vmatpush1.msra.mxu0 0.0
      %1014 = vmatprep.subr.mxu0 0.0
      %1015 = vmatpush1.msra.mxu0 0.0
      %1016 = vmatprep.subr.mxu0 0.0
      %1017 = vmatpush1.msra.mxu0 0.0
      %1018 = vmatprep.subr.mxu0 0.0
      %1019 = vmatpush1.msra.mxu0 0.0
      %1020 = vmatprep.subr.mxu0 0.0
      %1021 = vmatpush1.msra.mxu0 0.0
      %1022 = vmatprep.subr.mxu0 0.0
      %1023 = vmatpush1.msra.mxu0 %v992
      %1024 = vmatprep.subr.mxu0 0.0
      %1025 = vmatpush1.msra.mxu0 %v456
      %1026 = vmatprep.subr.mxu0 0.0
      %1027 = vmatpush2.msra.mxu0 0.0
      %1028 = vmatprep.subr.mxu0 0.0
      %1029 = vmatpush2.msra.mxu0 0.0
      %1030 = vmatprep.subr.mxu0 0.0
      %1031 = vmatpush2.msra.mxu0 0.0
      %1032 = vmatprep.subr.mxu0 0.0
      %1033 = vmatpush2.msra.mxu0 0.0
      %1034 = vmatprep.subr.mxu0 0.0
      %1035 = vmatpush2.msra.mxu0 0.0
      %1036 = vmatprep.subr.mxu0 0.0
      %1037 = vmatpush2.msra.mxu0 0.0
      %1038 = vmatprep.subr.mxu0 0.0
      %1039 = vmatpush2.msra.mxu0 0.0
      %1040 = vmatprep.subr.mxu0 0.0
      %1041 = vmatpush2.msra.mxu0 0.0
      %1042 = vmatprep.subr.mxu0 0.0
      %1043 = vmatpush2.msra.mxu0 0.0
      %1044 = vmatprep.subr.mxu0 0.0
      %1045 = vmatpush2.msra.mxu0 0.0
      %1046 = vmatprep.subr.mxu0 0.0
      %1047 = vmatpush2.msra.mxu0 0.0
      %1048 = vmatprep.subr.mxu0 0.0
      %1049 = vmatpush2.msra.mxu0 0.0
      %1050 = vmatprep.subr.mxu0 0.0
      %1051 = vmatpush2.msra.mxu0 0.0
      %1052 = vmatprep.subr.mxu0 0.0
      %1053 = vmatpush2.msra.mxu0 0.0
      %1054 = vmatprep.subr.mxu0 0.0
      %1055 = vmatpush2.msra.mxu0 0.0
      %1056 = vmatprep.subr.mxu0 0.0
      %1057 = vmatpush2.msra.mxu0 0.0
      %1058 = vmatprep.mubr.f32.mxu0 0.0
      %1059 = vmatmul.mubr.f32.gmra.mxu0 %v989
      %v1060 = vpop.f32.mrf.mxu0
      %v1061 = vadd.f32 0.0, %v1060
      %v1062 = vpop.f32.mrf.mxu0
      %1063 = vdwg.mxu0
      %v1065 = vsel %vm834, %v833, 0
      %v1068 = vsel %vm838, %v459, 0
      %1070 = vmatprep.subr.mxu0 0.0
      %1071 = vmatpush1.msra.mxu0 0.0
      %1072 = vmatprep.subr.mxu0 0.0
      %1073 = vmatpush1.msra.mxu0 0.0
      %1074 = vmatprep.subr.mxu0 0.0
      %1075 = vmatpush1.msra.mxu0 0.0
      %1076 = vmatprep.subr.mxu0 0.0
      %1077 = vmatpush1.msra.mxu0 0.0
      %1078 = vmatprep.subr.mxu0 0.0
      %1079 = vmatpush1.msra.mxu0 0.0
      %1080 = vmatprep.subr.mxu0 0.0
      %1081 = vmatpush1.msra.mxu0 0.0
      %1082 = vmatprep.subr.mxu0 0.0
      %1083 = vmatpush1.msra.mxu0 0.0
      %1084 = vmatprep.subr.mxu0 0.0
      %1085 = vmatpush1.msra.mxu0 0.0
      %1086 = vmatprep.subr.mxu0 0.0
      %1087 = vmatpush1.msra.mxu0 0.0
      %1088 = vmatprep.subr.mxu0 0.0
      %1089 = vmatpush1.msra.mxu0 0.0
      %1090 = vmatprep.subr.mxu0 0.0
      %1091 = vmatpush1.msra.mxu0 0.0
      %1092 = vmatprep.subr.mxu0 0.0
      %1093 = vmatpush1.msra.mxu0 0.0
      %1094 = vmatprep.subr.mxu0 0.0
      %1095 = vmatpush1.msra.mxu0 0.0
      %1096 = vmatprep.subr.mxu0 0.0
      %1097 = vmatpush1.msra.mxu0 0.0
      %1098 = vmatprep.subr.mxu0 0.0
      %1099 = vmatpush1.msra.mxu0 %v1068
      %1100 = vmatprep.subr.mxu0 0.0
      %1101 = vmatpush1.msra.mxu0 %v458
      %1102 = vmatprep.subr.mxu0 0.0
      %1103 = vmatpush2.msra.mxu0 0.0
      %1104 = vmatprep.subr.mxu0 0.0
      %1105 = vmatpush2.msra.mxu0 0.0
      %1106 = vmatprep.subr.mxu0 0.0
      %1107 = vmatpush2.msra.mxu0 0.0
      %1108 = vmatprep.subr.mxu0 0.0
      %1109 = vmatpush2.msra.mxu0 0.0
      %1110 = vmatprep.subr.mxu0 0.0
      %1111 = vmatpush2.msra.mxu0 0.0
      %1112 = vmatprep.subr.mxu0 0.0
      %1113 = vmatpush2.msra.mxu0 0.0
      %1114 = vmatprep.subr.mxu0 0.0
      %1115 = vmatpush2.msra.mxu0 0.0
      %1116 = vmatprep.subr.mxu0 0.0
      %1117 = vmatpush2.msra.mxu0 0.0
      %1118 = vmatprep.subr.mxu0 0.0
      %1119 = vmatpush2.msra.mxu0 0.0
      %1120 = vmatprep.subr.mxu0 0.0
      %1121 = vmatpush2.msra.mxu0 0.0
      %1122 = vmatprep.subr.mxu0 0.0
      %1123 = vmatpush2.msra.mxu0 0.0
      %1124 = vmatprep.subr.mxu0 0.0
      %1125 = vmatpush2.msra.mxu0 0.0
      %1126 = vmatprep.subr.mxu0 0.0
      %1127 = vmatpush2.msra.mxu0 0.0
      %1128 = vmatprep.subr.mxu0 0.0
      %1129 = vmatpush2.msra.mxu0 0.0
      %1130 = vmatprep.subr.mxu0 0.0
      %1131 = vmatpush2.msra.mxu0 0.0
      %1132 = vmatprep.subr.mxu0 0.0
      %1133 = vmatpush2.msra.mxu0 0.0
      %1134 = vmatprep.mubr.f32.mxu0 0.0
      %1135 = vmatmul.mubr.f32.gmra.mxu0 %v1065
      %v1136 = vpop.f32.mrf.mxu0
      %v1137 = vadd.f32 0.0, %v1136
      %v1138 = vpop.f32.mrf.mxu0
      %1139 = vdwg.mxu0
      %v1140 = vld [vmem:[%s5] sm:$0xff]
      %v1141 = vld [vmem:[%s5 + $0x8] sm:$0xff]
      %v1142 = vld [vmem:[%s5 + $0x10] sm:$0xff]
      %v1143 = vld [vmem:[%s5 + $0x18] sm:$0xff]
      %v1145 = vsel %vm460, %v909, 0
      %1147 = vmatprep.subr.mxu0 0.0
      %1148 = vmatpush1.msra.mxu0 0.0
      %1149 = vmatprep.subr.mxu0 0.0
      %1150 = vmatpush1.msra.mxu0 0.0
      %1151 = vmatprep.subr.mxu0 0.0
      %1152 = vmatpush1.msra.mxu0 0.0
      %1153 = vmatprep.subr.mxu0 0.0
      %1154 = vmatpush1.msra.mxu0 0.0
      %1155 = vmatprep.subr.mxu0 0.0
      %1156 = vmatpush1.msra.mxu0 0.0
      %1157 = vmatprep.subr.mxu0 0.0
      %1158 = vmatpush1.msra.mxu0 0.0
      %1159 = vmatprep.subr.mxu0 0.0
      %1160 = vmatpush1.msra.mxu0 0.0
      %1161 = vmatprep.subr.mxu0 0.0
      %1162 = vmatpush1.msra.mxu0 0.0
      %1163 = vmatprep.subr.mxu0 0.0
      %1164 = vmatpush1.msra.mxu0 0.0
      %1165 = vmatprep.subr.mxu0 0.0
      %1166 = vmatpush1.msra.mxu0 0.0
      %1167 = vmatprep.subr.mxu0 0.0
      %1168 = vmatpush1.msra.mxu0 0.0
      %1169 = vmatprep.subr.mxu0 0.0
      %1170 = vmatpush1.msra.mxu0 0.0
      %1171 = vmatprep.subr.mxu0 0.0
      %1172 = vmatpush1.msra.mxu0 %v1143
      %1173 = vmatprep.subr.mxu0 0.0
      %1174 = vmatpush1.msra.mxu0 %v1142
      %1175 = vmatprep.subr.mxu0 0.0
      %1176 = vmatpush1.msra.mxu0 %v1141
      %1177 = vmatprep.subr.mxu0 0.0
      %1178 = vmatpush1.msra.mxu0 %v1140
      %1179 = vmatprep.subr.mxu0 0.0
      %1180 = vmatpush2.msra.mxu0 0.0
      %1181 = vmatprep.subr.mxu0 0.0
      %1182 = vmatpush2.msra.mxu0 0.0
      %1183 = vmatprep.subr.mxu0 0.0
      %1184 = vmatpush2.msra.mxu0 0.0
      %1185 = vmatprep.subr.mxu0 0.0
      %1186 = vmatpush2.msra.mxu0 0.0
      %1187 = vmatprep.subr.mxu0 0.0
      %1188 = vmatpush2.msra.mxu0 0.0
      %1189 = vmatprep.subr.mxu0 0.0
      %1190 = vmatpush2.msra.mxu0 0.0
      %1191 = vmatprep.subr.mxu0 0.0
      %1192 = vmatpush2.msra.mxu0 0.0
      %1193 = vmatprep.subr.mxu0 0.0
      %1194 = vmatpush2.msra.mxu0 0.0
      %1195 = vmatprep.subr.mxu0 0.0
      %1196 = vmatpush2.msra.mxu0 0.0
      %1197 = vmatprep.subr.mxu0 0.0
      %1198 = vmatpush2.msra.mxu0 0.0
      %1199 = vmatprep.subr.mxu0 0.0
      %1200 = vmatpush2.msra.mxu0 0.0
      %1201 = vmatprep.subr.mxu0 0.0
      %1202 = vmatpush2.msra.mxu0 0.0
      %1203 = vmatprep.subr.mxu0 0.0
      %1204 = vmatpush2.msra.mxu0 0.0
      %1205 = vmatprep.subr.mxu0 0.0
      %1206 = vmatpush2.msra.mxu0 0.0
      %1207 = vmatprep.subr.mxu0 0.0
      %1208 = vmatpush2.msra.mxu0 0.0
      %1209 = vmatprep.subr.mxu0 0.0
      %1210 = vmatpush2.msra.mxu0 0.0
      %1211 = vmatprep.mubr.f32.mxu0 0.0
      %1212 = vmatmul.mubr.f32.gmra.mxu0 %v1145
      %v1213 = vpop.f32.mrf.mxu0
      %v1214 = vadd.f32 0.0, %v1213
      %v1215 = vpop.f32.mrf.mxu0
      %1216 = vdwg.mxu0
      %v1218 = vsel %vm460, %v985, 0
      %1220 = vmatprep.subr.mxu0 0.0
      %1221 = vmatpush1.msra.mxu0 0.0
      %1222 = vmatprep.subr.mxu0 0.0
      %1223 = vmatpush1.msra.mxu0 0.0
      %1224 = vmatprep.subr.mxu0 0.0
      %1225 = vmatpush1.msra.mxu0 0.0
      %1226 = vmatprep.subr.mxu0 0.0
      %1227 = vmatpush1.msra.mxu0 0.0
      %1228 = vmatprep.subr.mxu0 0.0
      %1229 = vmatpush1.msra.mxu0 0.0
      %1230 = vmatprep.subr.mxu0 0.0
      %1231 = vmatpush1.msra.mxu0 0.0
      %1232 = vmatprep.subr.mxu0 0.0
      %1233 = vmatpush1.msra.mxu0 0.0
      %1234 = vmatprep.subr.mxu0 0.0
      %1235 = vmatpush1.msra.mxu0 0.0
      %1236 = vmatprep.subr.mxu0 0.0
      %1237 = vmatpush1.msra.mxu0 0.0
      %1238 = vmatprep.subr.mxu0 0.0
      %1239 = vmatpush1.msra.mxu0 0.0
      %1240 = vmatprep.subr.mxu0 0.0
      %1241 = vmatpush1.msra.mxu0 0.0
      %1242 = vmatprep.subr.mxu0 0.0
      %1243 = vmatpush1.msra.mxu0 0.0
      %1244 = vmatprep.subr.mxu0 0.0
      %1245 = vmatpush1.msra.mxu0 %v1143
      %1246 = vmatprep.subr.mxu0 0.0
      %1247 = vmatpush1.msra.mxu0 %v1142
      %1248 = vmatprep.subr.mxu0 0.0
      %1249 = vmatpush1.msra.mxu0 %v1141
      %1250 = vmatprep.subr.mxu0 0.0
      %1251 = vmatpush1.msra.mxu0 %v1140
      %1252 = vmatprep.subr.mxu0 0.0
      %1253 = vmatpush2.msra.mxu0 0.0
      %1254 = vmatprep.subr.mxu0 0.0
      %1255 = vmatpush2.msra.mxu0 0.0
      %1256 = vmatprep.subr.mxu0 0.0
      %1257 = vmatpush2.msra.mxu0 0.0
      %1258 = vmatprep.subr.mxu0 0.0
      %1259 = vmatpush2.msra.mxu0 0.0
      %1260 = vmatprep.subr.mxu0 0.0
      %1261 = vmatpush2.msra.mxu0 0.0
      %1262 = vmatprep.subr.mxu0 0.0
      %1263 = vmatpush2.msra.mxu0 0.0
      %1264 = vmatprep.subr.mxu0 0.0
      %1265 = vmatpush2.msra.mxu0 0.0
      %1266 = vmatprep.subr.mxu0 0.0
      %1267 = vmatpush2.msra.mxu0 0.0
      %1268 = vmatprep.subr.mxu0 0.0
      %1269 = vmatpush2.msra.mxu0 0.0
      %1270 = vmatprep.subr.mxu0 0.0
      %1271 = vmatpush2.msra.mxu0 0.0
      %1272 = vmatprep.subr.mxu0 0.0
      %1273 = vmatpush2.msra.mxu0 0.0
      %1274 = vmatprep.subr.mxu0 0.0
      %1275 = vmatpush2.msra.mxu0 0.0
      %1276 = vmatprep.subr.mxu0 0.0
      %1277 = vmatpush2.msra.mxu0 0.0
      %1278 = vmatprep.subr.mxu0 0.0
      %1279 = vmatpush2.msra.mxu0 0.0
      %1280 = vmatprep.subr.mxu0 0.0
      %1281 = vmatpush2.msra.mxu0 0.0
      %1282 = vmatprep.subr.mxu0 0.0
      %1283 = vmatpush2.msra.mxu0 0.0
      %1284 = vmatprep.mubr.f32.mxu0 0.0
      %1285 = vmatmul.mubr.f32.gmra.mxu0 %v1218
      %v1286 = vpop.f32.mrf.mxu0
      %v1287 = vadd.f32 0.0, %v1286
      %v1288 = vpop.f32.mrf.mxu0
      %1289 = vdwg.mxu0
      %v1291 = vsel %vm460, %v1061, 0
      %1293 = vmatprep.subr.mxu0 0.0
      %1294 = vmatpush1.msra.mxu0 0.0
      %1295 = vmatprep.subr.mxu0 0.0
      %1296 = vmatpush1.msra.mxu0 0.0
      %1297 = vmatprep.subr.mxu0 0.0
      %1298 = vmatpush1.msra.mxu0 0.0
      %1299 = vmatprep.subr.mxu0 0.0
      %1300 = vmatpush1.msra.mxu0 0.0
      %1301 = vmatprep.subr.mxu0 0.0
      %1302 = vmatpush1.msra.mxu0 0.0
      %1303 = vmatprep.subr.mxu0 0.0
      %1304 = vmatpush1.msra.mxu0 0.0
      %1305 = vmatprep.subr.mxu0 0.0
      %1306 = vmatpush1.msra.mxu0 0.0
      %1307 = vmatprep.subr.mxu0 0.0
      %1308 = vmatpush1.msra.mxu0 0.0
      %1309 = vmatprep.subr.mxu0 0.0
      %1310 = vmatpush1.msra.mxu0 0.0
      %1311 = vmatprep.subr.mxu0 0.0
      %1312 = vmatpush1.msra.mxu0 0.0
      %1313 = vmatprep.subr.mxu0 0.0
      %1314 = vmatpush1.msra.mxu0 0.0
      %1315 = vmatprep.subr.mxu0 0.0
      %1316 = vmatpush1.msra.mxu0 0.0
      %1317 = vmatprep.subr.mxu0 0.0
      %1318 = vmatpush1.msra.mxu0 %v1143
      %1319 = vmatprep.subr.mxu0 0.0
      %1320 = vmatpush1.msra.mxu0 %v1142
      %1321 = vmatprep.subr.mxu0 0.0
      %1322 = vmatpush1.msra.mxu0 %v1141
      %1323 = vmatprep.subr.mxu0 0.0
      %1324 = vmatpush1.msra.mxu0 %v1140
      %1325 = vmatprep.subr.mxu0 0.0
      %1326 = vmatpush2.msra.mxu0 0.0
      %1327 = vmatprep.subr.mxu0 0.0
      %1328 = vmatpush2.msra.mxu0 0.0
      %1329 = vmatprep.subr.mxu0 0.0
      %1330 = vmatpush2.msra.mxu0 0.0
      %1331 = vmatprep.subr.mxu0 0.0
      %1332 = vmatpush2.msra.mxu0 0.0
      %1333 = vmatprep.subr.mxu0 0.0
      %1334 = vmatpush2.msra.mxu0 0.0
      %1335 = vmatprep.subr.mxu0 0.0
      %1336 = vmatpush2.msra.mxu0 0.0
      %1337 = vmatprep.subr.mxu0 0.0
      %1338 = vmatpush2.msra.mxu0 0.0
      %1339 = vmatprep.subr.mxu0 0.0
      %1340 = vmatpush2.msra.mxu0 0.0
      %1341 = vmatprep.subr.mxu0 0.0
      %1342 = vmatpush2.msra.mxu0 0.0
      %1343 = vmatprep.subr.mxu0 0.0
      %1344 = vmatpush2.msra.mxu0 0.0
      %1345 = vmatprep.subr.mxu0 0.0
      %1346 = vmatpush2.msra.mxu0 0.0
      %1347 = vmatprep.subr.mxu0 0.0
      %1348 = vmatpush2.msra.mxu0 0.0
      %1349 = vmatprep.subr.mxu0 0.0
      %1350 = vmatpush2.msra.mxu0 0.0
      %1351 = vmatprep.subr.mxu0 0.0
      %1352 = vmatpush2.msra.mxu0 0.0
      %1353 = vmatprep.subr.mxu0 0.0
      %1354 = vmatpush2.msra.mxu0 0.0
      %1355 = vmatprep.subr.mxu0 0.0
      %1356 = vmatpush2.msra.mxu0 0.0
      %1357 = vmatprep.mubr.f32.mxu0 0.0
      %1358 = vmatmul.mubr.f32.gmra.mxu0 %v1291
      %v1359 = vpop.f32.mrf.mxu0
      %v1360 = vadd.f32 0.0, %v1359
      %v1361 = vpop.f32.mrf.mxu0
      %1362 = vdwg.mxu0
      %v1364 = vsel %vm460, %v1137, 0
      %1366 = vmatprep.subr.mxu0 0.0
      %1367 = vmatpush1.msra.mxu0 0.0
      %1368 = vmatprep.subr.mxu0 0.0
      %1369 = vmatpush1.msra.mxu0 0.0
      %1370 = vmatprep.subr.mxu0 0.0
      %1371 = vmatpush1.msra.mxu0 0.0
      %1372 = vmatprep.subr.mxu0 0.0
      %1373 = vmatpush1.msra.mxu0 0.0
      %1374 = vmatprep.subr.mxu0 0.0
      %1375 = vmatpush1.msra.mxu0 0.0
      %1376 = vmatprep.subr.mxu0 0.0
      %1377 = vmatpush1.msra.mxu0 0.0
      %1378 = vmatprep.subr.mxu0 0.0
      %1379 = vmatpush1.msra.mxu0 0.0
      %1380 = vmatprep.subr.mxu0 0.0
      %1381 = vmatpush1.msra.mxu0 0.0
      %1382 = vmatprep.subr.mxu0 0.0
      %1383 = vmatpush1.msra.mxu0 0.0
      %1384 = vmatprep.subr.mxu0 0.0
      %1385 = vmatpush1.msra.mxu0 0.0
      %1386 = vmatprep.subr.mxu0 0.0
      %1387 = vmatpush1.msra.mxu0 0.0
      %1388 = vmatprep.subr.mxu0 0.0
      %1389 = vmatpush1.msra.mxu0 0.0
      %1390 = vmatprep.subr.mxu0 0.0
      %1391 = vmatpush1.msra.mxu0 %v1143
      %1392 = vmatprep.subr.mxu0 0.0
      %1393 = vmatpush1.msra.mxu0 %v1142
      %1394 = vmatprep.subr.mxu0 0.0
      %1395 = vmatpush1.msra.mxu0 %v1141
      %1396 = vmatprep.subr.mxu0 0.0
      %1397 = vmatpush1.msra.mxu0 %v1140
      %1398 = vmatprep.subr.mxu0 0.0
      %1399 = vmatpush2.msra.mxu0 0.0
      %1400 = vmatprep.subr.mxu0 0.0
      %1401 = vmatpush2.msra.mxu0 0.0
      %1402 = vmatprep.subr.mxu0 0.0
      %1403 = vmatpush2.msra.mxu0 0.0
      %1404 = vmatprep.subr.mxu0 0.0
      %1405 = vmatpush2.msra.mxu0 0.0
      %1406 = vmatprep.subr.mxu0 0.0
      %1407 = vmatpush2.msra.mxu0 0.0
      %1408 = vmatprep.subr.mxu0 0.0
      %1409 = vmatpush2.msra.mxu0 0.0
      %1410 = vmatprep.subr.mxu0 0.0
      %1411 = vmatpush2.msra.mxu0 0.0
      %1412 = vmatprep.subr.mxu0 0.0
      %1413 = vmatpush2.msra.mxu0 0.0
      %1414 = vmatprep.subr.mxu0 0.0
      %1415 = vmatpush2.msra.mxu0 0.0
      %1416 = vmatprep.subr.mxu0 0.0
      %1417 = vmatpush2.msra.mxu0 0.0
      %1418 = vmatprep.subr.mxu0 0.0
      %1419 = vmatpush2.msra.mxu0 0.0
      %1420 = vmatprep.subr.mxu0 0.0
      %1421 = vmatpush2.msra.mxu0 0.0
      %1422 = vmatprep.subr.mxu0 0.0
      %1423 = vmatpush2.msra.mxu0 0.0
      %1424 = vmatprep.subr.mxu0 0.0
      %1425 = vmatpush2.msra.mxu0 0.0
      %1426 = vmatprep.subr.mxu0 0.0
      %1427 = vmatpush2.msra.mxu0 0.0
      %1428 = vmatprep.subr.mxu0 0.0
      %1429 = vmatpush2.msra.mxu0 0.0
      %1430 = vmatprep.mubr.f32.mxu0 0.0
      %1431 = vmatmul.mubr.f32.gmra.mxu0 %v1364
      %v1432 = vpop.f32.mrf.mxu0
      %v1433 = vadd.f32 0.0, %v1432
      %v1434 = vpop.f32.mrf.mxu0
      %1435 = vdwg.mxu0
      %v1436 = vld [vmem:[%s431] sm:$0x1]
      %v1437 = vld [vmem:[%s431 + $0x1] sm:$0x1]
      %v1438 = vld [vmem:[%s431 + $0x2] sm:$0x1]
      %v1439 = vld [vmem:[%s431 + $0x3] sm:$0x1]
      %v1440 = vadd.f32 %v1436, %v1214
      %v1441 = vadd.f32 %v1437, %v1287
      %v1442 = vadd.f32 %v1438, %v1360
      %v1443 = vadd.f32 %v1439, %v1433
      %vm1444 = vcmask 253952
      %v1445 = vsel %vm1444, %v1440, 0.0
      %1446 = vadd.xlane.f32.xlu0 %v1445
      %v1447 = vpop.xlane.xlu0 %1446
      %v1448 = vsel %vm1444, %v1441, 0.0
      %1449 = vadd.xlane.f32.xlu0 %v1448
      %v1450 = vpop.xlane.xlu0 %1449
      %v1451 = vsel %vm1444, %v1442, 0.0
      %1452 = vadd.xlane.f32.xlu0 %v1451
      %v1453 = vpop.xlane.xlu0 %1452
      %v1454 = vsel %vm1444, %v1443, 0.0
      %1455 = vadd.xlane.f32.xlu0 %v1454
      %v1456 = vpop.xlane.xlu0 %1455
      %v1457 = vrcp.pop 32.0
      %v1458 = vmul.f32 %v1447, %v1457
      %v1459 = vmul.f32 %v1450, %v1457
      %v1460 = vmul.f32 %v1453, %v1457
      %v1461 = vmul.f32 %v1456, %v1457
      %v1462 = vsub.f32 %v1440, %v1458
      %v1463 = vsub.f32 %v1441, %v1459
      %v1464 = vsub.f32 %v1442, %v1460
      %v1465 = vsub.f32 %v1443, %v1461
      %v1466 = vmul.f32 %v1462, %v1462
      %v1467 = vmul.f32 %v1463, %v1463
      %v1468 = vmul.f32 %v1464, %v1464
      %v1469 = vmul.f32 %v1465, %v1465
      %v1470 = vsel %vm1444, %v1466, 0.0
      %1471 = vadd.xlane.f32.xlu0 %v1470
      %v1472 = vpop.xlane.xlu0 %1471
      %v1473 = vsel %vm1444, %v1467, 0.0
      %1474 = vadd.xlane.f32.xlu0 %v1473
      %v1475 = vpop.xlane.xlu0 %1474
      %v1476 = vsel %vm1444, %v1468, 0.0
      %1477 = vadd.xlane.f32.xlu0 %v1476
      %v1478 = vpop.xlane.xlu0 %1477
      %v1479 = vsel %vm1444, %v1469, 0.0
      %1480 = vadd.xlane.f32.xlu0 %v1479
      %v1481 = vpop.xlane.xlu0 %1480
      %v1482 = vmul.f32 %v1472, %v1457
      %v1483 = vmul.f32 %v1475, %v1457
      %v1484 = vmul.f32 %v1478, %v1457
      %v1485 = vmul.f32 %v1481, %v1457
      %v1486 = vadd.f32 %v1482, 1e-05
      %v1487 = vadd.f32 %v1483, 1e-05
      %v1488 = vadd.f32 %v1484, 1e-05
      %v1489 = vadd.f32 %v1485, 1e-05
      %v1490 = vrsqrt.pop %v1486
      %v1491 = vrsqrt.pop %v1487
      %v1492 = vrsqrt.pop %v1488
      %v1493 = vrsqrt.pop %v1489
      %v1494 = vmul.f32 %v1462, %v1490
      %v1495 = vmul.f32 %v1463, %v1491
      %v1496 = vmul.f32 %v1464, %v1492
      %v1497 = vmul.f32 %v1465, %v1493
      %v1498 = vld [vmem:[%s7] sm:$0x1]
      %v1499 = vmul.f32 %v1494, %v1498
      %v1500 = vmul.f32 %v1495, %v1498
      %v1501 = vmul.f32 %v1496, %v1498
      %v1502 = vmul.f32 %v1497, %v1498
      %v1503 = vld [vmem:[%s8] sm:$0x1]
      %v1504 = vadd.f32 %v1499, %v1503
      %v1505 = vadd.f32 %v1500, %v1503
      %v1506 = vadd.f32 %v1501, %v1503
      %v1507 = vadd.f32 %v1502, %v1503
      %1508 = vst.msk [vmem:[%s435] sm:$0x1] %vm1444, %v1504
      %1509 = vst.msk [vmem:[%s435 + $0x1] sm:$0x1] %vm1444, %v1505
      %1510 = vst.msk [vmem:[%s435 + $0x2] sm:$0x1] %vm1444, %v1506
      %1511 = vst.msk [vmem:[%s435 + $0x3] sm:$0x1] %vm1444, %v1507
      %v1512 = vld [vmem:[%s6] sm:$0xff]
      %v1513 = vld [vmem:[%s6 + $0x8] sm:$0xff]
      %v1514 = vld [vmem:[%s6 + $0x10] sm:$0xff]
      %v1515 = vld [vmem:[%s6 + $0x18] sm:$0xff]
      %v1517 = vsel %vm460, %v1504, 0
      %1519 = vmatprep.subr.mxu0 0.0
      %1520 = vmatpush1.msra.mxu0 0.0
      %1521 = vmatprep.subr.mxu0 0.0
      %1522 = vmatpush1.msra.mxu0 0.0
      %1523 = vmatprep.subr.mxu0 0.0
      %1524 = vmatpush1.msra.mxu0 0.0
      %1525 = vmatprep.subr.mxu0 0.0
      %1526 = vmatpush1.msra.mxu0 0.0
      %1527 = vmatprep.subr.mxu0 0.0
      %1528 = vmatpush1.msra.mxu0 0.0
      %1529 = vmatprep.subr.mxu0 0.0
      %1530 = vmatpush1.msra.mxu0 0.0
      %1531 = vmatprep.subr.mxu0 0.0
      %1532 = vmatpush1.msra.mxu0 0.0
      %1533 = vmatprep.subr.mxu0 0.0
      %1534 = vmatpush1.msra.mxu0 0.0
      %1535 = vmatprep.subr.mxu0 0.0
      %1536 = vmatpush1.msra.mxu0 0.0
      %1537 = vmatprep.subr.mxu0 0.0
      %1538 = vmatpush1.msra.mxu0 0.0
      %1539 = vmatprep.subr.mxu0 0.0
      %1540 = vmatpush1.msra.mxu0 0.0
      %1541 = vmatprep.subr.mxu0 0.0
      %1542 = vmatpush1.msra.mxu0 0.0
      %1543 = vmatprep.subr.mxu0 0.0
      %1544 = vmatpush1.msra.mxu0 %v1515
      %1545 = vmatprep.subr.mxu0 0.0
      %1546 = vmatpush1.msra.mxu0 %v1514
      %1547 = vmatprep.subr.mxu0 0.0
      %1548 = vmatpush1.msra.mxu0 %v1513
      %1549 = vmatprep.subr.mxu0 0.0
      %1550 = vmatpush1.msra.mxu0 %v1512
      %1551 = vmatprep.subr.mxu0 0.0
      %1552 = vmatpush2.msra.mxu0 0.0
      %1553 = vmatprep.subr.mxu0 0.0
      %1554 = vmatpush2.msra.mxu0 0.0
      %1555 = vmatprep.subr.mxu0 0.0
      %1556 = vmatpush2.msra.mxu0 0.0
      %1557 = vmatprep.subr.mxu0 0.0
      %1558 = vmatpush2.msra.mxu0 0.0
      %1559 = vmatprep.subr.mxu0 0.0
      %1560 = vmatpush2.msra.mxu0 0.0
      %1561 = vmatprep.subr.mxu0 0.0
      %1562 = vmatpush2.msra.mxu0 0.0
      %1563 = vmatprep.subr.mxu0 0.0
      %1564 = vmatpush2.msra.mxu0 0.0
      %1565 = vmatprep.subr.mxu0 0.0
      %1566 = vmatpush2.msra.mxu0 0.0
      %1567 = vmatprep.subr.mxu0 0.0
      %1568 = vmatpush2.msra.mxu0 0.0
      %1569 = vmatprep.subr.mxu0 0.0
      %1570 = vmatpush2.msra.mxu0 0.0
      %1571 = vmatprep.subr.mxu0 0.0
      %1572 = vmatpush2.msra.mxu0 0.0
      %1573 = vmatprep.subr.mxu0 0.0
      %1574 = vmatpush2.msra.mxu0 0.0
      %1575 = vmatprep.subr.mxu0 0.0
      %1576 = vmatpush2.msra.mxu0 0.0
      %1577 = vmatprep.subr.mxu0 0.0
      %1578 = vmatpush2.msra.mxu0 0.0
      %1579 = vmatprep.subr.mxu0 0.0
      %1580 = vmatpush2.msra.mxu0 0.0
      %1581 = vmatprep.subr.mxu0 0.0
      %1582 = vmatpush2.msra.mxu0 0.0
      %1583 = vmatprep.mubr.f32.mxu0 0.0
      %1584 = vmatmul.mubr.f32.gmra.mxu0 %v1517
      %v1585 = vpop.f32.mrf.mxu0
      %v1586 = vadd.f32 0.0, %v1585
      %v1587 = vpop.f32.mrf.mxu0
      %1588 = vdwg.mxu0
      %v1590 = vsel %vm460, %v1505, 0
      %1592 = vmatprep.subr.mxu0 0.0
      %1593 = vmatpush1.msra.mxu0 0.0
      %1594 = vmatprep.subr.mxu0 0.0
      %1595 = vmatpush1.msra.mxu0 0.0
      %1596 = vmatprep.subr.mxu0 0.0
      %1597 = vmatpush1.msra.mxu0 0.0
      %1598 = vmatprep.subr.mxu0 0.0
      %1599 = vmatpush1.msra.mxu0 0.0
      %1600 = vmatprep.subr.mxu0 0.0
      %1601 = vmatpush1.msra.mxu0 0.0
      %1602 = vmatprep.subr.mxu0 0.0
      %1603 = vmatpush1.msra.mxu0 0.0
      %1604 = vmatprep.subr.mxu0 0.0
      %1605 = vmatpush1.msra.mxu0 0.0
      %1606 = vmatprep.subr.mxu0 0.0
      %1607 = vmatpush1.msra.mxu0 0.0
      %1608 = vmatprep.subr.mxu0 0.0
      %1609 = vmatpush1.msra.mxu0 0.0
      %1610 = vmatprep.subr.mxu0 0.0
      %1611 = vmatpush1.msra.mxu0 0.0
      %1612 = vmatprep.subr.mxu0 0.0
      %1613 = vmatpush1.msra.mxu0 0.0
      %1614 = vmatprep.subr.mxu0 0.0
      %1615 = vmatpush1.msra.mxu0 0.0
      %1616 = vmatprep.subr.mxu0 0.0
      %1617 = vmatpush1.msra.mxu0 %v1515
      %1618 = vmatprep.subr.mxu0 0.0
      %1619 = vmatpush1.msra.mxu0 %v1514
      %1620 = vmatprep.subr.mxu0 0.0
      %1621 = vmatpush1.msra.mxu0 %v1513
      %1622 = vmatprep.subr.mxu0 0.0
      %1623 = vmatpush1.msra.mxu0 %v1512
      %1624 = vmatprep.subr.mxu0 0.0
      %1625 = vmatpush2.msra.mxu0 0.0
      %1626 = vmatprep.subr.mxu0 0.0
      %1627 = vmatpush2.msra.mxu0 0.0
      %1628 = vmatprep.subr.mxu0 0.0
      %1629 = vmatpush2.msra.mxu0 0.0
      %1630 = vmatprep.subr.mxu0 0.0
      %1631 = vmatpush2.msra.mxu0 0.0
      %1632 = vmatprep.subr.mxu0 0.0
      %1633 = vmatpush2.msra.mxu0 0.0
      %1634 = vmatprep.subr.mxu0 0.0
      %1635 = vmatpush2.msra.mxu0 0.0
      %1636 = vmatprep.subr.mxu0 0.0
      %1637 = vmatpush2.msra.mxu0 0.0
      %1638 = vmatprep.subr.mxu0 0.0
      %1639 = vmatpush2.msra.mxu0 0.0
      %1640 = vmatprep.subr.mxu0 0.0
      %1641 = vmatpush2.msra.mxu0 0.0
      %1642 = vmatprep.subr.mxu0 0.0
      %1643 = vmatpush2.msra.mxu0 0.0
      %1644 = vmatprep.subr.mxu0 0.0
      %1645 = vmatpush2.msra.mxu0 0.0
      %1646 = vmatprep.subr.mxu0 0.0
      %1647 = vmatpush2.msra.mxu0 0.0
      %1648 = vmatprep.subr.mxu0 0.0
      %1649 = vmatpush2.msra.mxu0 0.0
      %1650 = vmatprep.subr.mxu0 0.0
      %1651 = vmatpush2.msra.mxu0 0.0
      %1652 = vmatprep.subr.mxu0 0.0
      %1653 = vmatpush2.msra.mxu0 0.0
      %1654 = vmatprep.subr.mxu0 0.0
      %1655 = vmatpush2.msra.mxu0 0.0
      %1656 = vmatprep.mubr.f32.mxu0 0.0
      %1657 = vmatmul.mubr.f32.gmra.mxu0 %v1590
      %v1658 = vpop.f32.mrf.mxu0
      %v1659 = vadd.f32 0.0, %v1658
      %v1660 = vpop.f32.mrf.mxu0
      %1661 = vdwg.mxu0
      %v1663 = vsel %vm460, %v1506, 0
      %1665 = vmatprep.subr.mxu0 0.0
      %1666 = vmatpush1.msra.mxu0 0.0
      %1667 = vmatprep.subr.mxu0 0.0
      %1668 = vmatpush1.msra.mxu0 0.0
      %1669 = vmatprep.subr.mxu0 0.0
      %1670 = vmatpush1.msra.mxu0 0.0
      %1671 = vmatprep.subr.mxu0 0.0
      %1672 = vmatpush1.msra.mxu0 0.0
      %1673 = vmatprep.subr.mxu0 0.0
      %1674 = vmatpush1.msra.mxu0 0.0
      %1675 = vmatprep.subr.mxu0 0.0
      %1676 = vmatpush1.msra.mxu0 0.0
      %1677 = vmatprep.subr.mxu0 0.0
      %1678 = vmatpush1.msra.mxu0 0.0
      %1679 = vmatprep.subr.mxu0 0.0
      %1680 = vmatpush1.msra.mxu0 0.0
      %1681 = vmatprep.subr.mxu0 0.0
      %1682 = vmatpush1.msra.mxu0 0.0
      %1683 = vmatprep.subr.mxu0 0.0
      %1684 = vmatpush1.msra.mxu0 0.0
      %1685 = vmatprep.subr.mxu0 0.0
      %1686 = vmatpush1.msra.mxu0 0.0
      %1687 = vmatprep.subr.mxu0 0.0
      %1688 = vmatpush1.msra.mxu0 0.0
      %1689 = vmatprep.subr.mxu0 0.0
      %1690 = vmatpush1.msra.mxu0 %v1515
      %1691 = vmatprep.subr.mxu0 0.0
      %1692 = vmatpush1.msra.mxu0 %v1514
      %1693 = vmatprep.subr.mxu0 0.0
      %1694 = vmatpush1.msra.mxu0 %v1513
      %1695 = vmatprep.subr.mxu0 0.0
      %1696 = vmatpush1.msra.mxu0 %v1512
      %1697 = vmatprep.subr.mxu0 0.0
      %1698 = vmatpush2.msra.mxu0 0.0
      %1699 = vmatprep.subr.mxu0 0.0
      %1700 = vmatpush2.msra.mxu0 0.0
      %1701 = vmatprep.subr.mxu0 0.0
      %1702 = vmatpush2.msra.mxu0 0.0
      %1703 = vmatprep.subr.mxu0 0.0
      %1704 = vmatpush2.msra.mxu0 0.0
      %1705 = vmatprep.subr.mxu0 0.0
      %1706 = vmatpush2.msra.mxu0 0.0
      %1707 = vmatprep.subr.mxu0 0.0
      %1708 = vmatpush2.msra.mxu0 0.0
      %1709 = vmatprep.subr.mxu0 0.0
      %1710 = vmatpush2.msra.mxu0 0.0
      %1711 = vmatprep.subr.mxu0 0.0
      %1712 = vmatpush2.msra.mxu0 0.0
      %1713 = vmatprep.subr.mxu0 0.0
      %1714 = vmatpush2.msra.mxu0 0.0
      %1715 = vmatprep.subr.mxu0 0.0
      %1716 = vmatpush2.msra.mxu0 0.0
      %1717 = vmatprep.subr.mxu0 0.0
      %1718 = vmatpush2.msra.mxu0 0.0
      %1719 = vmatprep.subr.mxu0 0.0
      %1720 = vmatpush2.msra.mxu0 0.0
      %1721 = vmatprep.subr.mxu0 0.0
      %1722 = vmatpush2.msra.mxu0 0.0
      %1723 = vmatprep.subr.mxu0 0.0
      %1724 = vmatpush2.msra.mxu0 0.0
      %1725 = vmatprep.subr.mxu0 0.0
      %1726 = vmatpush2.msra.mxu0 0.0
      %1727 = vmatprep.subr.mxu0 0.0
      %1728 = vmatpush2.msra.mxu0 0.0
      %1729 = vmatprep.mubr.f32.mxu0 0.0
      %1730 = vmatmul.mubr.f32.gmra.mxu0 %v1663
      %v1731 = vpop.f32.mrf.mxu0
      %v1732 = vadd.f32 0.0, %v1731
      %v1733 = vpop.f32.mrf.mxu0
      %1734 = vdwg.mxu0
      %v1736 = vsel %vm460, %v1507, 0
      %1738 = vmatprep.subr.mxu0 0.0
      %1739 = vmatpush1.msra.mxu0 0.0
      %1740 = vmatprep.subr.mxu0 0.0
      %1741 = vmatpush1.msra.mxu0 0.0
      %1742 = vmatprep.subr.mxu0 0.0
      %1743 = vmatpush1.msra.mxu0 0.0
      %1744 = vmatprep.subr.mxu0 0.0
      %1745 = vmatpush1.msra.mxu0 0.0
      %1746 = vmatprep.subr.mxu0 0.0
      %1747 = vmatpush1.msra.mxu0 0.0
      %1748 = vmatprep.subr.mxu0 0.0
      %1749 = vmatpush1.msra.mxu0 0.0
      %1750 = vmatprep.subr.mxu0 0.0
      %1751 = vmatpush1.msra.mxu0 0.0
      %1752 = vmatprep.subr.mxu0 0.0
      %1753 = vmatpush1.msra.mxu0 0.0
      %1754 = vmatprep.subr.mxu0 0.0
      %1755 = vmatpush1.msra.mxu0 0.0
      %1756 = vmatprep.subr.mxu0 0.0
      %1757 = vmatpush1.msra.mxu0 0.0
      %1758 = vmatprep.subr.mxu0 0.0
      %1759 = vmatpush1.msra.mxu0 0.0
      %1760 = vmatprep.subr.mxu0 0.0
      %1761 = vmatpush1.msra.mxu0 0.0
      %1762 = vmatprep.subr.mxu0 0.0
      %1763 = vmatpush1.msra.mxu0 %v1515
      %1764 = vmatprep.subr.mxu0 0.0
      %1765 = vmatpush1.msra.mxu0 %v1514
      %1766 = vmatprep.subr.mxu0 0.0
      %1767 = vmatpush1.msra.mxu0 %v1513
      %1768 = vmatprep.subr.mxu0 0.0
      %1769 = vmatpush1.msra.mxu0 %v1512
      %1770 = vmatprep.subr.mxu0 0.0
      %1771 = vmatpush2.msra.mxu0 0.0
      %1772 = vmatprep.subr.mxu0 0.0
      %1773 = vmatpush2.msra.mxu0 0.0
      %1774 = vmatprep.subr.mxu0 0.0
      %1775 = vmatpush2.msra.mxu0 0.0
      %1776 = vmatprep.subr.mxu0 0.0
      %1777 = vmatpush2.msra.mxu0 0.0
      %1778 = vmatprep.subr.mxu0 0.0
      %1779 = vmatpush2.msra.mxu0 0.0
      %1780 = vmatprep.subr.mxu0 0.0
      %1781 = vmatpush2.msra.mxu0 0.0
      %1782 = vmatprep.subr.mxu0 0.0
      %1783 = vmatpush2.msra.mxu0 0.0
      %1784 = vmatprep.subr.mxu0 0.0
      %1785 = vmatpush2.msra.mxu0 0.0
      %1786 = vmatprep.subr.mxu0 0.0
      %1787 = vmatpush2.msra.mxu0 0.0
      %1788 = vmatprep.subr.mxu0 0.0
      %1789 = vmatpush2.msra.mxu0 0.0
      %1790 = vmatprep.subr.mxu0 0.0
      %1791 = vmatpush2.msra.mxu0 0.0
      %1792 = vmatprep.subr.mxu0 0.0
      %1793 = vmatpush2.msra.mxu0 0.0
      %1794 = vmatprep.subr.mxu0 0.0
      %1795 = vmatpush2.msra.mxu0 0.0
      %1796 = vmatprep.subr.mxu0 0.0
      %1797 = vmatpush2.msra.mxu0 0.0
      %1798 = vmatprep.subr.mxu0 0.0
      %1799 = vmatpush2.msra.mxu0 0.0
      %1800 = vmatprep.subr.mxu0 0.0
      %1801 = vmatpush2.msra.mxu0 0.0
      %1802 = vmatprep.mubr.f32.mxu0 0.0
      %1803 = vmatmul.mubr.f32.gmra.mxu0 %v1736
      %v1804 = vpop.f32.mrf.mxu0
      %v1805 = vadd.f32 0.0, %v1804
      %v1806 = vpop.f32.mrf.mxu0
      %1807 = vdwg.mxu0
      %1808 = vst.msk [vmem:[%s439] sm:$0x1] %vm1444, %v1586
      %1809 = vst.msk [vmem:[%s439 + $0x1] sm:$0x1] %vm1444, %v1659
      %1810 = vst.msk [vmem:[%s439 + $0x2] sm:$0x1] %vm1444, %v1732
      %1811 = vst.msk [vmem:[%s439 + $0x3] sm:$0x1] %vm1444, %v1805
      %p1812 = scmp.lt.s32.totalorder %s22, 1
      %s1813 = scalar_select %p1812, %s22, 1
      %s1814 = smul.addr %s1813, 4
      %s1815 = scalar_lea.vmem %s9, %s1814
      %p1816 = scmp.lt.s32.totalorder %s22, 1
      %s1817 = scalar_select %p1816, %s22, 1
      %s1818 = smul.addr %s1817, 4
      %s1819 = scalar_lea.vmem %s10, %s1818
      // Predicated region
      $region57: #{_lambda_.82} parent=55 // pred_check
        %p1820 = pneg %p254
      $region58: #{_lambda_.82} parent=55 // pred_check_branch
        %1822 = sbr.rel (%p1820) target = $region60
      $region59: #{_lambda_.82} parent=55 // pred_region
        _
      $region60: #{_lambda_.82} parent=55 // pred_fallthru
        _
      // Predicated region
      $region61: #{_lambda_.82} parent=55 // pred_check
        %p1823 = pneg %p280
      $region62: #{_lambda_.82} parent=55 // pred_check_branch
        %1825 = sbr.rel (%p1823) target = $region64
      $region63: #{_lambda_.82} parent=55 // pred_region
        _
      $region64: #{_lambda_.82} parent=55 // pred_fallthru
        _
    $region56: #{_lambda_.82} parent=5 // pred_fallthru
      _
    %p1826 = scmp.le.s32.totalorder 2, %s17
    // Predicated region
    $region65: #{_lambda_.82} parent=5 // pred_check
      %p1827 = pneg %p1826
    $region66: #{_lambda_.82} parent=5 // pred_check_branch
      %1829 = sbr.rel (%p1827) target = $region68
    $region67: #{_lambda_.82} parent=5 // pred_region
      %s1830 = ssub.s32 %s17, 2
      // Predicated region
      $region69: #{_lambda_.82} parent=67 // pred_check
        %p1831 = pneg %p260
      $region70: #{_lambda_.82} parent=67 // pred_check_branch
        %1833 = sbr.rel (%p1831) target = $region72
      $region71: #{_lambda_.82} parent=67 // pred_region
        %p1834 = scmp.lt.s32.totalorder %s23, 1
        %s1835 = scalar_select %p1834, %s23, 1
        %s1836 = smul.addr %s1835, 4
        %s1837 = scalar_lea.vmem %s9, %s1836
      $region72: #{_lambda_.82} parent=67 // pred_fallthru
        _
      // Predicated region
      $region73: #{_lambda_.82} parent=67 // pred_check
        %p1838 = pneg %p286
      $region74: #{_lambda_.82} parent=67 // pred_check_branch
        %1840 = sbr.rel (%p1838) target = $region76
      $region75: #{_lambda_.82} parent=67 // pred_region
        %p1841 = scmp.lt.s32.totalorder %s23, 1
        %s1842 = scalar_select %p1841, %s23, 1
        %s1843 = smul.addr %s1842, 4
        %s1844 = scalar_lea.vmem %s10, %s1843
      $region76: #{_lambda_.82} parent=67 // pred_fallthru
        _
    $region68: #{_lambda_.82} parent=5 // pred_fallthru
      _
  $region6: #{_lambda_.82} parent=0 // loop_footer
    %s21 = sadd.s32 1, %s17
  $region7: #{_lambda_.82} parent=0 // loop_footer_branch
    %16 = sbr.rel target = $region3
  $region8: #{_lambda_.82} parent=0 // loop_exit
    _

// kernel: _lambda_.70
$region0: #{_lambda_.70}
  #allocation0 [shape = 'u32[]', space=smem, size = 0x4, offset = 0x4, fixed_abs, tag = 'smem constant byte address 0x4 - core index']
  #allocation1 [shape = 'u32[144,128]{1,0:T(1,128)}', space=vmem, size = 0x12000, scoped, tag = 'internal scratch']
  %s0 = inlined_call_operand.vmem [shape: f32[4,6], index: 0, kind: input, shape index: {}]
  %s1 = inlined_call_operand.vmem [shape: f32[6,6], index: 1, kind: input, shape index: {}]
  %s2 = inlined_call_operand.vmem [shape: f32[1,6], index: 2, kind: input, shape index: {}]
  %s3 = inlined_call_operand.vmem [shape: f32[4,6], index: 3, kind: output, shape index: {}]
  %s4 = sld [smem:[#allocation0]]
  $region22: #{_lambda_.70} parent=0
    _
  %s6 = ssub.s32 1, %s4
  %s7 = scalar_select 0, %s6, %s4
  // Predicated region
  $region2: #{_lambda_.70} parent=0 // pred_check
    _
  $region3: #{_lambda_.70} parent=0 // pred_check_branch
    %9 = sbr.rel (0) target = $region5
  $region4: #{_lambda_.70} parent=0 // pred_region
    _
  $region5: #{_lambda_.70} parent=0 // pred_fallthru
    _
  // Predicated region
  $region6: #{_lambda_.70} parent=0 // pred_check
    _
  $region7: #{_lambda_.70} parent=0 // pred_check_branch
    %11 = sbr.rel (0) target = $region9
  $region8: #{_lambda_.70} parent=0 // pred_region
    _
  $region9: #{_lambda_.70} parent=0 // pred_fallthru
    _
  // Predicated region
  $region10: #{_lambda_.70} parent=0 // pred_check
    _
  $region11: #{_lambda_.70} parent=0 // pred_check_branch
    %13 = sbr.rel (0) target = $region13
  $region12: #{_lambda_.70} parent=0 // pred_region
    _
  $region13: #{_lambda_.70} parent=0 // pred_fallthru
    _
  %v14 = vld [vmem:[%s0] sm:$0xf]
  %v15 = vld [vmem:[%s1] sm:$0x3f]
  %v16 = vld [vmem:[%s2] sm:$0x1]
  %v18 = vlaneseq
  %v19 = vshrl.u32 %v18, 7
  %v20 = vsub.s32 0, %v19
  %v21 = vrot.slane %v16, %v20
  %vm23 = vcmask 48128
  %v25 = vsel %vm23, %v14, 0
  %vm27 = vcmask 1045504
  %v29 = vsel %vm27, %v15, 0
  %31 = vmatprep.subr.mxu0 0.0
  %32 = vmatpush1.msra.mxu0 0.0
  %33 = vmatprep.subr.mxu0 0.0
  %34 = vmatpush1.msra.mxu0 0.0
  %35 = vmatprep.subr.mxu0 0.0
  %36 = vmatpush1.msra.mxu0 0.0
  %37 = vmatprep.subr.mxu0 0.0
  %38 = vmatpush1.msra.mxu0 0.0
  %39 = vmatprep.subr.mxu0 0.0
  %40 = vmatpush1.msra.mxu0 0.0
  %41 = vmatprep.subr.mxu0 0.0
  %42 = vmatpush1.msra.mxu0 0.0
  %43 = vmatprep.subr.mxu0 0.0
  %44 = vmatpush1.msra.mxu0 0.0
  %45 = vmatprep.subr.mxu0 0.0
  %46 = vmatpush1.msra.mxu0 0.0
  %47 = vmatprep.subr.mxu0 0.0
  %48 = vmatpush1.msra.mxu0 0.0
  %49 = vmatprep.subr.mxu0 0.0
  %50 = vmatpush1.msra.mxu0 0.0
  %51 = vmatprep.subr.mxu0 0.0
  %52 = vmatpush1.msra.mxu0 0.0
  %53 = vmatprep.subr.mxu0 0.0
  %54 = vmatpush1.msra.mxu0 0.0
  %55 = vmatprep.subr.mxu0 0.0
  %56 = vmatpush1.msra.mxu0 0.0
  %57 = vmatprep.subr.mxu0 0.0
  %58 = vmatpush1.msra.mxu0 0.0
  %59 = vmatprep.subr.mxu0 0.0
  %60 = vmatpush1.msra.mxu0 0.0
  %61 = vmatprep.subr.mxu0 0.0
  %62 = vmatpush1.msra.mxu0 %v29
  %63 = vmatprep.subr.mxu0 0.0
  %64 = vmatpush2.msra.mxu0 0.0
  %65 = vmatprep.subr.mxu0 0.0
  %66 = vmatpush2.msra.mxu0 0.0
  %67 = vmatprep.subr.mxu0 0.0
  %68 = vmatpush2.msra.mxu0 0.0
  %69 = vmatprep.subr.mxu0 0.0
  %70 = vmatpush2.msra.mxu0 0.0
  %71 = vmatprep.subr.mxu0 0.0
  %72 = vmatpush2.msra.mxu0 0.0
  %73 = vmatprep.subr.mxu0 0.0
  %74 = vmatpush2.msra.mxu0 0.0
  %75 = vmatprep.subr.mxu0 0.0
  %76 = vmatpush2.msra.mxu0 0.0
  %77 = vmatprep.subr.mxu0 0.0
  %78 = vmatpush2.msra.mxu0 0.0
  %79 = vmatprep.subr.mxu0 0.0
  %80 = vmatpush2.msra.mxu0 0.0
  %81 = vmatprep.subr.mxu0 0.0
  %82 = vmatpush2.msra.mxu0 0.0
  %83 = vmatprep.subr.mxu0 0.0
  %84 = vmatpush2.msra.mxu0 0.0
  %85 = vmatprep.subr.mxu0 0.0
  %86 = vmatpush2.msra.mxu0 0.0
  %87 = vmatprep.subr.mxu0 0.0
  %88 = vmatpush2.msra.mxu0 0.0
  %89 = vmatprep.subr.mxu0 0.0
  %90 = vmatpush2.msra.mxu0 0.0
  %91 = vmatprep.subr.mxu0 0.0
  %92 = vmatpush2.msra.mxu0 0.0
  %93 = vmatprep.subr.mxu0 0.0
  %94 = vmatpush2.msra.mxu0 0.0
  %95 = vmatprep.mubr.f32.mxu0 0.0
  %96 = vmatmul.mubr.f32.gmra.mxu0 %v25
  %v97 = vpop.f32.mrf.mxu0
  %v98 = vadd.f32 %v21, %v97
  %v99 = vpop.f32.mrf.mxu0
  %100 = vdwg.mxu0
  %vm101 = vcmask 44032
  %102 = vst.msk [vmem:[%s3] sm:$0xf] %vm101, %v98
  // Predicated region
  $region14: #{_lambda_.70} parent=0 // pred_check
    _
  $region15: #{_lambda_.70} parent=0 // pred_check_branch
    %104 = sbr.rel (0) target = $region17
  $region16: #{_lambda_.70} parent=0 // pred_region
    _
  $region17: #{_lambda_.70} parent=0 // pred_fallthru
    _
  // Predicated region
  $region18: #{_lambda_.70} parent=0 // pred_check
    _
  $region19: #{_lambda_.70} parent=0 // pred_check_branch
    %106 = sbr.rel (0) target = $region21
  $region20: #{_lambda_.70} parent=0 // pred_region
    _
  $region21: #{_lambda_.70} parent=0 // pred_fallthru
    _

// kernel: _lambda_.83
$region0: #{_lambda_.83}
  #allocation0 [shape = 'u32[]', space=smem, size = 0x4, offset = 0x4, fixed_abs, tag = 'smem constant byte address 0x4 - core index']
  #allocation1 [shape = 'u32[144,128]{1,0:T(1,128)}', space=vmem, size = 0x12000, scoped, tag = 'internal scratch']
  %s0 = inlined_call_operand.vmem [shape: f32[4,4], index: 0, kind: input, shape index: {}]
  %s1 = inlined_call_operand.vmem [shape: f32[4,64], index: 1, kind: input, shape index: {}]
  %s2 = inlined_call_operand.vmem [shape: f32[1,64], index: 2, kind: input, shape index: {}]
  %s3 = inlined_call_operand.vmem [shape: f32[4,64], index: 3, kind: output, shape index: {}]
  %s4 = sld [smem:[#allocation0]]
  $region22: #{_lambda_.83} parent=0
    _
  %s6 = ssub.s32 1, %s4
  %s7 = scalar_select 0, %s6, %s4
  // Predicated region
  $region2: #{_lambda_.83} parent=0 // pred_check
    _
  $region3: #{_lambda_.83} parent=0 // pred_check_branch
    %9 = sbr.rel (0) target = $region5
  $region4: #{_lambda_.83} parent=0 // pred_region
    _
  $region5: #{_lambda_.83} parent=0 // pred_fallthru
    _
  // Predicated region
  $region6: #{_lambda_.83} parent=0 // pred_check
    _
  $region7: #{_lambda_.83} parent=0 // pred_check_branch
    %11 = sbr.rel (0) target = $region9
  $region8: #{_lambda_.83} parent=0 // pred_region
    _
  $region9: #{_lambda_.83} parent=0 // pred_fallthru
    _
  // Predicated region
  $region10: #{_lambda_.83} parent=0 // pred_check
    _
  $region11: #{_lambda_.83} parent=0 // pred_check_branch
    %13 = sbr.rel (0) target = $region13
  $region12: #{_lambda_.83} parent=0 // pred_region
    _
  $region13: #{_lambda_.83} parent=0 // pred_fallthru
    _
  %v14 = vld [vmem:[%s0] sm:$0xf]
  %v15 = vld [vmem:[%s1] sm:$0xf]
  %v16 = vld [vmem:[%s2] sm:$0x1]
  %v18 = vlaneseq
  %v19 = vshrl.u32 %v18, 7
  %v20 = vsub.s32 0, %v19
  %v21 = vrot.slane %v16, %v20
  %vm23 = vcmask 31744
  %v25 = vsel %vm23, %v14, 0
  %vm27 = vcmask 1043456
  %v29 = vsel %vm27, %v15, 0
  %31 = vmatprep.subr.mxu0 0.0
  %32 = vmatpush1.msra.mxu0 0.0
  %33 = vmatprep.subr.mxu0 0.0
  %34 = vmatpush1.msra.mxu0 0.0
  %35 = vmatprep.subr.mxu0 0.0
  %36 = vmatpush1.msra.mxu0 0.0
  %37 = vmatprep.subr.mxu0 0.0
  %38 = vmatpush1.msra.mxu0 0.0
  %39 = vmatprep.subr.mxu0 0.0
  %40 = vmatpush1.msra.mxu0 0.0
  %41 = vmatprep.subr.mxu0 0.0
  %42 = vmatpush1.msra.mxu0 0.0
  %43 = vmatprep.subr.mxu0 0.0
  %44 = vmatpush1.msra.mxu0 0.0
  %45 = vmatprep.subr.mxu0 0.0
  %46 = vmatpush1.msra.mxu0 0.0
  %47 = vmatprep.subr.mxu0 0.0
  %48 = vmatpush1.msra.mxu0 0.0
  %49 = vmatprep.subr.mxu0 0.0
  %50 = vmatpush1.msra.mxu0 0.0
  %51 = vmatprep.subr.mxu0 0.0
  %52 = vmatpush1.msra.mxu0 0.0
  %53 = vmatprep.subr.mxu0 0.0
  %54 = vmatpush1.msra.mxu0 0.0
  %55 = vmatprep.subr.mxu0 0.0
  %56 = vmatpush1.msra.mxu0 0.0
  %57 = vmatprep.subr.mxu0 0.0
  %58 = vmatpush1.msra.mxu0 0.0
  %59 = vmatprep.subr.mxu0 0.0
  %60 = vmatpush1.msra.mxu0 0.0
  %61 = vmatprep.subr.mxu0 0.0
  %62 = vmatpush1.msra.mxu0 %v29
  %63 = vmatprep.subr.mxu0 0.0
  %64 = vmatpush2.msra.mxu0 0.0
  %65 = vmatprep.subr.mxu0 0.0
  %66 = vmatpush2.msra.mxu0 0.0
  %67 = vmatprep.subr.mxu0 0.0
  %68 = vmatpush2.msra.mxu0 0.0
  %69 = vmatprep.subr.mxu0 0.0
  %70 = vmatpush2.msra.mxu0 0.0
  %71 = vmatprep.subr.mxu0 0.0
  %72 = vmatpush2.msra.mxu0 0.0
  %73 = vmatprep.subr.mxu0 0.0
  %74 = vmatpush2.msra.mxu0 0.0
  %75 = vmatprep.subr.mxu0 0.0
  %76 = vmatpush2.msra.mxu0 0.0
  %77 = vmatprep.subr.mxu0 0.0
  %78 = vmatpush2.msra.mxu0 0.0
  %79 = vmatprep.subr.mxu0 0.0
  %80 = vmatpush2.msra.mxu0 0.0
  %81 = vmatprep.subr.mxu0 0.0
  %82 = vmatpush2.msra.mxu0 0.0
  %83 = vmatprep.subr.mxu0 0.0
  %84 = vmatpush2.msra.mxu0 0.0
  %85 = vmatprep.subr.mxu0 0.0
  %86 = vmatpush2.msra.mxu0 0.0
  %87 = vmatprep.subr.mxu0 0.0
  %88 = vmatpush2.msra.mxu0 0.0
  %89 = vmatprep.subr.mxu0 0.0
  %90 = vmatpush2.msra.mxu0 0.0
  %91 = vmatprep.subr.mxu0 0.0
  %92 = vmatpush2.msra.mxu0 0.0
  %93 = vmatprep.subr.mxu0 0.0
  %94 = vmatpush2.msra.mxu0 0.0
  %95 = vmatprep.mubr.f32.mxu0 0.0
  %96 = vmatmul.mubr.f32.gmra.mxu0 %v25
  %v97 = vpop.f32.mrf.mxu0
  %v98 = vadd.f32 %v21, %v97
  %v99 = vpop.f32.mrf.mxu0
  %100 = vdwg.mxu0
  %vm101 = vcmask 519168
  %102 = vst.msk [vmem:[%s3] sm:$0xf] %vm101, %v98
  // Predicated region
  $region14: #{_lambda_.83} parent=0 // pred_check
    _
  $region15: #{_lambda_.83} parent=0 // pred_check_branch
    %104 = sbr.rel (0) target = $region17
  $region16: #{_lambda_.83} parent=0 // pred_region
    _
  $region17: #{_lambda_.83} parent=0 // pred_fallthru
    _
  // Predicated region
  $region18: #{_lambda_.83} parent=0 // pred_check
    _
  $region19: #{_lambda_.83} parent=0 // pred_check_branch
    %106 = sbr.rel (0) target = $region21
  $region20: #{_lambda_.83} parent=0 // pred_region
    _
  $region21: #{_lambda_.83} parent=0 // pred_fallthru
    _

// kernel: _lambda_.84
$region0: #{_lambda_.84}
  #allocation0 [shape = 'u32[]', space=smem, size = 0x4, offset = 0x4, fixed_abs, tag = 'smem constant byte address 0x4 - core index']
  #allocation1 [shape = 'u32[144,128]{1,0:T(1,128)}', space=vmem, size = 0x12000, scoped, tag = 'internal scratch']
  %s0 = inlined_call_operand.vmem [shape: f32[8,32], index: 0, kind: input, shape index: {}]
  %s1 = inlined_call_operand.vmem [shape: f32[8,32], index: 1, kind: input, shape index: {}]
  %s2 = inlined_call_operand.vmem [shape: f32[1,32], index: 2, kind: input, shape index: {}]
  %s3 = inlined_call_operand.vmem [shape: f32[1,32], index: 3, kind: input, shape index: {}]
  %s4 = inlined_call_operand.vmem [shape: f32[32,64], index: 4, kind: input, shape index: {}]
  %s5 = inlined_call_operand.vmem [shape: f32[8,32], index: 5, kind: output, shape index: {0}]
  %s6 = inlined_call_operand.vmem [shape: f32[8,64], index: 6, kind: output, shape index: {1}]
  %7 = xla_tuple %s5, %s6
  %s8 = sld [smem:[#allocation0]]
  $region38: #{_lambda_.84} parent=0
    _
  %s10 = ssub.s32 1, %s8
  %s11 = scalar_select 0, %s10, %s8
  // Predicated region
  $region2: #{_lambda_.84} parent=0 // pred_check
    _
  $region3: #{_lambda_.84} parent=0 // pred_check_branch
    %13 = sbr.rel (0) target = $region5
  $region4: #{_lambda_.84} parent=0 // pred_region
    _
  $region5: #{_lambda_.84} parent=0 // pred_fallthru
    _
  // Predicated region
  $region6: #{_lambda_.84} parent=0 // pred_check
    _
  $region7: #{_lambda_.84} parent=0 // pred_check_branch
    %15 = sbr.rel (0) target = $region9
  $region8: #{_lambda_.84} parent=0 // pred_region
    _
  $region9: #{_lambda_.84} parent=0 // pred_fallthru
    _
  // Predicated region
  $region10: #{_lambda_.84} parent=0 // pred_check
    _
  $region11: #{_lambda_.84} parent=0 // pred_check_branch
    %17 = sbr.rel (0) target = $region13
  $region12: #{_lambda_.84} parent=0 // pred_region
    _
  $region13: #{_lambda_.84} parent=0 // pred_fallthru
    _
  // Predicated region
  $region14: #{_lambda_.84} parent=0 // pred_check
    _
  $region15: #{_lambda_.84} parent=0 // pred_check_branch
    %19 = sbr.rel (0) target = $region17
  $region16: #{_lambda_.84} parent=0 // pred_region
    _
  $region17: #{_lambda_.84} parent=0 // pred_fallthru
    _
  // Predicated region
  $region18: #{_lambda_.84} parent=0 // pred_check
    _
  $region19: #{_lambda_.84} parent=0 // pred_check_branch
    %21 = sbr.rel (0) target = $region21
  $region20: #{_lambda_.84} parent=0 // pred_region
    _
  $region21: #{_lambda_.84} parent=0 // pred_fallthru
    _
  %v22 = vld [vmem:[%s0] sm:$0xff]
  %v23 = vld [vmem:[%s1] sm:$0xff]
  %v24 = vadd.f32 %v22, %v23
  %vm25 = vcmask 261120
  %v26 = vsel %vm25, %v24, 0.0
  %27 = vadd.xlane.f32.xlu0 %v26
  %v28 = vpop.xlane.xlu0 %27
  %v29 = vrcp.pop 32.0
  %v30 = vmul.f32 %v28, %v29
  %v31 = vsub.f32 %v24, %v30
  %v32 = vmul.f32 %v31, %v31
  %v33 = vsel %vm25, %v32, 0.0
  %34 = vadd.xlane.f32.xlu0 %v33
  %v35 = vpop.xlane.xlu0 %34
  %v36 = vmul.f32 %v35, %v29
  %v37 = vadd.f32 %v36, 1e-05
  %v38 = vrsqrt.pop %v37
  %v39 = vmul.f32 %v31, %v38
  %v40 = vld [vmem:[%s2] sm:$0x1]
  %v42 = vlaneseq
  %v43 = vshrl.u32 %v42, 7
  %v44 = vsub.s32 0, %v43
  %v45 = vrot.slane %v40, %v44
  %v47 = vmul.f32 %v39, %v45
  %v48 = vld [vmem:[%s3] sm:$0x1]
  %v50 = vlaneseq
  %v51 = vshrl.u32 %v50, 7
  %v52 = vsub.s32 0, %v51
  %v53 = vrot.slane %v48, %v52
  %v55 = vadd.f32 %v47, %v53
  %56 = vst.msk [vmem:[%s5] sm:$0xff] %vm25, %v55
  %v57 = vld [vmem:[%s4] sm:$0xff]
  %v58 = vld [vmem:[%s4 + $0x8] sm:$0xff]
  %v59 = vld [vmem:[%s4 + $0x10] sm:$0xff]
  %v60 = vld [vmem:[%s4 + $0x18] sm:$0xff]
  %v62 = vsel %vm25, %v55, 0
  %64 = vmatprep.subr.mxu0 0.0
  %65 = vmatpush1.msra.mxu0 0.0
  %66 = vmatprep.subr.mxu0 0.0
  %67 = vmatpush1.msra.mxu0 0.0
  %68 = vmatprep.subr.mxu0 0.0
  %69 = vmatpush1.msra.mxu0 0.0
  %70 = vmatprep.subr.mxu0 0.0
  %71 = vmatpush1.msra.mxu0 0.0
  %72 = vmatprep.subr.mxu0 0.0
  %73 = vmatpush1.msra.mxu0 0.0
  %74 = vmatprep.subr.mxu0 0.0
  %75 = vmatpush1.msra.mxu0 0.0
  %76 = vmatprep.subr.mxu0 0.0
  %77 = vmatpush1.msra.mxu0 0.0
  %78 = vmatprep.subr.mxu0 0.0
  %79 = vmatpush1.msra.mxu0 0.0
  %80 = vmatprep.subr.mxu0 0.0
  %81 = vmatpush1.msra.mxu0 0.0
  %82 = vmatprep.subr.mxu0 0.0
  %83 = vmatpush1.msra.mxu0 0.0
  %84 = vmatprep.subr.mxu0 0.0
  %85 = vmatpush1.msra.mxu0 0.0
  %86 = vmatprep.subr.mxu0 0.0
  %87 = vmatpush1.msra.mxu0 0.0
  %88 = vmatprep.subr.mxu0 0.0
  %89 = vmatpush1.msra.mxu0 %v60
  %90 = vmatprep.subr.mxu0 0.0
  %91 = vmatpush1.msra.mxu0 %v59
  %92 = vmatprep.subr.mxu0 0.0
  %93 = vmatpush1.msra.mxu0 %v58
  %94 = vmatprep.subr.mxu0 0.0
  %95 = vmatpush1.msra.mxu0 %v57
  %96 = vmatprep.subr.mxu0 0.0
  %97 = vmatpush2.msra.mxu0 0.0
  %98 = vmatprep.subr.mxu0 0.0
  %99 = vmatpush2.msra.mxu0 0.0
  %100 = vmatprep.subr.mxu0 0.0
  %101 = vmatpush2.msra.mxu0 0.0
  %102 = vmatprep.subr.mxu0 0.0
  %103 = vmatpush2.msra.mxu0 0.0
  %104 = vmatprep.subr.mxu0 0.0
  %105 = vmatpush2.msra.mxu0 0.0
  %106 = vmatprep.subr.mxu0 0.0
  %107 = vmatpush2.msra.mxu0 0.0
  %108 = vmatprep.subr.mxu0 0.0
  %109 = vmatpush2.msra.mxu0 0.0
  %110 = vmatprep.subr.mxu0 0.0
  %111 = vmatpush2.msra.mxu0 0.0
  %112 = vmatprep.subr.mxu0 0.0
  %113 = vmatpush2.msra.mxu0 0.0
  %114 = vmatprep.subr.mxu0 0.0
  %115 = vmatpush2.msra.mxu0 0.0
  %116 = vmatprep.subr.mxu0 0.0
  %117 = vmatpush2.msra.mxu0 0.0
  %118 = vmatprep.subr.mxu0 0.0
  %119 = vmatpush2.msra.mxu0 0.0
  %120 = vmatprep.subr.mxu0 0.0
  %121 = vmatpush2.msra.mxu0 0.0
  %122 = vmatprep.subr.mxu0 0.0
  %123 = vmatpush2.msra.mxu0 0.0
  %124 = vmatprep.subr.mxu0 0.0
  %125 = vmatpush2.msra.mxu0 0.0
  %126 = vmatprep.subr.mxu0 0.0
  %127 = vmatpush2.msra.mxu0 0.0
  %128 = vmatprep.mubr.f32.mxu0 0.0
  %129 = vmatmul.mubr.f32.gmra.mxu0 %v62
  %v130 = vpop.f32.mrf.mxu0
  %v131 = vadd.f32 0.0, %v130
  %v132 = vpop.f32.mrf.mxu0
  %133 = vdwg.mxu0
  %vm134 = vcmask 523264
  %135 = vst.msk [vmem:[%s6] sm:$0xff] %vm134, %v131
  // Predicated region
  $region22: #{_lambda_.84} parent=0 // pred_check
    _
  $region23: #{_lambda_.84} parent=0 // pred_check_branch
    %137 = sbr.rel (0) target = $region25
  $region24: #{_lambda_.84} parent=0 // pred_region
    _
  $region25: #{_lambda_.84} parent=0 // pred_fallthru
    _
  // Predicated region
  $region26: #{_lambda_.84} parent=0 // pred_check
    _
  $region27: #{_lambda_.84} parent=0 // pred_check_branch
    %139 = sbr.rel (0) target = $region29
  $region28: #{_lambda_.84} parent=0 // pred_region
    _
  $region29: #{_lambda_.84} parent=0 // pred_fallthru
    _
  // Predicated region
  $region30: #{_lambda_.84} parent=0 // pred_check
    _
  $region31: #{_lambda_.84} parent=0 // pred_check_branch
    %141 = sbr.rel (0) target = $region33
  $region32: #{_lambda_.84} parent=0 // pred_region
    _
  $region33: #{_lambda_.84} parent=0 // pred_fallthru
    _
  // Predicated region
  $region34: #{_lambda_.84} parent=0 // pred_check
    _
  $region35: #{_lambda_.84} parent=0 // pred_check_branch
    %143 = sbr.rel (0) target = $region37
  $region36: #{_lambda_.84} parent=0 // pred_region
    _
  $region37: #{_lambda_.84} parent=0 // pred_fallthru
    _

// kernel: _lambda_.85
$region0: #{_lambda_.85}
  #allocation0 [shape = 'u32[]', space=smem, size = 0x4, offset = 0x4, fixed_abs, tag = 'smem constant byte address 0x4 - core index']
  #allocation1 [shape = 'u32[144,128]{1,0:T(1,128)}', space=vmem, size = 0x12000, scoped, tag = 'internal scratch']
  %s0 = inlined_call_operand.vmem [shape: f32[2,4,12,32], index: 0, kind: input, shape index: {}]
  %s1 = inlined_call_operand.vmem [shape: f32[2,4,1,32], index: 1, kind: input, shape index: {}]
  %s2 = inlined_call_operand.vmem [shape: f32[2,4,1,32], index: 2, kind: input, shape index: {}]
  %s3 = inlined_call_operand.vmem [shape: f32[2,4,12,32], index: 3, kind: input, shape index: {}]
  %s4 = inlined_call_operand.vmem [shape: f32[2,4,12,32], index: 4, kind: input, shape index: {}]
  %s5 = inlined_call_operand.vmem [shape: f32[1,32], index: 5, kind: input, shape index: {}]
  %s6 = inlined_call_operand.vmem [shape: f32[1,32], index: 6, kind: input, shape index: {}]
  %s7 = inlined_call_operand.vmem [shape: f32[2,4,12,32], index: 7, kind: output, shape index: {}]
  %s8 = sld [smem:[#allocation0]]
  $region61: #{_lambda_.85} parent=0
    _
  %s10 = ssub.s32 1, %s8
  %s11 = scalar_select 0, %s10, %s8
  loop: start=0, step=1, limit=4
  $region2: #{_lambda_.85} parent=0 // loop_pre_header
    _
  $region3: #{_lambda_.85} parent=0 // loop_header
    %s13 = sphi 0, %s17
    %p14 = scmp.ge.s32.totalorder %s13, 4
    %s23 = sphi 0, %s25
    %s26 = sphi 0, %s23
    %s27 = sphi 0, %s26
    %s43 = sphi 0, %s27
    %s49 = sphi 0, %s51
    %s52 = sphi 0, %s49
    %s53 = sphi 0, %s52
    %s69 = sphi 0, %s53
    %s75 = sphi 0, %s77
    %s78 = sphi 0, %s75
    %s79 = sphi 0, %s78
    %s95 = sphi 0, %s79
    %s101 = sphi 0, %s103
    %s104 = sphi 0, %s101
    %s105 = sphi 0, %s104
    %s121 = sphi 0, %s105
    %s127 = sphi 0, %s129
    %s130 = sphi 0, %s127
    %s131 = sphi 0, %s130
    %s147 = sphi 0, %s131
    %s151 = sphi 0, %s151
    %s153 = sphi 0, %s151
    %s154 = sphi 0, %s153
    %s168 = sphi 0, %s154
    %s172 = sphi 0, %s172
    %s174 = sphi 0, %s172
    %s175 = sphi 0, %s174
    %s189 = sphi 0, %s175
    %s195 = sphi 0, %s197
    %s198 = sphi 0, %s195
    %s199 = sphi 0, %s198
    %s215 = sphi 0, %s199
  $region4: #{_lambda_.85} parent=0 // loop_header_branch
    %16 = sbr.rel (%p14) target = $region8
  $region5: #{_lambda_.85} parent=0 // loop_body
    %s18 = ssub.s32 %s13, 1
    %s19 = ssub.s32 %s13, 2
    %s20 = sadd.s32 %s13, 1
    %s21 = ssub.s32 %s13, %s20
    %p22 = scmp.eq.s32.totalorder %s21, 0
    %s24 = sadd.s32 %s23, 1
    %s25 = scalar_select %p22, %s23, %s24
    %p28 = pneg %p22
    %p29 = scmp.eq.s32.totalorder %s13, 1
    %p30 = por %p28, %p29
    %p31 = scmp.ne.s32.totalorder %s23, %s26
    %p32 = scmp.eq.s32.totalorder %s13, 0
    %p33 = por %p31, %p32
    %p34 = scmp.ne.s32.totalorder %s23, %s26
    %p35 = scmp.eq.s32.totalorder %s18, 1
    %p36 = por %p34, %p35
    %p37 = scmp.ne.s32.totalorder %s26, %s27
    %p38 = scmp.eq.s32.totalorder %s18, 0
    %p39 = por %p37, %p38
    %p40 = scmp.ne.s32.totalorder %s26, %s27
    %p41 = scmp.eq.s32.totalorder %s19, 1
    %p42 = por %p40, %p41
    %p44 = scmp.ne.s32.totalorder %s27, %s43
    %p45 = scmp.eq.s32.totalorder %s19, 0
    %p46 = por %p44, %p45
    %s47 = ssub.s32 %s13, %s20
    %p48 = scmp.eq.s32.totalorder %s47, 0
    %s50 = sadd.s32 %s49, 1
    %s51 = scalar_select %p48, %s49, %s50
    %p54 = pneg %p48
    %p55 = scmp.eq.s32.totalorder %s13, 1
    %p56 = por %p54, %p55
    %p57 = scmp.ne.s32.totalorder %s49, %s52
    %p58 = scmp.eq.s32.totalorder %s13, 0
    %p59 = por %p57, %p58
    %p60 = scmp.ne.s32.totalorder %s49, %s52
    %p61 = scmp.eq.s32.totalorder %s18, 1
    %p62 = por %p60, %p61
    %p63 = scmp.ne.s32.totalorder %s52, %s53
    %p64 = scmp.eq.s32.totalorder %s18, 0
    %p65 = por %p63, %p64
    %p66 = scmp.ne.s32.totalorder %s52, %s53
    %p67 = scmp.eq.s32.totalorder %s19, 1
    %p68 = por %p66, %p67
    %p70 = scmp.ne.s32.totalorder %s53, %s69
    %p71 = scmp.eq.s32.totalorder %s19, 0
    %p72 = por %p70, %p71
    %s73 = ssub.s32 %s13, %s20
    %p74 = scmp.eq.s32.totalorder %s73, 0
    %s76 = sadd.s32 %s75, 1
    %s77 = scalar_select %p74, %s75, %s76
    %p80 = pneg %p74
    %p81 = scmp.eq.s32.totalorder %s13, 1
    %p82 = por %p80, %p81
    %p83 = scmp.ne.s32.totalorder %s75, %s78
    %p84 = scmp.eq.s32.totalorder %s13, 0
    %p85 = por %p83, %p84
    %p86 = scmp.ne.s32.totalorder %s75, %s78
    %p87 = scmp.eq.s32.totalorder %s18, 1
    %p88 = por %p86, %p87
    %p89 = scmp.ne.s32.totalorder %s78, %s79
    %p90 = scmp.eq.s32.totalorder %s18, 0
    %p91 = por %p89, %p90
    %p92 = scmp.ne.s32.totalorder %s78, %s79
    %p93 = scmp.eq.s32.totalorder %s19, 1
    %p94 = por %p92, %p93
    %p96 = scmp.ne.s32.totalorder %s79, %s95
    %p97 = scmp.eq.s32.totalorder %s19, 0
    %p98 = por %p96, %p97
    %s99 = ssub.s32 %s13, %s20
    %p100 = scmp.eq.s32.totalorder %s99, 0
    %s102 = sadd.s32 %s101, 1
    %s103 = scalar_select %p100, %s101, %s102
    %p106 = pneg %p100
    %p107 = scmp.eq.s32.totalorder %s13, 1
    %p108 = por %p106, %p107
    %p109 = scmp.ne.s32.totalorder %s101, %s104
    %p110 = scmp.eq.s32.totalorder %s13, 0
    %p111 = por %p109, %p110
    %p112 = scmp.ne.s32.totalorder %s101, %s104
    %p113 = scmp.eq.s32.totalorder %s18, 1
    %p114 = por %p112, %p113
    %p115 = scmp.ne.s32.totalorder %s104, %s105
    %p116 = scmp.eq.s32.totalorder %s18, 0
    %p117 = por %p115, %p116
    %p118 = scmp.ne.s32.totalorder %s104, %s105
    %p119 = scmp.eq.s32.totalorder %s19, 1
    %p120 = por %p118, %p119
    %p122 = scmp.ne.s32.totalorder %s105, %s121
    %p123 = scmp.eq.s32.totalorder %s19, 0
    %p124 = por %p122, %p123
    %s125 = ssub.s32 %s13, %s20
    %p126 = scmp.eq.s32.totalorder %s125, 0
    %s128 = sadd.s32 %s127, 1
    %s129 = scalar_select %p126, %s127, %s128
    %p132 = pneg %p126
    %p133 = scmp.eq.s32.totalorder %s13, 1
    %p134 = por %p132, %p133
    %p135 = scmp.ne.s32.totalorder %s127, %s130
    %p136 = scmp.eq.s32.totalorder %s13, 0
    %p137 = por %p135, %p136
    %p138 = scmp.ne.s32.totalorder %s127, %s130
    %p139 = scmp.eq.s32.totalorder %s18, 1
    %p140 = por %p138, %p139
    %p141 = scmp.ne.s32.totalorder %s130, %s131
    %p142 = scmp.eq.s32.totalorder %s18, 0
    %p143 = por %p141, %p142
    %p144 = scmp.ne.s32.totalorder %s130, %s131
    %p145 = scmp.eq.s32.totalorder %s19, 1
    %p146 = por %p144, %p145
    %p148 = scmp.ne.s32.totalorder %s131, %s147
    %p149 = scmp.eq.s32.totalorder %s19, 0
    %p150 = por %p148, %p149
    %s152 = sadd.s32 %s151, 1
    %p155 = scmp.eq.s32.totalorder %s13, 1
    %p156 = scmp.ne.s32.totalorder %s151, %s153
    %p157 = scmp.eq.s32.totalorder %s13, 0
    %p158 = por %p156, %p157
    %p159 = scmp.ne.s32.totalorder %s151, %s153
    %p160 = scmp.eq.s32.totalorder %s18, 1
    %p161 = por %p159, %p160
    %p162 = scmp.ne.s32.totalorder %s153, %s154
    %p163 = scmp.eq.s32.totalorder %s18, 0
    %p164 = por %p162, %p163
    %p165 = scmp.ne.s32.totalorder %s153, %s154
    %p166 = scmp.eq.s32.totalorder %s19, 1
    %p167 = por %p165, %p166
    %p169 = scmp.ne.s32.totalorder %s154, %s168
    %p170 = scmp.eq.s32.totalorder %s19, 0
    %p171 = por %p169, %p170
    %s173 = sadd.s32 %s172, 1
    %p176 = scmp.eq.s32.totalorder %s13, 1
    %p177 = scmp.ne.s32.totalorder %s172, %s174
    %p178 = scmp.eq.s32.totalorder %s13, 0
    %p179 = por %p177, %p178
    %p180 = scmp.ne.s32.totalorder %s172, %s174
    %p181 = scmp.eq.s32.totalorder %s18, 1
    %p182 = por %p180, %p181
    %p183 = scmp.ne.s32.totalorder %s174, %s175
    %p184 = scmp.eq.s32.totalorder %s18, 0
    %p185 = por %p183, %p184
    %p186 = scmp.ne.s32.totalorder %s174, %s175
    %p187 = scmp.eq.s32.totalorder %s19, 1
    %p188 = por %p186, %p187
    %p190 = scmp.ne.s32.totalorder %s175, %s189
    %p191 = scmp.eq.s32.totalorder %s19, 0
    %p192 = por %p190, %p191
    %s193 = ssub.s32 %s13, %s20
    %p194 = scmp.eq.s32.totalorder %s193, 0
    %s196 = sadd.s32 %s195, 1
    %s197 = scalar_select %p194, %s195, %s196
    %p200 = pneg %p194
    %p201 = scmp.eq.s32.totalorder %s13, 1
    %p202 = por %p200, %p201
    %p203 = scmp.ne.s32.totalorder %s195, %s198
    %p204 = scmp.eq.s32.totalorder %s13, 0
    %p205 = por %p203, %p204
    %p206 = scmp.ne.s32.totalorder %s195, %s198
    %p207 = scmp.eq.s32.totalorder %s18, 1
    %p208 = por %p206, %p207
    %p209 = scmp.ne.s32.totalorder %s198, %s199
    %p210 = scmp.eq.s32.totalorder %s18, 0
    %p211 = por %p209, %p210
    %p212 = scmp.ne.s32.totalorder %s198, %s199
    %p213 = scmp.eq.s32.totalorder %s19, 1
    %p214 = por %p212, %p213
    %p216 = scmp.ne.s32.totalorder %s199, %s215
    %p217 = scmp.eq.s32.totalorder %s19, 0
    %p218 = por %p216, %p217
    %p219 = scmp.le.s32.totalorder 1, %s13
    %p220 = scmp.lt.s32.totalorder %s13, 3
    %p221 = pnand %p219, %p220
    %p222 = pneg %p221
    // Predicated region
    $region9: #{_lambda_.85} parent=5 // pred_check
      _
    $region10: #{_lambda_.85} parent=5 // pred_check_branch
      %224 = sbr.rel (%p221) target = $region12
    $region11: #{_lambda_.85} parent=5 // pred_region
      %s225 = ssub.s32 %s13, 1
      // Predicated region
      $region13: #{_lambda_.85} parent=11 // pred_check
        %p226 = pneg %p164
      $region14: #{_lambda_.85} parent=11 // pred_check_branch
        %228 = sbr.rel (%p226) target = $region16
      $region15: #{_lambda_.85} parent=11 // pred_region
        _
      $region16: #{_lambda_.85} parent=11 // pred_fallthru
        _
      // Predicated region
      $region17: #{_lambda_.85} parent=11 // pred_check
        %p229 = pneg %p185
      $region18: #{_lambda_.85} parent=11 // pred_check_branch
        %231 = sbr.rel (%p229) target = $region20
      $region19: #{_lambda_.85} parent=11 // pred_region
        _
      $region20: #{_lambda_.85} parent=11 // pred_fallthru
        _
    $region12: #{_lambda_.85} parent=5 // pred_fallthru
      _
    %p232 = scmp.lt.s32.totalorder %s13, 2
    // Predicated region
    $region21: #{_lambda_.85} parent=5 // pred_check
      %p233 = pneg %p232
    $region22: #{_lambda_.85} parent=5 // pred_check_branch
      %235 = sbr.rel (%p233) target = $region24
    $region23: #{_lambda_.85} parent=5 // pred_region
      // Predicated region
      $region25: #{_lambda_.85} parent=23 // pred_check
        %p236 = pneg %p33
      $region26: #{_lambda_.85} parent=23 // pred_check_branch
        %238 = sbr.rel (%p236) target = $region28
      $region27: #{_lambda_.85} parent=23 // pred_region
        %p239 = scmp.lt.s32.totalorder %s13, 1
        %s240 = scalar_select %p239, %s13, 1
        %s241 = smul.addr %s240, 8
        %s242 = smul.addr %s241, 8
        %s243 = scalar_lea.vmem %s0, %s242
      $region28: #{_lambda_.85} parent=23 // pred_fallthru
        _
      // Predicated region
      $region29: #{_lambda_.85} parent=23 // pred_check
        %p244 = pneg %p59
      $region30: #{_lambda_.85} parent=23 // pred_check_branch
        %246 = sbr.rel (%p244) target = $region32
      $region31: #{_lambda_.85} parent=23 // pred_region
        %p247 = scmp.lt.s32.totalorder %s13, 1
        %s248 = scalar_select %p247, %s13, 1
        %s249 = smul.addr %s248, 4
        %s250 = scalar_lea.vmem %s1, %s249
      $region32: #{_lambda_.85} parent=23 // pred_fallthru
        _
      // Predicated region
      $region33: #{_lambda_.85} parent=23 // pred_check
        %p251 = pneg %p85
      $region34: #{_lambda_.85} parent=23 // pred_check_branch
        %253 = sbr.rel (%p251) target = $region36
      $region35: #{_lambda_.85} parent=23 // pred_region
        %p254 = scmp.lt.s32.totalorder %s13, 1
        %s255 = scalar_select %p254, %s13, 1
        %s256 = smul.addr %s255, 4
        %s257 = scalar_lea.vmem %s2, %s256
      $region36: #{_lambda_.85} parent=23 // pred_fallthru
        _
      // Predicated region
      $region37: #{_lambda_.85} parent=23 // pred_check
        %p258 = pneg %p111
      $region38: #{_lambda_.85} parent=23 // pred_check_branch
        %260 = sbr.rel (%p258) target = $region40
      $region39: #{_lambda_.85} parent=23 // pred_region
        %p261 = scmp.lt.s32.totalorder %s13, 1
        %s262 = scalar_select %p261, %s13, 1
        %s263 = smul.addr %s262, 8
        %s264 = smul.addr %s263, 8
        %s265 = scalar_lea.vmem %s3, %s264
      $region40: #{_lambda_.85} parent=23 // pred_fallthru
        _
      // Predicated region
      $region41: #{_lambda_.85} parent=23 // pred_check
        %p266 = pneg %p137
      $region42: #{_lambda_.85} parent=23 // pred_check_branch
        %268 = sbr.rel (%p266) target = $region44
      $region43: #{_lambda_.85} parent=23 // pred_region
        %p269 = scmp.lt.s32.totalorder %s13, 1
        %s270 = scalar_select %p269, %s13, 1
        %s271 = smul.addr %s270, 8
        %s272 = smul.addr %s271, 8
        %s273 = scalar_lea.vmem %s4, %s272
      $region44: #{_lambda_.85} parent=23 // pred_fallthru
        _
    $region24: #{_lambda_.85} parent=5 // pred_fallthru
      _
    %p274 = scmp.le.s32.totalorder 1, %s13
    %p275 = scmp.lt.s32.totalorder %s13, 3
    %p276 = pnand %p274, %p275
    %p277 = pneg %p276
    // Predicated region
    $region45: #{_lambda_.85} parent=5 // pred_check
      _
    $region46: #{_lambda_.85} parent=5 // pred_check_branch
      %279 = sbr.rel (%p276) target = $region48
    $region47: #{_lambda_.85} parent=5 // pred_region
      %s280 = ssub.s32 %s13, 1
      %p281 = scmp.lt.s32.totalorder %s18, 1
      %s282 = scalar_select %p281, %s18, 1
      %s283 = smul.addr %s282, 8
      %s284 = smul.addr %s283, 8
      %s285 = scalar_lea.vmem %s0, %s284
      %p286 = pneg %p39
      %p287 = pneg %p36
      %p288 = scmp.lt.s32.totalorder %s18, 1
      %s289 = scalar_select %p288, %s18, 1
      %s290 = smul.addr %s289, 4
      %s291 = scalar_lea.vmem %s1, %s290
      %p292 = pneg %p65
      %p293 = pneg %p62
      %p294 = scmp.lt.s32.totalorder %s18, 1
      %s295 = scalar_select %p294, %s18, 1
      %s296 = smul.addr %s295, 4
      %s297 = scalar_lea.vmem %s2, %s296
      %p298 = pneg %p91
      %p299 = pneg %p88
      %p300 = scmp.lt.s32.totalorder %s18, 1
      %s301 = scalar_select %p300, %s18, 1
      %s302 = smul.addr %s301, 8
      %s303 = smul.addr %s302, 8
      %s304 = scalar_lea.vmem %s3, %s303
      %p305 = pneg %p117
      %p306 = pneg %p114
      %p307 = scmp.lt.s32.totalorder %s18, 1
      %s308 = scalar_select %p307, %s18, 1
      %s309 = smul.addr %s308, 8
      %s310 = smul.addr %s309, 8
      %s311 = scalar_lea.vmem %s4, %s310
      %p312 = pneg %p143
      %p313 = pneg %p140
      %p314 = pneg %p164
      %p315 = pneg %p161
      %p316 = pneg %p185
      %p317 = pneg %p182
      %p318 = pneg %p211
      %p319 = pneg %p208
      %p320 = scmp.lt.s32.totalorder %s18, 1
      %s321 = scalar_select %p320, %s18, 1
      %s322 = smul.addr %s321, 8
      %s323 = smul.addr %s322, 8
      %s324 = scalar_lea.vmem %s7, %s323
      %p325 = scmp.lt.s32.totalorder %s18, 1
      %s326 = scalar_select %p325, %s18, 1
      %s327 = smul.addr %s326, 8
      %s328 = smul.addr %s327, 8
      %s329 = scalar_lea.vmem %s0, %s328
      %p330 = scmp.lt.s32.totalorder %s18, 1
      %s331 = scalar_select %p330, %s18, 1
      %s332 = smul.addr %s331, 4
      %s333 = scalar_lea.vmem %s1, %s332
      %p334 = scmp.lt.s32.totalorder %s18, 1
      %s335 = scalar_select %p334, %s18, 1
      %s336 = smul.addr %s335, 4
      %s337 = scalar_lea.vmem %s2, %s336
      %p338 = scmp.lt.s32.totalorder %s18, 1
      %s339 = scalar_select %p338, %s18, 1
      %s340 = smul.addr %s339, 8
      %s341 = smul.addr %s340, 8
      %s342 = scalar_lea.vmem %s3, %s341
      %p343 = scmp.lt.s32.totalorder %s18, 1
      %s344 = scalar_select %p343, %s18, 1
      %s345 = smul.addr %s344, 8
      %s346 = smul.addr %s345, 8
      %s347 = scalar_lea.vmem %s4, %s346
      %p348 = scmp.lt.s32.totalorder %s18, 1
      %s349 = scalar_select %p348, %s18, 1
      %s350 = smul.addr %s349, 8
      %s351 = smul.addr %s350, 8
      %s352 = scalar_lea.vmem %s7, %s351
      %v353 = vld [vmem:[%s329] sm:$0xff]
      %v354 = vld [vmem:[%s329 + $0x8] sm:$0xf]
      %v355 = vld [vmem:[%s329 + $0x10] sm:$0xff]
      %v356 = vld [vmem:[%s329 + $0x18] sm:$0xf]
      %v357 = vld [vmem:[%s329 + $0x20] sm:$0xff]
      %v358 = vld [vmem:[%s329 + $0x28] sm:$0xf]
      %v359 = vld [vmem:[%s329 + $0x30] sm:$0xff]
      %v360 = vld [vmem:[%s329 + $0x38] sm:$0xf]
      %v361 = vld [vmem:[%s333] sm:$0x1]
      %v362 = vld [vmem:[%s333 + $0x1] sm:$0x1]
      %v363 = vld [vmem:[%s333 + $0x2] sm:$0x1]
      %v364 = vld [vmem:[%s333 + $0x3] sm:$0x1]
      %v365 = vld [vmem:[%s337] sm:$0x1]
      %v366 = vld [vmem:[%s337 + $0x1] sm:$0x1]
      %v367 = vld [vmem:[%s337 + $0x2] sm:$0x1]
      %v368 = vld [vmem:[%s337 + $0x3] sm:$0x1]
      %v370 = vlaneseq
      %v371 = vshrl.u32 %v370, 7
      %v372 = vsub.s32 0, %v371
      %v373 = vrot.slane %v361, %v372
      %v375 = vmul.f32 %v353, %v373
      %v376 = vmul.f32 %v354, %v373
      %vm377 = vcmask 261120
      %v378 = vsel %vm377, %v375, 0.0
      %379 = vadd.xlane.f32.xlu0 %v378
      %v380 = vpop.xlane.xlu0 %379
      %vm381 = vcmask 257024
      %v382 = vsel %vm381, %v376, 0.0
      %383 = vadd.xlane.f32.xlu0 %v382
      %v384 = vpop.xlane.xlu0 %383
      %v386 = vlaneseq
      %v387 = vshrl.u32 %v386, 7
      %v388 = vsub.s32 0, %v387
      %v389 = vrot.slane %v362, %v388
      %v391 = vmul.f32 %v355, %v389
      %v392 = vmul.f32 %v356, %v389
      %v393 = vsel %vm377, %v391, 0.0
      %394 = vadd.xlane.f32.xlu0 %v393
      %v395 = vpop.xlane.xlu0 %394
      %v396 = vsel %vm381, %v392, 0.0
      %397 = vadd.xlane.f32.xlu0 %v396
      %v398 = vpop.xlane.xlu0 %397
      %v400 = vlaneseq
      %v401 = vshrl.u32 %v400, 7
      %v402 = vsub.s32 0, %v401
      %v403 = vrot.slane %v363, %v402
      %v405 = vmul.f32 %v357, %v403
      %v406 = vmul.f32 %v358, %v403
      %v407 = vsel %vm377, %v405, 0.0
      %408 = vadd.xlane.f32.xlu0 %v407
      %v409 = vpop.xlane.xlu0 %408
      %v410 = vsel %vm381, %v406, 0.0
      %411 = vadd.xlane.f32.xlu0 %v410
      %v412 = vpop.xlane.xlu0 %411
      %v414 = vlaneseq
      %v415 = vshrl.u32 %v414, 7
      %v416 = vsub.s32 0, %v415
      %v417 = vrot.slane %v364, %v416
      %v419 = vmul.f32 %v359, %v417
      %v420 = vmul.f32 %v360, %v417
      %v421 = vsel %vm377, %v419, 0.0
      %422 = vadd.xlane.f32.xlu0 %v421
      %v423 = vpop.xlane.xlu0 %422
      %v424 = vsel %vm381, %v420, 0.0
      %425 = vadd.xlane.f32.xlu0 %v424
      %v426 = vpop.xlane.xlu0 %425
      %v427 = vmul.f32 %v380, 0.17677669
      %v428 = vmul.f32 %v384, 0.17677669
      %v429 = vmul.f32 %v395, 0.17677669
      %v430 = vmul.f32 %v398, 0.17677669
      %v431 = vmul.f32 %v409, 0.17677669
      %v432 = vmul.f32 %v412, 0.17677669
      %v433 = vmul.f32 %v423, 0.17677669
      %v434 = vmul.f32 %v426, 0.17677669
      %v435 = vsub.f32 %v427, %v427
      %v436 = vsub.f32 %v428, %v428
      %v437 = vsub.f32 %v429, %v429
      %v438 = vsub.f32 %v430, %v430
      %v439 = vsub.f32 %v431, %v431
      %v440 = vsub.f32 %v432, %v432
      %v441 = vsub.f32 %v433, %v433
      %v442 = vsub.f32 %v434, %v434
      %v443 = vmul.f32 %v435, 1.442695
      %v444 = vpow.pop %v443
      %v445 = vmul.f32 %v436, 1.442695
      %v446 = vpow.pop %v445
      %v447 = vmul.f32 %v437, 1.442695
      %v448 = vpow.pop %v447
      %v449 = vmul.f32 %v438, 1.442695
      %v450 = vpow.pop %v449
      %v451 = vmul.f32 %v439, 1.442695
      %v452 = vpow.pop %v451
      %v453 = vmul.f32 %v440, 1.442695
      %v454 = vpow.pop %v453
      %v455 = vmul.f32 %v441, 1.442695
      %v456 = vpow.pop %v455
      %v457 = vmul.f32 %v442, 1.442695
      %v458 = vpow.pop %v457
      %v459 = vadd.f32 %v444, 0.0
      %v460 = vadd.f32 %v446, 0.0
      %v461 = vadd.f32 %v448, 0.0
      %v462 = vadd.f32 %v450, 0.0
      %v463 = vadd.f32 %v452, 0.0
      %v464 = vadd.f32 %v454, 0.0
      %v465 = vadd.f32 %v456, 0.0
      %v466 = vadd.f32 %v458, 0.0
      %v467 = vrcp.pop %v459
      %v468 = vrcp.pop %v460
      %v469 = vrcp.pop %v461
      %v470 = vrcp.pop %v462
      %v471 = vrcp.pop %v463
      %v472 = vrcp.pop %v464
      %v473 = vrcp.pop %v465
      %v474 = vrcp.pop %v466
      %v475 = vmul.f32 %v444, %v467
      %v476 = vmul.f32 %v446, %v468
      %v477 = vmul.f32 %v448, %v469
      %v478 = vmul.f32 %v450, %v470
      %v479 = vmul.f32 %v452, %v471
      %v480 = vmul.f32 %v454, %v472
      %v481 = vmul.f32 %v456, %v473
      %v482 = vmul.f32 %v458, %v474
      %vm483 = vcmask 7168
      %v485 = vsel %vm483, %v475, 0
      %v488 = vsel %vm483, %v476, 0
      %vm490 = vcmask 1040384
      %v492 = vsel %vm490, %v365, 0
      %494 = vmatprep.subr.mxu0 0.0
      %495 = vmatpush1.msra.mxu0 0.0
      %496 = vmatprep.subr.mxu0 0.0
      %497 = vmatpush1.msra.mxu0 0.0
      %498 = vmatprep.subr.mxu0 0.0
      %499 = vmatpush1.msra.mxu0 0.0
      %500 = vmatprep.subr.mxu0 0.0
      %501 = vmatpush1.msra.mxu0 0.0
      %502 = vmatprep.subr.mxu0 0.0
      %503 = vmatpush1.msra.mxu0 0.0
      %504 = vmatprep.subr.mxu0 0.0
      %505 = vmatpush1.msra.mxu0 0.0
      %506 = vmatprep.subr.mxu0 0.0
      %507 = vmatpush1.msra.mxu0 0.0
      %508 = vmatprep.subr.mxu0 0.0
      %509 = vmatpush1.msra.mxu0 0.0
      %510 = vmatprep.subr.mxu0 0.0
      %511 = vmatpush1.msra.mxu0 0.0
      %512 = vmatprep.subr.mxu0 0.0
      %513 = vmatpush1.msra.mxu0 0.0
      %514 = vmatprep.subr.mxu0 0.0
      %515 = vmatpush1.msra.mxu0 0.0
      %516 = vmatprep.subr.mxu0 0.0
      %517 = vmatpush1.msra.mxu0 0.0
      %518 = vmatprep.subr.mxu0 0.0
      %519 = vmatpush1.msra.mxu0 0.0
      %520 = vmatprep.subr.mxu0 0.0
      %521 = vmatpush1.msra.mxu0 0.0
      %522 = vmatprep.subr.mxu0 0.0
      %523 = vmatpush1.msra.mxu0 0.0
      %524 = vmatprep.subr.mxu0 0.0
      %525 = vmatpush1.msra.mxu0 %v492
      %526 = vmatprep.subr.mxu0 0.0
      %527 = vmatpush2.msra.mxu0 0.0
      %528 = vmatprep.subr.mxu0 0.0
      %529 = vmatpush2.msra.mxu0 0.0
      %530 = vmatprep.subr.mxu0 0.0
      %531 = vmatpush2.msra.mxu0 0.0
      %532 = vmatprep.subr.mxu0 0.0
      %533 = vmatpush2.msra.mxu0 0.0
      %534 = vmatprep.subr.mxu0 0.0
      %535 = vmatpush2.msra.mxu0 0.0
      %536 = vmatprep.subr.mxu0 0.0
      %537 = vmatpush2.msra.mxu0 0.0
      %538 = vmatprep.subr.mxu0 0.0
      %539 = vmatpush2.msra.mxu0 0.0
      %540 = vmatprep.subr.mxu0 0.0
      %541 = vmatpush2.msra.mxu0 0.0
      %542 = vmatprep.subr.mxu0 0.0
      %543 = vmatpush2.msra.mxu0 0.0
      %544 = vmatprep.subr.mxu0 0.0
      %545 = vmatpush2.msra.mxu0 0.0
      %546 = vmatprep.subr.mxu0 0.0
      %547 = vmatpush2.msra.mxu0 0.0
      %548 = vmatprep.subr.mxu0 0.0
      %549 = vmatpush2.msra.mxu0 0.0
      %550 = vmatprep.subr.mxu0 0.0
      %551 = vmatpush2.msra.mxu0 0.0
      %552 = vmatprep.subr.mxu0 0.0
      %553 = vmatpush2.msra.mxu0 0.0
      %554 = vmatprep.subr.mxu0 0.0
      %555 = vmatpush2.msra.mxu0 0.0
      %556 = vmatprep.subr.mxu0 0.0
      %557 = vmatpush2.msra.mxu0 0.0
      %558 = vmatprep.mubr.f32.mxu0 0.0
      %559 = vmatmul.mubr.f32.gmra.mxu0 %v485
      %v560 = vpop.f32.mrf.mxu0
      %v561 = vadd.f32 0.0, %v560
      %v562 = vpop.f32.mrf.mxu0
      %563 = vmatprep.mubr.f32.mxu0 0.0
      %564 = vmatmul.mubr.f32.gmra.mxu0 %v488
      %v565 = vpop.f32.mrf.mxu0
      %v566 = vadd.f32 0.0, %v565
      %v567 = vpop.f32.mrf.mxu0
      %568 = vdwg.mxu0
      %v570 = vsel %vm483, %v477, 0
      %v573 = vsel %vm483, %v478, 0
      %v576 = vsel %vm490, %v366, 0
      %578 = vmatprep.subr.mxu0 0.0
      %579 = vmatpush1.msra.mxu0 0.0
      %580 = vmatprep.subr.mxu0 0.0
      %581 = vmatpush1.msra.mxu0 0.0
      %582 = vmatprep.subr.mxu0 0.0
      %583 = vmatpush1.msra.mxu0 0.0
      %584 = vmatprep.subr.mxu0 0.0
      %585 = vmatpush1.msra.mxu0 0.0
      %586 = vmatprep.subr.mxu0 0.0
      %587 = vmatpush1.msra.mxu0 0.0
      %588 = vmatprep.subr.mxu0 0.0
      %589 = vmatpush1.msra.mxu0 0.0
      %590 = vmatprep.subr.mxu0 0.0
      %591 = vmatpush1.msra.mxu0 0.0
      %592 = vmatprep.subr.mxu0 0.0
      %593 = vmatpush1.msra.mxu0 0.0
      %594 = vmatprep.subr.mxu0 0.0
      %595 = vmatpush1.msra.mxu0 0.0
      %596 = vmatprep.subr.mxu0 0.0
      %597 = vmatpush1.msra.mxu0 0.0
      %598 = vmatprep.subr.mxu0 0.0
      %599 = vmatpush1.msra.mxu0 0.0
      %600 = vmatprep.subr.mxu0 0.0
      %601 = vmatpush1.msra.mxu0 0.0
      %602 = vmatprep.subr.mxu0 0.0
      %603 = vmatpush1.msra.mxu0 0.0
      %604 = vmatprep.subr.mxu0 0.0
      %605 = vmatpush1.msra.mxu0 0.0
      %606 = vmatprep.subr.mxu0 0.0
      %607 = vmatpush1.msra.mxu0 0.0
      %608 = vmatprep.subr.mxu0 0.0
      %609 = vmatpush1.msra.mxu0 %v576
      %610 = vmatprep.subr.mxu0 0.0
      %611 = vmatpush2.msra.mxu0 0.0
      %612 = vmatprep.subr.mxu0 0.0
      %613 = vmatpush2.msra.mxu0 0.0
      %614 = vmatprep.subr.mxu0 0.0
      %615 = vmatpush2.msra.mxu0 0.0
      %616 = vmatprep.subr.mxu0 0.0
      %617 = vmatpush2.msra.mxu0 0.0
      %618 = vmatprep.subr.mxu0 0.0
      %619 = vmatpush2.msra.mxu0 0.0
      %620 = vmatprep.subr.mxu0 0.0
      %621 = vmatpush2.msra.mxu0 0.0
      %622 = vmatprep.subr.mxu0 0.0
      %623 = vmatpush2.msra.mxu0 0.0
      %624 = vmatprep.subr.mxu0 0.0
      %625 = vmatpush2.msra.mxu0 0.0
      %626 = vmatprep.subr.mxu0 0.0
      %627 = vmatpush2.msra.mxu0 0.0
      %628 = vmatprep.subr.mxu0 0.0
      %629 = vmatpush2.msra.mxu0 0.0
      %630 = vmatprep.subr.mxu0 0.0
      %631 = vmatpush2.msra.mxu0 0.0
      %632 = vmatprep.subr.mxu0 0.0
      %633 = vmatpush2.msra.mxu0 0.0
      %634 = vmatprep.subr.mxu0 0.0
      %635 = vmatpush2.msra.mxu0 0.0
      %636 = vmatprep.subr.mxu0 0.0
      %637 = vmatpush2.msra.mxu0 0.0
      %638 = vmatprep.subr.mxu0 0.0
      %639 = vmatpush2.msra.mxu0 0.0
      %640 = vmatprep.subr.mxu0 0.0
      %641 = vmatpush2.msra.mxu0 0.0
      %642 = vmatprep.mubr.f32.mxu0 0.0
      %643 = vmatmul.mubr.f32.gmra.mxu0 %v570
      %v644 = vpop.f32.mrf.mxu0
      %v645 = vadd.f32 0.0, %v644
      %v646 = vpop.f32.mrf.mxu0
      %647 = vmatprep.mubr.f32.mxu0 0.0
      %648 = vmatmul.mubr.f32.gmra.mxu0 %v573
      %v649 = vpop.f32.mrf.mxu0
      %v650 = vadd.f32 0.0, %v649
      %v651 = vpop.f32.mrf.mxu0
      %652 = vdwg.mxu0
      %v654 = vsel %vm483, %v479, 0
      %v657 = vsel %vm483, %v480, 0
      %v660 = vsel %vm490, %v367, 0
      %662 = vmatprep.subr.mxu0 0.0
      %663 = vmatpush1.msra.mxu0 0.0
      %664 = vmatprep.subr.mxu0 0.0
      %665 = vmatpush1.msra.mxu0 0.0
      %666 = vmatprep.subr.mxu0 0.0
      %667 = vmatpush1.msra.mxu0 0.0
      %668 = vmatprep.subr.mxu0 0.0
      %669 = vmatpush1.msra.mxu0 0.0
      %670 = vmatprep.subr.mxu0 0.0
      %671 = vmatpush1.msra.mxu0 0.0
      %672 = vmatprep.subr.mxu0 0.0
      %673 = vmatpush1.msra.mxu0 0.0
      %674 = vmatprep.subr.mxu0 0.0
      %675 = vmatpush1.msra.mxu0 0.0
      %676 = vmatprep.subr.mxu0 0.0
      %677 = vmatpush1.msra.mxu0 0.0
      %678 = vmatprep.subr.mxu0 0.0
      %679 = vmatpush1.msra.mxu0 0.0
      %680 = vmatprep.subr.mxu0 0.0
      %681 = vmatpush1.msra.mxu0 0.0
      %682 = vmatprep.subr.mxu0 0.0
      %683 = vmatpush1.msra.mxu0 0.0
      %684 = vmatprep.subr.mxu0 0.0
      %685 = vmatpush1.msra.mxu0 0.0
      %686 = vmatprep.subr.mxu0 0.0
      %687 = vmatpush1.msra.mxu0 0.0
      %688 = vmatprep.subr.mxu0 0.0
      %689 = vmatpush1.msra.mxu0 0.0
      %690 = vmatprep.subr.mxu0 0.0
      %691 = vmatpush1.msra.mxu0 0.0
      %692 = vmatprep.subr.mxu0 0.0
      %693 = vmatpush1.msra.mxu0 %v660
      %694 = vmatprep.subr.mxu0 0.0
      %695 = vmatpush2.msra.mxu0 0.0
      %696 = vmatprep.subr.mxu0 0.0
      %697 = vmatpush2.msra.mxu0 0.0
      %698 = vmatprep.subr.mxu0 0.0
      %699 = vmatpush2.msra.mxu0 0.0
      %700 = vmatprep.subr.mxu0 0.0
      %701 = vmatpush2.msra.mxu0 0.0
      %702 = vmatprep.subr.mxu0 0.0
      %703 = vmatpush2.msra.mxu0 0.0
      %704 = vmatprep.subr.mxu0 0.0
      %705 = vmatpush2.msra.mxu0 0.0
      %706 = vmatprep.subr.mxu0 0.0
      %707 = vmatpush2.msra.mxu0 0.0
      %708 = vmatprep.subr.mxu0 0.0
      %709 = vmatpush2.msra.mxu0 0.0
      %710 = vmatprep.subr.mxu0 0.0
      %711 = vmatpush2.msra.mxu0 0.0
      %712 = vmatprep.subr.mxu0 0.0
      %713 = vmatpush2.msra.mxu0 0.0
      %714 = vmatprep.subr.mxu0 0.0
      %715 = vmatpush2.msra.mxu0 0.0
      %716 = vmatprep.subr.mxu0 0.0
      %717 = vmatpush2.msra.mxu0 0.0
      %718 = vmatprep.subr.mxu0 0.0
      %719 = vmatpush2.msra.mxu0 0.0
      %720 = vmatprep.subr.mxu0 0.0
      %721 = vmatpush2.msra.mxu0 0.0
      %722 = vmatprep.subr.mxu0 0.0
      %723 = vmatpush2.msra.mxu0 0.0
      %724 = vmatprep.subr.mxu0 0.0
      %725 = vmatpush2.msra.mxu0 0.0
      %726 = vmatprep.mubr.f32.mxu0 0.0
      %727 = vmatmul.mubr.f32.gmra.mxu0 %v654
      %v728 = vpop.f32.mrf.mxu0
      %v729 = vadd.f32 0.0, %v728
      %v730 = vpop.f32.mrf.mxu0
      %731 = vmatprep.mubr.f32.mxu0 0.0
      %732 = vmatmul.mubr.f32.gmra.mxu0 %v657
      %v733 = vpop.f32.mrf.mxu0
      %v734 = vadd.f32 0.0, %v733
      %v735 = vpop.f32.mrf.mxu0
      %736 = vdwg.mxu0
      %v738 = vsel %vm483, %v481, 0
      %v741 = vsel %vm483, %v482, 0
      %v744 = vsel %vm490, %v368, 0
      %746 = vmatprep.subr.mxu0 0.0
      %747 = vmatpush1.msra.mxu0 0.0
      %748 = vmatprep.subr.mxu0 0.0
      %749 = vmatpush1.msra.mxu0 0.0
      %750 = vmatprep.subr.mxu0 0.0
      %751 = vmatpush1.msra.mxu0 0.0
      %752 = vmatprep.subr.mxu0 0.0
      %753 = vmatpush1.msra.mxu0 0.0
      %754 = vmatprep.subr.mxu0 0.0
      %755 = vmatpush1.msra.mxu0 0.0
      %756 = vmatprep.subr.mxu0 0.0
      %757 = vmatpush1.msra.mxu0 0.0
      %758 = vmatprep.subr.mxu0 0.0
      %759 = vmatpush1.msra.mxu0 0.0
      %760 = vmatprep.subr.mxu0 0.0
      %761 = vmatpush1.msra.mxu0 0.0
      %762 = vmatprep.subr.mxu0 0.0
      %763 = vmatpush1.msra.mxu0 0.0
      %764 = vmatprep.subr.mxu0 0.0
      %765 = vmatpush1.msra.mxu0 0.0
      %766 = vmatprep.subr.mxu0 0.0
      %767 = vmatpush1.msra.mxu0 0.0
      %768 = vmatprep.subr.mxu0 0.0
      %769 = vmatpush1.msra.mxu0 0.0
      %770 = vmatprep.subr.mxu0 0.0
      %771 = vmatpush1.msra.mxu0 0.0
      %772 = vmatprep.subr.mxu0 0.0
      %773 = vmatpush1.msra.mxu0 0.0
      %774 = vmatprep.subr.mxu0 0.0
      %775 = vmatpush1.msra.mxu0 0.0
      %776 = vmatprep.subr.mxu0 0.0
      %777 = vmatpush1.msra.mxu0 %v744
      %778 = vmatprep.subr.mxu0 0.0
      %779 = vmatpush2.msra.mxu0 0.0
      %780 = vmatprep.subr.mxu0 0.0
      %781 = vmatpush2.msra.mxu0 0.0
      %782 = vmatprep.subr.mxu0 0.0
      %783 = vmatpush2.msra.mxu0 0.0
      %784 = vmatprep.subr.mxu0 0.0
      %785 = vmatpush2.msra.mxu0 0.0
      %786 = vmatprep.subr.mxu0 0.0
      %787 = vmatpush2.msra.mxu0 0.0
      %788 = vmatprep.subr.mxu0 0.0
      %789 = vmatpush2.msra.mxu0 0.0
      %790 = vmatprep.subr.mxu0 0.0
      %791 = vmatpush2.msra.mxu0 0.0
      %792 = vmatprep.subr.mxu0 0.0
      %793 = vmatpush2.msra.mxu0 0.0
      %794 = vmatprep.subr.mxu0 0.0
      %795 = vmatpush2.msra.mxu0 0.0
      %796 = vmatprep.subr.mxu0 0.0
      %797 = vmatpush2.msra.mxu0 0.0
      %798 = vmatprep.subr.mxu0 0.0
      %799 = vmatpush2.msra.mxu0 0.0
      %800 = vmatprep.subr.mxu0 0.0
      %801 = vmatpush2.msra.mxu0 0.0
      %802 = vmatprep.subr.mxu0 0.0
      %803 = vmatpush2.msra.mxu0 0.0
      %804 = vmatprep.subr.mxu0 0.0
      %805 = vmatpush2.msra.mxu0 0.0
      %806 = vmatprep.subr.mxu0 0.0
      %807 = vmatpush2.msra.mxu0 0.0
      %808 = vmatprep.subr.mxu0 0.0
      %809 = vmatpush2.msra.mxu0 0.0
      %810 = vmatprep.mubr.f32.mxu0 0.0
      %811 = vmatmul.mubr.f32.gmra.mxu0 %v738
      %v812 = vpop.f32.mrf.mxu0
      %v813 = vadd.f32 0.0, %v812
      %v814 = vpop.f32.mrf.mxu0
      %815 = vmatprep.mubr.f32.mxu0 0.0
      %816 = vmatmul.mubr.f32.gmra.mxu0 %v741
      %v817 = vpop.f32.mrf.mxu0
      %v818 = vadd.f32 0.0, %v817
      %v819 = vpop.f32.mrf.mxu0
      %820 = vdwg.mxu0
      %v821 = vld [vmem:[%s342] sm:$0xff]
      %v822 = vld [vmem:[%s342 + $0x8] sm:$0xf]
      %v823 = vld [vmem:[%s342 + $0x10] sm:$0xff]
      %v824 = vld [vmem:[%s342 + $0x18] sm:$0xf]
      %v825 = vld [vmem:[%s342 + $0x20] sm:$0xff]
      %v826 = vld [vmem:[%s342 + $0x28] sm:$0xf]
      %v827 = vld [vmem:[%s342 + $0x30] sm:$0xff]
      %v828 = vld [vmem:[%s342 + $0x38] sm:$0xf]
      %v829 = vld [vmem:[%s347] sm:$0xff]
      %v830 = vld [vmem:[%s347 + $0x8] sm:$0xf]
      %v831 = vld [vmem:[%s347 + $0x10] sm:$0xff]
      %v832 = vld [vmem:[%s347 + $0x18] sm:$0xf]
      %v833 = vld [vmem:[%s347 + $0x20] sm:$0xff]
      %v834 = vld [vmem:[%s347 + $0x28] sm:$0xf]
      %v835 = vld [vmem:[%s347 + $0x30] sm:$0xff]
      %v836 = vld [vmem:[%s347 + $0x38] sm:$0xf]
      %v837 = vadd.f32 %v821, %v829
      %v838 = vadd.f32 %v822, %v830
      %v839 = vadd.f32 %v823, %v831
      %v840 = vadd.f32 %v824, %v832
      %v841 = vadd.f32 %v825, %v833
      %v842 = vadd.f32 %v826, %v834
      %v843 = vadd.f32 %v827, %v835
      %v844 = vadd.f32 %v828, %v836
      %v845 = vadd.f32 %v837, %v561
      %v846 = vadd.f32 %v838, %v566
      %v847 = vadd.f32 %v839, %v645
      %v848 = vadd.f32 %v840, %v650
      %v849 = vadd.f32 %v841, %v729
      %v850 = vadd.f32 %v842, %v734
      %v851 = vadd.f32 %v843, %v813
      %v852 = vadd.f32 %v844, %v818
      %v853 = vsel %vm377, %v845, 0.0
      %854 = vadd.xlane.f32.xlu0 %v853
      %v855 = vpop.xlane.xlu0 %854
      %v856 = vsel %vm381, %v846, 0.0
      %857 = vadd.xlane.f32.xlu0 %v856
      %v858 = vpop.xlane.xlu0 %857
      %v859 = vsel %vm377, %v847, 0.0
      %860 = vadd.xlane.f32.xlu0 %v859
      %v861 = vpop.xlane.xlu0 %860
      %v862 = vsel %vm381, %v848, 0.0
      %863 = vadd.xlane.f32.xlu0 %v862
      %v864 = vpop.xlane.xlu0 %863
      %v865 = vsel %vm377, %v849, 0.0
      %866 = vadd.xlane.f32.xlu0 %v865
      %v867 = vpop.xlane.xlu0 %866
      %v868 = vsel %vm381, %v850, 0.0
      %869 = vadd.xlane.f32.xlu0 %v868
      %v870 = vpop.xlane.xlu0 %869
      %v871 = vsel %vm377, %v851, 0.0
      %872 = vadd.xlane.f32.xlu0 %v871
      %v873 = vpop.xlane.xlu0 %872
      %v874 = vsel %vm381, %v852, 0.0
      %875 = vadd.xlane.f32.xlu0 %v874
      %v876 = vpop.xlane.xlu0 %875
      %v877 = vrcp.pop 32.0
      %v878 = vmul.f32 %v855, %v877
      %v879 = vmul.f32 %v858, %v877
      %v880 = vmul.f32 %v861, %v877
      %v881 = vmul.f32 %v864, %v877
      %v882 = vmul.f32 %v867, %v877
      %v883 = vmul.f32 %v870, %v877
      %v884 = vmul.f32 %v873, %v877
      %v885 = vmul.f32 %v876, %v877
      %v886 = vsub.f32 %v845, %v878
      %v887 = vsub.f32 %v846, %v879
      %v888 = vsub.f32 %v847, %v880
      %v889 = vsub.f32 %v848, %v881
      %v890 = vsub.f32 %v849, %v882
      %v891 = vsub.f32 %v850, %v883
      %v892 = vsub.f32 %v851, %v884
      %v893 = vsub.f32 %v852, %v885
      %v894 = vmul.f32 %v886, %v886
      %v895 = vmul.f32 %v887, %v887
      %v896 = vmul.f32 %v888, %v888
      %v897 = vmul.f32 %v889, %v889
      %v898 = vmul.f32 %v890, %v890
      %v899 = vmul.f32 %v891, %v891
      %v900 = vmul.f32 %v892, %v892
      %v901 = vmul.f32 %v893, %v893
      %v902 = vsel %vm377, %v894, 0.0
      %903 = vadd.xlane.f32.xlu0 %v902
      %v904 = vpop.xlane.xlu0 %903
      %v905 = vsel %vm381, %v895, 0.0
      %906 = vadd.xlane.f32.xlu0 %v905
      %v907 = vpop.xlane.xlu0 %906
      %v908 = vsel %vm377, %v896, 0.0
      %909 = vadd.xlane.f32.xlu0 %v908
      %v910 = vpop.xlane.xlu0 %909
      %v911 = vsel %vm381, %v897, 0.0
      %912 = vadd.xlane.f32.xlu0 %v911
      %v913 = vpop.xlane.xlu0 %912
      %v914 = vsel %vm377, %v898, 0.0
      %915 = vadd.xlane.f32.xlu0 %v914
      %v916 = vpop.xlane.xlu0 %915
      %v917 = vsel %vm381, %v899, 0.0
      %918 = vadd.xlane.f32.xlu0 %v917
      %v919 = vpop.xlane.xlu0 %918
      %v920 = vsel %vm377, %v900, 0.0
      %921 = vadd.xlane.f32.xlu0 %v920
      %v922 = vpop.xlane.xlu0 %921
      %v923 = vsel %vm381, %v901, 0.0
      %924 = vadd.xlane.f32.xlu0 %v923
      %v925 = vpop.xlane.xlu0 %924
      %v926 = vmul.f32 %v904, %v877
      %v927 = vmul.f32 %v907, %v877
      %v928 = vmul.f32 %v910, %v877
      %v929 = vmul.f32 %v913, %v877
      %v930 = vmul.f32 %v916, %v877
      %v931 = vmul.f32 %v919, %v877
      %v932 = vmul.f32 %v922, %v877
      %v933 = vmul.f32 %v925, %v877
      %v934 = vadd.f32 %v926, 1e-05
      %v935 = vadd.f32 %v927, 1e-05
      %v936 = vadd.f32 %v928, 1e-05
      %v937 = vadd.f32 %v929, 1e-05
      %v938 = vadd.f32 %v930, 1e-05
      %v939 = vadd.f32 %v931, 1e-05
      %v940 = vadd.f32 %v932, 1e-05
      %v941 = vadd.f32 %v933, 1e-05
      %v942 = vrsqrt.pop %v934
      %v943 = vrsqrt.pop %v935
      %v944 = vrsqrt.pop %v936
      %v945 = vrsqrt.pop %v937
      %v946 = vrsqrt.pop %v938
      %v947 = vrsqrt.pop %v939
      %v948 = vrsqrt.pop %v940
      %v949 = vrsqrt.pop %v941
      %v950 = vmul.f32 %v886, %v942
      %v951 = vmul.f32 %v887, %v943
      %v952 = vmul.f32 %v888, %v944
      %v953 = vmul.f32 %v889, %v945
      %v954 = vmul.f32 %v890, %v946
      %v955 = vmul.f32 %v891, %v947
      %v956 = vmul.f32 %v892, %v948
      %v957 = vmul.f32 %v893, %v949
      %v958 = vld [vmem:[%s5] sm:$0x1]
      %v960 = vlaneseq
      %v961 = vshrl.u32 %v960, 7
      %v962 = vsub.s32 0, %v961
      %v963 = vrot.slane %v958, %v962
      %v965 = vmul.f32 %v950, %v963
      %v966 = vmul.f32 %v951, %v963
      %v967 = vmul.f32 %v952, %v963
      %v968 = vmul.f32 %v953, %v963
      %v969 = vmul.f32 %v954, %v963
      %v970 = vmul.f32 %v955, %v963
      %v971 = vmul.f32 %v956, %v963
      %v972 = vmul.f32 %v957, %v963
      %v973 = vld [vmem:[%s6] sm:$0x1]
      %v975 = vlaneseq
      %v976 = vshrl.u32 %v975, 7
      %v977 = vsub.s32 0, %v976
      %v978 = vrot.slane %v973, %v977
      %v980 = vadd.f32 %v965, %v978
      %v981 = vadd.f32 %v966, %v978
      %v982 = vadd.f32 %v967, %v978
      %v983 = vadd.f32 %v968, %v978
      %v984 = vadd.f32 %v969, %v978
      %v985 = vadd.f32 %v970, %v978
      %v986 = vadd.f32 %v971, %v978
      %v987 = vadd.f32 %v972, %v978
      %988 = vst.msk [vmem:[%s352] sm:$0xff] %vm377, %v980
      %989 = vst.msk [vmem:[%s352 + $0x8] sm:$0xf] %vm381, %v981
      %990 = vst.msk [vmem:[%s352 + $0x10] sm:$0xff] %vm377, %v982
      %991 = vst.msk [vmem:[%s352 + $0x18] sm:$0xf] %vm381, %v983
      %992 = vst.msk [vmem:[%s352 + $0x20] sm:$0xff] %vm377, %v984
      %993 = vst.msk [vmem:[%s352 + $0x28] sm:$0xf] %vm381, %v985
      %994 = vst.msk [vmem:[%s352 + $0x30] sm:$0xff] %vm377, %v986
      %995 = vst.msk [vmem:[%s352 + $0x38] sm:$0xf] %vm381, %v987
      %p996 = scmp.lt.s32.totalorder %s18, 1
      %s997 = scalar_select %p996, %s18, 1
      %s998 = smul.addr %s997, 8
      %s999 = smul.addr %s998, 8
      %s1000 = scalar_lea.vmem %s7, %s999
      // Predicated region
      $region49: #{_lambda_.85} parent=47 // pred_check
        %p1001 = pneg %p208
      $region50: #{_lambda_.85} parent=47 // pred_check_branch
        %1003 = sbr.rel (%p1001) target = $region52
      $region51: #{_lambda_.85} parent=47 // pred_region
        _
      $region52: #{_lambda_.85} parent=47 // pred_fallthru
        _
    $region48: #{_lambda_.85} parent=5 // pred_fallthru
      _
    %p1004 = scmp.le.s32.totalorder 2, %s13
    // Predicated region
    $region53: #{_lambda_.85} parent=5 // pred_check
      %p1005 = pneg %p1004
    $region54: #{_lambda_.85} parent=5 // pred_check_branch
      %1007 = sbr.rel (%p1005) target = $region56
    $region55: #{_lambda_.85} parent=5 // pred_region
      %s1008 = ssub.s32 %s13, 2
      // Predicated region
      $region57: #{_lambda_.85} parent=55 // pred_check
        %p1009 = pneg %p214
      $region58: #{_lambda_.85} parent=55 // pred_check_branch
        %1011 = sbr.rel (%p1009) target = $region60
      $region59: #{_lambda_.85} parent=55 // pred_region
        %p1012 = scmp.lt.s32.totalorder %s19, 1
        %s1013 = scalar_select %p1012, %s19, 1
        %s1014 = smul.addr %s1013, 8
        %s1015 = smul.addr %s1014, 8
        %s1016 = scalar_lea.vmem %s7, %s1015
      $region60: #{_lambda_.85} parent=55 // pred_fallthru
        _
    $region56: #{_lambda_.85} parent=5 // pred_fallthru
      _
  $region6: #{_lambda_.85} parent=0 // loop_footer
    %s17 = sadd.s32 1, %s13
  $region7: #{_lambda_.85} parent=0 // loop_footer_branch
    %12 = sbr.rel target = $region3
  $region8: #{_lambda_.85} parent=0 // loop_exit
    _

// kernel: _lambda_.119
$region0: #{_lambda_.119}
  #allocation0 [shape = 'u32[]', space=smem, size = 0x4, offset = 0x4, fixed_abs, tag = 'smem constant byte address 0x4 - core index']
  #allocation1 [shape = 'u32[144,128]{1,0:T(1,128)}', space=vmem, size = 0x12000, scoped, tag = 'internal scratch']
  #allocation2 [shape = 'f32[1,1]{1,0:T(1,128)S(1)}', space=vmem, size = 0x200, scoped, tag = 'scoped memory for _lambda_.119']
  %s0 = inlined_call_operand.vmem [shape: f32[96,32], index: 0, kind: input, shape index: {}]
  %s1 = inlined_call_operand.vmem [shape: f32[32,32], index: 1, kind: input, shape index: {}]
  %s2 = inlined_call_operand.vmem [shape: f32[1,32], index: 2, kind: input, shape index: {}]
  %s3 = inlined_call_operand.vmem [shape: f32[32,32], index: 3, kind: input, shape index: {}]
  %s4 = inlined_call_operand.vmem [shape: f32[1,32], index: 4, kind: input, shape index: {}]
  %s5 = inlined_call_operand.vmem [shape: f32[32,1], index: 5, kind: input, shape index: {}]
  %s6 = inlined_call_operand.<no memory space> [shape: f32[1,1], index: 6, kind: input, shape index: {}]
  %s7 = inlined_call_operand.vmem [shape: f32[96,1], index: 7, kind: output, shape index: {}]
  %s8 = sld [smem:[#allocation0]]
  $region38: #{_lambda_.119} parent=0
    _
  %s10 = ssub.s32 1, %s8
  %s11 = scalar_select 0, %s10, %s8
  %v12 = vstv %s6
  %13 = vst [vmem:[#allocation2] sm:$0x1] %v12
  // Predicated region
  $region2: #{_lambda_.119} parent=0 // pred_check
    _
  $region3: #{_lambda_.119} parent=0 // pred_check_branch
    %15 = sbr.rel (0) target = $region5
  $region4: #{_lambda_.119} parent=0 // pred_region
    _
  $region5: #{_lambda_.119} parent=0 // pred_fallthru
    _
  // Predicated region
  $region6: #{_lambda_.119} parent=0 // pred_check
    _
  $region7: #{_lambda_.119} parent=0 // pred_check_branch
    %17 = sbr.rel (0) target = $region9
  $region8: #{_lambda_.119} parent=0 // pred_region
    _
  $region9: #{_lambda_.119} parent=0 // pred_fallthru
    _
  // Predicated region
  $region10: #{_lambda_.119} parent=0 // pred_check
    _
  $region11: #{_lambda_.119} parent=0 // pred_check_branch
    %19 = sbr.rel (0) target = $region13
  $region12: #{_lambda_.119} parent=0 // pred_region
    _
  $region13: #{_lambda_.119} parent=0 // pred_fallthru
    _
  // Predicated region
  $region14: #{_lambda_.119} parent=0 // pred_check
    _
  $region15: #{_lambda_.119} parent=0 // pred_check_branch
    %21 = sbr.rel (0) target = $region17
  $region16: #{_lambda_.119} parent=0 // pred_region
    _
  $region17: #{_lambda_.119} parent=0 // pred_fallthru
    _
  // Predicated region
  $region18: #{_lambda_.119} parent=0 // pred_check
    _
  $region19: #{_lambda_.119} parent=0 // pred_check_branch
    %23 = sbr.rel (0) target = $region21
  $region20: #{_lambda_.119} parent=0 // pred_region
    _
  $region21: #{_lambda_.119} parent=0 // pred_fallthru
    _
  // Predicated region
  $region22: #{_lambda_.119} parent=0 // pred_check
    _
  $region23: #{_lambda_.119} parent=0 // pred_check_branch
    %25 = sbr.rel (0) target = $region25
  $region24: #{_lambda_.119} parent=0 // pred_region
    _
  $region25: #{_lambda_.119} parent=0 // pred_fallthru
    _
  // Predicated region
  $region26: #{_lambda_.119} parent=0 // pred_check
    _
  $region27: #{_lambda_.119} parent=0 // pred_check_branch
    %27 = sbr.rel (0) target = $region29
  $region28: #{_lambda_.119} parent=0 // pred_region
    _
  $region29: #{_lambda_.119} parent=0 // pred_fallthru
    _
  %v28 = vld [vmem:[%s0] sm:$0xff]
  %v29 = vld [vmem:[%s0 + $0x8] sm:$0xff]
  %v30 = vld [vmem:[%s0 + $0x10] sm:$0xff]
  %v31 = vld [vmem:[%s0 + $0x18] sm:$0xff]
  %v32 = vld [vmem:[%s0 + $0x20] sm:$0xff]
  %v33 = vld [vmem:[%s0 + $0x28] sm:$0xff]
  %v34 = vld [vmem:[%s0 + $0x30] sm:$0xff]
  %v35 = vld [vmem:[%s0 + $0x38] sm:$0xff]
  %v36 = vld [vmem:[%s0 + $0x40] sm:$0xff]
  %v37 = vld [vmem:[%s0 + $0x48] sm:$0xff]
  %v38 = vld [vmem:[%s0 + $0x50] sm:$0xff]
  %v39 = vld [vmem:[%s0 + $0x58] sm:$0xff]
  %v40 = vld [vmem:[%s1] sm:$0xff]
  %v41 = vld [vmem:[%s1 + $0x8] sm:$0xff]
  %v42 = vld [vmem:[%s1 + $0x10] sm:$0xff]
  %v43 = vld [vmem:[%s1 + $0x18] sm:$0xff]
  %v44 = vld [vmem:[%s2] sm:$0x1]
  %v46 = vlaneseq
  %v47 = vshrl.u32 %v46, 7
  %v48 = vsub.s32 0, %v47
  %v49 = vrot.slane %v44, %v48
  %vm51 = vcmask 261120
  %v53 = vsel %vm51, %v28, 0
  %v56 = vsel %vm51, %v29, 0
  %v59 = vsel %vm51, %v30, 0
  %v62 = vsel %vm51, %v31, 0
  %v65 = vsel %vm51, %v32, 0
  %v68 = vsel %vm51, %v33, 0
  %v71 = vsel %vm51, %v34, 0
  %v74 = vsel %vm51, %v35, 0
  %v77 = vsel %vm51, %v36, 0
  %v80 = vsel %vm51, %v37, 0
  %v83 = vsel %vm51, %v38, 0
  %v86 = vsel %vm51, %v39, 0
  %88 = vmatprep.subr.mxu0 0.0
  %89 = vmatpush1.msra.mxu0 0.0
  %90 = vmatprep.subr.mxu0 0.0
  %91 = vmatpush1.msra.mxu0 0.0
  %92 = vmatprep.subr.mxu0 0.0
  %93 = vmatpush1.msra.mxu0 0.0
  %94 = vmatprep.subr.mxu0 0.0
  %95 = vmatpush1.msra.mxu0 0.0
  %96 = vmatprep.subr.mxu0 0.0
  %97 = vmatpush1.msra.mxu0 0.0
  %98 = vmatprep.subr.mxu0 0.0
  %99 = vmatpush1.msra.mxu0 0.0
  %100 = vmatprep.subr.mxu0 0.0
  %101 = vmatpush1.msra.mxu0 0.0
  %102 = vmatprep.subr.mxu0 0.0
  %103 = vmatpush1.msra.mxu0 0.0
  %104 = vmatprep.subr.mxu0 0.0
  %105 = vmatpush1.msra.mxu0 0.0
  %106 = vmatprep.subr.mxu0 0.0
  %107 = vmatpush1.msra.mxu0 0.0
  %108 = vmatprep.subr.mxu0 0.0
  %109 = vmatpush1.msra.mxu0 0.0
  %110 = vmatprep.subr.mxu0 0.0
  %111 = vmatpush1.msra.mxu0 0.0
  %112 = vmatprep.subr.mxu0 0.0
  %113 = vmatpush1.msra.mxu0 %v43
  %114 = vmatprep.subr.mxu0 0.0
  %115 = vmatpush1.msra.mxu0 %v42
  %116 = vmatprep.subr.mxu0 0.0
  %117 = vmatpush1.msra.mxu0 %v41
  %118 = vmatprep.subr.mxu0 0.0
  %119 = vmatpush1.msra.mxu0 %v40
  %120 = vmatprep.subr.mxu0 0.0
  %121 = vmatpush2.msra.mxu0 0.0
  %122 = vmatprep.subr.mxu0 0.0
  %123 = vmatpush2.msra.mxu0 0.0
  %124 = vmatprep.subr.mxu0 0.0
  %125 = vmatpush2.msra.mxu0 0.0
  %126 = vmatprep.subr.mxu0 0.0
  %127 = vmatpush2.msra.mxu0 0.0
  %128 = vmatprep.subr.mxu0 0.0
  %129 = vmatpush2.msra.mxu0 0.0
  %130 = vmatprep.subr.mxu0 0.0
  %131 = vmatpush2.msra.mxu0 0.0
  %132 = vmatprep.subr.mxu0 0.0
  %133 = vmatpush2.msra.mxu0 0.0
  %134 = vmatprep.subr.mxu0 0.0
  %135 = vmatpush2.msra.mxu0 0.0
  %136 = vmatprep.subr.mxu0 0.0
  %137 = vmatpush2.msra.mxu0 0.0
  %138 = vmatprep.subr.mxu0 0.0
  %139 = vmatpush2.msra.mxu0 0.0
  %140 = vmatprep.subr.mxu0 0.0
  %141 = vmatpush2.msra.mxu0 0.0
  %142 = vmatprep.subr.mxu0 0.0
  %143 = vmatpush2.msra.mxu0 0.0
  %144 = vmatprep.subr.mxu0 0.0
  %145 = vmatpush2.msra.mxu0 0.0
  %146 = vmatprep.subr.mxu0 0.0
  %147 = vmatpush2.msra.mxu0 0.0
  %148 = vmatprep.subr.mxu0 0.0
  %149 = vmatpush2.msra.mxu0 0.0
  %150 = vmatprep.subr.mxu0 0.0
  %151 = vmatpush2.msra.mxu0 0.0
  %152 = vmatprep.mubr.f32.mxu0 0.0
  %153 = vmatmul.mubr.f32.gmra.mxu0 %v53
  %v154 = vpop.f32.mrf.mxu0
  %v155 = vadd.f32 %v49, %v154
  %v156 = vpop.f32.mrf.mxu0
  %157 = vmatprep.mubr.f32.mxu0 0.0
  %158 = vmatmul.mubr.f32.gmra.mxu0 %v56
  %v159 = vpop.f32.mrf.mxu0
  %v160 = vadd.f32 %v49, %v159
  %v161 = vpop.f32.mrf.mxu0
  %162 = vmatprep.mubr.f32.mxu0 0.0
  %163 = vmatmul.mubr.f32.gmra.mxu0 %v59
  %v164 = vpop.f32.mrf.mxu0
  %v165 = vadd.f32 %v49, %v164
  %v166 = vpop.f32.mrf.mxu0
  %167 = vmatprep.mubr.f32.mxu0 0.0
  %168 = vmatmul.mubr.f32.gmra.mxu0 %v62
  %v169 = vpop.f32.mrf.mxu0
  %v170 = vadd.f32 %v49, %v169
  %v171 = vpop.f32.mrf.mxu0
  %172 = vmatprep.mubr.f32.mxu0 0.0
  %173 = vmatmul.mubr.f32.gmra.mxu0 %v65
  %v174 = vpop.f32.mrf.mxu0
  %v175 = vadd.f32 %v49, %v174
  %v176 = vpop.f32.mrf.mxu0
  %177 = vmatprep.mubr.f32.mxu0 0.0
  %178 = vmatmul.mubr.f32.gmra.mxu0 %v68
  %v179 = vpop.f32.mrf.mxu0
  %v180 = vadd.f32 %v49, %v179
  %v181 = vpop.f32.mrf.mxu0
  %182 = vmatprep.mubr.f32.mxu0 0.0
  %183 = vmatmul.mubr.f32.gmra.mxu0 %v71
  %v184 = vpop.f32.mrf.mxu0
  %v185 = vadd.f32 %v49, %v184
  %v186 = vpop.f32.mrf.mxu0
  %187 = vmatprep.mubr.f32.mxu0 0.0
  %188 = vmatmul.mubr.f32.gmra.mxu0 %v74
  %v189 = vpop.f32.mrf.mxu0
  %v190 = vadd.f32 %v49, %v189
  %v191 = vpop.f32.mrf.mxu0
  %192 = vmatprep.mubr.f32.mxu0 0.0
  %193 = vmatmul.mubr.f32.gmra.mxu0 %v77
  %v194 = vpop.f32.mrf.mxu0
  %v195 = vadd.f32 %v49, %v194
  %v196 = vpop.f32.mrf.mxu0
  %197 = vmatprep.mubr.f32.mxu0 0.0
  %198 = vmatmul.mubr.f32.gmra.mxu0 %v80
  %v199 = vpop.f32.mrf.mxu0
  %v200 = vadd.f32 %v49, %v199
  %v201 = vpop.f32.mrf.mxu0
  %202 = vmatprep.mubr.f32.mxu0 0.0
  %203 = vmatmul.mubr.f32.gmra.mxu0 %v83
  %v204 = vpop.f32.mrf.mxu0
  %v205 = vadd.f32 %v49, %v204
  %v206 = vpop.f32.mrf.mxu0
  %207 = vmatprep.mubr.f32.mxu0 0.0
  %208 = vmatmul.mubr.f32.gmra.mxu0 %v86
  %v209 = vpop.f32.mrf.mxu0
  %v210 = vadd.f32 %v49, %v209
  %v211 = vpop.f32.mrf.mxu0
  %212 = vdwg.mxu0
  %v213 = vmax.f32 %v155, 0.0
  %v214 = vmax.f32 %v160, 0.0
  %v215 = vmax.f32 %v165, 0.0
  %v216 = vmax.f32 %v170, 0.0
  %v217 = vmax.f32 %v175, 0.0
  %v218 = vmax.f32 %v180, 0.0
  %v219 = vmax.f32 %v185, 0.0
  %v220 = vmax.f32 %v190, 0.0
  %v221 = vmax.f32 %v195, 0.0
  %v222 = vmax.f32 %v200, 0.0
  %v223 = vmax.f32 %v205, 0.0
  %v224 = vmax.f32 %v210, 0.0
  %v225 = vld [vmem:[%s3] sm:$0xff]
  %v226 = vld [vmem:[%s3 + $0x8] sm:$0xff]
  %v227 = vld [vmem:[%s3 + $0x10] sm:$0xff]
  %v228 = vld [vmem:[%s3 + $0x18] sm:$0xff]
  %v229 = vld [vmem:[%s4] sm:$0x1]
  %v231 = vlaneseq
  %v232 = vshrl.u32 %v231, 7
  %v233 = vsub.s32 0, %v232
  %v234 = vrot.slane %v229, %v233
  %v237 = vsel %vm51, %v213, 0
  %v240 = vsel %vm51, %v214, 0
  %v243 = vsel %vm51, %v215, 0
  %v246 = vsel %vm51, %v216, 0
  %v249 = vsel %vm51, %v217, 0
  %v252 = vsel %vm51, %v218, 0
  %v255 = vsel %vm51, %v219, 0
  %v258 = vsel %vm51, %v220, 0
  %v261 = vsel %vm51, %v221, 0
  %v264 = vsel %vm51, %v222, 0
  %v267 = vsel %vm51, %v223, 0
  %v270 = vsel %vm51, %v224, 0
  %272 = vmatprep.subr.mxu0 0.0
  %273 = vmatpush1.msra.mxu0 0.0
  %274 = vmatprep.subr.mxu0 0.0
  %275 = vmatpush1.msra.mxu0 0.0
  %276 = vmatprep.subr.mxu0 0.0
  %277 = vmatpush1.msra.mxu0 0.0
  %278 = vmatprep.subr.mxu0 0.0
  %279 = vmatpush1.msra.mxu0 0.0
  %280 = vmatprep.subr.mxu0 0.0
  %281 = vmatpush1.msra.mxu0 0.0
  %282 = vmatprep.subr.mxu0 0.0
  %283 = vmatpush1.msra.mxu0 0.0
  %284 = vmatprep.subr.mxu0 0.0
  %285 = vmatpush1.msra.mxu0 0.0
  %286 = vmatprep.subr.mxu0 0.0
  %287 = vmatpush1.msra.mxu0 0.0
  %288 = vmatprep.subr.mxu0 0.0
  %289 = vmatpush1.msra.mxu0 0.0
  %290 = vmatprep.subr.mxu0 0.0
  %291 = vmatpush1.msra.mxu0 0.0
  %292 = vmatprep.subr.mxu0 0.0
  %293 = vmatpush1.msra.mxu0 0.0
  %294 = vmatprep.subr.mxu0 0.0
  %295 = vmatpush1.msra.mxu0 0.0
  %296 = vmatprep.subr.mxu0 0.0
  %297 = vmatpush1.msra.mxu0 %v228
  %298 = vmatprep.subr.mxu0 0.0
  %299 = vmatpush1.msra.mxu0 %v227
  %300 = vmatprep.subr.mxu0 0.0
  %301 = vmatpush1.msra.mxu0 %v226
  %302 = vmatprep.subr.mxu0 0.0
  %303 = vmatpush1.msra.mxu0 %v225
  %304 = vmatprep.subr.mxu0 0.0
  %305 = vmatpush2.msra.mxu0 0.0
  %306 = vmatprep.subr.mxu0 0.0
  %307 = vmatpush2.msra.mxu0 0.0
  %308 = vmatprep.subr.mxu0 0.0
  %309 = vmatpush2.msra.mxu0 0.0
  %310 = vmatprep.subr.mxu0 0.0
  %311 = vmatpush2.msra.mxu0 0.0
  %312 = vmatprep.subr.mxu0 0.0
  %313 = vmatpush2.msra.mxu0 0.0
  %314 = vmatprep.subr.mxu0 0.0
  %315 = vmatpush2.msra.mxu0 0.0
  %316 = vmatprep.subr.mxu0 0.0
  %317 = vmatpush2.msra.mxu0 0.0
  %318 = vmatprep.subr.mxu0 0.0
  %319 = vmatpush2.msra.mxu0 0.0
  %320 = vmatprep.subr.mxu0 0.0
  %321 = vmatpush2.msra.mxu0 0.0
  %322 = vmatprep.subr.mxu0 0.0
  %323 = vmatpush2.msra.mxu0 0.0
  %324 = vmatprep.subr.mxu0 0.0
  %325 = vmatpush2.msra.mxu0 0.0
  %326 = vmatprep.subr.mxu0 0.0
  %327 = vmatpush2.msra.mxu0 0.0
  %328 = vmatprep.subr.mxu0 0.0
  %329 = vmatpush2.msra.mxu0 0.0
  %330 = vmatprep.subr.mxu0 0.0
  %331 = vmatpush2.msra.mxu0 0.0
  %332 = vmatprep.subr.mxu0 0.0
  %333 = vmatpush2.msra.mxu0 0.0
  %334 = vmatprep.subr.mxu0 0.0
  %335 = vmatpush2.msra.mxu0 0.0
  %336 = vmatprep.mubr.f32.mxu0 0.0
  %337 = vmatmul.mubr.f32.gmra.mxu0 %v237
  %v338 = vpop.f32.mrf.mxu0
  %v339 = vadd.f32 %v234, %v338
  %v340 = vpop.f32.mrf.mxu0
  %341 = vmatprep.mubr.f32.mxu0 0.0
  %342 = vmatmul.mubr.f32.gmra.mxu0 %v240
  %v343 = vpop.f32.mrf.mxu0
  %v344 = vadd.f32 %v234, %v343
  %v345 = vpop.f32.mrf.mxu0
  %346 = vmatprep.mubr.f32.mxu0 0.0
  %347 = vmatmul.mubr.f32.gmra.mxu0 %v243
  %v348 = vpop.f32.mrf.mxu0
  %v349 = vadd.f32 %v234, %v348
  %v350 = vpop.f32.mrf.mxu0
  %351 = vmatprep.mubr.f32.mxu0 0.0
  %352 = vmatmul.mubr.f32.gmra.mxu0 %v246
  %v353 = vpop.f32.mrf.mxu0
  %v354 = vadd.f32 %v234, %v353
  %v355 = vpop.f32.mrf.mxu0
  %356 = vmatprep.mubr.f32.mxu0 0.0
  %357 = vmatmul.mubr.f32.gmra.mxu0 %v249
  %v358 = vpop.f32.mrf.mxu0
  %v359 = vadd.f32 %v234, %v358
  %v360 = vpop.f32.mrf.mxu0
  %361 = vmatprep.mubr.f32.mxu0 0.0
  %362 = vmatmul.mubr.f32.gmra.mxu0 %v252
  %v363 = vpop.f32.mrf.mxu0
  %v364 = vadd.f32 %v234, %v363
  %v365 = vpop.f32.mrf.mxu0
  %366 = vmatprep.mubr.f32.mxu0 0.0
  %367 = vmatmul.mubr.f32.gmra.mxu0 %v255
  %v368 = vpop.f32.mrf.mxu0
  %v369 = vadd.f32 %v234, %v368
  %v370 = vpop.f32.mrf.mxu0
  %371 = vmatprep.mubr.f32.mxu0 0.0
  %372 = vmatmul.mubr.f32.gmra.mxu0 %v258
  %v373 = vpop.f32.mrf.mxu0
  %v374 = vadd.f32 %v234, %v373
  %v375 = vpop.f32.mrf.mxu0
  %376 = vmatprep.mubr.f32.mxu0 0.0
  %377 = vmatmul.mubr.f32.gmra.mxu0 %v261
  %v378 = vpop.f32.mrf.mxu0
  %v379 = vadd.f32 %v234, %v378
  %v380 = vpop.f32.mrf.mxu0
  %381 = vmatprep.mubr.f32.mxu0 0.0
  %382 = vmatmul.mubr.f32.gmra.mxu0 %v264
  %v383 = vpop.f32.mrf.mxu0
  %v384 = vadd.f32 %v234, %v383
  %v385 = vpop.f32.mrf.mxu0
  %386 = vmatprep.mubr.f32.mxu0 0.0
  %387 = vmatmul.mubr.f32.gmra.mxu0 %v267
  %v388 = vpop.f32.mrf.mxu0
  %v389 = vadd.f32 %v234, %v388
  %v390 = vpop.f32.mrf.mxu0
  %391 = vmatprep.mubr.f32.mxu0 0.0
  %392 = vmatmul.mubr.f32.gmra.mxu0 %v270
  %v393 = vpop.f32.mrf.mxu0
  %v394 = vadd.f32 %v234, %v393
  %v395 = vpop.f32.mrf.mxu0
  %396 = vdwg.mxu0
  %v397 = vmax.f32 %v339, 0.0
  %v398 = vmax.f32 %v344, 0.0
  %v399 = vmax.f32 %v349, 0.0
  %v400 = vmax.f32 %v354, 0.0
  %v401 = vmax.f32 %v359, 0.0
  %v402 = vmax.f32 %v364, 0.0
  %v403 = vmax.f32 %v369, 0.0
  %v404 = vmax.f32 %v374, 0.0
  %v405 = vmax.f32 %v379, 0.0
  %v406 = vmax.f32 %v384, 0.0
  %v407 = vmax.f32 %v389, 0.0
  %v408 = vmax.f32 %v394, 0.0
  %v409 = vld [vmem:[%s5] sm:$0xff]
  %v410 = vld [vmem:[%s5 + $0x8] sm:$0xff]
  %v411 = vld [vmem:[%s5 + $0x10] sm:$0xff]
  %v412 = vld [vmem:[%s5 + $0x18] sm:$0xff]
  %v413 = vld [vmem:[#allocation2] sm:$0x1]
  %v415 = vlaneseq
  %v416 = vshrl.u32 %v415, 7
  %v417 = vsub.s32 0, %v416
  %v418 = vrot.slane %v413, %v417
  %v421 = vsel %vm51, %v397, 0
  %v424 = vsel %vm51, %v398, 0
  %v427 = vsel %vm51, %v399, 0
  %v430 = vsel %vm51, %v400, 0
  %v433 = vsel %vm51, %v401, 0
  %v436 = vsel %vm51, %v402, 0
  %v439 = vsel %vm51, %v403, 0
  %v442 = vsel %vm51, %v404, 0
  %v445 = vsel %vm51, %v405, 0
  %v448 = vsel %vm51, %v406, 0
  %v451 = vsel %vm51, %v407, 0
  %v454 = vsel %vm51, %v408, 0
  %456 = vmatprep.subr.mxu0 0.0
  %457 = vmatpush1.msra.mxu0 0.0
  %458 = vmatprep.subr.mxu0 0.0
  %459 = vmatpush1.msra.mxu0 0.0
  %460 = vmatprep.subr.mxu0 0.0
  %461 = vmatpush1.msra.mxu0 0.0
  %462 = vmatprep.subr.mxu0 0.0
  %463 = vmatpush1.msra.mxu0 0.0
  %464 = vmatprep.subr.mxu0 0.0
  %465 = vmatpush1.msra.mxu0 0.0
  %466 = vmatprep.subr.mxu0 0.0
  %467 = vmatpush1.msra.mxu0 0.0
  %468 = vmatprep.subr.mxu0 0.0
  %469 = vmatpush1.msra.mxu0 0.0
  %470 = vmatprep.subr.mxu0 0.0
  %471 = vmatpush1.msra.mxu0 0.0
  %472 = vmatprep.subr.mxu0 0.0
  %473 = vmatpush1.msra.mxu0 0.0
  %474 = vmatprep.subr.mxu0 0.0
  %475 = vmatpush1.msra.mxu0 0.0
  %476 = vmatprep.subr.mxu0 0.0
  %477 = vmatpush1.msra.mxu0 0.0
  %478 = vmatprep.subr.mxu0 0.0
  %479 = vmatpush1.msra.mxu0 0.0
  %480 = vmatprep.subr.mxu0 0.0
  %481 = vmatpush1.msra.mxu0 %v412
  %482 = vmatprep.subr.mxu0 0.0
  %483 = vmatpush1.msra.mxu0 %v411
  %484 = vmatprep.subr.mxu0 0.0
  %485 = vmatpush1.msra.mxu0 %v410
  %486 = vmatprep.subr.mxu0 0.0
  %487 = vmatpush1.msra.mxu0 %v409
  %488 = vmatprep.subr.mxu0 0.0
  %489 = vmatpush2.msra.mxu0 0.0
  %490 = vmatprep.subr.mxu0 0.0
  %491 = vmatpush2.msra.mxu0 0.0
  %492 = vmatprep.subr.mxu0 0.0
  %493 = vmatpush2.msra.mxu0 0.0
  %494 = vmatprep.subr.mxu0 0.0
  %495 = vmatpush2.msra.mxu0 0.0
  %496 = vmatprep.subr.mxu0 0.0
  %497 = vmatpush2.msra.mxu0 0.0
  %498 = vmatprep.subr.mxu0 0.0
  %499 = vmatpush2.msra.mxu0 0.0
  %500 = vmatprep.subr.mxu0 0.0
  %501 = vmatpush2.msra.mxu0 0.0
  %502 = vmatprep.subr.mxu0 0.0
  %503 = vmatpush2.msra.mxu0 0.0
  %504 = vmatprep.subr.mxu0 0.0
  %505 = vmatpush2.msra.mxu0 0.0
  %506 = vmatprep.subr.mxu0 0.0
  %507 = vmatpush2.msra.mxu0 0.0
  %508 = vmatprep.subr.mxu0 0.0
  %509 = vmatpush2.msra.mxu0 0.0
  %510 = vmatprep.subr.mxu0 0.0
  %511 = vmatpush2.msra.mxu0 0.0
  %512 = vmatprep.subr.mxu0 0.0
  %513 = vmatpush2.msra.mxu0 0.0
  %514 = vmatprep.subr.mxu0 0.0
  %515 = vmatpush2.msra.mxu0 0.0
  %516 = vmatprep.subr.mxu0 0.0
  %517 = vmatpush2.msra.mxu0 0.0
  %518 = vmatprep.subr.mxu0 0.0
  %519 = vmatpush2.msra.mxu0 0.0
  %520 = vmatprep.mubr.f32.mxu0 0.0
  %521 = vmatmul.mubr.f32.gmra.mxu0 %v421
  %v522 = vpop.f32.mrf.mxu0
  %v523 = vadd.f32 %v418, %v522
  %v524 = vpop.f32.mrf.mxu0
  %525 = vmatprep.mubr.f32.mxu0 0.0
  %526 = vmatmul.mubr.f32.gmra.mxu0 %v424
  %v527 = vpop.f32.mrf.mxu0
  %v528 = vadd.f32 %v418, %v527
  %v529 = vpop.f32.mrf.mxu0
  %530 = vmatprep.mubr.f32.mxu0 0.0
  %531 = vmatmul.mubr.f32.gmra.mxu0 %v427
  %v532 = vpop.f32.mrf.mxu0
  %v533 = vadd.f32 %v418, %v532
  %v534 = vpop.f32.mrf.mxu0
  %535 = vmatprep.mubr.f32.mxu0 0.0
  %536 = vmatmul.mubr.f32.gmra.mxu0 %v430
  %v537 = vpop.f32.mrf.mxu0
  %v538 = vadd.f32 %v418, %v537
  %v539 = vpop.f32.mrf.mxu0
  %540 = vmatprep.mubr.f32.mxu0 0.0
  %541 = vmatmul.mubr.f32.gmra.mxu0 %v433
  %v542 = vpop.f32.mrf.mxu0
  %v543 = vadd.f32 %v418, %v542
  %v544 = vpop.f32.mrf.mxu0
  %545 = vmatprep.mubr.f32.mxu0 0.0
  %546 = vmatmul.mubr.f32.gmra.mxu0 %v436
  %v547 = vpop.f32.mrf.mxu0
  %v548 = vadd.f32 %v418, %v547
  %v549 = vpop.f32.mrf.mxu0
  %550 = vmatprep.mubr.f32.mxu0 0.0
  %551 = vmatmul.mubr.f32.gmra.mxu0 %v439
  %v552 = vpop.f32.mrf.mxu0
  %v553 = vadd.f32 %v418, %v552
  %v554 = vpop.f32.mrf.mxu0
  %555 = vmatprep.mubr.f32.mxu0 0.0
  %556 = vmatmul.mubr.f32.gmra.mxu0 %v442
  %v557 = vpop.f32.mrf.mxu0
  %v558 = vadd.f32 %v418, %v557
  %v559 = vpop.f32.mrf.mxu0
  %560 = vmatprep.mubr.f32.mxu0 0.0
  %561 = vmatmul.mubr.f32.gmra.mxu0 %v445
  %v562 = vpop.f32.mrf.mxu0
  %v563 = vadd.f32 %v418, %v562
  %v564 = vpop.f32.mrf.mxu0
  %565 = vmatprep.mubr.f32.mxu0 0.0
  %566 = vmatmul.mubr.f32.gmra.mxu0 %v448
  %v567 = vpop.f32.mrf.mxu0
  %v568 = vadd.f32 %v418, %v567
  %v569 = vpop.f32.mrf.mxu0
  %570 = vmatprep.mubr.f32.mxu0 0.0
  %571 = vmatmul.mubr.f32.gmra.mxu0 %v451
  %v572 = vpop.f32.mrf.mxu0
  %v573 = vadd.f32 %v418, %v572
  %v574 = vpop.f32.mrf.mxu0
  %575 = vmatprep.mubr.f32.mxu0 0.0
  %576 = vmatmul.mubr.f32.gmra.mxu0 %v454
  %v577 = vpop.f32.mrf.mxu0
  %v578 = vadd.f32 %v418, %v577
  %v579 = vpop.f32.mrf.mxu0
  %580 = vdwg.mxu0
  %vm581 = vcmask 7168
  %582 = vst.msk [vmem:[%s7] sm:$0xff] %vm581, %v523
  %583 = vst.msk [vmem:[%s7 + $0x8] sm:$0xff] %vm581, %v528
  %584 = vst.msk [vmem:[%s7 + $0x10] sm:$0xff] %vm581, %v533
  %585 = vst.msk [vmem:[%s7 + $0x18] sm:$0xff] %vm581, %v538
  %586 = vst.msk [vmem:[%s7 + $0x20] sm:$0xff] %vm581, %v543
  %587 = vst.msk [vmem:[%s7 + $0x28] sm:$0xff] %vm581, %v548
  %588 = vst.msk [vmem:[%s7 + $0x30] sm:$0xff] %vm581, %v553
  %589 = vst.msk [vmem:[%s7 + $0x38] sm:$0xff] %vm581, %v558
  %590 = vst.msk [vmem:[%s7 + $0x40] sm:$0xff] %vm581, %v563
  %591 = vst.msk [vmem:[%s7 + $0x48] sm:$0xff] %vm581, %v568
  %592 = vst.msk [vmem:[%s7 + $0x50] sm:$0xff] %vm581, %v573
  %593 = vst.msk [vmem:[%s7 + $0x58] sm:$0xff] %vm581, %v578
  // Predicated region
  $region30: #{_lambda_.119} parent=0 // pred_check
    _
  $region31: #{_lambda_.119} parent=0 // pred_check_branch
    %595 = sbr.rel (0) target = $region33
  $region32: #{_lambda_.119} parent=0 // pred_region
    _
  $region33: #{_lambda_.119} parent=0 // pred_fallthru
    _
  // Predicated region
  $region34: #{_lambda_.119} parent=0 // pred_check
    _
  $region35: #{_lambda_.119} parent=0 // pred_check_branch
    %597 = sbr.rel (0) target = $region37
  $region36: #{_lambda_.119} parent=0 // pred_region
    _
  $region37: #{_lambda_.119} parent=0 // pred_fallthru
    _

// kernel: _lambda_.120
$region0: #{_lambda_.120}
  #allocation0 [shape = 'u32[]', space=smem, size = 0x4, offset = 0x4, fixed_abs, tag = 'smem constant byte address 0x4 - core index']
  #allocation1 [shape = 'u32[144,128]{1,0:T(1,128)}', space=vmem, size = 0x12000, scoped, tag = 'internal scratch']
  %s0 = inlined_call_operand.vmem [shape: f32[4,4], index: 0, kind: input, shape index: {}]
  %s1 = inlined_call_operand.vmem [shape: f32[4,2], index: 1, kind: input, shape index: {}]
  %s2 = inlined_call_operand.vmem [shape: f32[1,2], index: 2, kind: input, shape index: {}]
  %s3 = inlined_call_operand.vmem [shape: f32[4,2], index: 3, kind: output, shape index: {}]
  %s4 = sld [smem:[#allocation0]]
  $region22: #{_lambda_.120} parent=0
    _
  %s6 = ssub.s32 1, %s4
  %s7 = scalar_select 0, %s6, %s4
  // Predicated region
  $region2: #{_lambda_.120} parent=0 // pred_check
    _
  $region3: #{_lambda_.120} parent=0 // pred_check_branch
    %9 = sbr.rel (0) target = $region5
  $region4: #{_lambda_.120} parent=0 // pred_region
    _
  $region5: #{_lambda_.120} parent=0 // pred_fallthru
    _
  // Predicated region
  $region6: #{_lambda_.120} parent=0 // pred_check
    _
  $region7: #{_lambda_.120} parent=0 // pred_check_branch
    %11 = sbr.rel (0) target = $region9
  $region8: #{_lambda_.120} parent=0 // pred_region
    _
  $region9: #{_lambda_.120} parent=0 // pred_fallthru
    _
  // Predicated region
  $region10: #{_lambda_.120} parent=0 // pred_check
    _
  $region11: #{_lambda_.120} parent=0 // pred_check_branch
    %13 = sbr.rel (0) target = $region13
  $region12: #{_lambda_.120} parent=0 // pred_region
    _
  $region13: #{_lambda_.120} parent=0 // pred_fallthru
    _
  %v14 = vld [vmem:[%s0] sm:$0xf]
  %v15 = vld [vmem:[%s1] sm:$0xf]
  %v16 = vld [vmem:[%s2] sm:$0x1]
  %v18 = vlaneseq
  %v19 = vshrl.u32 %v18, 7
  %v20 = vsub.s32 0, %v19
  %v21 = vrot.slane %v16, %v20
  %vm23 = vcmask 31744
  %v25 = vsel %vm23, %v14, 0
  %vm27 = vcmask 1043456
  %v29 = vsel %vm27, %v15, 0
  %31 = vmatprep.subr.mxu0 0.0
  %32 = vmatpush1.msra.mxu0 0.0
  %33 = vmatprep.subr.mxu0 0.0
  %34 = vmatpush1.msra.mxu0 0.0
  %35 = vmatprep.subr.mxu0 0.0
  %36 = vmatpush1.msra.mxu0 0.0
  %37 = vmatprep.subr.mxu0 0.0
  %38 = vmatpush1.msra.mxu0 0.0
  %39 = vmatprep.subr.mxu0 0.0
  %40 = vmatpush1.msra.mxu0 0.0
  %41 = vmatprep.subr.mxu0 0.0
  %42 = vmatpush1.msra.mxu0 0.0
  %43 = vmatprep.subr.mxu0 0.0
  %44 = vmatpush1.msra.mxu0 0.0
  %45 = vmatprep.subr.mxu0 0.0
  %46 = vmatpush1.msra.mxu0 0.0
  %47 = vmatprep.subr.mxu0 0.0
  %48 = vmatpush1.msra.mxu0 0.0
  %49 = vmatprep.subr.mxu0 0.0
  %50 = vmatpush1.msra.mxu0 0.0
  %51 = vmatprep.subr.mxu0 0.0
  %52 = vmatpush1.msra.mxu0 0.0
  %53 = vmatprep.subr.mxu0 0.0
  %54 = vmatpush1.msra.mxu0 0.0
  %55 = vmatprep.subr.mxu0 0.0
  %56 = vmatpush1.msra.mxu0 0.0
  %57 = vmatprep.subr.mxu0 0.0
  %58 = vmatpush1.msra.mxu0 0.0
  %59 = vmatprep.subr.mxu0 0.0
  %60 = vmatpush1.msra.mxu0 0.0
  %61 = vmatprep.subr.mxu0 0.0
  %62 = vmatpush1.msra.mxu0 %v29
  %63 = vmatprep.subr.mxu0 0.0
  %64 = vmatpush2.msra.mxu0 0.0
  %65 = vmatprep.subr.mxu0 0.0
  %66 = vmatpush2.msra.mxu0 0.0
  %67 = vmatprep.subr.mxu0 0.0
  %68 = vmatpush2.msra.mxu0 0.0
  %69 = vmatprep.subr.mxu0 0.0
  %70 = vmatpush2.msra.mxu0 0.0
  %71 = vmatprep.subr.mxu0 0.0
  %72 = vmatpush2.msra.mxu0 0.0
  %73 = vmatprep.subr.mxu0 0.0
  %74 = vmatpush2.msra.mxu0 0.0
  %75 = vmatprep.subr.mxu0 0.0
  %76 = vmatpush2.msra.mxu0 0.0
  %77 = vmatprep.subr.mxu0 0.0
  %78 = vmatpush2.msra.mxu0 0.0
  %79 = vmatprep.subr.mxu0 0.0
  %80 = vmatpush2.msra.mxu0 0.0
  %81 = vmatprep.subr.mxu0 0.0
  %82 = vmatpush2.msra.mxu0 0.0
  %83 = vmatprep.subr.mxu0 0.0
  %84 = vmatpush2.msra.mxu0 0.0
  %85 = vmatprep.subr.mxu0 0.0
  %86 = vmatpush2.msra.mxu0 0.0
  %87 = vmatprep.subr.mxu0 0.0
  %88 = vmatpush2.msra.mxu0 0.0
  %89 = vmatprep.subr.mxu0 0.0
  %90 = vmatpush2.msra.mxu0 0.0
  %91 = vmatprep.subr.mxu0 0.0
  %92 = vmatpush2.msra.mxu0 0.0
  %93 = vmatprep.subr.mxu0 0.0
  %94 = vmatpush2.msra.mxu0 0.0
  %95 = vmatprep.mubr.f32.mxu0 0.0
  %96 = vmatmul.mubr.f32.gmra.mxu0 %v25
  %v97 = vpop.f32.mrf.mxu0
  %v98 = vadd.f32 %v21, %v97
  %v99 = vpop.f32.mrf.mxu0
  %100 = vdwg.mxu0
  %vm101 = vcmask 11264
  %102 = vst.msk [vmem:[%s3] sm:$0xf] %vm101, %v98
  // Predicated region
  $region14: #{_lambda_.120} parent=0 // pred_check
    _
  $region15: #{_lambda_.120} parent=0 // pred_check_branch
    %104 = sbr.rel (0) target = $region17
  $region16: #{_lambda_.120} parent=0 // pred_region
    _
  $region17: #{_lambda_.120} parent=0 // pred_fallthru
    _
  // Predicated region
  $region18: #{_lambda_.120} parent=0 // pred_check
    _
  $region19: #{_lambda_.120} parent=0 // pred_check_branch
    %106 = sbr.rel (0) target = $region21
  $region20: #{_lambda_.120} parent=0 // pred_region
    _
  $region21: #{_lambda_.120} parent=0 // pred_fallthru
    _

// kernel: _lambda_.122
$region0: #{_lambda_.122}
  #allocation0 [shape = 'u32[]', space=smem, size = 0x4, offset = 0x4, fixed_abs, tag = 'smem constant byte address 0x4 - core index']
  #allocation1 [shape = 'u32[144,128]{1,0:T(1,128)}', space=vmem, size = 0x12000, scoped, tag = 'internal scratch']
  %s0 = inlined_call_operand.vmem [shape: f32[6,4], index: 0, kind: input, shape index: {}]
  %s1 = inlined_call_operand.vmem [shape: f32[4,24], index: 1, kind: input, shape index: {}]
  %s2 = inlined_call_operand.vmem [shape: f32[1,24], index: 2, kind: input, shape index: {}]
  %s3 = inlined_call_operand.vmem [shape: f32[6,24], index: 3, kind: output, shape index: {}]
  %s4 = sld [smem:[#allocation0]]
  $region22: #{_lambda_.122} parent=0
    _
  %s6 = ssub.s32 1, %s4
  %s7 = scalar_select 0, %s6, %s4
  // Predicated region
  $region2: #{_lambda_.122} parent=0 // pred_check
    _
  $region3: #{_lambda_.122} parent=0 // pred_check_branch
    %9 = sbr.rel (0) target = $region5
  $region4: #{_lambda_.122} parent=0 // pred_region
    _
  $region5: #{_lambda_.122} parent=0 // pred_fallthru
    _
  // Predicated region
  $region6: #{_lambda_.122} parent=0 // pred_check
    _
  $region7: #{_lambda_.122} parent=0 // pred_check_branch
    %11 = sbr.rel (0) target = $region9
  $region8: #{_lambda_.122} parent=0 // pred_region
    _
  $region9: #{_lambda_.122} parent=0 // pred_fallthru
    _
  // Predicated region
  $region10: #{_lambda_.122} parent=0 // pred_check
    _
  $region11: #{_lambda_.122} parent=0 // pred_check_branch
    %13 = sbr.rel (0) target = $region13
  $region12: #{_lambda_.122} parent=0 // pred_region
    _
  $region13: #{_lambda_.122} parent=0 // pred_fallthru
    _
  %v14 = vld [vmem:[%s0] sm:$0x3f]
  %v15 = vld [vmem:[%s1] sm:$0xf]
  %v16 = vld [vmem:[%s2] sm:$0x1]
  %v18 = vlaneseq
  %v19 = vshrl.u32 %v18, 7
  %v20 = vsub.s32 0, %v19
  %v21 = vrot.slane %v16, %v20
  %vm23 = vcmask 31744
  %v25 = vsel %vm23, %v14, 0
  %vm27 = vcmask 1043456
  %v29 = vsel %vm27, %v15, 0
  %31 = vmatprep.subr.mxu0 0.0
  %32 = vmatpush1.msra.mxu0 0.0
  %33 = vmatprep.subr.mxu0 0.0
  %34 = vmatpush1.msra.mxu0 0.0
  %35 = vmatprep.subr.mxu0 0.0
  %36 = vmatpush1.msra.mxu0 0.0
  %37 = vmatprep.subr.mxu0 0.0
  %38 = vmatpush1.msra.mxu0 0.0
  %39 = vmatprep.subr.mxu0 0.0
  %40 = vmatpush1.msra.mxu0 0.0
  %41 = vmatprep.subr.mxu0 0.0
  %42 = vmatpush1.msra.mxu0 0.0
  %43 = vmatprep.subr.mxu0 0.0
  %44 = vmatpush1.msra.mxu0 0.0
  %45 = vmatprep.subr.mxu0 0.0
  %46 = vmatpush1.msra.mxu0 0.0
  %47 = vmatprep.subr.mxu0 0.0
  %48 = vmatpush1.msra.mxu0 0.0
  %49 = vmatprep.subr.mxu0 0.0
  %50 = vmatpush1.msra.mxu0 0.0
  %51 = vmatprep.subr.mxu0 0.0
  %52 = vmatpush1.msra.mxu0 0.0
  %53 = vmatprep.subr.mxu0 0.0
  %54 = vmatpush1.msra.mxu0 0.0
  %55 = vmatprep.subr.mxu0 0.0
  %56 = vmatpush1.msra.mxu0 0.0
  %57 = vmatprep.subr.mxu0 0.0
  %58 = vmatpush1.msra.mxu0 0.0
  %59 = vmatprep.subr.mxu0 0.0
  %60 = vmatpush1.msra.mxu0 0.0
  %61 = vmatprep.subr.mxu0 0.0
  %62 = vmatpush1.msra.mxu0 %v29
  %63 = vmatprep.subr.mxu0 0.0
  %64 = vmatpush2.msra.mxu0 0.0
  %65 = vmatprep.subr.mxu0 0.0
  %66 = vmatpush2.msra.mxu0 0.0
  %67 = vmatprep.subr.mxu0 0.0
  %68 = vmatpush2.msra.mxu0 0.0
  %69 = vmatprep.subr.mxu0 0.0
  %70 = vmatpush2.msra.mxu0 0.0
  %71 = vmatprep.subr.mxu0 0.0
  %72 = vmatpush2.msra.mxu0 0.0
  %73 = vmatprep.subr.mxu0 0.0
  %74 = vmatpush2.msra.mxu0 0.0
  %75 = vmatprep.subr.mxu0 0.0
  %76 = vmatpush2.msra.mxu0 0.0
  %77 = vmatprep.subr.mxu0 0.0
  %78 = vmatpush2.msra.mxu0 0.0
  %79 = vmatprep.subr.mxu0 0.0
  %80 = vmatpush2.msra.mxu0 0.0
  %81 = vmatprep.subr.mxu0 0.0
  %82 = vmatpush2.msra.mxu0 0.0
  %83 = vmatprep.subr.mxu0 0.0
  %84 = vmatpush2.msra.mxu0 0.0
  %85 = vmatprep.subr.mxu0 0.0
  %86 = vmatpush2.msra.mxu0 0.0
  %87 = vmatprep.subr.mxu0 0.0
  %88 = vmatpush2.msra.mxu0 0.0
  %89 = vmatprep.subr.mxu0 0.0
  %90 = vmatpush2.msra.mxu0 0.0
  %91 = vmatprep.subr.mxu0 0.0
  %92 = vmatpush2.msra.mxu0 0.0
  %93 = vmatprep.subr.mxu0 0.0
  %94 = vmatpush2.msra.mxu0 0.0
  %95 = vmatprep.mubr.f32.mxu0 0.0
  %96 = vmatmul.mubr.f32.gmra.mxu0 %v25
  %v97 = vpop.f32.mrf.mxu0
  %v98 = vadd.f32 %v21, %v97
  %v99 = vpop.f32.mrf.mxu0
  %100 = vdwg.mxu0
  %vm101 = vcmask 193536
  %102 = vst.msk [vmem:[%s3] sm:$0x3f] %vm101, %v98
  // Predicated region
  $region14: #{_lambda_.122} parent=0 // pred_check
    _
  $region15: #{_lambda_.122} parent=0 // pred_check_branch
    %104 = sbr.rel (0) target = $region17
  $region16: #{_lambda_.122} parent=0 // pred_region
    _
  $region17: #{_lambda_.122} parent=0 // pred_fallthru
    _
  // Predicated region
  $region18: #{_lambda_.122} parent=0 // pred_check
    _
  $region19: #{_lambda_.122} parent=0 // pred_check_branch
    %106 = sbr.rel (0) target = $region21
  $region20: #{_lambda_.122} parent=0 // pred_region
    _
  $region21: #{_lambda_.122} parent=0 // pred_fallthru
    _

// kernel: _lambda_.121
$region0: #{_lambda_.121}
  #allocation0 [shape = 'u32[]', space=smem, size = 0x4, offset = 0x4, fixed_abs, tag = 'smem constant byte address 0x4 - core index']
  #allocation1 [shape = 'u32[144,128]{1,0:T(1,128)}', space=vmem, size = 0x12000, scoped, tag = 'internal scratch']
  %s0 = inlined_call_operand.vmem [shape: f32[8,1], index: 0, kind: input, shape index: {}]
  %s1 = inlined_call_operand.vmem [shape: f32[1,6], index: 1, kind: input, shape index: {}]
  %s2 = inlined_call_operand.vmem [shape: f32[1,6], index: 2, kind: input, shape index: {}]
  %s3 = inlined_call_operand.vmem [shape: f32[8,6], index: 3, kind: output, shape index: {}]
  %s4 = sld [smem:[#allocation0]]
  $region22: #{_lambda_.121} parent=0
    _
  %s6 = ssub.s32 1, %s4
  %s7 = scalar_select 0, %s6, %s4
  // Predicated region
  $region2: #{_lambda_.121} parent=0 // pred_check
    _
  $region3: #{_lambda_.121} parent=0 // pred_check_branch
    %9 = sbr.rel (0) target = $region5
  $region4: #{_lambda_.121} parent=0 // pred_region
    _
  $region5: #{_lambda_.121} parent=0 // pred_fallthru
    _
  // Predicated region
  $region6: #{_lambda_.121} parent=0 // pred_check
    _
  $region7: #{_lambda_.121} parent=0 // pred_check_branch
    %11 = sbr.rel (0) target = $region9
  $region8: #{_lambda_.121} parent=0 // pred_region
    _
  $region9: #{_lambda_.121} parent=0 // pred_fallthru
    _
  // Predicated region
  $region10: #{_lambda_.121} parent=0 // pred_check
    _
  $region11: #{_lambda_.121} parent=0 // pred_check_branch
    %13 = sbr.rel (0) target = $region13
  $region12: #{_lambda_.121} parent=0 // pred_region
    _
  $region13: #{_lambda_.121} parent=0 // pred_fallthru
    _
  %v14 = vld [vmem:[%s0] sm:$0xff]
  %v15 = vld [vmem:[%s1] sm:$0x1]
  %v16 = vld [vmem:[%s2] sm:$0x1]
  %v18 = vlaneseq
  %v19 = vshrl.u32 %v18, 7
  %v20 = vsub.s32 0, %v19
  %v21 = vrot.slane %v16, %v20
  %vm23 = vcmask 7168
  %v25 = vsel %vm23, %v14, 0
  %vm27 = vcmask 1040384
  %v29 = vsel %vm27, %v15, 0
  %31 = vmatprep.subr.mxu0 0.0
  %32 = vmatpush1.msra.mxu0 0.0
  %33 = vmatprep.subr.mxu0 0.0
  %34 = vmatpush1.msra.mxu0 0.0
  %35 = vmatprep.subr.mxu0 0.0
  %36 = vmatpush1.msra.mxu0 0.0
  %37 = vmatprep.subr.mxu0 0.0
  %38 = vmatpush1.msra.mxu0 0.0
  %39 = vmatprep.subr.mxu0 0.0
  %40 = vmatpush1.msra.mxu0 0.0
  %41 = vmatprep.subr.mxu0 0.0
  %42 = vmatpush1.msra.mxu0 0.0
  %43 = vmatprep.subr.mxu0 0.0
  %44 = vmatpush1.msra.mxu0 0.0
  %45 = vmatprep.subr.mxu0 0.0
  %46 = vmatpush1.msra.mxu0 0.0
  %47 = vmatprep.subr.mxu0 0.0
  %48 = vmatpush1.msra.mxu0 0.0
  %49 = vmatprep.subr.mxu0 0.0
  %50 = vmatpush1.msra.mxu0 0.0
  %51 = vmatprep.subr.mxu0 0.0
  %52 = vmatpush1.msra.mxu0 0.0
  %53 = vmatprep.subr.mxu0 0.0
  %54 = vmatpush1.msra.mxu0 0.0
  %55 = vmatprep.subr.mxu0 0.0
  %56 = vmatpush1.msra.mxu0 0.0
  %57 = vmatprep.subr.mxu0 0.0
  %58 = vmatpush1.msra.mxu0 0.0
  %59 = vmatprep.subr.mxu0 0.0
  %60 = vmatpush1.msra.mxu0 0.0
  %61 = vmatprep.subr.mxu0 0.0
  %62 = vmatpush1.msra.mxu0 %v29
  %63 = vmatprep.subr.mxu0 0.0
  %64 = vmatpush2.msra.mxu0 0.0
  %65 = vmatprep.subr.mxu0 0.0
  %66 = vmatpush2.msra.mxu0 0.0
  %67 = vmatprep.subr.mxu0 0.0
  %68 = vmatpush2.msra.mxu0 0.0
  %69 = vmatprep.subr.mxu0 0.0
  %70 = vmatpush2.msra.mxu0 0.0
  %71 = vmatprep.subr.mxu0 0.0
  %72 = vmatpush2.msra.mxu0 0.0
  %73 = vmatprep.subr.mxu0 0.0
  %74 = vmatpush2.msra.mxu0 0.0
  %75 = vmatprep.subr.mxu0 0.0
  %76 = vmatpush2.msra.mxu0 0.0
  %77 = vmatprep.subr.mxu0 0.0
  %78 = vmatpush2.msra.mxu0 0.0
  %79 = vmatprep.subr.mxu0 0.0
  %80 = vmatpush2.msra.mxu0 0.0
  %81 = vmatprep.subr.mxu0 0.0
  %82 = vmatpush2.msra.mxu0 0.0
  %83 = vmatprep.subr.mxu0 0.0
  %84 = vmatpush2.msra.mxu0 0.0
  %85 = vmatprep.subr.mxu0 0.0
  %86 = vmatpush2.msra.mxu0 0.0
  %87 = vmatprep.subr.mxu0 0.0
  %88 = vmatpush2.msra.mxu0 0.0
  %89 = vmatprep.subr.mxu0 0.0
  %90 = vmatpush2.msra.mxu0 0.0
  %91 = vmatprep.subr.mxu0 0.0
  %92 = vmatpush2.msra.mxu0 0.0
  %93 = vmatprep.subr.mxu0 0.0
  %94 = vmatpush2.msra.mxu0 0.0
  %95 = vmatprep.mubr.f32.mxu0 0.0
  %96 = vmatmul.mubr.f32.gmra.mxu0 %v25
  %v97 = vpop.f32.mrf.mxu0
  %v98 = vadd.f32 %v21, %v97
  %v99 = vpop.f32.mrf.mxu0
  %100 = vdwg.mxu0
  %vm101 = vcmask 48128
  %102 = vst.msk [vmem:[%s3] sm:$0xff] %vm101, %v98
  // Predicated region
  $region14: #{_lambda_.121} parent=0 // pred_check
    _
  $region15: #{_lambda_.121} parent=0 // pred_check_branch
    %104 = sbr.rel (0) target = $region17
  $region16: #{_lambda_.121} parent=0 // pred_region
    _
  $region17: #{_lambda_.121} parent=0 // pred_fallthru
    _
  // Predicated region
  $region18: #{_lambda_.121} parent=0 // pred_check
    _
  $region19: #{_lambda_.121} parent=0 // pred_check_branch
    %106 = sbr.rel (0) target = $region21
  $region20: #{_lambda_.121} parent=0 // pred_region
    _
  $region21: #{_lambda_.121} parent=0 // pred_fallthru
    _

// kernel: _lambda_.128
$region0: #{_lambda_.128}
  #allocation0 [shape = 'u32[]', space=smem, size = 0x4, offset = 0x4, fixed_abs, tag = 'smem constant byte address 0x4 - core index']
  #allocation1 [shape = 'u32[144,128]{1,0:T(1,128)}', space=vmem, size = 0x12000, scoped, tag = 'internal scratch']
  %s0 = inlined_call_operand.vmem [shape: f32[8,32], index: 0, kind: input, shape index: {}]
  %s1 = inlined_call_operand.vmem [shape: f32[8,32], index: 1, kind: input, shape index: {}]
  %s2 = inlined_call_operand.vmem [shape: f32[1,32], index: 2, kind: input, shape index: {}]
  %s3 = inlined_call_operand.vmem [shape: f32[1,32], index: 3, kind: input, shape index: {}]
  %s4 = inlined_call_operand.vmem [shape: f32[32,64], index: 4, kind: input, shape index: {}]
  %s5 = inlined_call_operand.hbm [shape: f32[8,32], index: 5, kind: output, shape index: {0}]
  %s6 = inlined_call_operand.vmem [shape: f32[8,64], index: 6, kind: output, shape index: {1}]
  %7 = xla_tuple %s5, %s6
  %s8 = sld [smem:[#allocation0]]
  $region38: #{_lambda_.128} parent=0
    _
  %s10 = ssub.s32 1, %s8
  %s11 = scalar_select 0, %s10, %s8
  $region1: #{_lambda_.128} parent=0
    #allocation2 [shape = 'u8[4096]{0}', space=vmem, size = 0x1000, scoped, tag = 'output window, operand 0, single buffered']
    #allocation3 [shape = 's32[1]{0}', space=sflag, size = 0x4, scoped, tag = 'scoped memory for _lambda_.128']
    %12 = vsyncpa [#allocation3], 0
    // Predicated region
    $region2: #{_lambda_.128} parent=1 // pred_check
      _
    $region3: #{_lambda_.128} parent=1 // pred_check_branch
      %14 = sbr.rel (0) target = $region5
    $region4: #{_lambda_.128} parent=1 // pred_region
      _
    $region5: #{_lambda_.128} parent=1 // pred_fallthru
      _
    // Predicated region
    $region6: #{_lambda_.128} parent=1 // pred_check
      _
    $region7: #{_lambda_.128} parent=1 // pred_check_branch
      %16 = sbr.rel (0) target = $region9
    $region8: #{_lambda_.128} parent=1 // pred_region
      _
    $region9: #{_lambda_.128} parent=1 // pred_fallthru
      _
    // Predicated region
    $region10: #{_lambda_.128} parent=1 // pred_check
      _
    $region11: #{_lambda_.128} parent=1 // pred_check_branch
      %18 = sbr.rel (0) target = $region13
    $region12: #{_lambda_.128} parent=1 // pred_region
      _
    $region13: #{_lambda_.128} parent=1 // pred_fallthru
      _
    // Predicated region
    $region14: #{_lambda_.128} parent=1 // pred_check
      _
    $region15: #{_lambda_.128} parent=1 // pred_check_branch
      %20 = sbr.rel (0) target = $region17
    $region16: #{_lambda_.128} parent=1 // pred_region
      _
    $region17: #{_lambda_.128} parent=1 // pred_fallthru
      _
    // Predicated region
    $region18: #{_lambda_.128} parent=1 // pred_check
      _
    $region19: #{_lambda_.128} parent=1 // pred_check_branch
      %22 = sbr.rel (0) target = $region21
    $region20: #{_lambda_.128} parent=1 // pred_region
      _
    $region21: #{_lambda_.128} parent=1 // pred_fallthru
      _
    %v23 = vld [vmem:[%s0] sm:$0xff]
    %v24 = vld [vmem:[%s1] sm:$0xff]
    %v25 = vadd.f32 %v23, %v24
    %vm26 = vcmask 261120
    %v27 = vsel %vm26, %v25, 0.0
    %28 = vadd.xlane.f32.xlu0 %v27
    %v29 = vpop.xlane.xlu0 %28
    %v30 = vrcp.pop 32.0
    %v31 = vmul.f32 %v29, %v30
    %v32 = vsub.f32 %v25, %v31
    %v33 = vmul.f32 %v32, %v32
    %v34 = vsel %vm26, %v33, 0.0
    %35 = vadd.xlane.f32.xlu0 %v34
    %v36 = vpop.xlane.xlu0 %35
    %v37 = vmul.f32 %v36, %v30
    %v38 = vadd.f32 %v37, 1e-05
    %v39 = vrsqrt.pop %v38
    %v40 = vmul.f32 %v32, %v39
    %v41 = vld [vmem:[%s2] sm:$0x1]
    %v43 = vlaneseq
    %v44 = vshrl.u32 %v43, 7
    %v45 = vsub.s32 0, %v44
    %v46 = vrot.slane %v41, %v45
    %v48 = vmul.f32 %v40, %v46
    %v49 = vld [vmem:[%s3] sm:$0x1]
    %v51 = vlaneseq
    %v52 = vshrl.u32 %v51, 7
    %v53 = vsub.s32 0, %v52
    %v54 = vrot.slane %v49, %v53
    %v56 = vadd.f32 %v48, %v54
    %57 = vst.msk [vmem:[#allocation2] sm:$0xff] %vm26, %v56
    %v58 = vld [vmem:[%s4] sm:$0xff]
    %v59 = vld [vmem:[%s4 + $0x8] sm:$0xff]
    %v60 = vld [vmem:[%s4 + $0x10] sm:$0xff]
    %v61 = vld [vmem:[%s4 + $0x18] sm:$0xff]
    %v63 = vsel %vm26, %v56, 0
    %65 = vmatprep.subr.mxu0 0.0
    %66 = vmatpush1.msra.mxu0 0.0
    %67 = vmatprep.subr.mxu0 0.0
    %68 = vmatpush1.msra.mxu0 0.0
    %69 = vmatprep.subr.mxu0 0.0
    %70 = vmatpush1.msra.mxu0 0.0
    %71 = vmatprep.subr.mxu0 0.0
    %72 = vmatpush1.msra.mxu0 0.0
    %73 = vmatprep.subr.mxu0 0.0
    %74 = vmatpush1.msra.mxu0 0.0
    %75 = vmatprep.subr.mxu0 0.0
    %76 = vmatpush1.msra.mxu0 0.0
    %77 = vmatprep.subr.mxu0 0.0
    %78 = vmatpush1.msra.mxu0 0.0
    %79 = vmatprep.subr.mxu0 0.0
    %80 = vmatpush1.msra.mxu0 0.0
    %81 = vmatprep.subr.mxu0 0.0
    %82 = vmatpush1.msra.mxu0 0.0
    %83 = vmatprep.subr.mxu0 0.0
    %84 = vmatpush1.msra.mxu0 0.0
    %85 = vmatprep.subr.mxu0 0.0
    %86 = vmatpush1.msra.mxu0 0.0
    %87 = vmatprep.subr.mxu0 0.0
    %88 = vmatpush1.msra.mxu0 0.0
    %89 = vmatprep.subr.mxu0 0.0
    %90 = vmatpush1.msra.mxu0 %v61
    %91 = vmatprep.subr.mxu0 0.0
    %92 = vmatpush1.msra.mxu0 %v60
    %93 = vmatprep.subr.mxu0 0.0
    %94 = vmatpush1.msra.mxu0 %v59
    %95 = vmatprep.subr.mxu0 0.0
    %96 = vmatpush1.msra.mxu0 %v58
    %97 = vmatprep.subr.mxu0 0.0
    %98 = vmatpush2.msra.mxu0 0.0
    %99 = vmatprep.subr.mxu0 0.0
    %100 = vmatpush2.msra.mxu0 0.0
    %101 = vmatprep.subr.mxu0 0.0
    %102 = vmatpush2.msra.mxu0 0.0
    %103 = vmatprep.subr.mxu0 0.0
    %104 = vmatpush2.msra.mxu0 0.0
    %105 = vmatprep.subr.mxu0 0.0
    %106 = vmatpush2.msra.mxu0 0.0
    %107 = vmatprep.subr.mxu0 0.0
    %108 = vmatpush2.msra.mxu0 0.0
    %109 = vmatprep.subr.mxu0 0.0
    %110 = vmatpush2.msra.mxu0 0.0
    %111 = vmatprep.subr.mxu0 0.0
    %112 = vmatpush2.msra.mxu0 0.0
    %113 = vmatprep.subr.mxu0 0.0
    %114 = vmatpush2.msra.mxu0 0.0
    %115 = vmatprep.subr.mxu0 0.0
    %116 = vmatpush2.msra.mxu0 0.0
    %117 = vmatprep.subr.mxu0 0.0
    %118 = vmatpush2.msra.mxu0 0.0
    %119 = vmatprep.subr.mxu0 0.0
    %120 = vmatpush2.msra.mxu0 0.0
    %121 = vmatprep.subr.mxu0 0.0
    %122 = vmatpush2.msra.mxu0 0.0
    %123 = vmatprep.subr.mxu0 0.0
    %124 = vmatpush2.msra.mxu0 0.0
    %125 = vmatprep.subr.mxu0 0.0
    %126 = vmatpush2.msra.mxu0 0.0
    %127 = vmatprep.subr.mxu0 0.0
    %128 = vmatpush2.msra.mxu0 0.0
    %129 = vmatprep.mubr.f32.mxu0 0.0
    %130 = vmatmul.mubr.f32.gmra.mxu0 %v63
    %v131 = vpop.f32.mrf.mxu0
    %v132 = vadd.f32 0.0, %v131
    %v133 = vpop.f32.mrf.mxu0
    %134 = vdwg.mxu0
    %vm135 = vcmask 523264
    %136 = vst.msk [vmem:[%s6] sm:$0xff] %vm135, %v132
    // Predicated region
    $region22: #{_lambda_.128} parent=1 // pred_check
      _
    $region23: #{_lambda_.128} parent=1 // pred_check_branch
      %138 = sbr.rel (0) target = $region25
    $region24: #{_lambda_.128} parent=1 // pred_region
      %s140 = ssub.s32 128, 128
      %141 = vsyncadd [#allocation3], %s140
      %s143 = sshll.u32 [#allocation2], 4
      %s144 = int_to_ptr.vmem [resolvable:$true] %s143
      %146 = dma.vmem_to_hbm [thread:$0]  %s144, 128, %s5, [#allocation3]
    $region25: #{_lambda_.128} parent=1 // pred_fallthru
      _
    // Predicated region
    $region26: #{_lambda_.128} parent=1 // pred_check
      _
    $region27: #{_lambda_.128} parent=1 // pred_check_branch
      %148 = sbr.rel (0) target = $region29
    $region28: #{_lambda_.128} parent=1 // pred_region
      _
    $region29: #{_lambda_.128} parent=1 // pred_fallthru
      _
    // Predicated region
    $region30: #{_lambda_.128} parent=1 // pred_check
      _
    $region31: #{_lambda_.128} parent=1 // pred_check_branch
      %150 = sbr.rel (0) target = $region33
    $region32: #{_lambda_.128} parent=1 // pred_region
      %151 = dma.done [#allocation3], 128
    $region33: #{_lambda_.128} parent=1 // pred_fallthru
      _
    // Predicated region
    $region34: #{_lambda_.128} parent=1 // pred_check
      _
    $region35: #{_lambda_.128} parent=1 // pred_check_branch
      %153 = sbr.rel (0) target = $region37
    $region36: #{_lambda_.128} parent=1 // pred_region
      _
    $region37: #{_lambda_.128} parent=1 // pred_fallthru
      _
    %154 = vsyncpa [#allocation3], 1

</llo_original>
